<compile_context>
chip_gen: v5e
topology: v5e:2x2
jax: 0.10.0
libtpu: 0.0.40
codegen_flags: <defaults>
</compile_context>

<pallas_src>
import functools

import jax
import jax.numpy as jnp
from jax import lax
from jax.experimental import pallas as pl
from jax.experimental.pallas import tpu as pltpu

HIGHEST = lax.Precision.HIGHEST


# -----------------------------------------------------------------------------
# Fused autoregressive decode kernel: one invocation runs all T steps.
# -----------------------------------------------------------------------------
def decode_loop_kernel(tenc_ref, enc_ref, h0_ref, emb_ref,
                       w1h_ref, w2_ref,
                       wx_ref, wc_ref, wh_ref, bi_ref, bh_ref,
                       wout_ref, bout_ref,
                       logp_ref,
                       *, bos_id, num_steps, unroll):
    B, H = h0_ref.shape
    V = logp_ref.shape[-1]

    iota_v = lax.broadcasted_iota(jnp.int32, (B, V), 1)

    def dot(a, b):
        return jnp.dot(a, b, preferred_element_type=jnp.float32,
                       precision=HIGHEST)

    def step(t, carry):
        h, prev = carry

        # ---- greedy token selection (first-max tie-break == argmax) + embedding
        # gather via one-hot matmul.  V = 128 lanes here so this is free.
        # TODO(synk): at production vocab sizes replace with a per-batch dynamic
        # row read / DMA gather from an HBM-resident table (memory_space=pl.ANY).
        mx = jnp.max(prev, axis=1, keepdims=True)                      # (B, 1)
        idx = jnp.min(jnp.where(prev >= mx, iota_v, V),
                      axis=1, keepdims=True)                           # first max
        onehot = (iota_v == idx).astype(jnp.float32)                   # (B, V)
        xt = dot(onehot, emb_ref[...])                                 # (B, W)

        # ---- attention (encoder-side projection `tenc` precomputed per seq) ----
        t_hid = dot(h, w1h_ref[...])                                   # (B, H)
        aw = jnp.tanh(tenc_ref[...] + t_hid[:, None, :])               # (B, S, H)
        e = jnp.sum(aw * w2_ref[...], axis=-1)                         # (B, S)
        e_max = jnp.max(e, axis=1, keepdims=True)
        p = jnp.exp(e - e_max)
        alpha = p * pl.reciprocal(jnp.sum(p, axis=1, keepdims=True),
                                  approx=False)
        context = jnp.sum(alpha[:, :, None] * enc_ref[...], axis=1)    # (B, H)

        # ---- fused GRU cell: 3 dots, gates split by static lane slices ----
        gi = dot(xt, wx_ref[...]) + dot(context, wc_ref[...]) + bi_ref[...]
        gh = dot(h, wh_ref[...]) + bh_ref[...]                          # (B, 3H)
        r = jax.nn.sigmoid(gi[:, :H] + gh[:, :H])
        z = jax.nn.sigmoid(gi[:, H:2 * H] + gh[:, H:2 * H])
        n = jnp.tanh(gi[:, 2 * H:] + r * gh[:, 2 * H:])
        h_new = (1.0 - z) * n + z * h                                   # (B, H)

        # ---- output projection + log_softmax (V is a multiple of 128; padded
        # lanes would need -inf masking otherwise) ----
        logits = dot(h_new, wout_ref[...]) + bout_ref[...]              # (B, V)
        m = jnp.max(logits, axis=1, keepdims=True)
        lse = m + jnp.log(jnp.sum(jnp.exp(logits - m), axis=1, keepdims=True))
        logp = logits - lse

        logp_ref[t] = logp
        return (h_new, logp)

    # Seed "previous logprobs" so that step 0's argmax == BOS -> feeds emb[BOS].
    prev0 = jnp.where(iota_v == bos_id, 1.0, 0.0).astype(jnp.float32)
    lax.fori_loop(0, num_steps, step, (h0_ref[...], prev0), unroll=unroll)


def build_decode_loop(B, S, H, W, V, T, bos_id, *, batch_blocks=1):
    """batch_blocks > 1 splits the (independent) batch recurrences across the
    'parallel' grid axis (useful on v7x's two TensorCores for larger batches)."""
    assert B % batch_blocks == 0
    Bb = B // batch_blocks

    def const_spec(shape):
        nd = len(shape)
        return pl.BlockSpec(shape, lambda b, _nd=nd: (0,) * _nd)

    in_specs = [
        pl.BlockSpec((Bb, S, H), lambda b: (b, 0, 0)),   # tenc = enc @ W1e^T + b1
        pl.BlockSpec((Bb, S, H), lambda b: (b, 0, 0)),   # enc
        pl.BlockSpec((Bb, H), lambda b: (b, 0)),         # h0
        const_spec((V, W)),                              # embedding table
        const_spec((H, H)),                              # W1h^T (attention, hidden)
        const_spec((1, H)),                              # w2 (linear2, no bias)
        const_spec((W, 3 * H)),                          # W_ih xt part, transposed
        const_spec((H, 3 * H)),                          # W_ih ctx part, transposed
        const_spec((H, 3 * H)),                          # W_hh, transposed
        const_spec((1, 3 * H)),                          # b_ih
        const_spec((1, 3 * H)),                          # b_hh
        const_spec((H, V)),                              # W_out^T
        const_spec((1, V)),                              # b_out
    ]
    return pl.pallas_call(
        functools.partial(decode_loop_kernel, bos_id=bos_id, num_steps=T,
                          unroll=(T <= 8)),
        grid=(batch_blocks,),
        in_specs=in_specs,
        out_specs=pl.BlockSpec((T, Bb, V), lambda b: (0, b, 0)),
        out_shape=jax.ShapeDtypeStruct((T, B, V), jnp.float32),
        compiler_params=pltpu.CompilerParams(
            dimension_semantics=("parallel",),
            vmem_limit_bytes=32 * 1024 * 1024),
        # TODO(synk): production sizing (large V / H) on v7x (64 MiB VMEM): cast
        # resident weights to bf16 (keep f32 accumulation), tile W_out over V
        # with an online log-sum-exp, DMA-gather the embedding rows from HBM,
        # and mark never-changing weight blocks pipeline_mode=pl.Buffered(1).
    )


# -----------------------------------------------------------------------------
# One-time parameter preprocessing: pre-transpose / pre-split all weights.
# -----------------------------------------------------------------------------
def prep_params(params, H, W):
    W1 = params["W1"]        # (H, 2H): linear1 over cat([enc, h])
    Wih = params["Wih"]      # (3H, W+H): GRU input weights over cat([xt, ctx]); gates [r; z; n]
    Whh = params["Whh"]      # (3H, H)
    return {
        "w1e_T": W1[:, :H].T,            # (H, H) encoder part (hoisted out of loop)
        "w1h_T": W1[:, H:].T,            # (H, H)
        "b1": params["b1"],              # (1, H)
        "w2": params["w2"],              # (1, H)
        "emb": params["emb"],            # (V, W)
        "wx": Wih[:, :W].T,              # (W, 3H)
        "wc": Wih[:, W:].T,              # (H, 3H)
        "wh": Whh.T,                     # (H, 3H)
        "bi": params["bih"],             # (1, 3H)
        "bh": params["bhh"],             # (1, 3H)
        "wout_T": params["Wout"].T,      # (H, V)
        "bout": params["bout"],          # (1, V)
    }


# -----------------------------------------------------------------------------
# Decoder.forward (mode='inference'): autoregressive greedy decode.
# -----------------------------------------------------------------------------
def decoder_inference(encoder_outputs, encoder_hidden, params, *,
                      max_length, bos_id=1, testsize=119):
    B, S, H = encoder_outputs.shape
    V, W = params["emb"].shape
    T = max_length - 2                      # number of recorded decode steps
    pp = prep_params(params, H, W)
    decode_loop = build_decode_loop(B, S, H, W, V, T, bos_id)

    @jax.jit
    def run(enc, h0, pp):
        # Hoisted encoder-side attention projection (independent of h / step).
        tenc = jnp.einsum("bsh,hk->bsk", enc, pp["w1e_T"],
                          precision=HIGHEST) + pp["b1"]                  # (B, S, H)
        logp_all = decode_loop(
            tenc, enc, h0, pp["emb"], pp["w1h_T"], pp["w2"],
            pp["wx"], pp["wc"], pp["wh"], pp["bi"], pp["bh"],
            pp["wout_T"], pp["bout"])                                    # (T, B, V)
        # Bookkeeping ONCE over all steps (instead of T tiny top_k calls).
        sample_lp = jnp.max(logp_all, axis=2)                            # (T, B)
        preds = jnp.argmax(logp_all, axis=2).astype(jnp.int32)           # (T, B)
        top_lp, top_it = jax.lax.top_k(logp_all, testsize)               # (T, B, k)
        return (sample_lp.T,                                             # (B, T)
                preds.T,                                                 # (B, T)
                jnp.transpose(top_lp, (1, 0, 2)),                        # (B, T, k)
                jnp.transpose(top_it, (1, 0, 2)).astype(jnp.int32))      # (B, T, k)

    # _init_rnn_state: unidirectional encoder -> identity; drop the layer dim.
    h0 = encoder_hidden[0]
    return run(encoder_outputs, h0, pp)


# -----------------------------------------------------------------------------
# Pure-JAX reference of the full inference decode (test-only).
# -----------------------------------------------------------------------------
def _reference_decode(enc, h0, params, *, max_length, bos_id, testsize):
    B, S, H = enc.shape

    def step(h, it):
        xt = params["emb"][it]
        hid = jnp.broadcast_to(h[:, None, :], (B, S, H))
        inp = jnp.concatenate([enc, hid], axis=2)
        aw = jnp.tanh(inp @ params["W1"].T + params["b1"])
        e = (aw @ params["w2"].T)[..., 0]
        alpha = jax.nn.softmax(e, axis=1)
        ctx = jnp.einsum("bs,bsh->bh", alpha, enc)
        gx = jnp.concatenate([xt, ctx], axis=1) @ params["Wih"].T + params["bih"]
        gh = h @ params["Whh"].T + params["bhh"]
        r = jax.nn.sigmoid(gx[:, :H] + gh[:, :H])
        z = jax.nn.sigmoid(gx[:, H:2 * H] + gh[:, H:2 * H])
        n = jnp.tanh(gx[:, 2 * H:] + r * gh[:, 2 * H:])
        h_new = (1.0 - z) * n + z * h
        logits = h_new @ params["Wout"].T + params["bout"]
        return jax.nn.log_softmax(logits, axis=1), h_new

    h = h0
    it = jnp.full((B,), bos_id, jnp.int32)
    logprobs, h = step(h, it)
    seq_lp, seq_pred, all_lp, all_pred = [], [], [], []
    for _t in range(1, max_length - 1):
        seq_lp.append(jnp.max(logprobs, axis=1)[:, None])
        it = jnp.argmax(logprobs, axis=1).astype(jnp.int32)
        tl, ti = jax.lax.top_k(logprobs, testsize)
        seq_pred.append(it[:, None])
        all_lp.append(tl[:, None])
        all_pred.append(ti[:, None])
        logprobs, h = step(h, it)
    return (jnp.concatenate(seq_lp, 1), jnp.concatenate(seq_pred, 1),
            jnp.concatenate(all_lp, 1), jnp.concatenate(all_pred, 1))


if __name__ == "__main__":
    # Small shapes consistent with the module:
    B, S = 2, 8
    dim_hidden = 16            # ctor arg; decoder uses H = 2 * dim_hidden internally
    H = 2 * dim_hidden         # 32
    Wd = 16                    # dim_word
    V = 128                    # vocab_size (>= 119 so topk(k=119) is well-defined)
    max_length = 6
    TESTSIZE = 119
    BOS_ID = 1

    key = jax.random.PRNGKey(0)
    ks = jax.random.split(key, 12)
    s = 0.1
    params = {
        "emb":  jax.random.normal(ks[0], (V, Wd), jnp.float32),
        "W1":   s * jax.random.normal(ks[1], (H, 2 * H), jnp.float32),
        "b1":   s * jax.random.normal(ks[2], (1, H), jnp.float32),
        "w2":   s * jax.random.normal(ks[3], (1, H), jnp.float32),
        "Wih":  s * jax.random.normal(ks[4], (3 * H, Wd + H), jnp.float32),
        "bih":  s * jax.random.normal(ks[5], (1, 3 * H), jnp.float32),
        "Whh":  s * jax.random.normal(ks[6], (3 * H, H), jnp.float32),
        "bhh":  s * jax.random.normal(ks[7], (1, 3 * H), jnp.float32),
        "Wout": s * jax.random.normal(ks[8], (V, H), jnp.float32),
        "bout": s * jax.random.normal(ks[9], (1, V), jnp.float32),
    }

    encoder_outputs = jax.random.normal(ks[10], (B, S, H), jnp.float32)
    encoder_hidden = jax.random.normal(ks[11], (1, B, H), jnp.float32)  # (layers, B, H)

    outs = decoder_inference(encoder_outputs, encoder_hidden, params,
                             max_length=max_length, bos_id=BOS_ID,
                             testsize=TESTSIZE)
    outs = jax.block_until_ready(outs)
    seq_logprobs, seq_preds, all_seq_logprobs, all_seq_preds = outs

    Texp = max_length - 2
    assert seq_logprobs.shape == (B, Texp)
    assert seq_preds.shape == (B, Texp)
    assert all_seq_logprobs.shape == (B, Texp, TESTSIZE)
    assert all_seq_preds.shape == (B, Texp, TESTSIZE)

    # Correctness check against the pure-JAX reference (test-only, off the hot
    # path); scope the high-precision matmul config to the reference only.
    with jax.default_matmul_precision("highest"):
        ref = _reference_decode(encoder_outputs, encoder_hidden[0], params,
                                max_length=max_length, bos_id=BOS_ID,
                                testsize=TESTSIZE)
        ref = jax.block_until_ready(ref)
    ref_lp, ref_pred, ref_all_lp, ref_all_pred = ref
    assert jnp.allclose(seq_logprobs, ref_lp, atol=2e-3), "seq_logprobs mismatch"
    assert jnp.array_equal(seq_preds, ref_pred.astype(jnp.int32)), "seq_preds mismatch"
    assert jnp.allclose(all_seq_logprobs, ref_all_lp, atol=2e-3), "topk logprobs mismatch"

    print("KERNEL_OK")
</pallas_src>

<mosaic_0001>
module attributes {stable_mosaic.version = 11 : i64} {
  func.func @decode_loop_kernel(%arg0: i32, %arg1: memref<2x8x32xf32, #tpu.memory_space<vmem>>, %arg2: memref<2x8x32xf32, #tpu.memory_space<vmem>>, %arg3: memref<2x32xf32, #tpu.memory_space<vmem>>, %arg4: memref<128x16xf32, #tpu.memory_space<vmem>>, %arg5: memref<32x32xf32, #tpu.memory_space<vmem>>, %arg6: memref<1x32xf32, #tpu.memory_space<vmem>>, %arg7: memref<16x96xf32, #tpu.memory_space<vmem>>, %arg8: memref<32x96xf32, #tpu.memory_space<vmem>>, %arg9: memref<32x96xf32, #tpu.memory_space<vmem>>, %arg10: memref<1x96xf32, #tpu.memory_space<vmem>>, %arg11: memref<1x96xf32, #tpu.memory_space<vmem>>, %arg12: memref<32x128xf32, #tpu.memory_space<vmem>>, %arg13: memref<1x128xf32, #tpu.memory_space<vmem>>, %arg14: memref<4x2x128xf32, #tpu.memory_space<vmem>>) attributes {dimension_semantics = [#tpu.dimension_semantics<parallel>], iteration_bounds = array<i64: 1>, scalar_prefetch = 0 : i64, scratch_operands = 0 : i64, tpu.core_type = #tpu.core_type<tc>, window_params = [{transform_indices = @transform_0, window_bounds = array<i64: 2, 8, 32>}, {transform_indices = @transform_1, window_bounds = array<i64: 2, 8, 32>}, {transform_indices = @transform_2, window_bounds = array<i64: 2, 32>}, {pipeline_mode = #tpu.pipeline_mode<synchronous>, transform_indices = @transform_3, window_bounds = array<i64: 128, 16>}, {pipeline_mode = #tpu.pipeline_mode<synchronous>, transform_indices = @transform_4, window_bounds = array<i64: 32, 32>}, {pipeline_mode = #tpu.pipeline_mode<synchronous>, transform_indices = @transform_5, window_bounds = array<i64: 1, 32>}, {pipeline_mode = #tpu.pipeline_mode<synchronous>, transform_indices = @transform_6, window_bounds = array<i64: 16, 96>}, {pipeline_mode = #tpu.pipeline_mode<synchronous>, transform_indices = @transform_7, window_bounds = array<i64: 32, 96>}, {pipeline_mode = #tpu.pipeline_mode<synchronous>, transform_indices = @transform_8, window_bounds = array<i64: 32, 96>}, {pipeline_mode = #tpu.pipeline_mode<synchronous>, transform_indices = @transform_9, window_bounds = array<i64: 1, 96>}, {pipeline_mode = #tpu.pipeline_mode<synchronous>, transform_indices = @transform_10, window_bounds = array<i64: 1, 96>}, {pipeline_mode = #tpu.pipeline_mode<synchronous>, transform_indices = @transform_11, window_bounds = array<i64: 32, 128>}, {pipeline_mode = #tpu.pipeline_mode<synchronous>, transform_indices = @transform_12, window_bounds = array<i64: 1, 128>}, {transform_indices = @transform_13, window_bounds = array<i64: 4, 2, 128>}]} {
    %0 = tpu.iota {dimensions = array<i32: 1>} : vector<2x128xi32>
    %c1_i32 = arith.constant 1 : i32
    %1 = vector.broadcast %c1_i32 : i32 to vector<2x128xi32>
    %2 = arith.cmpi eq, %0, %1 : vector<2x128xi32>
    %cst = arith.constant 1.000000e+00 : f32
    %cst_0 = arith.constant 0.000000e+00 : f32
    %3 = vector.broadcast %cst : f32 to vector<2x128xf32>
    %4 = vector.broadcast %cst_0 : f32 to vector<2x128xf32>
    %5 = arith.select %2, %3, %4 : vector<2x128xi1>, vector<2x128xf32>
    %c0 = arith.constant 0 : index
    %c0_1 = arith.constant 0 : index
    %6 = vector.load %arg3[%c0, %c0_1] : memref<2x32xf32, #tpu.memory_space<vmem>>, vector<2x32xf32>
    %c0_i32 = arith.constant 0 : i32
    %cst_2 = arith.constant dense<0xFF800000> : vector<2xf32>
    %7 = vector.multi_reduction <maximumf>, %5, %cst_2 [1] : vector<2x128xf32> to vector<2xf32>
    %8 = vector.shape_cast %7 : vector<2xf32> to vector<2x1xf32>
    %9 = vector.broadcast %8 : vector<2x1xf32> to vector<2x128xf32>
    %10 = arith.cmpf oge, %5, %9 : vector<2x128xf32>
    %c128_i32 = arith.constant 128 : i32
    %11 = vector.broadcast %c128_i32 : i32 to vector<2x128xi32>
    %12 = arith.select %10, %0, %11 : vector<2x128xi1>, vector<2x128xi32>
    %cst_3 = arith.constant dense<2147483647> : vector<2xi32>
    %13 = vector.multi_reduction <minsi>, %12, %cst_3 [1] : vector<2x128xi32> to vector<2xi32>
    %14 = vector.shape_cast %13 : vector<2xi32> to vector<2x1xi32>
    %15 = vector.broadcast %14 : vector<2x1xi32> to vector<2x128xi32>
    %16 = arith.cmpi eq, %0, %15 : vector<2x128xi32>
    %17 = arith.extui %16 : vector<2x128xi1> to vector<2x128xi32>
    %18 = arith.sitofp %17 : vector<2x128xi32> to vector<2x128xf32>
    %c0_4 = arith.constant 0 : index
    %c0_5 = arith.constant 0 : index
    %19 = vector.load %arg4[%c0_4, %c0_5] : memref<128x16xf32, #tpu.memory_space<vmem>>, vector<128x16xf32>
    %cst_6 = arith.constant dense<0.000000e+00> : vector<2x16xf32>
    %20 = tpu.matmul %18, %19, %cst_6 {dimension_numbers = #tpu.dot_dimension_numbers<[1], [0], [0], [1], [0, 0, 1, 1], [], []>, precision = #tpu.contract_precision<fp32>} : vector<2x128xf32>, vector<128x16xf32>, vector<2x16xf32> -> vector<2x16xf32>
    %c0_7 = arith.constant 0 : index
    %c0_8 = arith.constant 0 : index
    %21 = vector.load %arg5[%c0_7, %c0_8] : memref<32x32xf32, #tpu.memory_space<vmem>>, vector<32x32xf32>
    %cst_9 = arith.constant dense<0.000000e+00> : vector<2x32xf32>
    %22 = tpu.matmul %6, %21, %cst_9 {dimension_numbers = #tpu.dot_dimension_numbers<[1], [0], [0], [1], [0, 0, 1, 1], [], []>, precision = #tpu.contract_precision<fp32>} : vector<2x32xf32>, vector<32x32xf32>, vector<2x32xf32> -> vector<2x32xf32>
    %c0_10 = arith.constant 0 : index
    %c0_11 = arith.constant 0 : index
    %c0_12 = arith.constant 0 : index
    %23 = vector.load %arg1[%c0_10, %c0_11, %c0_12] : memref<2x8x32xf32, #tpu.memory_space<vmem>>, vector<2x8x32xf32>
    %24 = vector.shape_cast %22 : vector<2x32xf32> to vector<2x1x32xf32>
    %25 = vector.broadcast %24 : vector<2x1x32xf32> to vector<2x8x32xf32>
    %26 = arith.addf %23, %25 : vector<2x8x32xf32>
    %27 = math.tanh %26 : vector<2x8x32xf32>
    %c0_13 = arith.constant 0 : index
    %c0_14 = arith.constant 0 : index
    %28 = vector.load %arg6[%c0_13, %c0_14] : memref<1x32xf32, #tpu.memory_space<vmem>>, vector<1x32xf32>
    %29 = vector.shape_cast %28 : vector<1x32xf32> to vector<1x1x32xf32>
    %30 = vector.broadcast %29 : vector<1x1x32xf32> to vector<2x8x32xf32>
    %31 = arith.mulf %27, %30 : vector<2x8x32xf32>
    %cst_15 = arith.constant dense<0.000000e+00> : vector<2x8xf32>
    %32 = vector.multi_reduction <add>, %31, %cst_15 [2] : vector<2x8x32xf32> to vector<2x8xf32>
    %cst_16 = arith.constant dense<0xFF800000> : vector<2xf32>
    %33 = vector.multi_reduction <maximumf>, %32, %cst_16 [1] : vector<2x8xf32> to vector<2xf32>
    %34 = vector.shape_cast %33 : vector<2xf32> to vector<2x1xf32>
    %35 = vector.broadcast %34 : vector<2x1xf32> to vector<2x8xf32>
    %36 = arith.subf %32, %35 : vector<2x8xf32>
    %37 = math.exp %36 : vector<2x8xf32>
    %cst_17 = arith.constant dense<0.000000e+00> : vector<2xf32>
    %38 = vector.multi_reduction <add>, %37, %cst_17 [1] : vector<2x8xf32> to vector<2xf32>
    %39 = vector.shape_cast %38 : vector<2xf32> to vector<2x1xf32>
    %40 = tpu.reciprocal %39 : vector<2x1xf32> -> vector<2x1xf32>
    %41 = vector.broadcast %40 : vector<2x1xf32> to vector<2x8xf32>
    %42 = arith.mulf %37, %41 : vector<2x8xf32>
    %43 = vector.shape_cast %42 : vector<2x8xf32> to vector<2x8x1xf32>
    %c0_18 = arith.constant 0 : index
    %c0_19 = arith.constant 0 : index
    %c0_20 = arith.constant 0 : index
    %44 = vector.load %arg2[%c0_18, %c0_19, %c0_20] : memref<2x8x32xf32, #tpu.memory_space<vmem>>, vector<2x8x32xf32>
    %45 = vector.broadcast %43 : vector<2x8x1xf32> to vector<2x8x32xf32>
    %46 = arith.mulf %45, %44 : vector<2x8x32xf32>
    %cst_21 = arith.constant dense<0.000000e+00> : vector<2x32xf32>
    %47 = vector.multi_reduction <add>, %46, %cst_21 [1] : vector<2x8x32xf32> to vector<2x32xf32>
    %c0_22 = arith.constant 0 : index
    %c0_23 = arith.constant 0 : index
    %48 = vector.load %arg7[%c0_22, %c0_23] : memref<16x96xf32, #tpu.memory_space<vmem>>, vector<16x96xf32>
    %cst_24 = arith.constant dense<0.000000e+00> : vector<2x96xf32>
    %49 = tpu.matmul %20, %48, %cst_24 {dimension_numbers = #tpu.dot_dimension_numbers<[1], [0], [0], [1], [0, 0, 1, 1], [], []>, precision = #tpu.contract_precision<fp32>} : vector<2x16xf32>, vector<16x96xf32>, vector<2x96xf32> -> vector<2x96xf32>
    %c0_25 = arith.constant 0 : index
    %c0_26 = arith.constant 0 : index
    %50 = vector.load %arg8[%c0_25, %c0_26] : memref<32x96xf32, #tpu.memory_space<vmem>>, vector<32x96xf32>
    %cst_27 = arith.constant dense<0.000000e+00> : vector<2x96xf32>
    %51 = tpu.matmul %47, %50, %cst_27 {dimension_numbers = #tpu.dot_dimension_numbers<[1], [0], [0], [1], [0, 0, 1, 1], [], []>, precision = #tpu.contract_precision<fp32>} : vector<2x32xf32>, vector<32x96xf32>, vector<2x96xf32> -> vector<2x96xf32>
    %52 = arith.addf %49, %51 : vector<2x96xf32>
    %c0_28 = arith.constant 0 : index
    %c0_29 = arith.constant 0 : index
    %53 = vector.load %arg10[%c0_28, %c0_29] : memref<1x96xf32, #tpu.memory_space<vmem>>, vector<1x96xf32>
    %54 = vector.broadcast %53 : vector<1x96xf32> to vector<2x96xf32>
    %55 = arith.addf %52, %54 : vector<2x96xf32>
    %c0_30 = arith.constant 0 : index
    %c0_31 = arith.constant 0 : index
    %56 = vector.load %arg9[%c0_30, %c0_31] : memref<32x96xf32, #tpu.memory_space<vmem>>, vector<32x96xf32>
    %cst_32 = arith.constant dense<0.000000e+00> : vector<2x96xf32>
    %57 = tpu.matmul %6, %56, %cst_32 {dimension_numbers = #tpu.dot_dimension_numbers<[1], [0], [0], [1], [0, 0, 1, 1], [], []>, precision = #tpu.contract_precision<fp32>} : vector<2x32xf32>, vector<32x96xf32>, vector<2x96xf32> -> vector<2x96xf32>
    %c0_33 = arith.constant 0 : index
    %c0_34 = arith.constant 0 : index
    %58 = vector.load %arg11[%c0_33, %c0_34] : memref<1x96xf32, #tpu.memory_space<vmem>>, vector<1x96xf32>
    %59 = vector.broadcast %58 : vector<1x96xf32> to vector<2x96xf32>
    %60 = arith.addf %57, %59 : vector<2x96xf32>
    %61 = vector.extract_strided_slice %55 {offsets = [0, 0], sizes = [2, 32], strides = [1, 1]} : vector<2x96xf32> to vector<2x32xf32>
    %62 = vector.extract_strided_slice %60 {offsets = [0, 0], sizes = [2, 32], strides = [1, 1]} : vector<2x96xf32> to vector<2x32xf32>
    %63 = arith.addf %61, %62 : vector<2x32xf32>
    %64 = arith.negf %63 : vector<2x32xf32>
    %65 = math.exp %64 : vector<2x32xf32>
    %cst_35 = arith.constant 1.000000e+00 : f32
    %66 = vector.broadcast %cst_35 : f32 to vector<2x32xf32>
    %67 = arith.addf %66, %65 : vector<2x32xf32>
    %68 = arith.divf %66, %67 : vector<2x32xf32>
    %69 = vector.extract_strided_slice %55 {offsets = [0, 32], sizes = [2, 32], strides = [1, 1]} : vector<2x96xf32> to vector<2x32xf32>
    %70 = vector.extract_strided_slice %60 {offsets = [0, 32], sizes = [2, 32], strides = [1, 1]} : vector<2x96xf32> to vector<2x32xf32>
    %71 = arith.addf %69, %70 : vector<2x32xf32>
    %72 = arith.negf %71 : vector<2x32xf32>
    %73 = math.exp %72 : vector<2x32xf32>
    %cst_36 = arith.constant 1.000000e+00 : f32
    %74 = vector.broadcast %cst_36 : f32 to vector<2x32xf32>
    %75 = arith.addf %74, %73 : vector<2x32xf32>
    %76 = arith.divf %74, %75 : vector<2x32xf32>
    %77 = vector.extract_strided_slice %55 {offsets = [0, 64], sizes = [2, 32], strides = [1, 1]} : vector<2x96xf32> to vector<2x32xf32>
    %78 = vector.extract_strided_slice %60 {offsets = [0, 64], sizes = [2, 32], strides = [1, 1]} : vector<2x96xf32> to vector<2x32xf32>
    %79 = arith.mulf %68, %78 : vector<2x32xf32>
    %80 = arith.addf %77, %79 : vector<2x32xf32>
    %81 = math.tanh %80 : vector<2x32xf32>
    %cst_37 = arith.constant 1.000000e+00 : f32
    %82 = vector.broadcast %cst_37 : f32 to vector<2x32xf32>
    %83 = arith.subf %82, %76 : vector<2x32xf32>
    %84 = arith.mulf %83, %81 : vector<2x32xf32>
    %85 = arith.mulf %76, %6 : vector<2x32xf32>
    %86 = arith.addf %84, %85 : vector<2x32xf32>
    %c0_38 = arith.constant 0 : index
    %c0_39 = arith.constant 0 : index
    %87 = vector.load %arg12[%c0_38, %c0_39] : memref<32x128xf32, #tpu.memory_space<vmem>>, vector<32x128xf32>
    %cst_40 = arith.constant dense<0.000000e+00> : vector<2x128xf32>
    %88 = tpu.matmul %86, %87, %cst_40 {dimension_numbers = #tpu.dot_dimension_numbers<[1], [0], [0], [1], [0, 0, 1, 1], [], []>, precision = #tpu.contract_precision<fp32>} : vector<2x32xf32>, vector<32x128xf32>, vector<2x128xf32> -> vector<2x128xf32>
    %c0_41 = arith.constant 0 : index
    %c0_42 = arith.constant 0 : index
    %89 = vector.load %arg13[%c0_41, %c0_42] : memref<1x128xf32, #tpu.memory_space<vmem>>, vector<1x128xf32>
    %90 = vector.broadcast %89 : vector<1x128xf32> to vector<2x128xf32>
    %91 = arith.addf %88, %90 : vector<2x128xf32>
    %cst_43 = arith.constant dense<0xFF800000> : vector<2xf32>
    %92 = vector.multi_reduction <maximumf>, %91, %cst_43 [1] : vector<2x128xf32> to vector<2xf32>
    %93 = vector.shape_cast %92 : vector<2xf32> to vector<2x1xf32>
    %94 = vector.broadcast %93 : vector<2x1xf32> to vector<2x128xf32>
    %95 = arith.subf %91, %94 : vector<2x128xf32>
    %96 = math.exp %95 : vector<2x128xf32>
    %cst_44 = arith.constant dense<0.000000e+00> : vector<2xf32>
    %97 = vector.multi_reduction <add>, %96, %cst_44 [1] : vector<2x128xf32> to vector<2xf32>
    %98 = vector.shape_cast %97 : vector<2xf32> to vector<2x1xf32>
    %99 = math.log %98 : vector<2x1xf32>
    %100 = arith.addf %93, %99 : vector<2x1xf32>
    %101 = vector.broadcast %100 : vector<2x1xf32> to vector<2x128xf32>
    %102 = arith.subf %91, %101 : vector<2x128xf32>
    %103 = arith.index_cast %c0_i32 : i32 to index
    %c0_45 = arith.constant 0 : index
    %c0_46 = arith.constant 0 : index
    %104 = vector.load %arg14[%103, %c0_45, %c0_46] : memref<4x2x128xf32, #tpu.memory_space<vmem>>, vector<1x2x128xf32>
    %105 = vector.shape_cast %104 : vector<1x2x128xf32> to vector<2x128xf32>
    %106 = vector.shape_cast %102 : vector<2x128xf32> to vector<1x2x128xf32>
    tpu.vector_store %arg14[%103, %c0_45, %c0_46], %106 {strides = array<i32>} : memref<4x2x128xf32, #tpu.memory_space<vmem>>, vector<1x2x128xf32>,
    %c1_i32_47 = arith.constant 1 : i32
    %cst_48 = arith.constant dense<0xFF800000> : vector<2xf32>
    %107 = vector.multi_reduction <maximumf>, %102, %cst_48 [1] : vector<2x128xf32> to vector<2xf32>
    %108 = vector.shape_cast %107 : vector<2xf32> to vector<2x1xf32>
    %109 = vector.broadcast %108 : vector<2x1xf32> to vector<2x128xf32>
    %110 = arith.cmpf oge, %102, %109 : vector<2x128xf32>
    %c128_i32_49 = arith.constant 128 : i32
    %111 = vector.broadcast %c128_i32_49 : i32 to vector<2x128xi32>
    %112 = arith.select %110, %0, %111 : vector<2x128xi1>, vector<2x128xi32>
    %cst_50 = arith.constant dense<2147483647> : vector<2xi32>
    %113 = vector.multi_reduction <minsi>, %112, %cst_50 [1] : vector<2x128xi32> to vector<2xi32>
    %114 = vector.shape_cast %113 : vector<2xi32> to vector<2x1xi32>
    %115 = vector.broadcast %114 : vector<2x1xi32> to vector<2x128xi32>
    %116 = arith.cmpi eq, %0, %115 : vector<2x128xi32>
    %117 = arith.extui %116 : vector<2x128xi1> to vector<2x128xi32>
    %118 = arith.sitofp %117 : vector<2x128xi32> to vector<2x128xf32>
    %c0_51 = arith.constant 0 : index
    %c0_52 = arith.constant 0 : index
    %119 = vector.load %arg4[%c0_51, %c0_52] : memref<128x16xf32, #tpu.memory_space<vmem>>, vector<128x16xf32>
    %cst_53 = arith.constant dense<0.000000e+00> : vector<2x16xf32>
    %120 = tpu.matmul %118, %119, %cst_53 {dimension_numbers = #tpu.dot_dimension_numbers<[1], [0], [0], [1], [0, 0, 1, 1], [], []>, precision = #tpu.contract_precision<fp32>} : vector<2x128xf32>, vector<128x16xf32>, vector<2x16xf32> -> vector<2x16xf32>
    %c0_54 = arith.constant 0 : index
    %c0_55 = arith.constant 0 : index
    %121 = vector.load %arg5[%c0_54, %c0_55] : memref<32x32xf32, #tpu.memory_space<vmem>>, vector<32x32xf32>
    %cst_56 = arith.constant dense<0.000000e+00> : vector<2x32xf32>
    %122 = tpu.matmul %86, %121, %cst_56 {dimension_numbers = #tpu.dot_dimension_numbers<[1], [0], [0], [1], [0, 0, 1, 1], [], []>, precision = #tpu.contract_precision<fp32>} : vector<2x32xf32>, vector<32x32xf32>, vector<2x32xf32> -> vector<2x32xf32>
    %c0_57 = arith.constant 0 : index
    %c0_58 = arith.constant 0 : index
    %c0_59 = arith.constant 0 : index
    %123 = vector.load %arg1[%c0_57, %c0_58, %c0_59] : memref<2x8x32xf32, #tpu.memory_space<vmem>>, vector<2x8x32xf32>
    %124 = vector.shape_cast %122 : vector<2x32xf32> to vector<2x1x32xf32>
    %125 = vector.broadcast %124 : vector<2x1x32xf32> to vector<2x8x32xf32>
    %126 = arith.addf %123, %125 : vector<2x8x32xf32>
    %127 = math.tanh %126 : vector<2x8x32xf32>
    %c0_60 = arith.constant 0 : index
    %c0_61 = arith.constant 0 : index
    %128 = vector.load %arg6[%c0_60, %c0_61] : memref<1x32xf32, #tpu.memory_space<vmem>>, vector<1x32xf32>
    %129 = vector.shape_cast %128 : vector<1x32xf32> to vector<1x1x32xf32>
    %130 = vector.broadcast %129 : vector<1x1x32xf32> to vector<2x8x32xf32>
    %131 = arith.mulf %127, %130 : vector<2x8x32xf32>
    %cst_62 = arith.constant dense<0.000000e+00> : vector<2x8xf32>
    %132 = vector.multi_reduction <add>, %131, %cst_62 [2] : vector<2x8x32xf32> to vector<2x8xf32>
    %cst_63 = arith.constant dense<0xFF800000> : vector<2xf32>
    %133 = vector.multi_reduction <maximumf>, %132, %cst_63 [1] : vector<2x8xf32> to vector<2xf32>
    %134 = vector.shape_cast %133 : vector<2xf32> to vector<2x1xf32>
    %135 = vector.broadcast %134 : vector<2x1xf32> to vector<2x8xf32>
    %136 = arith.subf %132, %135 : vector<2x8xf32>
    %137 = math.exp %136 : vector<2x8xf32>
    %cst_64 = arith.constant dense<0.000000e+00> : vector<2xf32>
    %138 = vector.multi_reduction <add>, %137, %cst_64 [1] : vector<2x8xf32> to vector<2xf32>
    %139 = vector.shape_cast %138 : vector<2xf32> to vector<2x1xf32>
    %140 = tpu.reciprocal %139 : vector<2x1xf32> -> vector<2x1xf32>
    %141 = vector.broadcast %140 : vector<2x1xf32> to vector<2x8xf32>
    %142 = arith.mulf %137, %141 : vector<2x8xf32>
    %143 = vector.shape_cast %142 : vector<2x8xf32> to vector<2x8x1xf32>
    %c0_65 = arith.constant 0 : index
    %c0_66 = arith.constant 0 : index
    %c0_67 = arith.constant 0 : index
    %144 = vector.load %arg2[%c0_65, %c0_66, %c0_67] : memref<2x8x32xf32, #tpu.memory_space<vmem>>, vector<2x8x32xf32>
    %145 = vector.broadcast %143 : vector<2x8x1xf32> to vector<2x8x32xf32>
    %146 = arith.mulf %145, %144 : vector<2x8x32xf32>
    %cst_68 = arith.constant dense<0.000000e+00> : vector<2x32xf32>
    %147 = vector.multi_reduction <add>, %146, %cst_68 [1] : vector<2x8x32xf32> to vector<2x32xf32>
    %c0_69 = arith.constant 0 : index
    %c0_70 = arith.constant 0 : index
    %148 = vector.load %arg7[%c0_69, %c0_70] : memref<16x96xf32, #tpu.memory_space<vmem>>, vector<16x96xf32>
    %cst_71 = arith.constant dense<0.000000e+00> : vector<2x96xf32>
    %149 = tpu.matmul %120, %148, %cst_71 {dimension_numbers = #tpu.dot_dimension_numbers<[1], [0], [0], [1], [0, 0, 1, 1], [], []>, precision = #tpu.contract_precision<fp32>} : vector<2x16xf32>, vector<16x96xf32>, vector<2x96xf32> -> vector<2x96xf32>
    %c0_72 = arith.constant 0 : index
    %c0_73 = arith.constant 0 : index
    %150 = vector.load %arg8[%c0_72, %c0_73] : memref<32x96xf32, #tpu.memory_space<vmem>>, vector<32x96xf32>
    %cst_74 = arith.constant dense<0.000000e+00> : vector<2x96xf32>
    %151 = tpu.matmul %147, %150, %cst_74 {dimension_numbers = #tpu.dot_dimension_numbers<[1], [0], [0], [1], [0, 0, 1, 1], [], []>, precision = #tpu.contract_precision<fp32>} : vector<2x32xf32>, vector<32x96xf32>, vector<2x96xf32> -> vector<2x96xf32>
    %152 = arith.addf %149, %151 : vector<2x96xf32>
    %c0_75 = arith.constant 0 : index
    %c0_76 = arith.constant 0 : index
    %153 = vector.load %arg10[%c0_75, %c0_76] : memref<1x96xf32, #tpu.memory_space<vmem>>, vector<1x96xf32>
    %154 = vector.broadcast %153 : vector<1x96xf32> to vector<2x96xf32>
    %155 = arith.addf %152, %154 : vector<2x96xf32>
    %c0_77 = arith.constant 0 : index
    %c0_78 = arith.constant 0 : index
    %156 = vector.load %arg9[%c0_77, %c0_78] : memref<32x96xf32, #tpu.memory_space<vmem>>, vector<32x96xf32>
    %cst_79 = arith.constant dense<0.000000e+00> : vector<2x96xf32>
    %157 = tpu.matmul %86, %156, %cst_79 {dimension_numbers = #tpu.dot_dimension_numbers<[1], [0], [0], [1], [0, 0, 1, 1], [], []>, precision = #tpu.contract_precision<fp32>} : vector<2x32xf32>, vector<32x96xf32>, vector<2x96xf32> -> vector<2x96xf32>
    %c0_80 = arith.constant 0 : index
    %c0_81 = arith.constant 0 : index
    %158 = vector.load %arg11[%c0_80, %c0_81] : memref<1x96xf32, #tpu.memory_space<vmem>>, vector<1x96xf32>
    %159 = vector.broadcast %158 : vector<1x96xf32> to vector<2x96xf32>
    %160 = arith.addf %157, %159 : vector<2x96xf32>
    %161 = vector.extract_strided_slice %155 {offsets = [0, 0], sizes = [2, 32], strides = [1, 1]} : vector<2x96xf32> to vector<2x32xf32>
    %162 = vector.extract_strided_slice %160 {offsets = [0, 0], sizes = [2, 32], strides = [1, 1]} : vector<2x96xf32> to vector<2x32xf32>
    %163 = arith.addf %161, %162 : vector<2x32xf32>
    %164 = arith.negf %163 : vector<2x32xf32>
    %165 = math.exp %164 : vector<2x32xf32>
    %cst_82 = arith.constant 1.000000e+00 : f32
    %166 = vector.broadcast %cst_82 : f32 to vector<2x32xf32>
    %167 = arith.addf %166, %165 : vector<2x32xf32>
    %168 = arith.divf %166, %167 : vector<2x32xf32>
    %169 = vector.extract_strided_slice %155 {offsets = [0, 32], sizes = [2, 32], strides = [1, 1]} : vector<2x96xf32> to vector<2x32xf32>
    %170 = vector.extract_strided_slice %160 {offsets = [0, 32], sizes = [2, 32], strides = [1, 1]} : vector<2x96xf32> to vector<2x32xf32>
    %171 = arith.addf %169, %170 : vector<2x32xf32>
    %172 = arith.negf %171 : vector<2x32xf32>
    %173 = math.exp %172 : vector<2x32xf32>
    %cst_83 = arith.constant 1.000000e+00 : f32
    %174 = vector.broadcast %cst_83 : f32 to vector<2x32xf32>
    %175 = arith.addf %174, %173 : vector<2x32xf32>
    %176 = arith.divf %174, %175 : vector<2x32xf32>
    %177 = vector.extract_strided_slice %155 {offsets = [0, 64], sizes = [2, 32], strides = [1, 1]} : vector<2x96xf32> to vector<2x32xf32>
    %178 = vector.extract_strided_slice %160 {offsets = [0, 64], sizes = [2, 32], strides = [1, 1]} : vector<2x96xf32> to vector<2x32xf32>
    %179 = arith.mulf %168, %178 : vector<2x32xf32>
    %180 = arith.addf %177, %179 : vector<2x32xf32>
    %181 = math.tanh %180 : vector<2x32xf32>
    %cst_84 = arith.constant 1.000000e+00 : f32
    %182 = vector.broadcast %cst_84 : f32 to vector<2x32xf32>
    %183 = arith.subf %182, %176 : vector<2x32xf32>
    %184 = arith.mulf %183, %181 : vector<2x32xf32>
    %185 = arith.mulf %176, %86 : vector<2x32xf32>
    %186 = arith.addf %184, %185 : vector<2x32xf32>
    %c0_85 = arith.constant 0 : index
    %c0_86 = arith.constant 0 : index
    %187 = vector.load %arg12[%c0_85, %c0_86] : memref<32x128xf32, #tpu.memory_space<vmem>>, vector<32x128xf32>
    %cst_87 = arith.constant dense<0.000000e+00> : vector<2x128xf32>
    %188 = tpu.matmul %186, %187, %cst_87 {dimension_numbers = #tpu.dot_dimension_numbers<[1], [0], [0], [1], [0, 0, 1, 1], [], []>, precision = #tpu.contract_precision<fp32>} : vector<2x32xf32>, vector<32x128xf32>, vector<2x128xf32> -> vector<2x128xf32>
    %c0_88 = arith.constant 0 : index
    %c0_89 = arith.constant 0 : index
    %189 = vector.load %arg13[%c0_88, %c0_89] : memref<1x128xf32, #tpu.memory_space<vmem>>, vector<1x128xf32>
    %190 = vector.broadcast %189 : vector<1x128xf32> to vector<2x128xf32>
    %191 = arith.addf %188, %190 : vector<2x128xf32>
    %cst_90 = arith.constant dense<0xFF800000> : vector<2xf32>
    %192 = vector.multi_reduction <maximumf>, %191, %cst_90 [1] : vector<2x128xf32> to vector<2xf32>
    %193 = vector.shape_cast %192 : vector<2xf32> to vector<2x1xf32>
    %194 = vector.broadcast %193 : vector<2x1xf32> to vector<2x128xf32>
    %195 = arith.subf %191, %194 : vector<2x128xf32>
    %196 = math.exp %195 : vector<2x128xf32>
    %cst_91 = arith.constant dense<0.000000e+00> : vector<2xf32>
    %197 = vector.multi_reduction <add>, %196, %cst_91 [1] : vector<2x128xf32> to vector<2xf32>
    %198 = vector.shape_cast %197 : vector<2xf32> to vector<2x1xf32>
    %199 = math.log %198 : vector<2x1xf32>
    %200 = arith.addf %193, %199 : vector<2x1xf32>
    %201 = vector.broadcast %200 : vector<2x1xf32> to vector<2x128xf32>
    %202 = arith.subf %191, %201 : vector<2x128xf32>
    %203 = arith.index_cast %c1_i32_47 : i32 to index
    %c0_92 = arith.constant 0 : index
    %c0_93 = arith.constant 0 : index
    %204 = vector.load %arg14[%203, %c0_92, %c0_93] : memref<4x2x128xf32, #tpu.memory_space<vmem>>, vector<1x2x128xf32>
    %205 = vector.shape_cast %204 : vector<1x2x128xf32> to vector<2x128xf32>
    %206 = vector.shape_cast %202 : vector<2x128xf32> to vector<1x2x128xf32>
    tpu.vector_store %arg14[%203, %c0_92, %c0_93], %206 {strides = array<i32>} : memref<4x2x128xf32, #tpu.memory_space<vmem>>, vector<1x2x128xf32>,
    %c2_i32 = arith.constant 2 : i32
    %cst_94 = arith.constant dense<0xFF800000> : vector<2xf32>
    %207 = vector.multi_reduction <maximumf>, %202, %cst_94 [1] : vector<2x128xf32> to vector<2xf32>
    %208 = vector.shape_cast %207 : vector<2xf32> to vector<2x1xf32>
    %209 = vector.broadcast %208 : vector<2x1xf32> to vector<2x128xf32>
    %210 = arith.cmpf oge, %202, %209 : vector<2x128xf32>
    %c128_i32_95 = arith.constant 128 : i32
    %211 = vector.broadcast %c128_i32_95 : i32 to vector<2x128xi32>
    %212 = arith.select %210, %0, %211 : vector<2x128xi1>, vector<2x128xi32>
    %cst_96 = arith.constant dense<2147483647> : vector<2xi32>
    %213 = vector.multi_reduction <minsi>, %212, %cst_96 [1] : vector<2x128xi32> to vector<2xi32>
    %214 = vector.shape_cast %213 : vector<2xi32> to vector<2x1xi32>
    %215 = vector.broadcast %214 : vector<2x1xi32> to vector<2x128xi32>
    %216 = arith.cmpi eq, %0, %215 : vector<2x128xi32>
    %217 = arith.extui %216 : vector<2x128xi1> to vector<2x128xi32>
    %218 = arith.sitofp %217 : vector<2x128xi32> to vector<2x128xf32>
    %c0_97 = arith.constant 0 : index
    %c0_98 = arith.constant 0 : index
    %219 = vector.load %arg4[%c0_97, %c0_98] : memref<128x16xf32, #tpu.memory_space<vmem>>, vector<128x16xf32>
    %cst_99 = arith.constant dense<0.000000e+00> : vector<2x16xf32>
    %220 = tpu.matmul %218, %219, %cst_99 {dimension_numbers = #tpu.dot_dimension_numbers<[1], [0], [0], [1], [0, 0, 1, 1], [], []>, precision = #tpu.contract_precision<fp32>} : vector<2x128xf32>, vector<128x16xf32>, vector<2x16xf32> -> vector<2x16xf32>
    %c0_100 = arith.constant 0 : index
    %c0_101 = arith.constant 0 : index
    %221 = vector.load %arg5[%c0_100, %c0_101] : memref<32x32xf32, #tpu.memory_space<vmem>>, vector<32x32xf32>
    %cst_102 = arith.constant dense<0.000000e+00> : vector<2x32xf32>
    %222 = tpu.matmul %186, %221, %cst_102 {dimension_numbers = #tpu.dot_dimension_numbers<[1], [0], [0], [1], [0, 0, 1, 1], [], []>, precision = #tpu.contract_precision<fp32>} : vector<2x32xf32>, vector<32x32xf32>, vector<2x32xf32> -> vector<2x32xf32>
    %c0_103 = arith.constant 0 : index
    %c0_104 = arith.constant 0 : index
    %c0_105 = arith.constant 0 : index
    %223 = vector.load %arg1[%c0_103, %c0_104, %c0_105] : memref<2x8x32xf32, #tpu.memory_space<vmem>>, vector<2x8x32xf32>
    %224 = vector.shape_cast %222 : vector<2x32xf32> to vector<2x1x32xf32>
    %225 = vector.broadcast %224 : vector<2x1x32xf32> to vector<2x8x32xf32>
    %226 = arith.addf %223, %225 : vector<2x8x32xf32>
    %227 = math.tanh %226 : vector<2x8x32xf32>
    %c0_106 = arith.constant 0 : index
    %c0_107 = arith.constant 0 : index
    %228 = vector.load %arg6[%c0_106, %c0_107] : memref<1x32xf32, #tpu.memory_space<vmem>>, vector<1x32xf32>
    %229 = vector.shape_cast %228 : vector<1x32xf32> to vector<1x1x32xf32>
    %230 = vector.broadcast %229 : vector<1x1x32xf32> to vector<2x8x32xf32>
    %231 = arith.mulf %227, %230 : vector<2x8x32xf32>
    %cst_108 = arith.constant dense<0.000000e+00> : vector<2x8xf32>
    %232 = vector.multi_reduction <add>, %231, %cst_108 [2] : vector<2x8x32xf32> to vector<2x8xf32>
    %cst_109 = arith.constant dense<0xFF800000> : vector<2xf32>
    %233 = vector.multi_reduction <maximumf>, %232, %cst_109 [1] : vector<2x8xf32> to vector<2xf32>
    %234 = vector.shape_cast %233 : vector<2xf32> to vector<2x1xf32>
    %235 = vector.broadcast %234 : vector<2x1xf32> to vector<2x8xf32>
    %236 = arith.subf %232, %235 : vector<2x8xf32>
    %237 = math.exp %236 : vector<2x8xf32>
    %cst_110 = arith.constant dense<0.000000e+00> : vector<2xf32>
    %238 = vector.multi_reduction <add>, %237, %cst_110 [1] : vector<2x8xf32> to vector<2xf32>
    %239 = vector.shape_cast %238 : vector<2xf32> to vector<2x1xf32>
    %240 = tpu.reciprocal %239 : vector<2x1xf32> -> vector<2x1xf32>
    %241 = vector.broadcast %240 : vector<2x1xf32> to vector<2x8xf32>
    %242 = arith.mulf %237, %241 : vector<2x8xf32>
    %243 = vector.shape_cast %242 : vector<2x8xf32> to vector<2x8x1xf32>
    %c0_111 = arith.constant 0 : index
    %c0_112 = arith.constant 0 : index
    %c0_113 = arith.constant 0 : index
    %244 = vector.load %arg2[%c0_111, %c0_112, %c0_113] : memref<2x8x32xf32, #tpu.memory_space<vmem>>, vector<2x8x32xf32>
    %245 = vector.broadcast %243 : vector<2x8x1xf32> to vector<2x8x32xf32>
    %246 = arith.mulf %245, %244 : vector<2x8x32xf32>
    %cst_114 = arith.constant dense<0.000000e+00> : vector<2x32xf32>
    %247 = vector.multi_reduction <add>, %246, %cst_114 [1] : vector<2x8x32xf32> to vector<2x32xf32>
    %c0_115 = arith.constant 0 : index
    %c0_116 = arith.constant 0 : index
    %248 = vector.load %arg7[%c0_115, %c0_116] : memref<16x96xf32, #tpu.memory_space<vmem>>, vector<16x96xf32>
    %cst_117 = arith.constant dense<0.000000e+00> : vector<2x96xf32>
    %249 = tpu.matmul %220, %248, %cst_117 {dimension_numbers = #tpu.dot_dimension_numbers<[1], [0], [0], [1], [0, 0, 1, 1], [], []>, precision = #tpu.contract_precision<fp32>} : vector<2x16xf32>, vector<16x96xf32>, vector<2x96xf32> -> vector<2x96xf32>
    %c0_118 = arith.constant 0 : index
    %c0_119 = arith.constant 0 : index
    %250 = vector.load %arg8[%c0_118, %c0_119] : memref<32x96xf32, #tpu.memory_space<vmem>>, vector<32x96xf32>
    %cst_120 = arith.constant dense<0.000000e+00> : vector<2x96xf32>
    %251 = tpu.matmul %247, %250, %cst_120 {dimension_numbers = #tpu.dot_dimension_numbers<[1], [0], [0], [1], [0, 0, 1, 1], [], []>, precision = #tpu.contract_precision<fp32>} : vector<2x32xf32>, vector<32x96xf32>, vector<2x96xf32> -> vector<2x96xf32>
    %252 = arith.addf %249, %251 : vector<2x96xf32>
    %c0_121 = arith.constant 0 : index
    %c0_122 = arith.constant 0 : index
    %253 = vector.load %arg10[%c0_121, %c0_122] : memref<1x96xf32, #tpu.memory_space<vmem>>, vector<1x96xf32>
    %254 = vector.broadcast %253 : vector<1x96xf32> to vector<2x96xf32>
    %255 = arith.addf %252, %254 : vector<2x96xf32>
    %c0_123 = arith.constant 0 : index
    %c0_124 = arith.constant 0 : index
    %256 = vector.load %arg9[%c0_123, %c0_124] : memref<32x96xf32, #tpu.memory_space<vmem>>, vector<32x96xf32>
    %cst_125 = arith.constant dense<0.000000e+00> : vector<2x96xf32>
    %257 = tpu.matmul %186, %256, %cst_125 {dimension_numbers = #tpu.dot_dimension_numbers<[1], [0], [0], [1], [0, 0, 1, 1], [], []>, precision = #tpu.contract_precision<fp32>} : vector<2x32xf32>, vector<32x96xf32>, vector<2x96xf32> -> vector<2x96xf32>
    %c0_126 = arith.constant 0 : index
    %c0_127 = arith.constant 0 : index
    %258 = vector.load %arg11[%c0_126, %c0_127] : memref<1x96xf32, #tpu.memory_space<vmem>>, vector<1x96xf32>
    %259 = vector.broadcast %258 : vector<1x96xf32> to vector<2x96xf32>
    %260 = arith.addf %257, %259 : vector<2x96xf32>
    %261 = vector.extract_strided_slice %255 {offsets = [0, 0], sizes = [2, 32], strides = [1, 1]} : vector<2x96xf32> to vector<2x32xf32>
    %262 = vector.extract_strided_slice %260 {offsets = [0, 0], sizes = [2, 32], strides = [1, 1]} : vector<2x96xf32> to vector<2x32xf32>
    %263 = arith.addf %261, %262 : vector<2x32xf32>
    %264 = arith.negf %263 : vector<2x32xf32>
    %265 = math.exp %264 : vector<2x32xf32>
    %cst_128 = arith.constant 1.000000e+00 : f32
    %266 = vector.broadcast %cst_128 : f32 to vector<2x32xf32>
    %267 = arith.addf %266, %265 : vector<2x32xf32>
    %268 = arith.divf %266, %267 : vector<2x32xf32>
    %269 = vector.extract_strided_slice %255 {offsets = [0, 32], sizes = [2, 32], strides = [1, 1]} : vector<2x96xf32> to vector<2x32xf32>
    %270 = vector.extract_strided_slice %260 {offsets = [0, 32], sizes = [2, 32], strides = [1, 1]} : vector<2x96xf32> to vector<2x32xf32>
    %271 = arith.addf %269, %270 : vector<2x32xf32>
    %272 = arith.negf %271 : vector<2x32xf32>
    %273 = math.exp %272 : vector<2x32xf32>
    %cst_129 = arith.constant 1.000000e+00 : f32
    %274 = vector.broadcast %cst_129 : f32 to vector<2x32xf32>
    %275 = arith.addf %274, %273 : vector<2x32xf32>
    %276 = arith.divf %274, %275 : vector<2x32xf32>
    %277 = vector.extract_strided_slice %255 {offsets = [0, 64], sizes = [2, 32], strides = [1, 1]} : vector<2x96xf32> to vector<2x32xf32>
    %278 = vector.extract_strided_slice %260 {offsets = [0, 64], sizes = [2, 32], strides = [1, 1]} : vector<2x96xf32> to vector<2x32xf32>
    %279 = arith.mulf %268, %278 : vector<2x32xf32>
    %280 = arith.addf %277, %279 : vector<2x32xf32>
    %281 = math.tanh %280 : vector<2x32xf32>
    %cst_130 = arith.constant 1.000000e+00 : f32
    %282 = vector.broadcast %cst_130 : f32 to vector<2x32xf32>
    %283 = arith.subf %282, %276 : vector<2x32xf32>
    %284 = arith.mulf %283, %281 : vector<2x32xf32>
    %285 = arith.mulf %276, %186 : vector<2x32xf32>
    %286 = arith.addf %284, %285 : vector<2x32xf32>
    %c0_131 = arith.constant 0 : index
    %c0_132 = arith.constant 0 : index
    %287 = vector.load %arg12[%c0_131, %c0_132] : memref<32x128xf32, #tpu.memory_space<vmem>>, vector<32x128xf32>
    %cst_133 = arith.constant dense<0.000000e+00> : vector<2x128xf32>
    %288 = tpu.matmul %286, %287, %cst_133 {dimension_numbers = #tpu.dot_dimension_numbers<[1], [0], [0], [1], [0, 0, 1, 1], [], []>, precision = #tpu.contract_precision<fp32>} : vector<2x32xf32>, vector<32x128xf32>, vector<2x128xf32> -> vector<2x128xf32>
    %c0_134 = arith.constant 0 : index
    %c0_135 = arith.constant 0 : index
    %289 = vector.load %arg13[%c0_134, %c0_135] : memref<1x128xf32, #tpu.memory_space<vmem>>, vector<1x128xf32>
    %290 = vector.broadcast %289 : vector<1x128xf32> to vector<2x128xf32>
    %291 = arith.addf %288, %290 : vector<2x128xf32>
    %cst_136 = arith.constant dense<0xFF800000> : vector<2xf32>
    %292 = vector.multi_reduction <maximumf>, %291, %cst_136 [1] : vector<2x128xf32> to vector<2xf32>
    %293 = vector.shape_cast %292 : vector<2xf32> to vector<2x1xf32>
    %294 = vector.broadcast %293 : vector<2x1xf32> to vector<2x128xf32>
    %295 = arith.subf %291, %294 : vector<2x128xf32>
    %296 = math.exp %295 : vector<2x128xf32>
    %cst_137 = arith.constant dense<0.000000e+00> : vector<2xf32>
    %297 = vector.multi_reduction <add>, %296, %cst_137 [1] : vector<2x128xf32> to vector<2xf32>
    %298 = vector.shape_cast %297 : vector<2xf32> to vector<2x1xf32>
    %299 = math.log %298 : vector<2x1xf32>
    %300 = arith.addf %293, %299 : vector<2x1xf32>
    %301 = vector.broadcast %300 : vector<2x1xf32> to vector<2x128xf32>
    %302 = arith.subf %291, %301 : vector<2x128xf32>
    %303 = arith.index_cast %c2_i32 : i32 to index
    %c0_138 = arith.constant 0 : index
    %c0_139 = arith.constant 0 : index
    %304 = vector.load %arg14[%303, %c0_138, %c0_139] : memref<4x2x128xf32, #tpu.memory_space<vmem>>, vector<1x2x128xf32>
    %305 = vector.shape_cast %304 : vector<1x2x128xf32> to vector<2x128xf32>
    %306 = vector.shape_cast %302 : vector<2x128xf32> to vector<1x2x128xf32>
    tpu.vector_store %arg14[%303, %c0_138, %c0_139], %306 {strides = array<i32>} : memref<4x2x128xf32, #tpu.memory_space<vmem>>, vector<1x2x128xf32>,
    %c3_i32 = arith.constant 3 : i32
    %cst_140 = arith.constant dense<0xFF800000> : vector<2xf32>
    %307 = vector.multi_reduction <maximumf>, %302, %cst_140 [1] : vector<2x128xf32> to vector<2xf32>
    %308 = vector.shape_cast %307 : vector<2xf32> to vector<2x1xf32>
    %309 = vector.broadcast %308 : vector<2x1xf32> to vector<2x128xf32>
    %310 = arith.cmpf oge, %302, %309 : vector<2x128xf32>
    %c128_i32_141 = arith.constant 128 : i32
    %311 = vector.broadcast %c128_i32_141 : i32 to vector<2x128xi32>
    %312 = arith.select %310, %0, %311 : vector<2x128xi1>, vector<2x128xi32>
    %cst_142 = arith.constant dense<2147483647> : vector<2xi32>
    %313 = vector.multi_reduction <minsi>, %312, %cst_142 [1] : vector<2x128xi32> to vector<2xi32>
    %314 = vector.shape_cast %313 : vector<2xi32> to vector<2x1xi32>
    %315 = vector.broadcast %314 : vector<2x1xi32> to vector<2x128xi32>
    %316 = arith.cmpi eq, %0, %315 : vector<2x128xi32>
    %317 = arith.extui %316 : vector<2x128xi1> to vector<2x128xi32>
    %318 = arith.sitofp %317 : vector<2x128xi32> to vector<2x128xf32>
    %c0_143 = arith.constant 0 : index
    %c0_144 = arith.constant 0 : index
    %319 = vector.load %arg4[%c0_143, %c0_144] : memref<128x16xf32, #tpu.memory_space<vmem>>, vector<128x16xf32>
    %cst_145 = arith.constant dense<0.000000e+00> : vector<2x16xf32>
    %320 = tpu.matmul %318, %319, %cst_145 {dimension_numbers = #tpu.dot_dimension_numbers<[1], [0], [0], [1], [0, 0, 1, 1], [], []>, precision = #tpu.contract_precision<fp32>} : vector<2x128xf32>, vector<128x16xf32>, vector<2x16xf32> -> vector<2x16xf32>
    %c0_146 = arith.constant 0 : index
    %c0_147 = arith.constant 0 : index
    %321 = vector.load %arg5[%c0_146, %c0_147] : memref<32x32xf32, #tpu.memory_space<vmem>>, vector<32x32xf32>
    %cst_148 = arith.constant dense<0.000000e+00> : vector<2x32xf32>
    %322 = tpu.matmul %286, %321, %cst_148 {dimension_numbers = #tpu.dot_dimension_numbers<[1], [0], [0], [1], [0, 0, 1, 1], [], []>, precision = #tpu.contract_precision<fp32>} : vector<2x32xf32>, vector<32x32xf32>, vector<2x32xf32> -> vector<2x32xf32>
    %c0_149 = arith.constant 0 : index
    %c0_150 = arith.constant 0 : index
    %c0_151 = arith.constant 0 : index
    %323 = vector.load %arg1[%c0_149, %c0_150, %c0_151] : memref<2x8x32xf32, #tpu.memory_space<vmem>>, vector<2x8x32xf32>
    %324 = vector.shape_cast %322 : vector<2x32xf32> to vector<2x1x32xf32>
    %325 = vector.broadcast %324 : vector<2x1x32xf32> to vector<2x8x32xf32>
    %326 = arith.addf %323, %325 : vector<2x8x32xf32>
    %327 = math.tanh %326 : vector<2x8x32xf32>
    %c0_152 = arith.constant 0 : index
    %c0_153 = arith.constant 0 : index
    %328 = vector.load %arg6[%c0_152, %c0_153] : memref<1x32xf32, #tpu.memory_space<vmem>>, vector<1x32xf32>
    %329 = vector.shape_cast %328 : vector<1x32xf32> to vector<1x1x32xf32>
    %330 = vector.broadcast %329 : vector<1x1x32xf32> to vector<2x8x32xf32>
    %331 = arith.mulf %327, %330 : vector<2x8x32xf32>
    %cst_154 = arith.constant dense<0.000000e+00> : vector<2x8xf32>
    %332 = vector.multi_reduction <add>, %331, %cst_154 [2] : vector<2x8x32xf32> to vector<2x8xf32>
    %cst_155 = arith.constant dense<0xFF800000> : vector<2xf32>
    %333 = vector.multi_reduction <maximumf>, %332, %cst_155 [1] : vector<2x8xf32> to vector<2xf32>
    %334 = vector.shape_cast %333 : vector<2xf32> to vector<2x1xf32>
    %335 = vector.broadcast %334 : vector<2x1xf32> to vector<2x8xf32>
    %336 = arith.subf %332, %335 : vector<2x8xf32>
    %337 = math.exp %336 : vector<2x8xf32>
    %cst_156 = arith.constant dense<0.000000e+00> : vector<2xf32>
    %338 = vector.multi_reduction <add>, %337, %cst_156 [1] : vector<2x8xf32> to vector<2xf32>
    %339 = vector.shape_cast %338 : vector<2xf32> to vector<2x1xf32>
    %340 = tpu.reciprocal %339 : vector<2x1xf32> -> vector<2x1xf32>
    %341 = vector.broadcast %340 : vector<2x1xf32> to vector<2x8xf32>
    %342 = arith.mulf %337, %341 : vector<2x8xf32>
    %343 = vector.shape_cast %342 : vector<2x8xf32> to vector<2x8x1xf32>
    %c0_157 = arith.constant 0 : index
    %c0_158 = arith.constant 0 : index
    %c0_159 = arith.constant 0 : index
    %344 = vector.load %arg2[%c0_157, %c0_158, %c0_159] : memref<2x8x32xf32, #tpu.memory_space<vmem>>, vector<2x8x32xf32>
    %345 = vector.broadcast %343 : vector<2x8x1xf32> to vector<2x8x32xf32>
    %346 = arith.mulf %345, %344 : vector<2x8x32xf32>
    %cst_160 = arith.constant dense<0.000000e+00> : vector<2x32xf32>
    %347 = vector.multi_reduction <add>, %346, %cst_160 [1] : vector<2x8x32xf32> to vector<2x32xf32>
    %c0_161 = arith.constant 0 : index
    %c0_162 = arith.constant 0 : index
    %348 = vector.load %arg7[%c0_161, %c0_162] : memref<16x96xf32, #tpu.memory_space<vmem>>, vector<16x96xf32>
    %cst_163 = arith.constant dense<0.000000e+00> : vector<2x96xf32>
    %349 = tpu.matmul %320, %348, %cst_163 {dimension_numbers = #tpu.dot_dimension_numbers<[1], [0], [0], [1], [0, 0, 1, 1], [], []>, precision = #tpu.contract_precision<fp32>} : vector<2x16xf32>, vector<16x96xf32>, vector<2x96xf32> -> vector<2x96xf32>
    %c0_164 = arith.constant 0 : index
    %c0_165 = arith.constant 0 : index
    %350 = vector.load %arg8[%c0_164, %c0_165] : memref<32x96xf32, #tpu.memory_space<vmem>>, vector<32x96xf32>
    %cst_166 = arith.constant dense<0.000000e+00> : vector<2x96xf32>
    %351 = tpu.matmul %347, %350, %cst_166 {dimension_numbers = #tpu.dot_dimension_numbers<[1], [0], [0], [1], [0, 0, 1, 1], [], []>, precision = #tpu.contract_precision<fp32>} : vector<2x32xf32>, vector<32x96xf32>, vector<2x96xf32> -> vector<2x96xf32>
    %352 = arith.addf %349, %351 : vector<2x96xf32>
    %c0_167 = arith.constant 0 : index
    %c0_168 = arith.constant 0 : index
    %353 = vector.load %arg10[%c0_167, %c0_168] : memref<1x96xf32, #tpu.memory_space<vmem>>, vector<1x96xf32>
    %354 = vector.broadcast %353 : vector<1x96xf32> to vector<2x96xf32>
    %355 = arith.addf %352, %354 : vector<2x96xf32>
    %c0_169 = arith.constant 0 : index
    %c0_170 = arith.constant 0 : index
    %356 = vector.load %arg9[%c0_169, %c0_170] : memref<32x96xf32, #tpu.memory_space<vmem>>, vector<32x96xf32>
    %cst_171 = arith.constant dense<0.000000e+00> : vector<2x96xf32>
    %357 = tpu.matmul %286, %356, %cst_171 {dimension_numbers = #tpu.dot_dimension_numbers<[1], [0], [0], [1], [0, 0, 1, 1], [], []>, precision = #tpu.contract_precision<fp32>} : vector<2x32xf32>, vector<32x96xf32>, vector<2x96xf32> -> vector<2x96xf32>
    %c0_172 = arith.constant 0 : index
    %c0_173 = arith.constant 0 : index
    %358 = vector.load %arg11[%c0_172, %c0_173] : memref<1x96xf32, #tpu.memory_space<vmem>>, vector<1x96xf32>
    %359 = vector.broadcast %358 : vector<1x96xf32> to vector<2x96xf32>
    %360 = arith.addf %357, %359 : vector<2x96xf32>
    %361 = vector.extract_strided_slice %355 {offsets = [0, 0], sizes = [2, 32], strides = [1, 1]} : vector<2x96xf32> to vector<2x32xf32>
    %362 = vector.extract_strided_slice %360 {offsets = [0, 0], sizes = [2, 32], strides = [1, 1]} : vector<2x96xf32> to vector<2x32xf32>
    %363 = arith.addf %361, %362 : vector<2x32xf32>
    %364 = arith.negf %363 : vector<2x32xf32>
    %365 = math.exp %364 : vector<2x32xf32>
    %cst_174 = arith.constant 1.000000e+00 : f32
    %366 = vector.broadcast %cst_174 : f32 to vector<2x32xf32>
    %367 = arith.addf %366, %365 : vector<2x32xf32>
    %368 = arith.divf %366, %367 : vector<2x32xf32>
    %369 = vector.extract_strided_slice %355 {offsets = [0, 32], sizes = [2, 32], strides = [1, 1]} : vector<2x96xf32> to vector<2x32xf32>
    %370 = vector.extract_strided_slice %360 {offsets = [0, 32], sizes = [2, 32], strides = [1, 1]} : vector<2x96xf32> to vector<2x32xf32>
    %371 = arith.addf %369, %370 : vector<2x32xf32>
    %372 = arith.negf %371 : vector<2x32xf32>
    %373 = math.exp %372 : vector<2x32xf32>
    %cst_175 = arith.constant 1.000000e+00 : f32
    %374 = vector.broadcast %cst_175 : f32 to vector<2x32xf32>
    %375 = arith.addf %374, %373 : vector<2x32xf32>
    %376 = arith.divf %374, %375 : vector<2x32xf32>
    %377 = vector.extract_strided_slice %355 {offsets = [0, 64], sizes = [2, 32], strides = [1, 1]} : vector<2x96xf32> to vector<2x32xf32>
    %378 = vector.extract_strided_slice %360 {offsets = [0, 64], sizes = [2, 32], strides = [1, 1]} : vector<2x96xf32> to vector<2x32xf32>
    %379 = arith.mulf %368, %378 : vector<2x32xf32>
    %380 = arith.addf %377, %379 : vector<2x32xf32>
    %381 = math.tanh %380 : vector<2x32xf32>
    %cst_176 = arith.constant 1.000000e+00 : f32
    %382 = vector.broadcast %cst_176 : f32 to vector<2x32xf32>
    %383 = arith.subf %382, %376 : vector<2x32xf32>
    %384 = arith.mulf %383, %381 : vector<2x32xf32>
    %385 = arith.mulf %376, %286 : vector<2x32xf32>
    %386 = arith.addf %384, %385 : vector<2x32xf32>
    %c0_177 = arith.constant 0 : index
    %c0_178 = arith.constant 0 : index
    %387 = vector.load %arg12[%c0_177, %c0_178] : memref<32x128xf32, #tpu.memory_space<vmem>>, vector<32x128xf32>
    %cst_179 = arith.constant dense<0.000000e+00> : vector<2x128xf32>
    %388 = tpu.matmul %386, %387, %cst_179 {dimension_numbers = #tpu.dot_dimension_numbers<[1], [0], [0], [1], [0, 0, 1, 1], [], []>, precision = #tpu.contract_precision<fp32>} : vector<2x32xf32>, vector<32x128xf32>, vector<2x128xf32> -> vector<2x128xf32>
    %c0_180 = arith.constant 0 : index
    %c0_181 = arith.constant 0 : index
    %389 = vector.load %arg13[%c0_180, %c0_181] : memref<1x128xf32, #tpu.memory_space<vmem>>, vector<1x128xf32>
    %390 = vector.broadcast %389 : vector<1x128xf32> to vector<2x128xf32>
    %391 = arith.addf %388, %390 : vector<2x128xf32>
    %cst_182 = arith.constant dense<0xFF800000> : vector<2xf32>
    %392 = vector.multi_reduction <maximumf>, %391, %cst_182 [1] : vector<2x128xf32> to vector<2xf32>
    %393 = vector.shape_cast %392 : vector<2xf32> to vector<2x1xf32>
    %394 = vector.broadcast %393 : vector<2x1xf32> to vector<2x128xf32>
    %395 = arith.subf %391, %394 : vector<2x128xf32>
    %396 = math.exp %395 : vector<2x128xf32>
    %cst_183 = arith.constant dense<0.000000e+00> : vector<2xf32>
    %397 = vector.multi_reduction <add>, %396, %cst_183 [1] : vector<2x128xf32> to vector<2xf32>
    %398 = vector.shape_cast %397 : vector<2xf32> to vector<2x1xf32>
    %399 = math.log %398 : vector<2x1xf32>
    %400 = arith.addf %393, %399 : vector<2x1xf32>
    %401 = vector.broadcast %400 : vector<2x1xf32> to vector<2x128xf32>
    %402 = arith.subf %391, %401 : vector<2x128xf32>
    %403 = arith.index_cast %c3_i32 : i32 to index
    %c0_184 = arith.constant 0 : index
    %c0_185 = arith.constant 0 : index
    %404 = vector.load %arg14[%403, %c0_184, %c0_185] : memref<4x2x128xf32, #tpu.memory_space<vmem>>, vector<1x2x128xf32>
    %405 = vector.shape_cast %404 : vector<1x2x128xf32> to vector<2x128xf32>
    %406 = vector.shape_cast %402 : vector<2x128xf32> to vector<1x2x128xf32>
    tpu.vector_store %arg14[%403, %c0_184, %c0_185], %406 {strides = array<i32>} : memref<4x2x128xf32, #tpu.memory_space<vmem>>, vector<1x2x128xf32>,
    %c4_i32 = arith.constant 4 : i32
    return
  }
  func.func @transform_0(%arg0: i32) -> (i32, i32, i32) {
    %c0_i32 = arith.constant 0 : i32
    %c0_i32_0 = arith.constant 0 : i32
    %c0_i32_1 = arith.constant 0 : i32
    return %arg0, %c0_i32, %c0_i32_0 : i32, i32, i32
  }
  func.func @transform_1(%arg0: i32) -> (i32, i32, i32) {
    %c0_i32 = arith.constant 0 : i32
    %c0_i32_0 = arith.constant 0 : i32
    %c0_i32_1 = arith.constant 0 : i32
    return %arg0, %c0_i32, %c0_i32_0 : i32, i32, i32
  }
  func.func @transform_2(%arg0: i32) -> (i32, i32) {
    %c0_i32 = arith.constant 0 : i32
    %c0_i32_0 = arith.constant 0 : i32
    return %arg0, %c0_i32 : i32, i32
  }
  func.func @transform_3(%arg0: i32) -> (i32, i32) {
    %c0_i32 = arith.constant 0 : i32
    %c0_i32_0 = arith.constant 0 : i32
    %c0_i32_1 = arith.constant 0 : i32
    return %c0_i32, %c0_i32_0 : i32, i32
  }
  func.func @transform_4(%arg0: i32) -> (i32, i32) {
    %c0_i32 = arith.constant 0 : i32
    %c0_i32_0 = arith.constant 0 : i32
    %c0_i32_1 = arith.constant 0 : i32
    return %c0_i32, %c0_i32_0 : i32, i32
  }
  func.func @transform_5(%arg0: i32) -> (i32, i32) {
    %c0_i32 = arith.constant 0 : i32
    %c0_i32_0 = arith.constant 0 : i32
    %c0_i32_1 = arith.constant 0 : i32
    return %c0_i32, %c0_i32_0 : i32, i32
  }
  func.func @transform_6(%arg0: i32) -> (i32, i32) {
    %c0_i32 = arith.constant 0 : i32
    %c0_i32_0 = arith.constant 0 : i32
    %c0_i32_1 = arith.constant 0 : i32
    return %c0_i32, %c0_i32_0 : i32, i32
  }
  func.func @transform_7(%arg0: i32) -> (i32, i32) {
    %c0_i32 = arith.constant 0 : i32
    %c0_i32_0 = arith.constant 0 : i32
    %c0_i32_1 = arith.constant 0 : i32
    return %c0_i32, %c0_i32_0 : i32, i32
  }
  func.func @transform_8(%arg0: i32) -> (i32, i32) {
    %c0_i32 = arith.constant 0 : i32
    %c0_i32_0 = arith.constant 0 : i32
    %c0_i32_1 = arith.constant 0 : i32
    return %c0_i32, %c0_i32_0 : i32, i32
  }
  func.func @transform_9(%arg0: i32) -> (i32, i32) {
    %c0_i32 = arith.constant 0 : i32
    %c0_i32_0 = arith.constant 0 : i32
    %c0_i32_1 = arith.constant 0 : i32
    return %c0_i32, %c0_i32_0 : i32, i32
  }
  func.func @transform_10(%arg0: i32) -> (i32, i32) {
    %c0_i32 = arith.constant 0 : i32
    %c0_i32_0 = arith.constant 0 : i32
    %c0_i32_1 = arith.constant 0 : i32
    return %c0_i32, %c0_i32_0 : i32, i32
  }
  func.func @transform_11(%arg0: i32) -> (i32, i32) {
    %c0_i32 = arith.constant 0 : i32
    %c0_i32_0 = arith.constant 0 : i32
    %c0_i32_1 = arith.constant 0 : i32
    return %c0_i32, %c0_i32_0 : i32, i32
  }
  func.func @transform_12(%arg0: i32) -> (i32, i32) {
    %c0_i32 = arith.constant 0 : i32
    %c0_i32_0 = arith.constant 0 : i32
    %c0_i32_1 = arith.constant 0 : i32
    return %c0_i32, %c0_i32_0 : i32, i32
  }
  func.func @transform_13(%arg0: i32) -> (i32, i32, i32) {
    %c0_i32 = arith.constant 0 : i32
    %c0_i32_0 = arith.constant 0 : i32
    %c0_i32_1 = arith.constant 0 : i32
    return %c0_i32, %arg0, %c0_i32_0 : i32, i32, i32
  }
}

</mosaic_0001>

<llo_original>
// kernel: run.1
$region0: #{run.1}
  #allocation0 [shape = 'u32[]', space=smem, size = 0x4, offset = 0x4, fixed_abs, tag = 'smem constant byte address 0x4 - core index']
  #allocation1 [shape = 'u32[72,128]{1,0:T(1,128)}', space=vmem, size = 0x9000, scoped, tag = 'internal scratch']
  %s0 = inlined_call_operand.vmem [shape: f32[2,8,32], index: 0, kind: input, shape index: {}]
  %s1 = inlined_call_operand.vmem [shape: f32[2,8,32], index: 1, kind: input, shape index: {}]
  %s2 = inlined_call_operand.vmem [shape: f32[2,32], index: 2, kind: input, shape index: {}]
  %s3 = inlined_call_operand.vmem [shape: f32[128,16], index: 3, kind: input, shape index: {}]
  %s4 = inlined_call_operand.vmem [shape: f32[32,32], index: 4, kind: input, shape index: {}]
  %s5 = inlined_call_operand.vmem [shape: f32[1,32], index: 5, kind: input, shape index: {}]
  %s6 = inlined_call_operand.vmem [shape: f32[16,96], index: 6, kind: input, shape index: {}]
  %s7 = inlined_call_operand.vmem [shape: f32[32,96], index: 7, kind: input, shape index: {}]
  %s8 = inlined_call_operand.vmem [shape: f32[32,96], index: 8, kind: input, shape index: {}]
  %s9 = inlined_call_operand.vmem [shape: f32[1,96], index: 9, kind: input, shape index: {}]
  %s10 = inlined_call_operand.vmem [shape: f32[1,96], index: 10, kind: input, shape index: {}]
  %s11 = inlined_call_operand.vmem [shape: f32[32,128], index: 11, kind: input, shape index: {}]
  %s12 = inlined_call_operand.vmem [shape: f32[1,128], index: 12, kind: input, shape index: {}]
  %s13 = inlined_call_operand.vmem [shape: f32[4,2,128], index: 13, kind: output, shape index: {}]
  %s14 = sld [smem:[#allocation0]]
  $region62: #{run.1} parent=0
    _
  %s16 = ssub.s32 1, %s14
  %s17 = scalar_select 0, %s16, %s14
  // Predicated region
  $region2: #{run.1} parent=0 // pred_check
    _
  $region3: #{run.1} parent=0 // pred_check_branch
    %19 = sbr.rel (0) target = $region5
  $region4: #{run.1} parent=0 // pred_region
    _
  $region5: #{run.1} parent=0 // pred_fallthru
    _
  // Predicated region
  $region6: #{run.1} parent=0 // pred_check
    _
  $region7: #{run.1} parent=0 // pred_check_branch
    %21 = sbr.rel (0) target = $region9
  $region8: #{run.1} parent=0 // pred_region
    _
  $region9: #{run.1} parent=0 // pred_fallthru
    _
  // Predicated region
  $region10: #{run.1} parent=0 // pred_check
    _
  $region11: #{run.1} parent=0 // pred_check_branch
    %23 = sbr.rel (0) target = $region13
  $region12: #{run.1} parent=0 // pred_region
    _
  $region13: #{run.1} parent=0 // pred_fallthru
    _
  // Predicated region
  $region14: #{run.1} parent=0 // pred_check
    _
  $region15: #{run.1} parent=0 // pred_check_branch
    %25 = sbr.rel (0) target = $region17
  $region16: #{run.1} parent=0 // pred_region
    _
  $region17: #{run.1} parent=0 // pred_fallthru
    _
  // Predicated region
  $region18: #{run.1} parent=0 // pred_check
    _
  $region19: #{run.1} parent=0 // pred_check_branch
    %27 = sbr.rel (0) target = $region21
  $region20: #{run.1} parent=0 // pred_region
    _
  $region21: #{run.1} parent=0 // pred_fallthru
    _
  // Predicated region
  $region22: #{run.1} parent=0 // pred_check
    _
  $region23: #{run.1} parent=0 // pred_check_branch
    %29 = sbr.rel (0) target = $region25
  $region24: #{run.1} parent=0 // pred_region
    _
  $region25: #{run.1} parent=0 // pred_fallthru
    _
  // Predicated region
  $region26: #{run.1} parent=0 // pred_check
    _
  $region27: #{run.1} parent=0 // pred_check_branch
    %31 = sbr.rel (0) target = $region29
  $region28: #{run.1} parent=0 // pred_region
    _
  $region29: #{run.1} parent=0 // pred_fallthru
    _
  // Predicated region
  $region30: #{run.1} parent=0 // pred_check
    _
  $region31: #{run.1} parent=0 // pred_check_branch
    %33 = sbr.rel (0) target = $region33
  $region32: #{run.1} parent=0 // pred_region
    _
  $region33: #{run.1} parent=0 // pred_fallthru
    _
  // Predicated region
  $region34: #{run.1} parent=0 // pred_check
    _
  $region35: #{run.1} parent=0 // pred_check_branch
    %35 = sbr.rel (0) target = $region37
  $region36: #{run.1} parent=0 // pred_region
    _
  $region37: #{run.1} parent=0 // pred_fallthru
    _
  // Predicated region
  $region38: #{run.1} parent=0 // pred_check
    _
  $region39: #{run.1} parent=0 // pred_check_branch
    %37 = sbr.rel (0) target = $region41
  $region40: #{run.1} parent=0 // pred_region
    _
  $region41: #{run.1} parent=0 // pred_fallthru
    _
  // Predicated region
  $region42: #{run.1} parent=0 // pred_check
    _
  $region43: #{run.1} parent=0 // pred_check_branch
    %39 = sbr.rel (0) target = $region45
  $region44: #{run.1} parent=0 // pred_region
    _
  $region45: #{run.1} parent=0 // pred_fallthru
    _
  // Predicated region
  $region46: #{run.1} parent=0 // pred_check
    _
  $region47: #{run.1} parent=0 // pred_check_branch
    %41 = sbr.rel (0) target = $region49
  $region48: #{run.1} parent=0 // pred_region
    _
  $region49: #{run.1} parent=0 // pred_fallthru
    _
  // Predicated region
  $region50: #{run.1} parent=0 // pred_check
    _
  $region51: #{run.1} parent=0 // pred_check_branch
    %43 = sbr.rel (0) target = $region53
  $region52: #{run.1} parent=0 // pred_region
    _
  $region53: #{run.1} parent=0 // pred_fallthru
    _
  %v44 = vlaneseq
  %v45 = vand.u32 %v44, 127
  %vm46 = vcmp.eq.s32.totalorder %v45, 1
  %v47 = vsel %vm46, 1.0, 0.0
  %v48 = vld [vmem:[%s2] sm:$0x3]
  %49 = vmax.xlane.f32.xlu0 %v47
  %v50 = vpop.xlane.xlu0 %49
  %vm51 = vcmp.ge.f32.partialorder %v47, %v50
  %v52 = vsel %vm51, %v45, 128
  %v53 = vand.u32 %v52, 65535
  %v54 = vshra.s32 %v52, 16
  %v55 = vcvt.s32.f32 %v53
  %v56 = vcvt.s32.f32 %v54
  %57 = vmin.xlane.f32.xlu0 %v56
  %v58 = vpop.xlane.xlu0 %57
  %vm59 = vcmp.eq.f32.partialorder %v56, %v58
  %v60 = vsel %vm59, %v55, inf
  %61 = vmin.xlane.f32.xlu0 %v60
  %v62 = vpop.xlane.xlu0 %61
  %v63 = vcvt.f32.s32 %v62
  %v64 = vcvt.f32.s32 %v58
  %v65 = vshll.u32 %v64, 16
  %v66 = vadd.s32 %v65, %v63
  %vm67 = vcmp.eq.s32.totalorder %v45, %v66
  %v68 = vsel %vm67, 1, 0
  %v69 = vcvt.s32.f32 %v68
  %v70 = vld [vmem:[%s3] sm:$0xff]
  %v71 = vld [vmem:[%s3 + $0x8] sm:$0xff]
  %v72 = vld [vmem:[%s3 + $0x10] sm:$0xff]
  %v73 = vld [vmem:[%s3 + $0x18] sm:$0xff]
  %v74 = vld [vmem:[%s3 + $0x20] sm:$0xff]
  %v75 = vld [vmem:[%s3 + $0x28] sm:$0xff]
  %v76 = vld [vmem:[%s3 + $0x30] sm:$0xff]
  %v77 = vld [vmem:[%s3 + $0x38] sm:$0xff]
  %v78 = vld [vmem:[%s3 + $0x40] sm:$0xff]
  %v79 = vld [vmem:[%s3 + $0x48] sm:$0xff]
  %v80 = vld [vmem:[%s3 + $0x50] sm:$0xff]
  %v81 = vld [vmem:[%s3 + $0x58] sm:$0xff]
  %v82 = vld [vmem:[%s3 + $0x60] sm:$0xff]
  %v83 = vld [vmem:[%s3 + $0x68] sm:$0xff]
  %v84 = vld [vmem:[%s3 + $0x70] sm:$0xff]
  %v85 = vld [vmem:[%s3 + $0x78] sm:$0xff]
  %v86 = vand.u32 %v85, 4294901760
  %87 = vmatpush.msra.mxu0 %v86
  %v88 = vand.u32 %v84, 4294901760
  %89 = vmatpush.msra.mxu0 %v88
  %v90 = vand.u32 %v83, 4294901760
  %91 = vmatpush.msra.mxu0 %v90
  %v92 = vand.u32 %v82, 4294901760
  %93 = vmatpush.msra.mxu0 %v92
  %v94 = vand.u32 %v81, 4294901760
  %95 = vmatpush.msra.mxu0 %v94
  %v96 = vand.u32 %v80, 4294901760
  %97 = vmatpush.msra.mxu0 %v96
  %v98 = vand.u32 %v79, 4294901760
  %99 = vmatpush.msra.mxu0 %v98
  %v100 = vand.u32 %v78, 4294901760
  %101 = vmatpush.msra.mxu0 %v100
  %v102 = vand.u32 %v77, 4294901760
  %103 = vmatpush.msra.mxu0 %v102
  %v104 = vand.u32 %v76, 4294901760
  %105 = vmatpush.msra.mxu0 %v104
  %v106 = vand.u32 %v75, 4294901760
  %107 = vmatpush.msra.mxu0 %v106
  %v108 = vand.u32 %v74, 4294901760
  %109 = vmatpush.msra.mxu0 %v108
  %v110 = vand.u32 %v73, 4294901760
  %111 = vmatpush.msra.mxu0 %v110
  %v112 = vand.u32 %v72, 4294901760
  %113 = vmatpush.msra.mxu0 %v112
  %v114 = vand.u32 %v71, 4294901760
  %115 = vmatpush.msra.mxu0 %v114
  %v116 = vand.u32 %v70, 4294901760
  %117 = vmatpush.msra.mxu0 %v116
  %v118 = vand.u32 %v69, 4294901760
  %v119 = vsub.f32 %v69, %v118
  %v120 = vand.u32 %v119, 4294901760
  %v121 = vsub.f32 %v119, %v120
  %v122 = vand.u32 %v121, 4294901760
  %123 = vmatmul.f32.gmra.mxu0 %v122
  %v124 = vpop.f32.mrf.mxu0
  %v125 = vadd.f32 0.0, %v124
  %126 = vdwg.mxu0
  %v127 = vand.u32 %v85, 4294901760
  %v128 = vsub.f32 %v85, %v127
  %v129 = vand.u32 %v128, 4294901760
  %v130 = vsub.f32 %v128, %v129
  %v131 = vand.u32 %v130, 4294901760
  %132 = vmatpush.msra.mxu0 %v131
  %v133 = vand.u32 %v84, 4294901760
  %v134 = vsub.f32 %v84, %v133
  %v135 = vand.u32 %v134, 4294901760
  %v136 = vsub.f32 %v134, %v135
  %v137 = vand.u32 %v136, 4294901760
  %138 = vmatpush.msra.mxu0 %v137
  %v139 = vand.u32 %v83, 4294901760
  %v140 = vsub.f32 %v83, %v139
  %v141 = vand.u32 %v140, 4294901760
  %v142 = vsub.f32 %v140, %v141
  %v143 = vand.u32 %v142, 4294901760
  %144 = vmatpush.msra.mxu0 %v143
  %v145 = vand.u32 %v82, 4294901760
  %v146 = vsub.f32 %v82, %v145
  %v147 = vand.u32 %v146, 4294901760
  %v148 = vsub.f32 %v146, %v147
  %v149 = vand.u32 %v148, 4294901760
  %150 = vmatpush.msra.mxu0 %v149
  %v151 = vand.u32 %v81, 4294901760
  %v152 = vsub.f32 %v81, %v151
  %v153 = vand.u32 %v152, 4294901760
  %v154 = vsub.f32 %v152, %v153
  %v155 = vand.u32 %v154, 4294901760
  %156 = vmatpush.msra.mxu0 %v155
  %v157 = vand.u32 %v80, 4294901760
  %v158 = vsub.f32 %v80, %v157
  %v159 = vand.u32 %v158, 4294901760
  %v160 = vsub.f32 %v158, %v159
  %v161 = vand.u32 %v160, 4294901760
  %162 = vmatpush.msra.mxu0 %v161
  %v163 = vand.u32 %v79, 4294901760
  %v164 = vsub.f32 %v79, %v163
  %v165 = vand.u32 %v164, 4294901760
  %v166 = vsub.f32 %v164, %v165
  %v167 = vand.u32 %v166, 4294901760
  %168 = vmatpush.msra.mxu0 %v167
  %v169 = vand.u32 %v78, 4294901760
  %v170 = vsub.f32 %v78, %v169
  %v171 = vand.u32 %v170, 4294901760
  %v172 = vsub.f32 %v170, %v171
  %v173 = vand.u32 %v172, 4294901760
  %174 = vmatpush.msra.mxu0 %v173
  %v175 = vand.u32 %v77, 4294901760
  %v176 = vsub.f32 %v77, %v175
  %v177 = vand.u32 %v176, 4294901760
  %v178 = vsub.f32 %v176, %v177
  %v179 = vand.u32 %v178, 4294901760
  %180 = vmatpush.msra.mxu0 %v179
  %v181 = vand.u32 %v76, 4294901760
  %v182 = vsub.f32 %v76, %v181
  %v183 = vand.u32 %v182, 4294901760
  %v184 = vsub.f32 %v182, %v183
  %v185 = vand.u32 %v184, 4294901760
  %186 = vmatpush.msra.mxu0 %v185
  %v187 = vand.u32 %v75, 4294901760
  %v188 = vsub.f32 %v75, %v187
  %v189 = vand.u32 %v188, 4294901760
  %v190 = vsub.f32 %v188, %v189
  %v191 = vand.u32 %v190, 4294901760
  %192 = vmatpush.msra.mxu0 %v191
  %v193 = vand.u32 %v74, 4294901760
  %v194 = vsub.f32 %v74, %v193
  %v195 = vand.u32 %v194, 4294901760
  %v196 = vsub.f32 %v194, %v195
  %v197 = vand.u32 %v196, 4294901760
  %198 = vmatpush.msra.mxu0 %v197
  %v199 = vand.u32 %v73, 4294901760
  %v200 = vsub.f32 %v73, %v199
  %v201 = vand.u32 %v200, 4294901760
  %v202 = vsub.f32 %v200, %v201
  %v203 = vand.u32 %v202, 4294901760
  %204 = vmatpush.msra.mxu0 %v203
  %v205 = vand.u32 %v72, 4294901760
  %v206 = vsub.f32 %v72, %v205
  %v207 = vand.u32 %v206, 4294901760
  %v208 = vsub.f32 %v206, %v207
  %v209 = vand.u32 %v208, 4294901760
  %210 = vmatpush.msra.mxu0 %v209
  %v211 = vand.u32 %v71, 4294901760
  %v212 = vsub.f32 %v71, %v211
  %v213 = vand.u32 %v212, 4294901760
  %v214 = vsub.f32 %v212, %v213
  %v215 = vand.u32 %v214, 4294901760
  %216 = vmatpush.msra.mxu0 %v215
  %v217 = vand.u32 %v70, 4294901760
  %v218 = vsub.f32 %v70, %v217
  %v219 = vand.u32 %v218, 4294901760
  %v220 = vsub.f32 %v218, %v219
  %v221 = vand.u32 %v220, 4294901760
  %222 = vmatpush.msra.mxu0 %v221
  %v223 = vand.u32 %v69, 4294901760
  %224 = vmatmul.f32.gmra.mxu0 %v223
  %v225 = vpop.f32.mrf.mxu0
  %v226 = vadd.f32 %v125, %v225
  %227 = vdwg.mxu0
  %v228 = vand.u32 %v85, 4294901760
  %v229 = vsub.f32 %v85, %v228
  %230 = vmatpush.msra.mxu0 %v229
  %v231 = vand.u32 %v84, 4294901760
  %v232 = vsub.f32 %v84, %v231
  %233 = vmatpush.msra.mxu0 %v232
  %v234 = vand.u32 %v83, 4294901760
  %v235 = vsub.f32 %v83, %v234
  %236 = vmatpush.msra.mxu0 %v235
  %v237 = vand.u32 %v82, 4294901760
  %v238 = vsub.f32 %v82, %v237
  %239 = vmatpush.msra.mxu0 %v238
  %v240 = vand.u32 %v81, 4294901760
  %v241 = vsub.f32 %v81, %v240
  %242 = vmatpush.msra.mxu0 %v241
  %v243 = vand.u32 %v80, 4294901760
  %v244 = vsub.f32 %v80, %v243
  %245 = vmatpush.msra.mxu0 %v244
  %v246 = vand.u32 %v79, 4294901760
  %v247 = vsub.f32 %v79, %v246
  %248 = vmatpush.msra.mxu0 %v247
  %v249 = vand.u32 %v78, 4294901760
  %v250 = vsub.f32 %v78, %v249
  %251 = vmatpush.msra.mxu0 %v250
  %v252 = vand.u32 %v77, 4294901760
  %v253 = vsub.f32 %v77, %v252
  %254 = vmatpush.msra.mxu0 %v253
  %v255 = vand.u32 %v76, 4294901760
  %v256 = vsub.f32 %v76, %v255
  %257 = vmatpush.msra.mxu0 %v256
  %v258 = vand.u32 %v75, 4294901760
  %v259 = vsub.f32 %v75, %v258
  %260 = vmatpush.msra.mxu0 %v259
  %v261 = vand.u32 %v74, 4294901760
  %v262 = vsub.f32 %v74, %v261
  %263 = vmatpush.msra.mxu0 %v262
  %v264 = vand.u32 %v73, 4294901760
  %v265 = vsub.f32 %v73, %v264
  %266 = vmatpush.msra.mxu0 %v265
  %v267 = vand.u32 %v72, 4294901760
  %v268 = vsub.f32 %v72, %v267
  %269 = vmatpush.msra.mxu0 %v268
  %v270 = vand.u32 %v71, 4294901760
  %v271 = vsub.f32 %v71, %v270
  %272 = vmatpush.msra.mxu0 %v271
  %v273 = vand.u32 %v70, 4294901760
  %v274 = vsub.f32 %v70, %v273
  %275 = vmatpush.msra.mxu0 %v274
  %v276 = vand.u32 %v69, 4294901760
  %v277 = vsub.f32 %v69, %v276
  %278 = vmatmul.f32.gmra.mxu0 %v277
  %v279 = vpop.f32.mrf.mxu0
  %v280 = vadd.f32 %v226, %v279
  %281 = vdwg.mxu0
  %v282 = vand.u32 %v85, 4294901760
  %283 = vmatpush.msra.mxu0 %v282
  %v284 = vand.u32 %v84, 4294901760
  %285 = vmatpush.msra.mxu0 %v284
  %v286 = vand.u32 %v83, 4294901760
  %287 = vmatpush.msra.mxu0 %v286
  %v288 = vand.u32 %v82, 4294901760
  %289 = vmatpush.msra.mxu0 %v288
  %v290 = vand.u32 %v81, 4294901760
  %291 = vmatpush.msra.mxu0 %v290
  %v292 = vand.u32 %v80, 4294901760
  %293 = vmatpush.msra.mxu0 %v292
  %v294 = vand.u32 %v79, 4294901760
  %295 = vmatpush.msra.mxu0 %v294
  %v296 = vand.u32 %v78, 4294901760
  %297 = vmatpush.msra.mxu0 %v296
  %v298 = vand.u32 %v77, 4294901760
  %299 = vmatpush.msra.mxu0 %v298
  %v300 = vand.u32 %v76, 4294901760
  %301 = vmatpush.msra.mxu0 %v300
  %v302 = vand.u32 %v75, 4294901760
  %303 = vmatpush.msra.mxu0 %v302
  %v304 = vand.u32 %v74, 4294901760
  %305 = vmatpush.msra.mxu0 %v304
  %v306 = vand.u32 %v73, 4294901760
  %307 = vmatpush.msra.mxu0 %v306
  %v308 = vand.u32 %v72, 4294901760
  %309 = vmatpush.msra.mxu0 %v308
  %v310 = vand.u32 %v71, 4294901760
  %311 = vmatpush.msra.mxu0 %v310
  %v312 = vand.u32 %v70, 4294901760
  %313 = vmatpush.msra.mxu0 %v312
  %v314 = vand.u32 %v69, 4294901760
  %v315 = vsub.f32 %v69, %v314
  %v316 = vand.u32 %v315, 4294901760
  %317 = vmatmul.f32.gmra.mxu0 %v316
  %v318 = vpop.f32.mrf.mxu0
  %v319 = vadd.f32 %v280, %v318
  %320 = vdwg.mxu0
  %v321 = vand.u32 %v85, 4294901760
  %v322 = vsub.f32 %v85, %v321
  %v323 = vand.u32 %v322, 4294901760
  %324 = vmatpush.msra.mxu0 %v323
  %v325 = vand.u32 %v84, 4294901760
  %v326 = vsub.f32 %v84, %v325
  %v327 = vand.u32 %v326, 4294901760
  %328 = vmatpush.msra.mxu0 %v327
  %v329 = vand.u32 %v83, 4294901760
  %v330 = vsub.f32 %v83, %v329
  %v331 = vand.u32 %v330, 4294901760
  %332 = vmatpush.msra.mxu0 %v331
  %v333 = vand.u32 %v82, 4294901760
  %v334 = vsub.f32 %v82, %v333
  %v335 = vand.u32 %v334, 4294901760
  %336 = vmatpush.msra.mxu0 %v335
  %v337 = vand.u32 %v81, 4294901760
  %v338 = vsub.f32 %v81, %v337
  %v339 = vand.u32 %v338, 4294901760
  %340 = vmatpush.msra.mxu0 %v339
  %v341 = vand.u32 %v80, 4294901760
  %v342 = vsub.f32 %v80, %v341
  %v343 = vand.u32 %v342, 4294901760
  %344 = vmatpush.msra.mxu0 %v343
  %v345 = vand.u32 %v79, 4294901760
  %v346 = vsub.f32 %v79, %v345
  %v347 = vand.u32 %v346, 4294901760
  %348 = vmatpush.msra.mxu0 %v347
  %v349 = vand.u32 %v78, 4294901760
  %v350 = vsub.f32 %v78, %v349
  %v351 = vand.u32 %v350, 4294901760
  %352 = vmatpush.msra.mxu0 %v351
  %v353 = vand.u32 %v77, 4294901760
  %v354 = vsub.f32 %v77, %v353
  %v355 = vand.u32 %v354, 4294901760
  %356 = vmatpush.msra.mxu0 %v355
  %v357 = vand.u32 %v76, 4294901760
  %v358 = vsub.f32 %v76, %v357
  %v359 = vand.u32 %v358, 4294901760
  %360 = vmatpush.msra.mxu0 %v359
  %v361 = vand.u32 %v75, 4294901760
  %v362 = vsub.f32 %v75, %v361
  %v363 = vand.u32 %v362, 4294901760
  %364 = vmatpush.msra.mxu0 %v363
  %v365 = vand.u32 %v74, 4294901760
  %v366 = vsub.f32 %v74, %v365
  %v367 = vand.u32 %v366, 4294901760
  %368 = vmatpush.msra.mxu0 %v367
  %v369 = vand.u32 %v73, 4294901760
  %v370 = vsub.f32 %v73, %v369
  %v371 = vand.u32 %v370, 4294901760
  %372 = vmatpush.msra.mxu0 %v371
  %v373 = vand.u32 %v72, 4294901760
  %v374 = vsub.f32 %v72, %v373
  %v375 = vand.u32 %v374, 4294901760
  %376 = vmatpush.msra.mxu0 %v375
  %v377 = vand.u32 %v71, 4294901760
  %v378 = vsub.f32 %v71, %v377
  %v379 = vand.u32 %v378, 4294901760
  %380 = vmatpush.msra.mxu0 %v379
  %v381 = vand.u32 %v70, 4294901760
  %v382 = vsub.f32 %v70, %v381
  %v383 = vand.u32 %v382, 4294901760
  %384 = vmatpush.msra.mxu0 %v383
  %v385 = vand.u32 %v69, 4294901760
  %386 = vmatmul.f32.gmra.mxu0 %v385
  %v387 = vpop.f32.mrf.mxu0
  %v388 = vadd.f32 %v319, %v387
  %389 = vdwg.mxu0
  %v390 = vand.u32 %v85, 4294901760
  %391 = vmatpush.msra.mxu0 %v390
  %v392 = vand.u32 %v84, 4294901760
  %393 = vmatpush.msra.mxu0 %v392
  %v394 = vand.u32 %v83, 4294901760
  %395 = vmatpush.msra.mxu0 %v394
  %v396 = vand.u32 %v82, 4294901760
  %397 = vmatpush.msra.mxu0 %v396
  %v398 = vand.u32 %v81, 4294901760
  %399 = vmatpush.msra.mxu0 %v398
  %v400 = vand.u32 %v80, 4294901760
  %401 = vmatpush.msra.mxu0 %v400
  %v402 = vand.u32 %v79, 4294901760
  %403 = vmatpush.msra.mxu0 %v402
  %v404 = vand.u32 %v78, 4294901760
  %405 = vmatpush.msra.mxu0 %v404
  %v406 = vand.u32 %v77, 4294901760
  %407 = vmatpush.msra.mxu0 %v406
  %v408 = vand.u32 %v76, 4294901760
  %409 = vmatpush.msra.mxu0 %v408
  %v410 = vand.u32 %v75, 4294901760
  %411 = vmatpush.msra.mxu0 %v410
  %v412 = vand.u32 %v74, 4294901760
  %413 = vmatpush.msra.mxu0 %v412
  %v414 = vand.u32 %v73, 4294901760
  %415 = vmatpush.msra.mxu0 %v414
  %v416 = vand.u32 %v72, 4294901760
  %417 = vmatpush.msra.mxu0 %v416
  %v418 = vand.u32 %v71, 4294901760
  %419 = vmatpush.msra.mxu0 %v418
  %v420 = vand.u32 %v70, 4294901760
  %421 = vmatpush.msra.mxu0 %v420
  %v422 = vand.u32 %v69, 4294901760
  %423 = vmatmul.f32.gmra.mxu0 %v422
  %v424 = vpop.f32.mrf.mxu0
  %v425 = vadd.f32 %v388, %v424
  %426 = vdwg.mxu0
  %v427 = vld [vmem:[%s4] sm:$0xff]
  %v428 = vld [vmem:[%s4 + $0x8] sm:$0xff]
  %v429 = vld [vmem:[%s4 + $0x10] sm:$0xff]
  %v430 = vld [vmem:[%s4 + $0x18] sm:$0xff]
  %vm431 = vcmask 261120
  %v433 = vsel %vm431, %v48, 0
  %435 = vmatpush.msra.mxu0 0.0
  %436 = vmatpush.msra.mxu0 0.0
  %437 = vmatpush.msra.mxu0 0.0
  %438 = vmatpush.msra.mxu0 0.0
  %439 = vmatpush.msra.mxu0 0.0
  %440 = vmatpush.msra.mxu0 0.0
  %441 = vmatpush.msra.mxu0 0.0
  %442 = vmatpush.msra.mxu0 0.0
  %443 = vmatpush.msra.mxu0 0.0
  %444 = vmatpush.msra.mxu0 0.0
  %445 = vmatpush.msra.mxu0 0.0
  %446 = vmatpush.msra.mxu0 0.0
  %v447 = vand.u32 %v430, 4294901760
  %448 = vmatpush.msra.mxu0 %v447
  %v449 = vand.u32 %v429, 4294901760
  %450 = vmatpush.msra.mxu0 %v449
  %v451 = vand.u32 %v428, 4294901760
  %452 = vmatpush.msra.mxu0 %v451
  %v453 = vand.u32 %v427, 4294901760
  %454 = vmatpush.msra.mxu0 %v453
  %v455 = vand.u32 %v433, 4294901760
  %v456 = vsub.f32 %v433, %v455
  %v457 = vand.u32 %v456, 4294901760
  %v458 = vsub.f32 %v456, %v457
  %v459 = vand.u32 %v458, 4294901760
  %460 = vmatmul.f32.gmra.mxu0 %v459
  %v461 = vpop.f32.mrf.mxu0
  %v462 = vadd.f32 0.0, %v461
  %463 = vdwg.mxu0
  %464 = vmatpush.msra.mxu0 0.0
  %465 = vmatpush.msra.mxu0 0.0
  %466 = vmatpush.msra.mxu0 0.0
  %467 = vmatpush.msra.mxu0 0.0
  %468 = vmatpush.msra.mxu0 0.0
  %469 = vmatpush.msra.mxu0 0.0
  %470 = vmatpush.msra.mxu0 0.0
  %471 = vmatpush.msra.mxu0 0.0
  %472 = vmatpush.msra.mxu0 0.0
  %473 = vmatpush.msra.mxu0 0.0
  %474 = vmatpush.msra.mxu0 0.0
  %475 = vmatpush.msra.mxu0 0.0
  %v476 = vand.u32 %v430, 4294901760
  %v477 = vsub.f32 %v430, %v476
  %v478 = vand.u32 %v477, 4294901760
  %v479 = vsub.f32 %v477, %v478
  %v480 = vand.u32 %v479, 4294901760
  %481 = vmatpush.msra.mxu0 %v480
  %v482 = vand.u32 %v429, 4294901760
  %v483 = vsub.f32 %v429, %v482
  %v484 = vand.u32 %v483, 4294901760
  %v485 = vsub.f32 %v483, %v484
  %v486 = vand.u32 %v485, 4294901760
  %487 = vmatpush.msra.mxu0 %v486
  %v488 = vand.u32 %v428, 4294901760
  %v489 = vsub.f32 %v428, %v488
  %v490 = vand.u32 %v489, 4294901760
  %v491 = vsub.f32 %v489, %v490
  %v492 = vand.u32 %v491, 4294901760
  %493 = vmatpush.msra.mxu0 %v492
  %v494 = vand.u32 %v427, 4294901760
  %v495 = vsub.f32 %v427, %v494
  %v496 = vand.u32 %v495, 4294901760
  %v497 = vsub.f32 %v495, %v496
  %v498 = vand.u32 %v497, 4294901760
  %499 = vmatpush.msra.mxu0 %v498
  %v500 = vand.u32 %v433, 4294901760
  %501 = vmatmul.f32.gmra.mxu0 %v500
  %v502 = vpop.f32.mrf.mxu0
  %v503 = vadd.f32 %v462, %v502
  %504 = vdwg.mxu0
  %505 = vmatpush.msra.mxu0 0.0
  %506 = vmatpush.msra.mxu0 0.0
  %507 = vmatpush.msra.mxu0 0.0
  %508 = vmatpush.msra.mxu0 0.0
  %509 = vmatpush.msra.mxu0 0.0
  %510 = vmatpush.msra.mxu0 0.0
  %511 = vmatpush.msra.mxu0 0.0
  %512 = vmatpush.msra.mxu0 0.0
  %513 = vmatpush.msra.mxu0 0.0
  %514 = vmatpush.msra.mxu0 0.0
  %515 = vmatpush.msra.mxu0 0.0
  %516 = vmatpush.msra.mxu0 0.0
  %v517 = vand.u32 %v430, 4294901760
  %v518 = vsub.f32 %v430, %v517
  %519 = vmatpush.msra.mxu0 %v518
  %v520 = vand.u32 %v429, 4294901760
  %v521 = vsub.f32 %v429, %v520
  %522 = vmatpush.msra.mxu0 %v521
  %v523 = vand.u32 %v428, 4294901760
  %v524 = vsub.f32 %v428, %v523
  %525 = vmatpush.msra.mxu0 %v524
  %v526 = vand.u32 %v427, 4294901760
  %v527 = vsub.f32 %v427, %v526
  %528 = vmatpush.msra.mxu0 %v527
  %v529 = vand.u32 %v433, 4294901760
  %v530 = vsub.f32 %v433, %v529
  %531 = vmatmul.f32.gmra.mxu0 %v530
  %v532 = vpop.f32.mrf.mxu0
  %v533 = vadd.f32 %v503, %v532
  %534 = vdwg.mxu0
  %535 = vmatpush.msra.mxu0 0.0
  %536 = vmatpush.msra.mxu0 0.0
  %537 = vmatpush.msra.mxu0 0.0
  %538 = vmatpush.msra.mxu0 0.0
  %539 = vmatpush.msra.mxu0 0.0
  %540 = vmatpush.msra.mxu0 0.0
  %541 = vmatpush.msra.mxu0 0.0
  %542 = vmatpush.msra.mxu0 0.0
  %543 = vmatpush.msra.mxu0 0.0
  %544 = vmatpush.msra.mxu0 0.0
  %545 = vmatpush.msra.mxu0 0.0
  %546 = vmatpush.msra.mxu0 0.0
  %v547 = vand.u32 %v430, 4294901760
  %548 = vmatpush.msra.mxu0 %v547
  %v549 = vand.u32 %v429, 4294901760
  %550 = vmatpush.msra.mxu0 %v549
  %v551 = vand.u32 %v428, 4294901760
  %552 = vmatpush.msra.mxu0 %v551
  %v553 = vand.u32 %v427, 4294901760
  %554 = vmatpush.msra.mxu0 %v553
  %v555 = vand.u32 %v433, 4294901760
  %v556 = vsub.f32 %v433, %v555
  %v557 = vand.u32 %v556, 4294901760
  %558 = vmatmul.f32.gmra.mxu0 %v557
  %v559 = vpop.f32.mrf.mxu0
  %v560 = vadd.f32 %v533, %v559
  %561 = vdwg.mxu0
  %562 = vmatpush.msra.mxu0 0.0
  %563 = vmatpush.msra.mxu0 0.0
  %564 = vmatpush.msra.mxu0 0.0
  %565 = vmatpush.msra.mxu0 0.0
  %566 = vmatpush.msra.mxu0 0.0
  %567 = vmatpush.msra.mxu0 0.0
  %568 = vmatpush.msra.mxu0 0.0
  %569 = vmatpush.msra.mxu0 0.0
  %570 = vmatpush.msra.mxu0 0.0
  %571 = vmatpush.msra.mxu0 0.0
  %572 = vmatpush.msra.mxu0 0.0
  %573 = vmatpush.msra.mxu0 0.0
  %v574 = vand.u32 %v430, 4294901760
  %v575 = vsub.f32 %v430, %v574
  %v576 = vand.u32 %v575, 4294901760
  %577 = vmatpush.msra.mxu0 %v576
  %v578 = vand.u32 %v429, 4294901760
  %v579 = vsub.f32 %v429, %v578
  %v580 = vand.u32 %v579, 4294901760
  %581 = vmatpush.msra.mxu0 %v580
  %v582 = vand.u32 %v428, 4294901760
  %v583 = vsub.f32 %v428, %v582
  %v584 = vand.u32 %v583, 4294901760
  %585 = vmatpush.msra.mxu0 %v584
  %v586 = vand.u32 %v427, 4294901760
  %v587 = vsub.f32 %v427, %v586
  %v588 = vand.u32 %v587, 4294901760
  %589 = vmatpush.msra.mxu0 %v588
  %v590 = vand.u32 %v433, 4294901760
  %591 = vmatmul.f32.gmra.mxu0 %v590
  %v592 = vpop.f32.mrf.mxu0
  %v593 = vadd.f32 %v560, %v592
  %594 = vdwg.mxu0
  %595 = vmatpush.msra.mxu0 0.0
  %596 = vmatpush.msra.mxu0 0.0
  %597 = vmatpush.msra.mxu0 0.0
  %598 = vmatpush.msra.mxu0 0.0
  %599 = vmatpush.msra.mxu0 0.0
  %600 = vmatpush.msra.mxu0 0.0
  %601 = vmatpush.msra.mxu0 0.0
  %602 = vmatpush.msra.mxu0 0.0
  %603 = vmatpush.msra.mxu0 0.0
  %604 = vmatpush.msra.mxu0 0.0
  %605 = vmatpush.msra.mxu0 0.0
  %606 = vmatpush.msra.mxu0 0.0
  %v607 = vand.u32 %v430, 4294901760
  %608 = vmatpush.msra.mxu0 %v607
  %v609 = vand.u32 %v429, 4294901760
  %610 = vmatpush.msra.mxu0 %v609
  %v611 = vand.u32 %v428, 4294901760
  %612 = vmatpush.msra.mxu0 %v611
  %v613 = vand.u32 %v427, 4294901760
  %614 = vmatpush.msra.mxu0 %v613
  %v615 = vand.u32 %v433, 4294901760
  %616 = vmatmul.f32.gmra.mxu0 %v615
  %v617 = vpop.f32.mrf.mxu0
  %v618 = vadd.f32 %v593, %v617
  %619 = vdwg.mxu0
  %v620 = vld [vmem:[%s0] sm:$0xff]
  %v621 = vld [vmem:[%s0 + $0x8] sm:$0xff]
  %v623 = vrot.slane %v618, 1
  %v624 = vperm.slane %v618, 0
  %v625 = vperm.slane %v623, 0
  %v628 = vadd.f32 %v620, %v624
  %v629 = vadd.f32 %v621, %v625
  %v630 = vtanh.pop %v628
  %v631 = vtanh.pop %v629
  %v632 = vld [vmem:[%s5] sm:$0x1]
  %v634 = vperm.slane %v632, 0
  %v636 = vmul.f32 %v630, %v634
  %v637 = vmul.f32 %v631, %v634
  %v638 = vsel %vm431, %v636, 0.0
  %639 = vadd.xlane.f32.xlu0 %v638
  %v640 = vpop.xlane.xlu0 %639
  %v641 = vsel %vm431, %v637, 0.0
  %642 = vadd.xlane.f32.xlu0 %v641
  %v643 = vpop.xlane.xlu0 %642
  %v646 = vperm.slane %v640, %v45
  %v647 = vperm.slane %v643, %v45
  %vm648 = vcmask 1041409
  %v649 = vsel %vm648, %v647, %v646
  %vm651 = vcmask 58368
  %v652 = vsel %vm651, %v649, -inf
  %653 = vmax.xlane.f32.xlu0 %v652
  %v654 = vpop.xlane.xlu0 %653
  %v656 = vperm.slane %v654, 0
  %v657 = vperm.slane %v654, 1
  %v660 = vsub.f32 %v640, %v656
  %v661 = vsub.f32 %v643, %v657
  %v662 = vmul.f32 %v660, 1.442695
  %v663 = vpow.pop %v662
  %v664 = vmul.f32 %v661, 1.442695
  %v665 = vpow.pop %v664
  %668 = vset.pattern.permute.xlu0 0
  %669 = vperm.xlu0 %668, %v663
  %v670 = vpop.permute.xlu0 %669
  %671 = vset.pattern.permute.xlu0 0
  %672 = vperm.xlu0 %671, %v665
  %v673 = vpop.permute.xlu0 %672
  %v674 = vperm.slane %v670, %v45
  %v675 = vperm.slane %v673, %v45
  %v676 = vsel %vm648, %v675, %v674
  %v678 = vsel %vm651, %v676, 0.0
  %679 = vadd.xlane.f32.xlu0 %v678
  %v680 = vpop.xlane.xlu0 %679
  %v681 = vrcp.pop %v680
  %v682 = vmul.f32 %v680, %v681
  %v683 = vsub.f32 1.0, %v682
  %v684 = vmul.f32 %v681, %v683
  %v685 = vadd.f32 %v681, %v684
  %vm686 = vweird.f32 %v680
  %vm687 = vweird.f32 %v681
  %vm688 = vmor %vm686, %vm687
  %v689 = vsel %vm688, %v681, %v685
  %v690 = vand.u32 2147483647, %v680
  %vm691 = vcmp.eq.f32.partialorder %v690, 8.507059e+37
  %v692 = vand.u32 %v680, 2147483648
  %v693 = vor.u32 1.1754944e-38, %v692
  %v694 = vsel %vm691, %v693, %v689
  %v696 = vperm.slane %v694, 0
  %v697 = vperm.slane %v694, 1
  %v700 = vmul.f32 %v663, %v696
  %v701 = vmul.f32 %v665, %v697
  %v702 = vld [vmem:[%s1] sm:$0xff]
  %v703 = vld [vmem:[%s1 + $0x8] sm:$0xff]
  %705 = vset.pattern.permute.xlu0 0
  %706 = vperm.xlu0 %705, %v700
  %v707 = vpop.permute.xlu0 %706
  %710 = vset.pattern.permute.xlu0 0
  %711 = vperm.xlu0 %710, %v701
  %v712 = vpop.permute.xlu0 %711
  %v714 = vmul.f32 %v707, %v702
  %v715 = vmul.f32 %v712, %v703
  %v716 = vsel %vm431, %v714, 0.0
  %v717 = vrot.slane %v716, 4
  %v718 = vadd.f32 %v716, %v717
  %v719 = vrot.slane %v718, 2
  %v720 = vadd.f32 %v718, %v719
  %v721 = vrot.slane %v720, 1
  %v722 = vadd.f32 %v720, %v721
  %v723 = vsel %vm431, %v715, 0.0
  %v724 = vrot.slane %v723, 4
  %v725 = vadd.f32 %v723, %v724
  %v726 = vrot.slane %v725, 2
  %v727 = vadd.f32 %v725, %v726
  %v728 = vrot.slane %v727, 1
  %v729 = vadd.f32 %v727, %v728
  %v730 = vld [vmem:[%s6] sm:$0xff]
  %v731 = vld [vmem:[%s6 + $0x8] sm:$0xff]
  %v732 = vld [vmem:[%s7] sm:$0xff]
  %v733 = vld [vmem:[%s7 + $0x8] sm:$0xff]
  %v734 = vld [vmem:[%s7 + $0x10] sm:$0xff]
  %v735 = vld [vmem:[%s7 + $0x18] sm:$0xff]
  %v738 = vsel %vm648, %v729, %v722
  %v739 = vsel %vm431, %v738, 0
  %741 = vmatpush.msra.mxu0 0.0
  %742 = vmatpush.msra.mxu0 0.0
  %743 = vmatpush.msra.mxu0 0.0
  %744 = vmatpush.msra.mxu0 0.0
  %745 = vmatpush.msra.mxu0 0.0
  %746 = vmatpush.msra.mxu0 0.0
  %747 = vmatpush.msra.mxu0 0.0
  %748 = vmatpush.msra.mxu0 0.0
  %749 = vmatpush.msra.mxu0 0.0
  %750 = vmatpush.msra.mxu0 0.0
  %751 = vmatpush.msra.mxu0 0.0
  %752 = vmatpush.msra.mxu0 0.0
  %v753 = vand.u32 %v735, 4294901760
  %754 = vmatpush.msra.mxu0 %v753
  %v755 = vand.u32 %v734, 4294901760
  %756 = vmatpush.msra.mxu0 %v755
  %v757 = vand.u32 %v733, 4294901760
  %758 = vmatpush.msra.mxu0 %v757
  %v759 = vand.u32 %v732, 4294901760
  %760 = vmatpush.msra.mxu0 %v759
  %v761 = vand.u32 %v739, 4294901760
  %v762 = vsub.f32 %v739, %v761
  %v763 = vand.u32 %v762, 4294901760
  %v764 = vsub.f32 %v762, %v763
  %v765 = vand.u32 %v764, 4294901760
  %766 = vmatmul.f32.gmra.mxu0 %v765
  %v767 = vpop.f32.mrf.mxu0
  %v768 = vadd.f32 0.0, %v767
  %769 = vdwg.mxu0
  %770 = vmatpush.msra.mxu0 0.0
  %771 = vmatpush.msra.mxu0 0.0
  %772 = vmatpush.msra.mxu0 0.0
  %773 = vmatpush.msra.mxu0 0.0
  %774 = vmatpush.msra.mxu0 0.0
  %775 = vmatpush.msra.mxu0 0.0
  %776 = vmatpush.msra.mxu0 0.0
  %777 = vmatpush.msra.mxu0 0.0
  %778 = vmatpush.msra.mxu0 0.0
  %779 = vmatpush.msra.mxu0 0.0
  %780 = vmatpush.msra.mxu0 0.0
  %781 = vmatpush.msra.mxu0 0.0
  %v782 = vand.u32 %v735, 4294901760
  %v783 = vsub.f32 %v735, %v782
  %v784 = vand.u32 %v783, 4294901760
  %v785 = vsub.f32 %v783, %v784
  %v786 = vand.u32 %v785, 4294901760
  %787 = vmatpush.msra.mxu0 %v786
  %v788 = vand.u32 %v734, 4294901760
  %v789 = vsub.f32 %v734, %v788
  %v790 = vand.u32 %v789, 4294901760
  %v791 = vsub.f32 %v789, %v790
  %v792 = vand.u32 %v791, 4294901760
  %793 = vmatpush.msra.mxu0 %v792
  %v794 = vand.u32 %v733, 4294901760
  %v795 = vsub.f32 %v733, %v794
  %v796 = vand.u32 %v795, 4294901760
  %v797 = vsub.f32 %v795, %v796
  %v798 = vand.u32 %v797, 4294901760
  %799 = vmatpush.msra.mxu0 %v798
  %v800 = vand.u32 %v732, 4294901760
  %v801 = vsub.f32 %v732, %v800
  %v802 = vand.u32 %v801, 4294901760
  %v803 = vsub.f32 %v801, %v802
  %v804 = vand.u32 %v803, 4294901760
  %805 = vmatpush.msra.mxu0 %v804
  %v806 = vand.u32 %v739, 4294901760
  %807 = vmatmul.f32.gmra.mxu0 %v806
  %v808 = vpop.f32.mrf.mxu0
  %v809 = vadd.f32 %v768, %v808
  %810 = vdwg.mxu0
  %811 = vmatpush.msra.mxu0 0.0
  %812 = vmatpush.msra.mxu0 0.0
  %813 = vmatpush.msra.mxu0 0.0
  %814 = vmatpush.msra.mxu0 0.0
  %815 = vmatpush.msra.mxu0 0.0
  %816 = vmatpush.msra.mxu0 0.0
  %817 = vmatpush.msra.mxu0 0.0
  %818 = vmatpush.msra.mxu0 0.0
  %819 = vmatpush.msra.mxu0 0.0
  %820 = vmatpush.msra.mxu0 0.0
  %821 = vmatpush.msra.mxu0 0.0
  %822 = vmatpush.msra.mxu0 0.0
  %v823 = vand.u32 %v735, 4294901760
  %v824 = vsub.f32 %v735, %v823
  %825 = vmatpush.msra.mxu0 %v824
  %v826 = vand.u32 %v734, 4294901760
  %v827 = vsub.f32 %v734, %v826
  %828 = vmatpush.msra.mxu0 %v827
  %v829 = vand.u32 %v733, 4294901760
  %v830 = vsub.f32 %v733, %v829
  %831 = vmatpush.msra.mxu0 %v830
  %v832 = vand.u32 %v732, 4294901760
  %v833 = vsub.f32 %v732, %v832
  %834 = vmatpush.msra.mxu0 %v833
  %v835 = vand.u32 %v739, 4294901760
  %v836 = vsub.f32 %v739, %v835
  %837 = vmatmul.f32.gmra.mxu0 %v836
  %v838 = vpop.f32.mrf.mxu0
  %v839 = vadd.f32 %v809, %v838
  %840 = vdwg.mxu0
  %841 = vmatpush.msra.mxu0 0.0
  %842 = vmatpush.msra.mxu0 0.0
  %843 = vmatpush.msra.mxu0 0.0
  %844 = vmatpush.msra.mxu0 0.0
  %845 = vmatpush.msra.mxu0 0.0
  %846 = vmatpush.msra.mxu0 0.0
  %847 = vmatpush.msra.mxu0 0.0
  %848 = vmatpush.msra.mxu0 0.0
  %849 = vmatpush.msra.mxu0 0.0
  %850 = vmatpush.msra.mxu0 0.0
  %851 = vmatpush.msra.mxu0 0.0
  %852 = vmatpush.msra.mxu0 0.0
  %v853 = vand.u32 %v735, 4294901760
  %854 = vmatpush.msra.mxu0 %v853
  %v855 = vand.u32 %v734, 4294901760
  %856 = vmatpush.msra.mxu0 %v855
  %v857 = vand.u32 %v733, 4294901760
  %858 = vmatpush.msra.mxu0 %v857
  %v859 = vand.u32 %v732, 4294901760
  %860 = vmatpush.msra.mxu0 %v859
  %v861 = vand.u32 %v739, 4294901760
  %v862 = vsub.f32 %v739, %v861
  %v863 = vand.u32 %v862, 4294901760
  %864 = vmatmul.f32.gmra.mxu0 %v863
  %v865 = vpop.f32.mrf.mxu0
  %v866 = vadd.f32 %v839, %v865
  %867 = vdwg.mxu0
  %868 = vmatpush.msra.mxu0 0.0
  %869 = vmatpush.msra.mxu0 0.0
  %870 = vmatpush.msra.mxu0 0.0
  %871 = vmatpush.msra.mxu0 0.0
  %872 = vmatpush.msra.mxu0 0.0
  %873 = vmatpush.msra.mxu0 0.0
  %874 = vmatpush.msra.mxu0 0.0
  %875 = vmatpush.msra.mxu0 0.0
  %876 = vmatpush.msra.mxu0 0.0
  %877 = vmatpush.msra.mxu0 0.0
  %878 = vmatpush.msra.mxu0 0.0
  %879 = vmatpush.msra.mxu0 0.0
  %v880 = vand.u32 %v735, 4294901760
  %v881 = vsub.f32 %v735, %v880
  %v882 = vand.u32 %v881, 4294901760
  %883 = vmatpush.msra.mxu0 %v882
  %v884 = vand.u32 %v734, 4294901760
  %v885 = vsub.f32 %v734, %v884
  %v886 = vand.u32 %v885, 4294901760
  %887 = vmatpush.msra.mxu0 %v886
  %v888 = vand.u32 %v733, 4294901760
  %v889 = vsub.f32 %v733, %v888
  %v890 = vand.u32 %v889, 4294901760
  %891 = vmatpush.msra.mxu0 %v890
  %v892 = vand.u32 %v732, 4294901760
  %v893 = vsub.f32 %v732, %v892
  %v894 = vand.u32 %v893, 4294901760
  %895 = vmatpush.msra.mxu0 %v894
  %v896 = vand.u32 %v739, 4294901760
  %897 = vmatmul.f32.gmra.mxu0 %v896
  %v898 = vpop.f32.mrf.mxu0
  %v899 = vadd.f32 %v866, %v898
  %900 = vdwg.mxu0
  %901 = vmatpush.msra.mxu0 0.0
  %902 = vmatpush.msra.mxu0 0.0
  %903 = vmatpush.msra.mxu0 0.0
  %904 = vmatpush.msra.mxu0 0.0
  %905 = vmatpush.msra.mxu0 0.0
  %906 = vmatpush.msra.mxu0 0.0
  %907 = vmatpush.msra.mxu0 0.0
  %908 = vmatpush.msra.mxu0 0.0
  %909 = vmatpush.msra.mxu0 0.0
  %910 = vmatpush.msra.mxu0 0.0
  %911 = vmatpush.msra.mxu0 0.0
  %912 = vmatpush.msra.mxu0 0.0
  %v913 = vand.u32 %v735, 4294901760
  %914 = vmatpush.msra.mxu0 %v913
  %v915 = vand.u32 %v734, 4294901760
  %916 = vmatpush.msra.mxu0 %v915
  %v917 = vand.u32 %v733, 4294901760
  %918 = vmatpush.msra.mxu0 %v917
  %v919 = vand.u32 %v732, 4294901760
  %920 = vmatpush.msra.mxu0 %v919
  %v921 = vand.u32 %v739, 4294901760
  %922 = vmatmul.f32.gmra.mxu0 %v921
  %v923 = vpop.f32.mrf.mxu0
  %v924 = vadd.f32 %v899, %v923
  %925 = vdwg.mxu0
  %vm926 = vcmask 130048
  %v928 = vsel %vm926, %v425, 0
  %930 = vmatpush.msra.mxu0 0.0
  %931 = vmatpush.msra.mxu0 0.0
  %932 = vmatpush.msra.mxu0 0.0
  %933 = vmatpush.msra.mxu0 0.0
  %934 = vmatpush.msra.mxu0 0.0
  %935 = vmatpush.msra.mxu0 0.0
  %936 = vmatpush.msra.mxu0 0.0
  %937 = vmatpush.msra.mxu0 0.0
  %938 = vmatpush.msra.mxu0 0.0
  %939 = vmatpush.msra.mxu0 0.0
  %940 = vmatpush.msra.mxu0 0.0
  %941 = vmatpush.msra.mxu0 0.0
  %942 = vmatpush.msra.mxu0 0.0
  %943 = vmatpush.msra.mxu0 0.0
  %v944 = vand.u32 %v731, 4294901760
  %945 = vmatpush.msra.mxu0 %v944
  %v946 = vand.u32 %v730, 4294901760
  %947 = vmatpush.msra.mxu0 %v946
  %v948 = vand.u32 %v928, 4294901760
  %v949 = vsub.f32 %v928, %v948
  %v950 = vand.u32 %v949, 4294901760
  %v951 = vsub.f32 %v949, %v950
  %v952 = vand.u32 %v951, 4294901760
  %953 = vmatmul.f32.gmra.mxu0 %v952
  %v954 = vpop.f32.mrf.mxu0
  %v955 = vadd.f32 %v924, %v954
  %956 = vdwg.mxu0
  %957 = vmatpush.msra.mxu0 0.0
  %958 = vmatpush.msra.mxu0 0.0
  %959 = vmatpush.msra.mxu0 0.0
  %960 = vmatpush.msra.mxu0 0.0
  %961 = vmatpush.msra.mxu0 0.0
  %962 = vmatpush.msra.mxu0 0.0
  %963 = vmatpush.msra.mxu0 0.0
  %964 = vmatpush.msra.mxu0 0.0
  %965 = vmatpush.msra.mxu0 0.0
  %966 = vmatpush.msra.mxu0 0.0
  %967 = vmatpush.msra.mxu0 0.0
  %968 = vmatpush.msra.mxu0 0.0
  %969 = vmatpush.msra.mxu0 0.0
  %970 = vmatpush.msra.mxu0 0.0
  %v971 = vand.u32 %v731, 4294901760
  %v972 = vsub.f32 %v731, %v971
  %v973 = vand.u32 %v972, 4294901760
  %v974 = vsub.f32 %v972, %v973
  %v975 = vand.u32 %v974, 4294901760
  %976 = vmatpush.msra.mxu0 %v975
  %v977 = vand.u32 %v730, 4294901760
  %v978 = vsub.f32 %v730, %v977
  %v979 = vand.u32 %v978, 4294901760
  %v980 = vsub.f32 %v978, %v979
  %v981 = vand.u32 %v980, 4294901760
  %982 = vmatpush.msra.mxu0 %v981
  %v983 = vand.u32 %v928, 4294901760
  %984 = vmatmul.f32.gmra.mxu0 %v983
  %v985 = vpop.f32.mrf.mxu0
  %v986 = vadd.f32 %v955, %v985
  %987 = vdwg.mxu0
  %988 = vmatpush.msra.mxu0 0.0
  %989 = vmatpush.msra.mxu0 0.0
  %990 = vmatpush.msra.mxu0 0.0
  %991 = vmatpush.msra.mxu0 0.0
  %992 = vmatpush.msra.mxu0 0.0
  %993 = vmatpush.msra.mxu0 0.0
  %994 = vmatpush.msra.mxu0 0.0
  %995 = vmatpush.msra.mxu0 0.0
  %996 = vmatpush.msra.mxu0 0.0
  %997 = vmatpush.msra.mxu0 0.0
  %998 = vmatpush.msra.mxu0 0.0
  %999 = vmatpush.msra.mxu0 0.0
  %1000 = vmatpush.msra.mxu0 0.0
  %1001 = vmatpush.msra.mxu0 0.0
  %v1002 = vand.u32 %v731, 4294901760
  %v1003 = vsub.f32 %v731, %v1002
  %1004 = vmatpush.msra.mxu0 %v1003
  %v1005 = vand.u32 %v730, 4294901760
  %v1006 = vsub.f32 %v730, %v1005
  %1007 = vmatpush.msra.mxu0 %v1006
  %v1008 = vand.u32 %v928, 4294901760
  %v1009 = vsub.f32 %v928, %v1008
  %1010 = vmatmul.f32.gmra.mxu0 %v1009
  %v1011 = vpop.f32.mrf.mxu0
  %v1012 = vadd.f32 %v986, %v1011
  %1013 = vdwg.mxu0
  %1014 = vmatpush.msra.mxu0 0.0
  %1015 = vmatpush.msra.mxu0 0.0
  %1016 = vmatpush.msra.mxu0 0.0
  %1017 = vmatpush.msra.mxu0 0.0
  %1018 = vmatpush.msra.mxu0 0.0
  %1019 = vmatpush.msra.mxu0 0.0
  %1020 = vmatpush.msra.mxu0 0.0
  %1021 = vmatpush.msra.mxu0 0.0
  %1022 = vmatpush.msra.mxu0 0.0
  %1023 = vmatpush.msra.mxu0 0.0
  %1024 = vmatpush.msra.mxu0 0.0
  %1025 = vmatpush.msra.mxu0 0.0
  %1026 = vmatpush.msra.mxu0 0.0
  %1027 = vmatpush.msra.mxu0 0.0
  %v1028 = vand.u32 %v731, 4294901760
  %1029 = vmatpush.msra.mxu0 %v1028
  %v1030 = vand.u32 %v730, 4294901760
  %1031 = vmatpush.msra.mxu0 %v1030
  %v1032 = vand.u32 %v928, 4294901760
  %v1033 = vsub.f32 %v928, %v1032
  %v1034 = vand.u32 %v1033, 4294901760
  %1035 = vmatmul.f32.gmra.mxu0 %v1034
  %v1036 = vpop.f32.mrf.mxu0
  %v1037 = vadd.f32 %v1012, %v1036
  %1038 = vdwg.mxu0
  %1039 = vmatpush.msra.mxu0 0.0
  %1040 = vmatpush.msra.mxu0 0.0
  %1041 = vmatpush.msra.mxu0 0.0
  %1042 = vmatpush.msra.mxu0 0.0
  %1043 = vmatpush.msra.mxu0 0.0
  %1044 = vmatpush.msra.mxu0 0.0
  %1045 = vmatpush.msra.mxu0 0.0
  %1046 = vmatpush.msra.mxu0 0.0
  %1047 = vmatpush.msra.mxu0 0.0
  %1048 = vmatpush.msra.mxu0 0.0
  %1049 = vmatpush.msra.mxu0 0.0
  %1050 = vmatpush.msra.mxu0 0.0
  %1051 = vmatpush.msra.mxu0 0.0
  %1052 = vmatpush.msra.mxu0 0.0
  %v1053 = vand.u32 %v731, 4294901760
  %v1054 = vsub.f32 %v731, %v1053
  %v1055 = vand.u32 %v1054, 4294901760
  %1056 = vmatpush.msra.mxu0 %v1055
  %v1057 = vand.u32 %v730, 4294901760
  %v1058 = vsub.f32 %v730, %v1057
  %v1059 = vand.u32 %v1058, 4294901760
  %1060 = vmatpush.msra.mxu0 %v1059
  %v1061 = vand.u32 %v928, 4294901760
  %1062 = vmatmul.f32.gmra.mxu0 %v1061
  %v1063 = vpop.f32.mrf.mxu0
  %v1064 = vadd.f32 %v1037, %v1063
  %1065 = vdwg.mxu0
  %1066 = vmatpush.msra.mxu0 0.0
  %1067 = vmatpush.msra.mxu0 0.0
  %1068 = vmatpush.msra.mxu0 0.0
  %1069 = vmatpush.msra.mxu0 0.0
  %1070 = vmatpush.msra.mxu0 0.0
  %1071 = vmatpush.msra.mxu0 0.0
  %1072 = vmatpush.msra.mxu0 0.0
  %1073 = vmatpush.msra.mxu0 0.0
  %1074 = vmatpush.msra.mxu0 0.0
  %1075 = vmatpush.msra.mxu0 0.0
  %1076 = vmatpush.msra.mxu0 0.0
  %1077 = vmatpush.msra.mxu0 0.0
  %1078 = vmatpush.msra.mxu0 0.0
  %1079 = vmatpush.msra.mxu0 0.0
  %v1080 = vand.u32 %v731, 4294901760
  %1081 = vmatpush.msra.mxu0 %v1080
  %v1082 = vand.u32 %v730, 4294901760
  %1083 = vmatpush.msra.mxu0 %v1082
  %v1084 = vand.u32 %v928, 4294901760
  %1085 = vmatmul.f32.gmra.mxu0 %v1084
  %v1086 = vpop.f32.mrf.mxu0
  %v1087 = vadd.f32 %v1064, %v1086
  %1088 = vdwg.mxu0
  %v1089 = vld [vmem:[%s9] sm:$0x1]
  %v1091 = vperm.slane %v1089, 0
  %v1093 = vadd.f32 %v1087, %v1091
  %v1094 = vld [vmem:[%s8] sm:$0xff]
  %v1095 = vld [vmem:[%s8 + $0x8] sm:$0xff]
  %v1096 = vld [vmem:[%s8 + $0x10] sm:$0xff]
  %v1097 = vld [vmem:[%s8 + $0x18] sm:$0xff]
  %v1098 = vld [vmem:[%s10] sm:$0x1]
  %v1100 = vperm.slane %v1098, 0
  %1102 = vmatpush.msra.mxu0 0.0
  %1103 = vmatpush.msra.mxu0 0.0
  %1104 = vmatpush.msra.mxu0 0.0
  %1105 = vmatpush.msra.mxu0 0.0
  %1106 = vmatpush.msra.mxu0 0.0
  %1107 = vmatpush.msra.mxu0 0.0
  %1108 = vmatpush.msra.mxu0 0.0
  %1109 = vmatpush.msra.mxu0 0.0
  %1110 = vmatpush.msra.mxu0 0.0
  %1111 = vmatpush.msra.mxu0 0.0
  %1112 = vmatpush.msra.mxu0 0.0
  %1113 = vmatpush.msra.mxu0 0.0
  %v1114 = vand.u32 %v1097, 4294901760
  %1115 = vmatpush.msra.mxu0 %v1114
  %v1116 = vand.u32 %v1096, 4294901760
  %1117 = vmatpush.msra.mxu0 %v1116
  %v1118 = vand.u32 %v1095, 4294901760
  %1119 = vmatpush.msra.mxu0 %v1118
  %v1120 = vand.u32 %v1094, 4294901760
  %1121 = vmatpush.msra.mxu0 %v1120
  %v1122 = vand.u32 %v433, 4294901760
  %v1123 = vsub.f32 %v433, %v1122
  %v1124 = vand.u32 %v1123, 4294901760
  %v1125 = vsub.f32 %v1123, %v1124
  %v1126 = vand.u32 %v1125, 4294901760
  %1127 = vmatmul.f32.gmra.mxu0 %v1126
  %v1128 = vpop.f32.mrf.mxu0
  %v1129 = vadd.f32 %v1100, %v1128
  %1130 = vdwg.mxu0
  %1131 = vmatpush.msra.mxu0 0.0
  %1132 = vmatpush.msra.mxu0 0.0
  %1133 = vmatpush.msra.mxu0 0.0
  %1134 = vmatpush.msra.mxu0 0.0
  %1135 = vmatpush.msra.mxu0 0.0
  %1136 = vmatpush.msra.mxu0 0.0
  %1137 = vmatpush.msra.mxu0 0.0
  %1138 = vmatpush.msra.mxu0 0.0
  %1139 = vmatpush.msra.mxu0 0.0
  %1140 = vmatpush.msra.mxu0 0.0
  %1141 = vmatpush.msra.mxu0 0.0
  %1142 = vmatpush.msra.mxu0 0.0
  %v1143 = vand.u32 %v1097, 4294901760
  %v1144 = vsub.f32 %v1097, %v1143
  %v1145 = vand.u32 %v1144, 4294901760
  %v1146 = vsub.f32 %v1144, %v1145
  %v1147 = vand.u32 %v1146, 4294901760
  %1148 = vmatpush.msra.mxu0 %v1147
  %v1149 = vand.u32 %v1096, 4294901760
  %v1150 = vsub.f32 %v1096, %v1149
  %v1151 = vand.u32 %v1150, 4294901760
  %v1152 = vsub.f32 %v1150, %v1151
  %v1153 = vand.u32 %v1152, 4294901760
  %1154 = vmatpush.msra.mxu0 %v1153
  %v1155 = vand.u32 %v1095, 4294901760
  %v1156 = vsub.f32 %v1095, %v1155
  %v1157 = vand.u32 %v1156, 4294901760
  %v1158 = vsub.f32 %v1156, %v1157
  %v1159 = vand.u32 %v1158, 4294901760
  %1160 = vmatpush.msra.mxu0 %v1159
  %v1161 = vand.u32 %v1094, 4294901760
  %v1162 = vsub.f32 %v1094, %v1161
  %v1163 = vand.u32 %v1162, 4294901760
  %v1164 = vsub.f32 %v1162, %v1163
  %v1165 = vand.u32 %v1164, 4294901760
  %1166 = vmatpush.msra.mxu0 %v1165
  %v1167 = vand.u32 %v433, 4294901760
  %1168 = vmatmul.f32.gmra.mxu0 %v1167
  %v1169 = vpop.f32.mrf.mxu0
  %v1170 = vadd.f32 %v1129, %v1169
  %1171 = vdwg.mxu0
  %1172 = vmatpush.msra.mxu0 0.0
  %1173 = vmatpush.msra.mxu0 0.0
  %1174 = vmatpush.msra.mxu0 0.0
  %1175 = vmatpush.msra.mxu0 0.0
  %1176 = vmatpush.msra.mxu0 0.0
  %1177 = vmatpush.msra.mxu0 0.0
  %1178 = vmatpush.msra.mxu0 0.0
  %1179 = vmatpush.msra.mxu0 0.0
  %1180 = vmatpush.msra.mxu0 0.0
  %1181 = vmatpush.msra.mxu0 0.0
  %1182 = vmatpush.msra.mxu0 0.0
  %1183 = vmatpush.msra.mxu0 0.0
  %v1184 = vand.u32 %v1097, 4294901760
  %v1185 = vsub.f32 %v1097, %v1184
  %1186 = vmatpush.msra.mxu0 %v1185
  %v1187 = vand.u32 %v1096, 4294901760
  %v1188 = vsub.f32 %v1096, %v1187
  %1189 = vmatpush.msra.mxu0 %v1188
  %v1190 = vand.u32 %v1095, 4294901760
  %v1191 = vsub.f32 %v1095, %v1190
  %1192 = vmatpush.msra.mxu0 %v1191
  %v1193 = vand.u32 %v1094, 4294901760
  %v1194 = vsub.f32 %v1094, %v1193
  %1195 = vmatpush.msra.mxu0 %v1194
  %v1196 = vand.u32 %v433, 4294901760
  %v1197 = vsub.f32 %v433, %v1196
  %1198 = vmatmul.f32.gmra.mxu0 %v1197
  %v1199 = vpop.f32.mrf.mxu0
  %v1200 = vadd.f32 %v1170, %v1199
  %1201 = vdwg.mxu0
  %1202 = vmatpush.msra.mxu0 0.0
  %1203 = vmatpush.msra.mxu0 0.0
  %1204 = vmatpush.msra.mxu0 0.0
  %1205 = vmatpush.msra.mxu0 0.0
  %1206 = vmatpush.msra.mxu0 0.0
  %1207 = vmatpush.msra.mxu0 0.0
  %1208 = vmatpush.msra.mxu0 0.0
  %1209 = vmatpush.msra.mxu0 0.0
  %1210 = vmatpush.msra.mxu0 0.0
  %1211 = vmatpush.msra.mxu0 0.0
  %1212 = vmatpush.msra.mxu0 0.0
  %1213 = vmatpush.msra.mxu0 0.0
  %v1214 = vand.u32 %v1097, 4294901760
  %1215 = vmatpush.msra.mxu0 %v1214
  %v1216 = vand.u32 %v1096, 4294901760
  %1217 = vmatpush.msra.mxu0 %v1216
  %v1218 = vand.u32 %v1095, 4294901760
  %1219 = vmatpush.msra.mxu0 %v1218
  %v1220 = vand.u32 %v1094, 4294901760
  %1221 = vmatpush.msra.mxu0 %v1220
  %v1222 = vand.u32 %v433, 4294901760
  %v1223 = vsub.f32 %v433, %v1222
  %v1224 = vand.u32 %v1223, 4294901760
  %1225 = vmatmul.f32.gmra.mxu0 %v1224
  %v1226 = vpop.f32.mrf.mxu0
  %v1227 = vadd.f32 %v1200, %v1226
  %1228 = vdwg.mxu0
  %1229 = vmatpush.msra.mxu0 0.0
  %1230 = vmatpush.msra.mxu0 0.0
  %1231 = vmatpush.msra.mxu0 0.0
  %1232 = vmatpush.msra.mxu0 0.0
  %1233 = vmatpush.msra.mxu0 0.0
  %1234 = vmatpush.msra.mxu0 0.0
  %1235 = vmatpush.msra.mxu0 0.0
  %1236 = vmatpush.msra.mxu0 0.0
  %1237 = vmatpush.msra.mxu0 0.0
  %1238 = vmatpush.msra.mxu0 0.0
  %1239 = vmatpush.msra.mxu0 0.0
  %1240 = vmatpush.msra.mxu0 0.0
  %v1241 = vand.u32 %v1097, 4294901760
  %v1242 = vsub.f32 %v1097, %v1241
  %v1243 = vand.u32 %v1242, 4294901760
  %1244 = vmatpush.msra.mxu0 %v1243
  %v1245 = vand.u32 %v1096, 4294901760
  %v1246 = vsub.f32 %v1096, %v1245
  %v1247 = vand.u32 %v1246, 4294901760
  %1248 = vmatpush.msra.mxu0 %v1247
  %v1249 = vand.u32 %v1095, 4294901760
  %v1250 = vsub.f32 %v1095, %v1249
  %v1251 = vand.u32 %v1250, 4294901760
  %1252 = vmatpush.msra.mxu0 %v1251
  %v1253 = vand.u32 %v1094, 4294901760
  %v1254 = vsub.f32 %v1094, %v1253
  %v1255 = vand.u32 %v1254, 4294901760
  %1256 = vmatpush.msra.mxu0 %v1255
  %v1257 = vand.u32 %v433, 4294901760
  %1258 = vmatmul.f32.gmra.mxu0 %v1257
  %v1259 = vpop.f32.mrf.mxu0
  %v1260 = vadd.f32 %v1227, %v1259
  %1261 = vdwg.mxu0
  %1262 = vmatpush.msra.mxu0 0.0
  %1263 = vmatpush.msra.mxu0 0.0
  %1264 = vmatpush.msra.mxu0 0.0
  %1265 = vmatpush.msra.mxu0 0.0
  %1266 = vmatpush.msra.mxu0 0.0
  %1267 = vmatpush.msra.mxu0 0.0
  %1268 = vmatpush.msra.mxu0 0.0
  %1269 = vmatpush.msra.mxu0 0.0
  %1270 = vmatpush.msra.mxu0 0.0
  %1271 = vmatpush.msra.mxu0 0.0
  %1272 = vmatpush.msra.mxu0 0.0
  %1273 = vmatpush.msra.mxu0 0.0
  %v1274 = vand.u32 %v1097, 4294901760
  %1275 = vmatpush.msra.mxu0 %v1274
  %v1276 = vand.u32 %v1096, 4294901760
  %1277 = vmatpush.msra.mxu0 %v1276
  %v1278 = vand.u32 %v1095, 4294901760
  %1279 = vmatpush.msra.mxu0 %v1278
  %v1280 = vand.u32 %v1094, 4294901760
  %1281 = vmatpush.msra.mxu0 %v1280
  %v1282 = vand.u32 %v433, 4294901760
  %1283 = vmatmul.f32.gmra.mxu0 %v1282
  %v1284 = vpop.f32.mrf.mxu0
  %v1285 = vadd.f32 %v1260, %v1284
  %1286 = vdwg.mxu0
  %v1287 = vadd.f32 %v1093, %v1285
  %v1288 = vxor.u32 %v1287, 2147483648
  %v1289 = vmul.f32 %v1288, 1.442695
  %v1290 = vpow.pop %v1289
  %v1291 = vadd.f32 %v1290, 1.0
  %v1292 = vrcp.pop %v1291
  %v1293 = vmul.f32 %v1291, %v1292
  %v1294 = vsub.f32 1.0, %v1293
  %v1295 = vmul.f32 %v1292, %v1294
  %v1296 = vadd.f32 %v1292, %v1295
  %vm1297 = vweird.f32 %v1291
  %vm1298 = vweird.f32 %v1292
  %vm1299 = vmor %vm1297, %vm1298
  %v1300 = vsel %vm1299, %v1292, %v1296
  %v1301 = vand.u32 2147483647, %v1291
  %vm1302 = vcmp.eq.f32.partialorder %v1301, 8.507059e+37
  %v1303 = vand.u32 %v1291, 2147483648
  %v1304 = vor.u32 1.1754944e-38, %v1303
  %v1305 = vsel %vm1302, %v1304, %v1300
  %v1306 = vmul.f32 1.0, %v1305
  %1308 = vrot.lane.b32.xlu0 %v1285, 64
  %v1309 = vpop.permute.xlu0 %1308
  %v1311 = vmul.f32 %v1306, %v1309
  %1313 = vrot.lane.b32.xlu0 %v1311, 64
  %v1314 = vpop.permute.xlu0 %1313
  %v1316 = vadd.f32 %v1093, %v1314
  %v1317 = vtanh.pop %v1316
  %v1318 = vsub.f32 1.0, %v1306
  %1320 = vrot.lane.b32.xlu0 %v1317, 96
  %v1321 = vpop.permute.xlu0 %1320
  %v1323 = vmul.f32 %v1318, %v1321
  %1324 = vrot.lane.b32.xlu0 %v48, 32
  %v1325 = vpop.permute.xlu0 %1324
  %v1327 = vmul.f32 %v1306, %v1325
  %v1328 = vadd.f32 %v1323, %v1327
  %v1329 = vld [vmem:[%s11] sm:$0xff]
  %v1330 = vld [vmem:[%s11 + $0x8] sm:$0xff]
  %v1331 = vld [vmem:[%s11 + $0x10] sm:$0xff]
  %v1332 = vld [vmem:[%s11 + $0x18] sm:$0xff]
  %v1333 = vld [vmem:[%s12] sm:$0x1]
  %v1335 = vperm.slane %v1333, 0
  %1338 = vrot.lane.b32.xlu0 %v1328, 96
  %v1339 = vpop.permute.xlu0 %1338
  %v1340 = vsel %vm431, %v1339, 0
  %1342 = vmatpush.msra.mxu0 0.0
  %1343 = vmatpush.msra.mxu0 0.0
  %1344 = vmatpush.msra.mxu0 0.0
  %1345 = vmatpush.msra.mxu0 0.0
  %1346 = vmatpush.msra.mxu0 0.0
  %1347 = vmatpush.msra.mxu0 0.0
  %1348 = vmatpush.msra.mxu0 0.0
  %1349 = vmatpush.msra.mxu0 0.0
  %1350 = vmatpush.msra.mxu0 0.0
  %1351 = vmatpush.msra.mxu0 0.0
  %1352 = vmatpush.msra.mxu0 0.0
  %1353 = vmatpush.msra.mxu0 0.0
  %v1354 = vand.u32 %v1332, 4294901760
  %1355 = vmatpush.msra.mxu0 %v1354
  %v1356 = vand.u32 %v1331, 4294901760
  %1357 = vmatpush.msra.mxu0 %v1356
  %v1358 = vand.u32 %v1330, 4294901760
  %1359 = vmatpush.msra.mxu0 %v1358
  %v1360 = vand.u32 %v1329, 4294901760
  %1361 = vmatpush.msra.mxu0 %v1360
  %v1362 = vand.u32 %v1340, 4294901760
  %v1363 = vsub.f32 %v1340, %v1362
  %v1364 = vand.u32 %v1363, 4294901760
  %v1365 = vsub.f32 %v1363, %v1364
  %v1366 = vand.u32 %v1365, 4294901760
  %1367 = vmatmul.f32.gmra.mxu0 %v1366
  %v1368 = vpop.f32.mrf.mxu0
  %v1369 = vadd.f32 %v1335, %v1368
  %1370 = vdwg.mxu0
  %1371 = vmatpush.msra.mxu0 0.0
  %1372 = vmatpush.msra.mxu0 0.0
  %1373 = vmatpush.msra.mxu0 0.0
  %1374 = vmatpush.msra.mxu0 0.0
  %1375 = vmatpush.msra.mxu0 0.0
  %1376 = vmatpush.msra.mxu0 0.0
  %1377 = vmatpush.msra.mxu0 0.0
  %1378 = vmatpush.msra.mxu0 0.0
  %1379 = vmatpush.msra.mxu0 0.0
  %1380 = vmatpush.msra.mxu0 0.0
  %1381 = vmatpush.msra.mxu0 0.0
  %1382 = vmatpush.msra.mxu0 0.0
  %v1383 = vand.u32 %v1332, 4294901760
  %v1384 = vsub.f32 %v1332, %v1383
  %v1385 = vand.u32 %v1384, 4294901760
  %v1386 = vsub.f32 %v1384, %v1385
  %v1387 = vand.u32 %v1386, 4294901760
  %1388 = vmatpush.msra.mxu0 %v1387
  %v1389 = vand.u32 %v1331, 4294901760
  %v1390 = vsub.f32 %v1331, %v1389
  %v1391 = vand.u32 %v1390, 4294901760
  %v1392 = vsub.f32 %v1390, %v1391
  %v1393 = vand.u32 %v1392, 4294901760
  %1394 = vmatpush.msra.mxu0 %v1393
  %v1395 = vand.u32 %v1330, 4294901760
  %v1396 = vsub.f32 %v1330, %v1395
  %v1397 = vand.u32 %v1396, 4294901760
  %v1398 = vsub.f32 %v1396, %v1397
  %v1399 = vand.u32 %v1398, 4294901760
  %1400 = vmatpush.msra.mxu0 %v1399
  %v1401 = vand.u32 %v1329, 4294901760
  %v1402 = vsub.f32 %v1329, %v1401
  %v1403 = vand.u32 %v1402, 4294901760
  %v1404 = vsub.f32 %v1402, %v1403
  %v1405 = vand.u32 %v1404, 4294901760
  %1406 = vmatpush.msra.mxu0 %v1405
  %v1407 = vand.u32 %v1340, 4294901760
  %1408 = vmatmul.f32.gmra.mxu0 %v1407
  %v1409 = vpop.f32.mrf.mxu0
  %v1410 = vadd.f32 %v1369, %v1409
  %1411 = vdwg.mxu0
  %1412 = vmatpush.msra.mxu0 0.0
  %1413 = vmatpush.msra.mxu0 0.0
  %1414 = vmatpush.msra.mxu0 0.0
  %1415 = vmatpush.msra.mxu0 0.0
  %1416 = vmatpush.msra.mxu0 0.0
  %1417 = vmatpush.msra.mxu0 0.0
  %1418 = vmatpush.msra.mxu0 0.0
  %1419 = vmatpush.msra.mxu0 0.0
  %1420 = vmatpush.msra.mxu0 0.0
  %1421 = vmatpush.msra.mxu0 0.0
  %1422 = vmatpush.msra.mxu0 0.0
  %1423 = vmatpush.msra.mxu0 0.0
  %v1424 = vand.u32 %v1332, 4294901760
  %v1425 = vsub.f32 %v1332, %v1424
  %1426 = vmatpush.msra.mxu0 %v1425
  %v1427 = vand.u32 %v1331, 4294901760
  %v1428 = vsub.f32 %v1331, %v1427
  %1429 = vmatpush.msra.mxu0 %v1428
  %v1430 = vand.u32 %v1330, 4294901760
  %v1431 = vsub.f32 %v1330, %v1430
  %1432 = vmatpush.msra.mxu0 %v1431
  %v1433 = vand.u32 %v1329, 4294901760
  %v1434 = vsub.f32 %v1329, %v1433
  %1435 = vmatpush.msra.mxu0 %v1434
  %v1436 = vand.u32 %v1340, 4294901760
  %v1437 = vsub.f32 %v1340, %v1436
  %1438 = vmatmul.f32.gmra.mxu0 %v1437
  %v1439 = vpop.f32.mrf.mxu0
  %v1440 = vadd.f32 %v1410, %v1439
  %1441 = vdwg.mxu0
  %1442 = vmatpush.msra.mxu0 0.0
  %1443 = vmatpush.msra.mxu0 0.0
  %1444 = vmatpush.msra.mxu0 0.0
  %1445 = vmatpush.msra.mxu0 0.0
  %1446 = vmatpush.msra.mxu0 0.0
  %1447 = vmatpush.msra.mxu0 0.0
  %1448 = vmatpush.msra.mxu0 0.0
  %1449 = vmatpush.msra.mxu0 0.0
  %1450 = vmatpush.msra.mxu0 0.0
  %1451 = vmatpush.msra.mxu0 0.0
  %1452 = vmatpush.msra.mxu0 0.0
  %1453 = vmatpush.msra.mxu0 0.0
  %v1454 = vand.u32 %v1332, 4294901760
  %1455 = vmatpush.msra.mxu0 %v1454
  %v1456 = vand.u32 %v1331, 4294901760
  %1457 = vmatpush.msra.mxu0 %v1456
  %v1458 = vand.u32 %v1330, 4294901760
  %1459 = vmatpush.msra.mxu0 %v1458
  %v1460 = vand.u32 %v1329, 4294901760
  %1461 = vmatpush.msra.mxu0 %v1460
  %v1462 = vand.u32 %v1340, 4294901760
  %v1463 = vsub.f32 %v1340, %v1462
  %v1464 = vand.u32 %v1463, 4294901760
  %1465 = vmatmul.f32.gmra.mxu0 %v1464
  %v1466 = vpop.f32.mrf.mxu0
  %v1467 = vadd.f32 %v1440, %v1466
  %1468 = vdwg.mxu0
  %1469 = vmatpush.msra.mxu0 0.0
  %1470 = vmatpush.msra.mxu0 0.0
  %1471 = vmatpush.msra.mxu0 0.0
  %1472 = vmatpush.msra.mxu0 0.0
  %1473 = vmatpush.msra.mxu0 0.0
  %1474 = vmatpush.msra.mxu0 0.0
  %1475 = vmatpush.msra.mxu0 0.0
  %1476 = vmatpush.msra.mxu0 0.0
  %1477 = vmatpush.msra.mxu0 0.0
  %1478 = vmatpush.msra.mxu0 0.0
  %1479 = vmatpush.msra.mxu0 0.0
  %1480 = vmatpush.msra.mxu0 0.0
  %v1481 = vand.u32 %v1332, 4294901760
  %v1482 = vsub.f32 %v1332, %v1481
  %v1483 = vand.u32 %v1482, 4294901760
  %1484 = vmatpush.msra.mxu0 %v1483
  %v1485 = vand.u32 %v1331, 4294901760
  %v1486 = vsub.f32 %v1331, %v1485
  %v1487 = vand.u32 %v1486, 4294901760
  %1488 = vmatpush.msra.mxu0 %v1487
  %v1489 = vand.u32 %v1330, 4294901760
  %v1490 = vsub.f32 %v1330, %v1489
  %v1491 = vand.u32 %v1490, 4294901760
  %1492 = vmatpush.msra.mxu0 %v1491
  %v1493 = vand.u32 %v1329, 4294901760
  %v1494 = vsub.f32 %v1329, %v1493
  %v1495 = vand.u32 %v1494, 4294901760
  %1496 = vmatpush.msra.mxu0 %v1495
  %v1497 = vand.u32 %v1340, 4294901760
  %1498 = vmatmul.f32.gmra.mxu0 %v1497
  %v1499 = vpop.f32.mrf.mxu0
  %v1500 = vadd.f32 %v1467, %v1499
  %1501 = vdwg.mxu0
  %1502 = vmatpush.msra.mxu0 0.0
  %1503 = vmatpush.msra.mxu0 0.0
  %1504 = vmatpush.msra.mxu0 0.0
  %1505 = vmatpush.msra.mxu0 0.0
  %1506 = vmatpush.msra.mxu0 0.0
  %1507 = vmatpush.msra.mxu0 0.0
  %1508 = vmatpush.msra.mxu0 0.0
  %1509 = vmatpush.msra.mxu0 0.0
  %1510 = vmatpush.msra.mxu0 0.0
  %1511 = vmatpush.msra.mxu0 0.0
  %1512 = vmatpush.msra.mxu0 0.0
  %1513 = vmatpush.msra.mxu0 0.0
  %v1514 = vand.u32 %v1332, 4294901760
  %1515 = vmatpush.msra.mxu0 %v1514
  %v1516 = vand.u32 %v1331, 4294901760
  %1517 = vmatpush.msra.mxu0 %v1516
  %v1518 = vand.u32 %v1330, 4294901760
  %1519 = vmatpush.msra.mxu0 %v1518
  %v1520 = vand.u32 %v1329, 4294901760
  %1521 = vmatpush.msra.mxu0 %v1520
  %v1522 = vand.u32 %v1340, 4294901760
  %1523 = vmatmul.f32.gmra.mxu0 %v1522
  %v1524 = vpop.f32.mrf.mxu0
  %v1525 = vadd.f32 %v1500, %v1524
  %1526 = vdwg.mxu0
  %vm1527 = vcmask 1041408
  %v1528 = vsel %vm1527, %v1525, -inf
  %1529 = vmax.xlane.f32.xlu0 %v1528
  %v1530 = vpop.xlane.xlu0 %1529
  %v1531 = vsub.f32 %v1525, %v1530
  %v1532 = vmul.f32 %v1531, 1.442695
  %v1533 = vpow.pop %v1532
  %v1534 = vsel %vm1527, %v1533, 0.0
  %1535 = vadd.xlane.f32.xlu0 %v1534
  %v1536 = vpop.xlane.xlu0 %1535
  %v1537 = vlog2.pop %v1536
  %v1538 = vmul.f32 %v1537, 0.6931472
  %v1539 = vadd.f32 %v1530, %v1538
  %v1540 = vsub.f32 %v1525, %v1539
  %1541 = vst [vmem:[%s13] sm:$0x3] %v1540
  %v1542 = vsel %vm1527, %v1540, -inf
  %1543 = vmax.xlane.f32.xlu0 %v1542
  %v1544 = vpop.xlane.xlu0 %1543
  %vm1545 = vcmp.ge.f32.partialorder %v1540, %v1544
  %v1546 = vsel %vm1545, %v45, 128
  %v1547 = vsel %vm1527, %v1546, 2147483647
  %v1548 = vand.u32 %v1547, 65535
  %v1549 = vshra.s32 %v1547, 16
  %v1550 = vcvt.s32.f32 %v1548
  %v1551 = vcvt.s32.f32 %v1549
  %1552 = vmin.xlane.f32.xlu0 %v1551
  %v1553 = vpop.xlane.xlu0 %1552
  %vm1554 = vcmp.eq.f32.partialorder %v1551, %v1553
  %v1555 = vsel %vm1554, %v1550, inf
  %1556 = vmin.xlane.f32.xlu0 %v1555
  %v1557 = vpop.xlane.xlu0 %1556
  %v1558 = vcvt.f32.s32 %v1557
  %v1559 = vcvt.f32.s32 %v1553
  %v1560 = vshll.u32 %v1559, 16
  %v1561 = vadd.s32 %v1560, %v1558
  %vm1562 = vcmp.eq.s32.totalorder %v45, %v1561
  %v1563 = vsel %vm1562, 1, 0
  %v1564 = vcvt.s32.f32 %v1563
  %v1565 = vld [vmem:[%s3] sm:$0xff]
  %v1566 = vld [vmem:[%s3 + $0x8] sm:$0xff]
  %v1567 = vld [vmem:[%s3 + $0x10] sm:$0xff]
  %v1568 = vld [vmem:[%s3 + $0x18] sm:$0xff]
  %v1569 = vld [vmem:[%s3 + $0x20] sm:$0xff]
  %v1570 = vld [vmem:[%s3 + $0x28] sm:$0xff]
  %v1571 = vld [vmem:[%s3 + $0x30] sm:$0xff]
  %v1572 = vld [vmem:[%s3 + $0x38] sm:$0xff]
  %v1573 = vld [vmem:[%s3 + $0x40] sm:$0xff]
  %v1574 = vld [vmem:[%s3 + $0x48] sm:$0xff]
  %v1575 = vld [vmem:[%s3 + $0x50] sm:$0xff]
  %v1576 = vld [vmem:[%s3 + $0x58] sm:$0xff]
  %v1577 = vld [vmem:[%s3 + $0x60] sm:$0xff]
  %v1578 = vld [vmem:[%s3 + $0x68] sm:$0xff]
  %v1579 = vld [vmem:[%s3 + $0x70] sm:$0xff]
  %v1580 = vld [vmem:[%s3 + $0x78] sm:$0xff]
  %v1581 = vand.u32 %v1580, 4294901760
  %1582 = vmatpush.msra.mxu0 %v1581
  %v1583 = vand.u32 %v1579, 4294901760
  %1584 = vmatpush.msra.mxu0 %v1583
  %v1585 = vand.u32 %v1578, 4294901760
  %1586 = vmatpush.msra.mxu0 %v1585
  %v1587 = vand.u32 %v1577, 4294901760
  %1588 = vmatpush.msra.mxu0 %v1587
  %v1589 = vand.u32 %v1576, 4294901760
  %1590 = vmatpush.msra.mxu0 %v1589
  %v1591 = vand.u32 %v1575, 4294901760
  %1592 = vmatpush.msra.mxu0 %v1591
  %v1593 = vand.u32 %v1574, 4294901760
  %1594 = vmatpush.msra.mxu0 %v1593
  %v1595 = vand.u32 %v1573, 4294901760
  %1596 = vmatpush.msra.mxu0 %v1595
  %v1597 = vand.u32 %v1572, 4294901760
  %1598 = vmatpush.msra.mxu0 %v1597
  %v1599 = vand.u32 %v1571, 4294901760
  %1600 = vmatpush.msra.mxu0 %v1599
  %v1601 = vand.u32 %v1570, 4294901760
  %1602 = vmatpush.msra.mxu0 %v1601
  %v1603 = vand.u32 %v1569, 4294901760
  %1604 = vmatpush.msra.mxu0 %v1603
  %v1605 = vand.u32 %v1568, 4294901760
  %1606 = vmatpush.msra.mxu0 %v1605
  %v1607 = vand.u32 %v1567, 4294901760
  %1608 = vmatpush.msra.mxu0 %v1607
  %v1609 = vand.u32 %v1566, 4294901760
  %1610 = vmatpush.msra.mxu0 %v1609
  %v1611 = vand.u32 %v1565, 4294901760
  %1612 = vmatpush.msra.mxu0 %v1611
  %v1613 = vand.u32 %v1564, 4294901760
  %v1614 = vsub.f32 %v1564, %v1613
  %v1615 = vand.u32 %v1614, 4294901760
  %v1616 = vsub.f32 %v1614, %v1615
  %v1617 = vand.u32 %v1616, 4294901760
  %1618 = vmatmul.f32.gmra.mxu0 %v1617
  %v1619 = vpop.f32.mrf.mxu0
  %v1620 = vadd.f32 0.0, %v1619
  %1621 = vdwg.mxu0
  %v1622 = vand.u32 %v1580, 4294901760
  %v1623 = vsub.f32 %v1580, %v1622
  %v1624 = vand.u32 %v1623, 4294901760
  %v1625 = vsub.f32 %v1623, %v1624
  %v1626 = vand.u32 %v1625, 4294901760
  %1627 = vmatpush.msra.mxu0 %v1626
  %v1628 = vand.u32 %v1579, 4294901760
  %v1629 = vsub.f32 %v1579, %v1628
  %v1630 = vand.u32 %v1629, 4294901760
  %v1631 = vsub.f32 %v1629, %v1630
  %v1632 = vand.u32 %v1631, 4294901760
  %1633 = vmatpush.msra.mxu0 %v1632
  %v1634 = vand.u32 %v1578, 4294901760
  %v1635 = vsub.f32 %v1578, %v1634
  %v1636 = vand.u32 %v1635, 4294901760
  %v1637 = vsub.f32 %v1635, %v1636
  %v1638 = vand.u32 %v1637, 4294901760
  %1639 = vmatpush.msra.mxu0 %v1638
  %v1640 = vand.u32 %v1577, 4294901760
  %v1641 = vsub.f32 %v1577, %v1640
  %v1642 = vand.u32 %v1641, 4294901760
  %v1643 = vsub.f32 %v1641, %v1642
  %v1644 = vand.u32 %v1643, 4294901760
  %1645 = vmatpush.msra.mxu0 %v1644
  %v1646 = vand.u32 %v1576, 4294901760
  %v1647 = vsub.f32 %v1576, %v1646
  %v1648 = vand.u32 %v1647, 4294901760
  %v1649 = vsub.f32 %v1647, %v1648
  %v1650 = vand.u32 %v1649, 4294901760
  %1651 = vmatpush.msra.mxu0 %v1650
  %v1652 = vand.u32 %v1575, 4294901760
  %v1653 = vsub.f32 %v1575, %v1652
  %v1654 = vand.u32 %v1653, 4294901760
  %v1655 = vsub.f32 %v1653, %v1654
  %v1656 = vand.u32 %v1655, 4294901760
  %1657 = vmatpush.msra.mxu0 %v1656
  %v1658 = vand.u32 %v1574, 4294901760
  %v1659 = vsub.f32 %v1574, %v1658
  %v1660 = vand.u32 %v1659, 4294901760
  %v1661 = vsub.f32 %v1659, %v1660
  %v1662 = vand.u32 %v1661, 4294901760
  %1663 = vmatpush.msra.mxu0 %v1662
  %v1664 = vand.u32 %v1573, 4294901760
  %v1665 = vsub.f32 %v1573, %v1664
  %v1666 = vand.u32 %v1665, 4294901760
  %v1667 = vsub.f32 %v1665, %v1666
  %v1668 = vand.u32 %v1667, 4294901760
  %1669 = vmatpush.msra.mxu0 %v1668
  %v1670 = vand.u32 %v1572, 4294901760
  %v1671 = vsub.f32 %v1572, %v1670
  %v1672 = vand.u32 %v1671, 4294901760
  %v1673 = vsub.f32 %v1671, %v1672
  %v1674 = vand.u32 %v1673, 4294901760
  %1675 = vmatpush.msra.mxu0 %v1674
  %v1676 = vand.u32 %v1571, 4294901760
  %v1677 = vsub.f32 %v1571, %v1676
  %v1678 = vand.u32 %v1677, 4294901760
  %v1679 = vsub.f32 %v1677, %v1678
  %v1680 = vand.u32 %v1679, 4294901760
  %1681 = vmatpush.msra.mxu0 %v1680
  %v1682 = vand.u32 %v1570, 4294901760
  %v1683 = vsub.f32 %v1570, %v1682
  %v1684 = vand.u32 %v1683, 4294901760
  %v1685 = vsub.f32 %v1683, %v1684
  %v1686 = vand.u32 %v1685, 4294901760
  %1687 = vmatpush.msra.mxu0 %v1686
  %v1688 = vand.u32 %v1569, 4294901760
  %v1689 = vsub.f32 %v1569, %v1688
  %v1690 = vand.u32 %v1689, 4294901760
  %v1691 = vsub.f32 %v1689, %v1690
  %v1692 = vand.u32 %v1691, 4294901760
  %1693 = vmatpush.msra.mxu0 %v1692
  %v1694 = vand.u32 %v1568, 4294901760
  %v1695 = vsub.f32 %v1568, %v1694
  %v1696 = vand.u32 %v1695, 4294901760
  %v1697 = vsub.f32 %v1695, %v1696
  %v1698 = vand.u32 %v1697, 4294901760
  %1699 = vmatpush.msra.mxu0 %v1698
  %v1700 = vand.u32 %v1567, 4294901760
  %v1701 = vsub.f32 %v1567, %v1700
  %v1702 = vand.u32 %v1701, 4294901760
  %v1703 = vsub.f32 %v1701, %v1702
  %v1704 = vand.u32 %v1703, 4294901760
  %1705 = vmatpush.msra.mxu0 %v1704
  %v1706 = vand.u32 %v1566, 4294901760
  %v1707 = vsub.f32 %v1566, %v1706
  %v1708 = vand.u32 %v1707, 4294901760
  %v1709 = vsub.f32 %v1707, %v1708
  %v1710 = vand.u32 %v1709, 4294901760
  %1711 = vmatpush.msra.mxu0 %v1710
  %v1712 = vand.u32 %v1565, 4294901760
  %v1713 = vsub.f32 %v1565, %v1712
  %v1714 = vand.u32 %v1713, 4294901760
  %v1715 = vsub.f32 %v1713, %v1714
  %v1716 = vand.u32 %v1715, 4294901760
  %1717 = vmatpush.msra.mxu0 %v1716
  %v1718 = vand.u32 %v1564, 4294901760
  %1719 = vmatmul.f32.gmra.mxu0 %v1718
  %v1720 = vpop.f32.mrf.mxu0
  %v1721 = vadd.f32 %v1620, %v1720
  %1722 = vdwg.mxu0
  %v1723 = vand.u32 %v1580, 4294901760
  %v1724 = vsub.f32 %v1580, %v1723
  %1725 = vmatpush.msra.mxu0 %v1724
  %v1726 = vand.u32 %v1579, 4294901760
  %v1727 = vsub.f32 %v1579, %v1726
  %1728 = vmatpush.msra.mxu0 %v1727
  %v1729 = vand.u32 %v1578, 4294901760
  %v1730 = vsub.f32 %v1578, %v1729
  %1731 = vmatpush.msra.mxu0 %v1730
  %v1732 = vand.u32 %v1577, 4294901760
  %v1733 = vsub.f32 %v1577, %v1732
  %1734 = vmatpush.msra.mxu0 %v1733
  %v1735 = vand.u32 %v1576, 4294901760
  %v1736 = vsub.f32 %v1576, %v1735
  %1737 = vmatpush.msra.mxu0 %v1736
  %v1738 = vand.u32 %v1575, 4294901760
  %v1739 = vsub.f32 %v1575, %v1738
  %1740 = vmatpush.msra.mxu0 %v1739
  %v1741 = vand.u32 %v1574, 4294901760
  %v1742 = vsub.f32 %v1574, %v1741
  %1743 = vmatpush.msra.mxu0 %v1742
  %v1744 = vand.u32 %v1573, 4294901760
  %v1745 = vsub.f32 %v1573, %v1744
  %1746 = vmatpush.msra.mxu0 %v1745
  %v1747 = vand.u32 %v1572, 4294901760
  %v1748 = vsub.f32 %v1572, %v1747
  %1749 = vmatpush.msra.mxu0 %v1748
  %v1750 = vand.u32 %v1571, 4294901760
  %v1751 = vsub.f32 %v1571, %v1750
  %1752 = vmatpush.msra.mxu0 %v1751
  %v1753 = vand.u32 %v1570, 4294901760
  %v1754 = vsub.f32 %v1570, %v1753
  %1755 = vmatpush.msra.mxu0 %v1754
  %v1756 = vand.u32 %v1569, 4294901760
  %v1757 = vsub.f32 %v1569, %v1756
  %1758 = vmatpush.msra.mxu0 %v1757
  %v1759 = vand.u32 %v1568, 4294901760
  %v1760 = vsub.f32 %v1568, %v1759
  %1761 = vmatpush.msra.mxu0 %v1760
  %v1762 = vand.u32 %v1567, 4294901760
  %v1763 = vsub.f32 %v1567, %v1762
  %1764 = vmatpush.msra.mxu0 %v1763
  %v1765 = vand.u32 %v1566, 4294901760
  %v1766 = vsub.f32 %v1566, %v1765
  %1767 = vmatpush.msra.mxu0 %v1766
  %v1768 = vand.u32 %v1565, 4294901760
  %v1769 = vsub.f32 %v1565, %v1768
  %1770 = vmatpush.msra.mxu0 %v1769
  %v1771 = vand.u32 %v1564, 4294901760
  %v1772 = vsub.f32 %v1564, %v1771
  %1773 = vmatmul.f32.gmra.mxu0 %v1772
  %v1774 = vpop.f32.mrf.mxu0
  %v1775 = vadd.f32 %v1721, %v1774
  %1776 = vdwg.mxu0
  %v1777 = vand.u32 %v1580, 4294901760
  %1778 = vmatpush.msra.mxu0 %v1777
  %v1779 = vand.u32 %v1579, 4294901760
  %1780 = vmatpush.msra.mxu0 %v1779
  %v1781 = vand.u32 %v1578, 4294901760
  %1782 = vmatpush.msra.mxu0 %v1781
  %v1783 = vand.u32 %v1577, 4294901760
  %1784 = vmatpush.msra.mxu0 %v1783
  %v1785 = vand.u32 %v1576, 4294901760
  %1786 = vmatpush.msra.mxu0 %v1785
  %v1787 = vand.u32 %v1575, 4294901760
  %1788 = vmatpush.msra.mxu0 %v1787
  %v1789 = vand.u32 %v1574, 4294901760
  %1790 = vmatpush.msra.mxu0 %v1789
  %v1791 = vand.u32 %v1573, 4294901760
  %1792 = vmatpush.msra.mxu0 %v1791
  %v1793 = vand.u32 %v1572, 4294901760
  %1794 = vmatpush.msra.mxu0 %v1793
  %v1795 = vand.u32 %v1571, 4294901760
  %1796 = vmatpush.msra.mxu0 %v1795
  %v1797 = vand.u32 %v1570, 4294901760
  %1798 = vmatpush.msra.mxu0 %v1797
  %v1799 = vand.u32 %v1569, 4294901760
  %1800 = vmatpush.msra.mxu0 %v1799
  %v1801 = vand.u32 %v1568, 4294901760
  %1802 = vmatpush.msra.mxu0 %v1801
  %v1803 = vand.u32 %v1567, 4294901760
  %1804 = vmatpush.msra.mxu0 %v1803
  %v1805 = vand.u32 %v1566, 4294901760
  %1806 = vmatpush.msra.mxu0 %v1805
  %v1807 = vand.u32 %v1565, 4294901760
  %1808 = vmatpush.msra.mxu0 %v1807
  %v1809 = vand.u32 %v1564, 4294901760
  %v1810 = vsub.f32 %v1564, %v1809
  %v1811 = vand.u32 %v1810, 4294901760
  %1812 = vmatmul.f32.gmra.mxu0 %v1811
  %v1813 = vpop.f32.mrf.mxu0
  %v1814 = vadd.f32 %v1775, %v1813
  %1815 = vdwg.mxu0
  %v1816 = vand.u32 %v1580, 4294901760
  %v1817 = vsub.f32 %v1580, %v1816
  %v1818 = vand.u32 %v1817, 4294901760
  %1819 = vmatpush.msra.mxu0 %v1818
  %v1820 = vand.u32 %v1579, 4294901760
  %v1821 = vsub.f32 %v1579, %v1820
  %v1822 = vand.u32 %v1821, 4294901760
  %1823 = vmatpush.msra.mxu0 %v1822
  %v1824 = vand.u32 %v1578, 4294901760
  %v1825 = vsub.f32 %v1578, %v1824
  %v1826 = vand.u32 %v1825, 4294901760
  %1827 = vmatpush.msra.mxu0 %v1826
  %v1828 = vand.u32 %v1577, 4294901760
  %v1829 = vsub.f32 %v1577, %v1828
  %v1830 = vand.u32 %v1829, 4294901760
  %1831 = vmatpush.msra.mxu0 %v1830
  %v1832 = vand.u32 %v1576, 4294901760
  %v1833 = vsub.f32 %v1576, %v1832
  %v1834 = vand.u32 %v1833, 4294901760
  %1835 = vmatpush.msra.mxu0 %v1834
  %v1836 = vand.u32 %v1575, 4294901760
  %v1837 = vsub.f32 %v1575, %v1836
  %v1838 = vand.u32 %v1837, 4294901760
  %1839 = vmatpush.msra.mxu0 %v1838
  %v1840 = vand.u32 %v1574, 4294901760
  %v1841 = vsub.f32 %v1574, %v1840
  %v1842 = vand.u32 %v1841, 4294901760
  %1843 = vmatpush.msra.mxu0 %v1842
  %v1844 = vand.u32 %v1573, 4294901760
  %v1845 = vsub.f32 %v1573, %v1844
  %v1846 = vand.u32 %v1845, 4294901760
  %1847 = vmatpush.msra.mxu0 %v1846
  %v1848 = vand.u32 %v1572, 4294901760
  %v1849 = vsub.f32 %v1572, %v1848
  %v1850 = vand.u32 %v1849, 4294901760
  %1851 = vmatpush.msra.mxu0 %v1850
  %v1852 = vand.u32 %v1571, 4294901760
  %v1853 = vsub.f32 %v1571, %v1852
  %v1854 = vand.u32 %v1853, 4294901760
  %1855 = vmatpush.msra.mxu0 %v1854
  %v1856 = vand.u32 %v1570, 4294901760
  %v1857 = vsub.f32 %v1570, %v1856
  %v1858 = vand.u32 %v1857, 4294901760
  %1859 = vmatpush.msra.mxu0 %v1858
  %v1860 = vand.u32 %v1569, 4294901760
  %v1861 = vsub.f32 %v1569, %v1860
  %v1862 = vand.u32 %v1861, 4294901760
  %1863 = vmatpush.msra.mxu0 %v1862
  %v1864 = vand.u32 %v1568, 4294901760
  %v1865 = vsub.f32 %v1568, %v1864
  %v1866 = vand.u32 %v1865, 4294901760
  %1867 = vmatpush.msra.mxu0 %v1866
  %v1868 = vand.u32 %v1567, 4294901760
  %v1869 = vsub.f32 %v1567, %v1868
  %v1870 = vand.u32 %v1869, 4294901760
  %1871 = vmatpush.msra.mxu0 %v1870
  %v1872 = vand.u32 %v1566, 4294901760
  %v1873 = vsub.f32 %v1566, %v1872
  %v1874 = vand.u32 %v1873, 4294901760
  %1875 = vmatpush.msra.mxu0 %v1874
  %v1876 = vand.u32 %v1565, 4294901760
  %v1877 = vsub.f32 %v1565, %v1876
  %v1878 = vand.u32 %v1877, 4294901760
  %1879 = vmatpush.msra.mxu0 %v1878
  %v1880 = vand.u32 %v1564, 4294901760
  %1881 = vmatmul.f32.gmra.mxu0 %v1880
  %v1882 = vpop.f32.mrf.mxu0
  %v1883 = vadd.f32 %v1814, %v1882
  %1884 = vdwg.mxu0
  %v1885 = vand.u32 %v1580, 4294901760
  %1886 = vmatpush.msra.mxu0 %v1885
  %v1887 = vand.u32 %v1579, 4294901760
  %1888 = vmatpush.msra.mxu0 %v1887
  %v1889 = vand.u32 %v1578, 4294901760
  %1890 = vmatpush.msra.mxu0 %v1889
  %v1891 = vand.u32 %v1577, 4294901760
  %1892 = vmatpush.msra.mxu0 %v1891
  %v1893 = vand.u32 %v1576, 4294901760
  %1894 = vmatpush.msra.mxu0 %v1893
  %v1895 = vand.u32 %v1575, 4294901760
  %1896 = vmatpush.msra.mxu0 %v1895
  %v1897 = vand.u32 %v1574, 4294901760
  %1898 = vmatpush.msra.mxu0 %v1897
  %v1899 = vand.u32 %v1573, 4294901760
  %1900 = vmatpush.msra.mxu0 %v1899
  %v1901 = vand.u32 %v1572, 4294901760
  %1902 = vmatpush.msra.mxu0 %v1901
  %v1903 = vand.u32 %v1571, 4294901760
  %1904 = vmatpush.msra.mxu0 %v1903
  %v1905 = vand.u32 %v1570, 4294901760
  %1906 = vmatpush.msra.mxu0 %v1905
  %v1907 = vand.u32 %v1569, 4294901760
  %1908 = vmatpush.msra.mxu0 %v1907
  %v1909 = vand.u32 %v1568, 4294901760
  %1910 = vmatpush.msra.mxu0 %v1909
  %v1911 = vand.u32 %v1567, 4294901760
  %1912 = vmatpush.msra.mxu0 %v1911
  %v1913 = vand.u32 %v1566, 4294901760
  %1914 = vmatpush.msra.mxu0 %v1913
  %v1915 = vand.u32 %v1565, 4294901760
  %1916 = vmatpush.msra.mxu0 %v1915
  %v1917 = vand.u32 %v1564, 4294901760
  %1918 = vmatmul.f32.gmra.mxu0 %v1917
  %v1919 = vpop.f32.mrf.mxu0
  %v1920 = vadd.f32 %v1883, %v1919
  %1921 = vdwg.mxu0
  %v1922 = vld [vmem:[%s4] sm:$0xff]
  %v1923 = vld [vmem:[%s4 + $0x8] sm:$0xff]
  %v1924 = vld [vmem:[%s4 + $0x10] sm:$0xff]
  %v1925 = vld [vmem:[%s4 + $0x18] sm:$0xff]
  %1926 = vmatpush.msra.mxu0 0.0
  %1927 = vmatpush.msra.mxu0 0.0
  %1928 = vmatpush.msra.mxu0 0.0
  %1929 = vmatpush.msra.mxu0 0.0
  %1930 = vmatpush.msra.mxu0 0.0
  %1931 = vmatpush.msra.mxu0 0.0
  %1932 = vmatpush.msra.mxu0 0.0
  %1933 = vmatpush.msra.mxu0 0.0
  %1934 = vmatpush.msra.mxu0 0.0
  %1935 = vmatpush.msra.mxu0 0.0
  %1936 = vmatpush.msra.mxu0 0.0
  %1937 = vmatpush.msra.mxu0 0.0
  %v1938 = vand.u32 %v1925, 4294901760
  %1939 = vmatpush.msra.mxu0 %v1938
  %v1940 = vand.u32 %v1924, 4294901760
  %1941 = vmatpush.msra.mxu0 %v1940
  %v1942 = vand.u32 %v1923, 4294901760
  %1943 = vmatpush.msra.mxu0 %v1942
  %v1944 = vand.u32 %v1922, 4294901760
  %1945 = vmatpush.msra.mxu0 %v1944
  %v1946 = vand.u32 %v1340, 4294901760
  %v1947 = vsub.f32 %v1340, %v1946
  %v1948 = vand.u32 %v1947, 4294901760
  %v1949 = vsub.f32 %v1947, %v1948
  %v1950 = vand.u32 %v1949, 4294901760
  %1951 = vmatmul.f32.gmra.mxu0 %v1950
  %v1952 = vpop.f32.mrf.mxu0
  %v1953 = vadd.f32 0.0, %v1952
  %1954 = vdwg.mxu0
  %1955 = vmatpush.msra.mxu0 0.0
  %1956 = vmatpush.msra.mxu0 0.0
  %1957 = vmatpush.msra.mxu0 0.0
  %1958 = vmatpush.msra.mxu0 0.0
  %1959 = vmatpush.msra.mxu0 0.0
  %1960 = vmatpush.msra.mxu0 0.0
  %1961 = vmatpush.msra.mxu0 0.0
  %1962 = vmatpush.msra.mxu0 0.0
  %1963 = vmatpush.msra.mxu0 0.0
  %1964 = vmatpush.msra.mxu0 0.0
  %1965 = vmatpush.msra.mxu0 0.0
  %1966 = vmatpush.msra.mxu0 0.0
  %v1967 = vand.u32 %v1925, 4294901760
  %v1968 = vsub.f32 %v1925, %v1967
  %v1969 = vand.u32 %v1968, 4294901760
  %v1970 = vsub.f32 %v1968, %v1969
  %v1971 = vand.u32 %v1970, 4294901760
  %1972 = vmatpush.msra.mxu0 %v1971
  %v1973 = vand.u32 %v1924, 4294901760
  %v1974 = vsub.f32 %v1924, %v1973
  %v1975 = vand.u32 %v1974, 4294901760
  %v1976 = vsub.f32 %v1974, %v1975
  %v1977 = vand.u32 %v1976, 4294901760
  %1978 = vmatpush.msra.mxu0 %v1977
  %v1979 = vand.u32 %v1923, 4294901760
  %v1980 = vsub.f32 %v1923, %v1979
  %v1981 = vand.u32 %v1980, 4294901760
  %v1982 = vsub.f32 %v1980, %v1981
  %v1983 = vand.u32 %v1982, 4294901760
  %1984 = vmatpush.msra.mxu0 %v1983
  %v1985 = vand.u32 %v1922, 4294901760
  %v1986 = vsub.f32 %v1922, %v1985
  %v1987 = vand.u32 %v1986, 4294901760
  %v1988 = vsub.f32 %v1986, %v1987
  %v1989 = vand.u32 %v1988, 4294901760
  %1990 = vmatpush.msra.mxu0 %v1989
  %v1991 = vand.u32 %v1340, 4294901760
  %1992 = vmatmul.f32.gmra.mxu0 %v1991
  %v1993 = vpop.f32.mrf.mxu0
  %v1994 = vadd.f32 %v1953, %v1993
  %1995 = vdwg.mxu0
  %1996 = vmatpush.msra.mxu0 0.0
  %1997 = vmatpush.msra.mxu0 0.0
  %1998 = vmatpush.msra.mxu0 0.0
  %1999 = vmatpush.msra.mxu0 0.0
  %2000 = vmatpush.msra.mxu0 0.0
  %2001 = vmatpush.msra.mxu0 0.0
  %2002 = vmatpush.msra.mxu0 0.0
  %2003 = vmatpush.msra.mxu0 0.0
  %2004 = vmatpush.msra.mxu0 0.0
  %2005 = vmatpush.msra.mxu0 0.0
  %2006 = vmatpush.msra.mxu0 0.0
  %2007 = vmatpush.msra.mxu0 0.0
  %v2008 = vand.u32 %v1925, 4294901760
  %v2009 = vsub.f32 %v1925, %v2008
  %2010 = vmatpush.msra.mxu0 %v2009
  %v2011 = vand.u32 %v1924, 4294901760
  %v2012 = vsub.f32 %v1924, %v2011
  %2013 = vmatpush.msra.mxu0 %v2012
  %v2014 = vand.u32 %v1923, 4294901760
  %v2015 = vsub.f32 %v1923, %v2014
  %2016 = vmatpush.msra.mxu0 %v2015
  %v2017 = vand.u32 %v1922, 4294901760
  %v2018 = vsub.f32 %v1922, %v2017
  %2019 = vmatpush.msra.mxu0 %v2018
  %v2020 = vand.u32 %v1340, 4294901760
  %v2021 = vsub.f32 %v1340, %v2020
  %2022 = vmatmul.f32.gmra.mxu0 %v2021
  %v2023 = vpop.f32.mrf.mxu0
  %v2024 = vadd.f32 %v1994, %v2023
  %2025 = vdwg.mxu0
  %2026 = vmatpush.msra.mxu0 0.0
  %2027 = vmatpush.msra.mxu0 0.0
  %2028 = vmatpush.msra.mxu0 0.0
  %2029 = vmatpush.msra.mxu0 0.0
  %2030 = vmatpush.msra.mxu0 0.0
  %2031 = vmatpush.msra.mxu0 0.0
  %2032 = vmatpush.msra.mxu0 0.0
  %2033 = vmatpush.msra.mxu0 0.0
  %2034 = vmatpush.msra.mxu0 0.0
  %2035 = vmatpush.msra.mxu0 0.0
  %2036 = vmatpush.msra.mxu0 0.0
  %2037 = vmatpush.msra.mxu0 0.0
  %v2038 = vand.u32 %v1925, 4294901760
  %2039 = vmatpush.msra.mxu0 %v2038
  %v2040 = vand.u32 %v1924, 4294901760
  %2041 = vmatpush.msra.mxu0 %v2040
  %v2042 = vand.u32 %v1923, 4294901760
  %2043 = vmatpush.msra.mxu0 %v2042
  %v2044 = vand.u32 %v1922, 4294901760
  %2045 = vmatpush.msra.mxu0 %v2044
  %v2046 = vand.u32 %v1340, 4294901760
  %v2047 = vsub.f32 %v1340, %v2046
  %v2048 = vand.u32 %v2047, 4294901760
  %2049 = vmatmul.f32.gmra.mxu0 %v2048
  %v2050 = vpop.f32.mrf.mxu0
  %v2051 = vadd.f32 %v2024, %v2050
  %2052 = vdwg.mxu0
  %2053 = vmatpush.msra.mxu0 0.0
  %2054 = vmatpush.msra.mxu0 0.0
  %2055 = vmatpush.msra.mxu0 0.0
  %2056 = vmatpush.msra.mxu0 0.0
  %2057 = vmatpush.msra.mxu0 0.0
  %2058 = vmatpush.msra.mxu0 0.0
  %2059 = vmatpush.msra.mxu0 0.0
  %2060 = vmatpush.msra.mxu0 0.0
  %2061 = vmatpush.msra.mxu0 0.0
  %2062 = vmatpush.msra.mxu0 0.0
  %2063 = vmatpush.msra.mxu0 0.0
  %2064 = vmatpush.msra.mxu0 0.0
  %v2065 = vand.u32 %v1925, 4294901760
  %v2066 = vsub.f32 %v1925, %v2065
  %v2067 = vand.u32 %v2066, 4294901760
  %2068 = vmatpush.msra.mxu0 %v2067
  %v2069 = vand.u32 %v1924, 4294901760
  %v2070 = vsub.f32 %v1924, %v2069
  %v2071 = vand.u32 %v2070, 4294901760
  %2072 = vmatpush.msra.mxu0 %v2071
  %v2073 = vand.u32 %v1923, 4294901760
  %v2074 = vsub.f32 %v1923, %v2073
  %v2075 = vand.u32 %v2074, 4294901760
  %2076 = vmatpush.msra.mxu0 %v2075
  %v2077 = vand.u32 %v1922, 4294901760
  %v2078 = vsub.f32 %v1922, %v2077
  %v2079 = vand.u32 %v2078, 4294901760
  %2080 = vmatpush.msra.mxu0 %v2079
  %v2081 = vand.u32 %v1340, 4294901760
  %2082 = vmatmul.f32.gmra.mxu0 %v2081
  %v2083 = vpop.f32.mrf.mxu0
  %v2084 = vadd.f32 %v2051, %v2083
  %2085 = vdwg.mxu0
  %2086 = vmatpush.msra.mxu0 0.0
  %2087 = vmatpush.msra.mxu0 0.0
  %2088 = vmatpush.msra.mxu0 0.0
  %2089 = vmatpush.msra.mxu0 0.0
  %2090 = vmatpush.msra.mxu0 0.0
  %2091 = vmatpush.msra.mxu0 0.0
  %2092 = vmatpush.msra.mxu0 0.0
  %2093 = vmatpush.msra.mxu0 0.0
  %2094 = vmatpush.msra.mxu0 0.0
  %2095 = vmatpush.msra.mxu0 0.0
  %2096 = vmatpush.msra.mxu0 0.0
  %2097 = vmatpush.msra.mxu0 0.0
  %v2098 = vand.u32 %v1925, 4294901760
  %2099 = vmatpush.msra.mxu0 %v2098
  %v2100 = vand.u32 %v1924, 4294901760
  %2101 = vmatpush.msra.mxu0 %v2100
  %v2102 = vand.u32 %v1923, 4294901760
  %2103 = vmatpush.msra.mxu0 %v2102
  %v2104 = vand.u32 %v1922, 4294901760
  %2105 = vmatpush.msra.mxu0 %v2104
  %v2106 = vand.u32 %v1340, 4294901760
  %2107 = vmatmul.f32.gmra.mxu0 %v2106
  %v2108 = vpop.f32.mrf.mxu0
  %v2109 = vadd.f32 %v2084, %v2108
  %2110 = vdwg.mxu0
  %v2111 = vld [vmem:[%s0] sm:$0xff]
  %v2112 = vld [vmem:[%s0 + $0x8] sm:$0xff]
  %v2114 = vrot.slane %v2109, 1
  %v2115 = vperm.slane %v2109, 0
  %v2116 = vperm.slane %v2114, 0
  %v2119 = vadd.f32 %v2111, %v2115
  %v2120 = vadd.f32 %v2112, %v2116
  %v2121 = vtanh.pop %v2119
  %v2122 = vtanh.pop %v2120
  %v2123 = vld [vmem:[%s5] sm:$0x1]
  %v2125 = vperm.slane %v2123, 0
  %v2127 = vmul.f32 %v2121, %v2125
  %v2128 = vmul.f32 %v2122, %v2125
  %v2129 = vsel %vm431, %v2127, 0.0
  %2130 = vadd.xlane.f32.xlu0 %v2129
  %v2131 = vpop.xlane.xlu0 %2130
  %v2132 = vsel %vm431, %v2128, 0.0
  %2133 = vadd.xlane.f32.xlu0 %v2132
  %v2134 = vpop.xlane.xlu0 %2133
  %v2137 = vperm.slane %v2131, %v45
  %v2138 = vperm.slane %v2134, %v45
  %v2139 = vsel %vm648, %v2138, %v2137
  %v2141 = vsel %vm651, %v2139, -inf
  %2142 = vmax.xlane.f32.xlu0 %v2141
  %v2143 = vpop.xlane.xlu0 %2142
  %v2145 = vperm.slane %v2143, 0
  %v2146 = vperm.slane %v2143, 1
  %v2149 = vsub.f32 %v2131, %v2145
  %v2150 = vsub.f32 %v2134, %v2146
  %v2151 = vmul.f32 %v2149, 1.442695
  %v2152 = vpow.pop %v2151
  %v2153 = vmul.f32 %v2150, 1.442695
  %v2154 = vpow.pop %v2153
  %2157 = vset.pattern.permute.xlu0 0
  %2158 = vperm.xlu0 %2157, %v2152
  %v2159 = vpop.permute.xlu0 %2158
  %2160 = vset.pattern.permute.xlu0 0
  %2161 = vperm.xlu0 %2160, %v2154
  %v2162 = vpop.permute.xlu0 %2161
  %v2163 = vperm.slane %v2159, %v45
  %v2164 = vperm.slane %v2162, %v45
  %v2165 = vsel %vm648, %v2164, %v2163
  %v2167 = vsel %vm651, %v2165, 0.0
  %2168 = vadd.xlane.f32.xlu0 %v2167
  %v2169 = vpop.xlane.xlu0 %2168
  %v2170 = vrcp.pop %v2169
  %v2171 = vmul.f32 %v2169, %v2170
  %v2172 = vsub.f32 1.0, %v2171
  %v2173 = vmul.f32 %v2170, %v2172
  %v2174 = vadd.f32 %v2170, %v2173
  %vm2175 = vweird.f32 %v2169
  %vm2176 = vweird.f32 %v2170
  %vm2177 = vmor %vm2175, %vm2176
  %v2178 = vsel %vm2177, %v2170, %v2174
  %v2179 = vand.u32 2147483647, %v2169
  %vm2180 = vcmp.eq.f32.partialorder %v2179, 8.507059e+37
  %v2181 = vand.u32 %v2169, 2147483648
  %v2182 = vor.u32 1.1754944e-38, %v2181
  %v2183 = vsel %vm2180, %v2182, %v2178
  %v2185 = vperm.slane %v2183, 0
  %v2186 = vperm.slane %v2183, 1
  %v2189 = vmul.f32 %v2152, %v2185
  %v2190 = vmul.f32 %v2154, %v2186
  %v2191 = vld [vmem:[%s1] sm:$0xff]
  %v2192 = vld [vmem:[%s1 + $0x8] sm:$0xff]
  %2194 = vset.pattern.permute.xlu0 0
  %2195 = vperm.xlu0 %2194, %v2189
  %v2196 = vpop.permute.xlu0 %2195
  %2199 = vset.pattern.permute.xlu0 0
  %2200 = vperm.xlu0 %2199, %v2190
  %v2201 = vpop.permute.xlu0 %2200
  %v2203 = vmul.f32 %v2196, %v2191
  %v2204 = vmul.f32 %v2201, %v2192
  %v2205 = vsel %vm431, %v2203, 0.0
  %v2206 = vrot.slane %v2205, 4
  %v2207 = vadd.f32 %v2205, %v2206
  %v2208 = vrot.slane %v2207, 2
  %v2209 = vadd.f32 %v2207, %v2208
  %v2210 = vrot.slane %v2209, 1
  %v2211 = vadd.f32 %v2209, %v2210
  %v2212 = vsel %vm431, %v2204, 0.0
  %v2213 = vrot.slane %v2212, 4
  %v2214 = vadd.f32 %v2212, %v2213
  %v2215 = vrot.slane %v2214, 2
  %v2216 = vadd.f32 %v2214, %v2215
  %v2217 = vrot.slane %v2216, 1
  %v2218 = vadd.f32 %v2216, %v2217
  %v2219 = vld [vmem:[%s6] sm:$0xff]
  %v2220 = vld [vmem:[%s6 + $0x8] sm:$0xff]
  %v2221 = vld [vmem:[%s7] sm:$0xff]
  %v2222 = vld [vmem:[%s7 + $0x8] sm:$0xff]
  %v2223 = vld [vmem:[%s7 + $0x10] sm:$0xff]
  %v2224 = vld [vmem:[%s7 + $0x18] sm:$0xff]
  %v2227 = vsel %vm648, %v2218, %v2211
  %v2228 = vsel %vm431, %v2227, 0
  %2230 = vmatpush.msra.mxu0 0.0
  %2231 = vmatpush.msra.mxu0 0.0
  %2232 = vmatpush.msra.mxu0 0.0
  %2233 = vmatpush.msra.mxu0 0.0
  %2234 = vmatpush.msra.mxu0 0.0
  %2235 = vmatpush.msra.mxu0 0.0
  %2236 = vmatpush.msra.mxu0 0.0
  %2237 = vmatpush.msra.mxu0 0.0
  %2238 = vmatpush.msra.mxu0 0.0
  %2239 = vmatpush.msra.mxu0 0.0
  %2240 = vmatpush.msra.mxu0 0.0
  %2241 = vmatpush.msra.mxu0 0.0
  %v2242 = vand.u32 %v2224, 4294901760
  %2243 = vmatpush.msra.mxu0 %v2242
  %v2244 = vand.u32 %v2223, 4294901760
  %2245 = vmatpush.msra.mxu0 %v2244
  %v2246 = vand.u32 %v2222, 4294901760
  %2247 = vmatpush.msra.mxu0 %v2246
  %v2248 = vand.u32 %v2221, 4294901760
  %2249 = vmatpush.msra.mxu0 %v2248
  %v2250 = vand.u32 %v2228, 4294901760
  %v2251 = vsub.f32 %v2228, %v2250
  %v2252 = vand.u32 %v2251, 4294901760
  %v2253 = vsub.f32 %v2251, %v2252
  %v2254 = vand.u32 %v2253, 4294901760
  %2255 = vmatmul.f32.gmra.mxu0 %v2254
  %v2256 = vpop.f32.mrf.mxu0
  %v2257 = vadd.f32 0.0, %v2256
  %2258 = vdwg.mxu0
  %2259 = vmatpush.msra.mxu0 0.0
  %2260 = vmatpush.msra.mxu0 0.0
  %2261 = vmatpush.msra.mxu0 0.0
  %2262 = vmatpush.msra.mxu0 0.0
  %2263 = vmatpush.msra.mxu0 0.0
  %2264 = vmatpush.msra.mxu0 0.0
  %2265 = vmatpush.msra.mxu0 0.0
  %2266 = vmatpush.msra.mxu0 0.0
  %2267 = vmatpush.msra.mxu0 0.0
  %2268 = vmatpush.msra.mxu0 0.0
  %2269 = vmatpush.msra.mxu0 0.0
  %2270 = vmatpush.msra.mxu0 0.0
  %v2271 = vand.u32 %v2224, 4294901760
  %v2272 = vsub.f32 %v2224, %v2271
  %v2273 = vand.u32 %v2272, 4294901760
  %v2274 = vsub.f32 %v2272, %v2273
  %v2275 = vand.u32 %v2274, 4294901760
  %2276 = vmatpush.msra.mxu0 %v2275
  %v2277 = vand.u32 %v2223, 4294901760
  %v2278 = vsub.f32 %v2223, %v2277
  %v2279 = vand.u32 %v2278, 4294901760
  %v2280 = vsub.f32 %v2278, %v2279
  %v2281 = vand.u32 %v2280, 4294901760
  %2282 = vmatpush.msra.mxu0 %v2281
  %v2283 = vand.u32 %v2222, 4294901760
  %v2284 = vsub.f32 %v2222, %v2283
  %v2285 = vand.u32 %v2284, 4294901760
  %v2286 = vsub.f32 %v2284, %v2285
  %v2287 = vand.u32 %v2286, 4294901760
  %2288 = vmatpush.msra.mxu0 %v2287
  %v2289 = vand.u32 %v2221, 4294901760
  %v2290 = vsub.f32 %v2221, %v2289
  %v2291 = vand.u32 %v2290, 4294901760
  %v2292 = vsub.f32 %v2290, %v2291
  %v2293 = vand.u32 %v2292, 4294901760
  %2294 = vmatpush.msra.mxu0 %v2293
  %v2295 = vand.u32 %v2228, 4294901760
  %2296 = vmatmul.f32.gmra.mxu0 %v2295
  %v2297 = vpop.f32.mrf.mxu0
  %v2298 = vadd.f32 %v2257, %v2297
  %2299 = vdwg.mxu0
  %2300 = vmatpush.msra.mxu0 0.0
  %2301 = vmatpush.msra.mxu0 0.0
  %2302 = vmatpush.msra.mxu0 0.0
  %2303 = vmatpush.msra.mxu0 0.0
  %2304 = vmatpush.msra.mxu0 0.0
  %2305 = vmatpush.msra.mxu0 0.0
  %2306 = vmatpush.msra.mxu0 0.0
  %2307 = vmatpush.msra.mxu0 0.0
  %2308 = vmatpush.msra.mxu0 0.0
  %2309 = vmatpush.msra.mxu0 0.0
  %2310 = vmatpush.msra.mxu0 0.0
  %2311 = vmatpush.msra.mxu0 0.0
  %v2312 = vand.u32 %v2224, 4294901760
  %v2313 = vsub.f32 %v2224, %v2312
  %2314 = vmatpush.msra.mxu0 %v2313
  %v2315 = vand.u32 %v2223, 4294901760
  %v2316 = vsub.f32 %v2223, %v2315
  %2317 = vmatpush.msra.mxu0 %v2316
  %v2318 = vand.u32 %v2222, 4294901760
  %v2319 = vsub.f32 %v2222, %v2318
  %2320 = vmatpush.msra.mxu0 %v2319
  %v2321 = vand.u32 %v2221, 4294901760
  %v2322 = vsub.f32 %v2221, %v2321
  %2323 = vmatpush.msra.mxu0 %v2322
  %v2324 = vand.u32 %v2228, 4294901760
  %v2325 = vsub.f32 %v2228, %v2324
  %2326 = vmatmul.f32.gmra.mxu0 %v2325
  %v2327 = vpop.f32.mrf.mxu0
  %v2328 = vadd.f32 %v2298, %v2327
  %2329 = vdwg.mxu0
  %2330 = vmatpush.msra.mxu0 0.0
  %2331 = vmatpush.msra.mxu0 0.0
  %2332 = vmatpush.msra.mxu0 0.0
  %2333 = vmatpush.msra.mxu0 0.0
  %2334 = vmatpush.msra.mxu0 0.0
  %2335 = vmatpush.msra.mxu0 0.0
  %2336 = vmatpush.msra.mxu0 0.0
  %2337 = vmatpush.msra.mxu0 0.0
  %2338 = vmatpush.msra.mxu0 0.0
  %2339 = vmatpush.msra.mxu0 0.0
  %2340 = vmatpush.msra.mxu0 0.0
  %2341 = vmatpush.msra.mxu0 0.0
  %v2342 = vand.u32 %v2224, 4294901760
  %2343 = vmatpush.msra.mxu0 %v2342
  %v2344 = vand.u32 %v2223, 4294901760
  %2345 = vmatpush.msra.mxu0 %v2344
  %v2346 = vand.u32 %v2222, 4294901760
  %2347 = vmatpush.msra.mxu0 %v2346
  %v2348 = vand.u32 %v2221, 4294901760
  %2349 = vmatpush.msra.mxu0 %v2348
  %v2350 = vand.u32 %v2228, 4294901760
  %v2351 = vsub.f32 %v2228, %v2350
  %v2352 = vand.u32 %v2351, 4294901760
  %2353 = vmatmul.f32.gmra.mxu0 %v2352
  %v2354 = vpop.f32.mrf.mxu0
  %v2355 = vadd.f32 %v2328, %v2354
  %2356 = vdwg.mxu0
  %2357 = vmatpush.msra.mxu0 0.0
  %2358 = vmatpush.msra.mxu0 0.0
  %2359 = vmatpush.msra.mxu0 0.0
  %2360 = vmatpush.msra.mxu0 0.0
  %2361 = vmatpush.msra.mxu0 0.0
  %2362 = vmatpush.msra.mxu0 0.0
  %2363 = vmatpush.msra.mxu0 0.0
  %2364 = vmatpush.msra.mxu0 0.0
  %2365 = vmatpush.msra.mxu0 0.0
  %2366 = vmatpush.msra.mxu0 0.0
  %2367 = vmatpush.msra.mxu0 0.0
  %2368 = vmatpush.msra.mxu0 0.0
  %v2369 = vand.u32 %v2224, 4294901760
  %v2370 = vsub.f32 %v2224, %v2369
  %v2371 = vand.u32 %v2370, 4294901760
  %2372 = vmatpush.msra.mxu0 %v2371
  %v2373 = vand.u32 %v2223, 4294901760
  %v2374 = vsub.f32 %v2223, %v2373
  %v2375 = vand.u32 %v2374, 4294901760
  %2376 = vmatpush.msra.mxu0 %v2375
  %v2377 = vand.u32 %v2222, 4294901760
  %v2378 = vsub.f32 %v2222, %v2377
  %v2379 = vand.u32 %v2378, 4294901760
  %2380 = vmatpush.msra.mxu0 %v2379
  %v2381 = vand.u32 %v2221, 4294901760
  %v2382 = vsub.f32 %v2221, %v2381
  %v2383 = vand.u32 %v2382, 4294901760
  %2384 = vmatpush.msra.mxu0 %v2383
  %v2385 = vand.u32 %v2228, 4294901760
  %2386 = vmatmul.f32.gmra.mxu0 %v2385
  %v2387 = vpop.f32.mrf.mxu0
  %v2388 = vadd.f32 %v2355, %v2387
  %2389 = vdwg.mxu0
  %2390 = vmatpush.msra.mxu0 0.0
  %2391 = vmatpush.msra.mxu0 0.0
  %2392 = vmatpush.msra.mxu0 0.0
  %2393 = vmatpush.msra.mxu0 0.0
  %2394 = vmatpush.msra.mxu0 0.0
  %2395 = vmatpush.msra.mxu0 0.0
  %2396 = vmatpush.msra.mxu0 0.0
  %2397 = vmatpush.msra.mxu0 0.0
  %2398 = vmatpush.msra.mxu0 0.0
  %2399 = vmatpush.msra.mxu0 0.0
  %2400 = vmatpush.msra.mxu0 0.0
  %2401 = vmatpush.msra.mxu0 0.0
  %v2402 = vand.u32 %v2224, 4294901760
  %2403 = vmatpush.msra.mxu0 %v2402
  %v2404 = vand.u32 %v2223, 4294901760
  %2405 = vmatpush.msra.mxu0 %v2404
  %v2406 = vand.u32 %v2222, 4294901760
  %2407 = vmatpush.msra.mxu0 %v2406
  %v2408 = vand.u32 %v2221, 4294901760
  %2409 = vmatpush.msra.mxu0 %v2408
  %v2410 = vand.u32 %v2228, 4294901760
  %2411 = vmatmul.f32.gmra.mxu0 %v2410
  %v2412 = vpop.f32.mrf.mxu0
  %v2413 = vadd.f32 %v2388, %v2412
  %2414 = vdwg.mxu0
  %v2416 = vsel %vm926, %v1920, 0
  %2418 = vmatpush.msra.mxu0 0.0
  %2419 = vmatpush.msra.mxu0 0.0
  %2420 = vmatpush.msra.mxu0 0.0
  %2421 = vmatpush.msra.mxu0 0.0
  %2422 = vmatpush.msra.mxu0 0.0
  %2423 = vmatpush.msra.mxu0 0.0
  %2424 = vmatpush.msra.mxu0 0.0
  %2425 = vmatpush.msra.mxu0 0.0
  %2426 = vmatpush.msra.mxu0 0.0
  %2427 = vmatpush.msra.mxu0 0.0
  %2428 = vmatpush.msra.mxu0 0.0
  %2429 = vmatpush.msra.mxu0 0.0
  %2430 = vmatpush.msra.mxu0 0.0
  %2431 = vmatpush.msra.mxu0 0.0
  %v2432 = vand.u32 %v2220, 4294901760
  %2433 = vmatpush.msra.mxu0 %v2432
  %v2434 = vand.u32 %v2219, 4294901760
  %2435 = vmatpush.msra.mxu0 %v2434
  %v2436 = vand.u32 %v2416, 4294901760
  %v2437 = vsub.f32 %v2416, %v2436
  %v2438 = vand.u32 %v2437, 4294901760
  %v2439 = vsub.f32 %v2437, %v2438
  %v2440 = vand.u32 %v2439, 4294901760
  %2441 = vmatmul.f32.gmra.mxu0 %v2440
  %v2442 = vpop.f32.mrf.mxu0
  %v2443 = vadd.f32 %v2413, %v2442
  %2444 = vdwg.mxu0
  %2445 = vmatpush.msra.mxu0 0.0
  %2446 = vmatpush.msra.mxu0 0.0
  %2447 = vmatpush.msra.mxu0 0.0
  %2448 = vmatpush.msra.mxu0 0.0
  %2449 = vmatpush.msra.mxu0 0.0
  %2450 = vmatpush.msra.mxu0 0.0
  %2451 = vmatpush.msra.mxu0 0.0
  %2452 = vmatpush.msra.mxu0 0.0
  %2453 = vmatpush.msra.mxu0 0.0
  %2454 = vmatpush.msra.mxu0 0.0
  %2455 = vmatpush.msra.mxu0 0.0
  %2456 = vmatpush.msra.mxu0 0.0
  %2457 = vmatpush.msra.mxu0 0.0
  %2458 = vmatpush.msra.mxu0 0.0
  %v2459 = vand.u32 %v2220, 4294901760
  %v2460 = vsub.f32 %v2220, %v2459
  %v2461 = vand.u32 %v2460, 4294901760
  %v2462 = vsub.f32 %v2460, %v2461
  %v2463 = vand.u32 %v2462, 4294901760
  %2464 = vmatpush.msra.mxu0 %v2463
  %v2465 = vand.u32 %v2219, 4294901760
  %v2466 = vsub.f32 %v2219, %v2465
  %v2467 = vand.u32 %v2466, 4294901760
  %v2468 = vsub.f32 %v2466, %v2467
  %v2469 = vand.u32 %v2468, 4294901760
  %2470 = vmatpush.msra.mxu0 %v2469
  %v2471 = vand.u32 %v2416, 4294901760
  %2472 = vmatmul.f32.gmra.mxu0 %v2471
  %v2473 = vpop.f32.mrf.mxu0
  %v2474 = vadd.f32 %v2443, %v2473
  %2475 = vdwg.mxu0
  %2476 = vmatpush.msra.mxu0 0.0
  %2477 = vmatpush.msra.mxu0 0.0
  %2478 = vmatpush.msra.mxu0 0.0
  %2479 = vmatpush.msra.mxu0 0.0
  %2480 = vmatpush.msra.mxu0 0.0
  %2481 = vmatpush.msra.mxu0 0.0
  %2482 = vmatpush.msra.mxu0 0.0
  %2483 = vmatpush.msra.mxu0 0.0
  %2484 = vmatpush.msra.mxu0 0.0
  %2485 = vmatpush.msra.mxu0 0.0
  %2486 = vmatpush.msra.mxu0 0.0
  %2487 = vmatpush.msra.mxu0 0.0
  %2488 = vmatpush.msra.mxu0 0.0
  %2489 = vmatpush.msra.mxu0 0.0
  %v2490 = vand.u32 %v2220, 4294901760
  %v2491 = vsub.f32 %v2220, %v2490
  %2492 = vmatpush.msra.mxu0 %v2491
  %v2493 = vand.u32 %v2219, 4294901760
  %v2494 = vsub.f32 %v2219, %v2493
  %2495 = vmatpush.msra.mxu0 %v2494
  %v2496 = vand.u32 %v2416, 4294901760
  %v2497 = vsub.f32 %v2416, %v2496
  %2498 = vmatmul.f32.gmra.mxu0 %v2497
  %v2499 = vpop.f32.mrf.mxu0
  %v2500 = vadd.f32 %v2474, %v2499
  %2501 = vdwg.mxu0
  %2502 = vmatpush.msra.mxu0 0.0
  %2503 = vmatpush.msra.mxu0 0.0
  %2504 = vmatpush.msra.mxu0 0.0
  %2505 = vmatpush.msra.mxu0 0.0
  %2506 = vmatpush.msra.mxu0 0.0
  %2507 = vmatpush.msra.mxu0 0.0
  %2508 = vmatpush.msra.mxu0 0.0
  %2509 = vmatpush.msra.mxu0 0.0
  %2510 = vmatpush.msra.mxu0 0.0
  %2511 = vmatpush.msra.mxu0 0.0
  %2512 = vmatpush.msra.mxu0 0.0
  %2513 = vmatpush.msra.mxu0 0.0
  %2514 = vmatpush.msra.mxu0 0.0
  %2515 = vmatpush.msra.mxu0 0.0
  %v2516 = vand.u32 %v2220, 4294901760
  %2517 = vmatpush.msra.mxu0 %v2516
  %v2518 = vand.u32 %v2219, 4294901760
  %2519 = vmatpush.msra.mxu0 %v2518
  %v2520 = vand.u32 %v2416, 4294901760
  %v2521 = vsub.f32 %v2416, %v2520
  %v2522 = vand.u32 %v2521, 4294901760
  %2523 = vmatmul.f32.gmra.mxu0 %v2522
  %v2524 = vpop.f32.mrf.mxu0
  %v2525 = vadd.f32 %v2500, %v2524
  %2526 = vdwg.mxu0
  %2527 = vmatpush.msra.mxu0 0.0
  %2528 = vmatpush.msra.mxu0 0.0
  %2529 = vmatpush.msra.mxu0 0.0
  %2530 = vmatpush.msra.mxu0 0.0
  %2531 = vmatpush.msra.mxu0 0.0
  %2532 = vmatpush.msra.mxu0 0.0
  %2533 = vmatpush.msra.mxu0 0.0
  %2534 = vmatpush.msra.mxu0 0.0
  %2535 = vmatpush.msra.mxu0 0.0
  %2536 = vmatpush.msra.mxu0 0.0
  %2537 = vmatpush.msra.mxu0 0.0
  %2538 = vmatpush.msra.mxu0 0.0
  %2539 = vmatpush.msra.mxu0 0.0
  %2540 = vmatpush.msra.mxu0 0.0
  %v2541 = vand.u32 %v2220, 4294901760
  %v2542 = vsub.f32 %v2220, %v2541
  %v2543 = vand.u32 %v2542, 4294901760
  %2544 = vmatpush.msra.mxu0 %v2543
  %v2545 = vand.u32 %v2219, 4294901760
  %v2546 = vsub.f32 %v2219, %v2545
  %v2547 = vand.u32 %v2546, 4294901760
  %2548 = vmatpush.msra.mxu0 %v2547
  %v2549 = vand.u32 %v2416, 4294901760
  %2550 = vmatmul.f32.gmra.mxu0 %v2549
  %v2551 = vpop.f32.mrf.mxu0
  %v2552 = vadd.f32 %v2525, %v2551
  %2553 = vdwg.mxu0
  %2554 = vmatpush.msra.mxu0 0.0
  %2555 = vmatpush.msra.mxu0 0.0
  %2556 = vmatpush.msra.mxu0 0.0
  %2557 = vmatpush.msra.mxu0 0.0
  %2558 = vmatpush.msra.mxu0 0.0
  %2559 = vmatpush.msra.mxu0 0.0
  %2560 = vmatpush.msra.mxu0 0.0
  %2561 = vmatpush.msra.mxu0 0.0
  %2562 = vmatpush.msra.mxu0 0.0
  %2563 = vmatpush.msra.mxu0 0.0
  %2564 = vmatpush.msra.mxu0 0.0
  %2565 = vmatpush.msra.mxu0 0.0
  %2566 = vmatpush.msra.mxu0 0.0
  %2567 = vmatpush.msra.mxu0 0.0
  %v2568 = vand.u32 %v2220, 4294901760
  %2569 = vmatpush.msra.mxu0 %v2568
  %v2570 = vand.u32 %v2219, 4294901760
  %2571 = vmatpush.msra.mxu0 %v2570
  %v2572 = vand.u32 %v2416, 4294901760
  %2573 = vmatmul.f32.gmra.mxu0 %v2572
  %v2574 = vpop.f32.mrf.mxu0
  %v2575 = vadd.f32 %v2552, %v2574
  %2576 = vdwg.mxu0
  %v2577 = vld [vmem:[%s9] sm:$0x1]
  %v2579 = vperm.slane %v2577, 0
  %v2581 = vadd.f32 %v2575, %v2579
  %v2582 = vld [vmem:[%s8] sm:$0xff]
  %v2583 = vld [vmem:[%s8 + $0x8] sm:$0xff]
  %v2584 = vld [vmem:[%s8 + $0x10] sm:$0xff]
  %v2585 = vld [vmem:[%s8 + $0x18] sm:$0xff]
  %v2586 = vld [vmem:[%s10] sm:$0x1]
  %v2588 = vperm.slane %v2586, 0
  %2590 = vmatpush.msra.mxu0 0.0
  %2591 = vmatpush.msra.mxu0 0.0
  %2592 = vmatpush.msra.mxu0 0.0
  %2593 = vmatpush.msra.mxu0 0.0
  %2594 = vmatpush.msra.mxu0 0.0
  %2595 = vmatpush.msra.mxu0 0.0
  %2596 = vmatpush.msra.mxu0 0.0
  %2597 = vmatpush.msra.mxu0 0.0
  %2598 = vmatpush.msra.mxu0 0.0
  %2599 = vmatpush.msra.mxu0 0.0
  %2600 = vmatpush.msra.mxu0 0.0
  %2601 = vmatpush.msra.mxu0 0.0
  %v2602 = vand.u32 %v2585, 4294901760
  %2603 = vmatpush.msra.mxu0 %v2602
  %v2604 = vand.u32 %v2584, 4294901760
  %2605 = vmatpush.msra.mxu0 %v2604
  %v2606 = vand.u32 %v2583, 4294901760
  %2607 = vmatpush.msra.mxu0 %v2606
  %v2608 = vand.u32 %v2582, 4294901760
  %2609 = vmatpush.msra.mxu0 %v2608
  %v2610 = vand.u32 %v1340, 4294901760
  %v2611 = vsub.f32 %v1340, %v2610
  %v2612 = vand.u32 %v2611, 4294901760
  %v2613 = vsub.f32 %v2611, %v2612
  %v2614 = vand.u32 %v2613, 4294901760
  %2615 = vmatmul.f32.gmra.mxu0 %v2614
  %v2616 = vpop.f32.mrf.mxu0
  %v2617 = vadd.f32 %v2588, %v2616
  %2618 = vdwg.mxu0
  %2619 = vmatpush.msra.mxu0 0.0
  %2620 = vmatpush.msra.mxu0 0.0
  %2621 = vmatpush.msra.mxu0 0.0
  %2622 = vmatpush.msra.mxu0 0.0
  %2623 = vmatpush.msra.mxu0 0.0
  %2624 = vmatpush.msra.mxu0 0.0
  %2625 = vmatpush.msra.mxu0 0.0
  %2626 = vmatpush.msra.mxu0 0.0
  %2627 = vmatpush.msra.mxu0 0.0
  %2628 = vmatpush.msra.mxu0 0.0
  %2629 = vmatpush.msra.mxu0 0.0
  %2630 = vmatpush.msra.mxu0 0.0
  %v2631 = vand.u32 %v2585, 4294901760
  %v2632 = vsub.f32 %v2585, %v2631
  %v2633 = vand.u32 %v2632, 4294901760
  %v2634 = vsub.f32 %v2632, %v2633
  %v2635 = vand.u32 %v2634, 4294901760
  %2636 = vmatpush.msra.mxu0 %v2635
  %v2637 = vand.u32 %v2584, 4294901760
  %v2638 = vsub.f32 %v2584, %v2637
  %v2639 = vand.u32 %v2638, 4294901760
  %v2640 = vsub.f32 %v2638, %v2639
  %v2641 = vand.u32 %v2640, 4294901760
  %2642 = vmatpush.msra.mxu0 %v2641
  %v2643 = vand.u32 %v2583, 4294901760
  %v2644 = vsub.f32 %v2583, %v2643
  %v2645 = vand.u32 %v2644, 4294901760
  %v2646 = vsub.f32 %v2644, %v2645
  %v2647 = vand.u32 %v2646, 4294901760
  %2648 = vmatpush.msra.mxu0 %v2647
  %v2649 = vand.u32 %v2582, 4294901760
  %v2650 = vsub.f32 %v2582, %v2649
  %v2651 = vand.u32 %v2650, 4294901760
  %v2652 = vsub.f32 %v2650, %v2651
  %v2653 = vand.u32 %v2652, 4294901760
  %2654 = vmatpush.msra.mxu0 %v2653
  %v2655 = vand.u32 %v1340, 4294901760
  %2656 = vmatmul.f32.gmra.mxu0 %v2655
  %v2657 = vpop.f32.mrf.mxu0
  %v2658 = vadd.f32 %v2617, %v2657
  %2659 = vdwg.mxu0
  %2660 = vmatpush.msra.mxu0 0.0
  %2661 = vmatpush.msra.mxu0 0.0
  %2662 = vmatpush.msra.mxu0 0.0
  %2663 = vmatpush.msra.mxu0 0.0
  %2664 = vmatpush.msra.mxu0 0.0
  %2665 = vmatpush.msra.mxu0 0.0
  %2666 = vmatpush.msra.mxu0 0.0
  %2667 = vmatpush.msra.mxu0 0.0
  %2668 = vmatpush.msra.mxu0 0.0
  %2669 = vmatpush.msra.mxu0 0.0
  %2670 = vmatpush.msra.mxu0 0.0
  %2671 = vmatpush.msra.mxu0 0.0
  %v2672 = vand.u32 %v2585, 4294901760
  %v2673 = vsub.f32 %v2585, %v2672
  %2674 = vmatpush.msra.mxu0 %v2673
  %v2675 = vand.u32 %v2584, 4294901760
  %v2676 = vsub.f32 %v2584, %v2675
  %2677 = vmatpush.msra.mxu0 %v2676
  %v2678 = vand.u32 %v2583, 4294901760
  %v2679 = vsub.f32 %v2583, %v2678
  %2680 = vmatpush.msra.mxu0 %v2679
  %v2681 = vand.u32 %v2582, 4294901760
  %v2682 = vsub.f32 %v2582, %v2681
  %2683 = vmatpush.msra.mxu0 %v2682
  %v2684 = vand.u32 %v1340, 4294901760
  %v2685 = vsub.f32 %v1340, %v2684
  %2686 = vmatmul.f32.gmra.mxu0 %v2685
  %v2687 = vpop.f32.mrf.mxu0
  %v2688 = vadd.f32 %v2658, %v2687
  %2689 = vdwg.mxu0
  %2690 = vmatpush.msra.mxu0 0.0
  %2691 = vmatpush.msra.mxu0 0.0
  %2692 = vmatpush.msra.mxu0 0.0
  %2693 = vmatpush.msra.mxu0 0.0
  %2694 = vmatpush.msra.mxu0 0.0
  %2695 = vmatpush.msra.mxu0 0.0
  %2696 = vmatpush.msra.mxu0 0.0
  %2697 = vmatpush.msra.mxu0 0.0
  %2698 = vmatpush.msra.mxu0 0.0
  %2699 = vmatpush.msra.mxu0 0.0
  %2700 = vmatpush.msra.mxu0 0.0
  %2701 = vmatpush.msra.mxu0 0.0
  %v2702 = vand.u32 %v2585, 4294901760
  %2703 = vmatpush.msra.mxu0 %v2702
  %v2704 = vand.u32 %v2584, 4294901760
  %2705 = vmatpush.msra.mxu0 %v2704
  %v2706 = vand.u32 %v2583, 4294901760
  %2707 = vmatpush.msra.mxu0 %v2706
  %v2708 = vand.u32 %v2582, 4294901760
  %2709 = vmatpush.msra.mxu0 %v2708
  %v2710 = vand.u32 %v1340, 4294901760
  %v2711 = vsub.f32 %v1340, %v2710
  %v2712 = vand.u32 %v2711, 4294901760
  %2713 = vmatmul.f32.gmra.mxu0 %v2712
  %v2714 = vpop.f32.mrf.mxu0
  %v2715 = vadd.f32 %v2688, %v2714
  %2716 = vdwg.mxu0
  %2717 = vmatpush.msra.mxu0 0.0
  %2718 = vmatpush.msra.mxu0 0.0
  %2719 = vmatpush.msra.mxu0 0.0
  %2720 = vmatpush.msra.mxu0 0.0
  %2721 = vmatpush.msra.mxu0 0.0
  %2722 = vmatpush.msra.mxu0 0.0
  %2723 = vmatpush.msra.mxu0 0.0
  %2724 = vmatpush.msra.mxu0 0.0
  %2725 = vmatpush.msra.mxu0 0.0
  %2726 = vmatpush.msra.mxu0 0.0
  %2727 = vmatpush.msra.mxu0 0.0
  %2728 = vmatpush.msra.mxu0 0.0
  %v2729 = vand.u32 %v2585, 4294901760
  %v2730 = vsub.f32 %v2585, %v2729
  %v2731 = vand.u32 %v2730, 4294901760
  %2732 = vmatpush.msra.mxu0 %v2731
  %v2733 = vand.u32 %v2584, 4294901760
  %v2734 = vsub.f32 %v2584, %v2733
  %v2735 = vand.u32 %v2734, 4294901760
  %2736 = vmatpush.msra.mxu0 %v2735
  %v2737 = vand.u32 %v2583, 4294901760
  %v2738 = vsub.f32 %v2583, %v2737
  %v2739 = vand.u32 %v2738, 4294901760
  %2740 = vmatpush.msra.mxu0 %v2739
  %v2741 = vand.u32 %v2582, 4294901760
  %v2742 = vsub.f32 %v2582, %v2741
  %v2743 = vand.u32 %v2742, 4294901760
  %2744 = vmatpush.msra.mxu0 %v2743
  %v2745 = vand.u32 %v1340, 4294901760
  %2746 = vmatmul.f32.gmra.mxu0 %v2745
  %v2747 = vpop.f32.mrf.mxu0
  %v2748 = vadd.f32 %v2715, %v2747
  %2749 = vdwg.mxu0
  %2750 = vmatpush.msra.mxu0 0.0
  %2751 = vmatpush.msra.mxu0 0.0
  %2752 = vmatpush.msra.mxu0 0.0
  %2753 = vmatpush.msra.mxu0 0.0
  %2754 = vmatpush.msra.mxu0 0.0
  %2755 = vmatpush.msra.mxu0 0.0
  %2756 = vmatpush.msra.mxu0 0.0
  %2757 = vmatpush.msra.mxu0 0.0
  %2758 = vmatpush.msra.mxu0 0.0
  %2759 = vmatpush.msra.mxu0 0.0
  %2760 = vmatpush.msra.mxu0 0.0
  %2761 = vmatpush.msra.mxu0 0.0
  %v2762 = vand.u32 %v2585, 4294901760
  %2763 = vmatpush.msra.mxu0 %v2762
  %v2764 = vand.u32 %v2584, 4294901760
  %2765 = vmatpush.msra.mxu0 %v2764
  %v2766 = vand.u32 %v2583, 4294901760
  %2767 = vmatpush.msra.mxu0 %v2766
  %v2768 = vand.u32 %v2582, 4294901760
  %2769 = vmatpush.msra.mxu0 %v2768
  %v2770 = vand.u32 %v1340, 4294901760
  %2771 = vmatmul.f32.gmra.mxu0 %v2770
  %v2772 = vpop.f32.mrf.mxu0
  %v2773 = vadd.f32 %v2748, %v2772
  %2774 = vdwg.mxu0
  %v2775 = vadd.f32 %v2581, %v2773
  %v2776 = vxor.u32 %v2775, 2147483648
  %v2777 = vmul.f32 %v2776, 1.442695
  %v2778 = vpow.pop %v2777
  %v2779 = vadd.f32 %v2778, 1.0
  %v2780 = vrcp.pop %v2779
  %v2781 = vmul.f32 %v2779, %v2780
  %v2782 = vsub.f32 1.0, %v2781
  %v2783 = vmul.f32 %v2780, %v2782
  %v2784 = vadd.f32 %v2780, %v2783
  %vm2785 = vweird.f32 %v2779
  %vm2786 = vweird.f32 %v2780
  %vm2787 = vmor %vm2785, %vm2786
  %v2788 = vsel %vm2787, %v2780, %v2784
  %v2789 = vand.u32 2147483647, %v2779
  %vm2790 = vcmp.eq.f32.partialorder %v2789, 8.507059e+37
  %v2791 = vand.u32 %v2779, 2147483648
  %v2792 = vor.u32 1.1754944e-38, %v2791
  %v2793 = vsel %vm2790, %v2792, %v2788
  %v2794 = vmul.f32 1.0, %v2793
  %2796 = vrot.lane.b32.xlu0 %v2773, 64
  %v2797 = vpop.permute.xlu0 %2796
  %v2799 = vmul.f32 %v2794, %v2797
  %2801 = vrot.lane.b32.xlu0 %v2799, 64
  %v2802 = vpop.permute.xlu0 %2801
  %v2804 = vadd.f32 %v2581, %v2802
  %v2805 = vtanh.pop %v2804
  %v2806 = vsub.f32 1.0, %v2794
  %2808 = vrot.lane.b32.xlu0 %v2805, 96
  %v2809 = vpop.permute.xlu0 %2808
  %v2811 = vmul.f32 %v2806, %v2809
  %v2812 = vmul.f32 %v2794, %v1328
  %v2813 = vadd.f32 %v2811, %v2812
  %v2814 = vld [vmem:[%s11] sm:$0xff]
  %v2815 = vld [vmem:[%s11 + $0x8] sm:$0xff]
  %v2816 = vld [vmem:[%s11 + $0x10] sm:$0xff]
  %v2817 = vld [vmem:[%s11 + $0x18] sm:$0xff]
  %v2818 = vld [vmem:[%s12] sm:$0x1]
  %v2820 = vperm.slane %v2818, 0
  %2823 = vrot.lane.b32.xlu0 %v2813, 96
  %v2824 = vpop.permute.xlu0 %2823
  %v2825 = vsel %vm431, %v2824, 0
  %2827 = vmatpush.msra.mxu0 0.0
  %2828 = vmatpush.msra.mxu0 0.0
  %2829 = vmatpush.msra.mxu0 0.0
  %2830 = vmatpush.msra.mxu0 0.0
  %2831 = vmatpush.msra.mxu0 0.0
  %2832 = vmatpush.msra.mxu0 0.0
  %2833 = vmatpush.msra.mxu0 0.0
  %2834 = vmatpush.msra.mxu0 0.0
  %2835 = vmatpush.msra.mxu0 0.0
  %2836 = vmatpush.msra.mxu0 0.0
  %2837 = vmatpush.msra.mxu0 0.0
  %2838 = vmatpush.msra.mxu0 0.0
  %v2839 = vand.u32 %v2817, 4294901760
  %2840 = vmatpush.msra.mxu0 %v2839
  %v2841 = vand.u32 %v2816, 4294901760
  %2842 = vmatpush.msra.mxu0 %v2841
  %v2843 = vand.u32 %v2815, 4294901760
  %2844 = vmatpush.msra.mxu0 %v2843
  %v2845 = vand.u32 %v2814, 4294901760
  %2846 = vmatpush.msra.mxu0 %v2845
  %v2847 = vand.u32 %v2825, 4294901760
  %v2848 = vsub.f32 %v2825, %v2847
  %v2849 = vand.u32 %v2848, 4294901760
  %v2850 = vsub.f32 %v2848, %v2849
  %v2851 = vand.u32 %v2850, 4294901760
  %2852 = vmatmul.f32.gmra.mxu0 %v2851
  %v2853 = vpop.f32.mrf.mxu0
  %v2854 = vadd.f32 %v2820, %v2853
  %2855 = vdwg.mxu0
  %2856 = vmatpush.msra.mxu0 0.0
  %2857 = vmatpush.msra.mxu0 0.0
  %2858 = vmatpush.msra.mxu0 0.0
  %2859 = vmatpush.msra.mxu0 0.0
  %2860 = vmatpush.msra.mxu0 0.0
  %2861 = vmatpush.msra.mxu0 0.0
  %2862 = vmatpush.msra.mxu0 0.0
  %2863 = vmatpush.msra.mxu0 0.0
  %2864 = vmatpush.msra.mxu0 0.0
  %2865 = vmatpush.msra.mxu0 0.0
  %2866 = vmatpush.msra.mxu0 0.0
  %2867 = vmatpush.msra.mxu0 0.0
  %v2868 = vand.u32 %v2817, 4294901760
  %v2869 = vsub.f32 %v2817, %v2868
  %v2870 = vand.u32 %v2869, 4294901760
  %v2871 = vsub.f32 %v2869, %v2870
  %v2872 = vand.u32 %v2871, 4294901760
  %2873 = vmatpush.msra.mxu0 %v2872
  %v2874 = vand.u32 %v2816, 4294901760
  %v2875 = vsub.f32 %v2816, %v2874
  %v2876 = vand.u32 %v2875, 4294901760
  %v2877 = vsub.f32 %v2875, %v2876
  %v2878 = vand.u32 %v2877, 4294901760
  %2879 = vmatpush.msra.mxu0 %v2878
  %v2880 = vand.u32 %v2815, 4294901760
  %v2881 = vsub.f32 %v2815, %v2880
  %v2882 = vand.u32 %v2881, 4294901760
  %v2883 = vsub.f32 %v2881, %v2882
  %v2884 = vand.u32 %v2883, 4294901760
  %2885 = vmatpush.msra.mxu0 %v2884
  %v2886 = vand.u32 %v2814, 4294901760
  %v2887 = vsub.f32 %v2814, %v2886
  %v2888 = vand.u32 %v2887, 4294901760
  %v2889 = vsub.f32 %v2887, %v2888
  %v2890 = vand.u32 %v2889, 4294901760
  %2891 = vmatpush.msra.mxu0 %v2890
  %v2892 = vand.u32 %v2825, 4294901760
  %2893 = vmatmul.f32.gmra.mxu0 %v2892
  %v2894 = vpop.f32.mrf.mxu0
  %v2895 = vadd.f32 %v2854, %v2894
  %2896 = vdwg.mxu0
  %2897 = vmatpush.msra.mxu0 0.0
  %2898 = vmatpush.msra.mxu0 0.0
  %2899 = vmatpush.msra.mxu0 0.0
  %2900 = vmatpush.msra.mxu0 0.0
  %2901 = vmatpush.msra.mxu0 0.0
  %2902 = vmatpush.msra.mxu0 0.0
  %2903 = vmatpush.msra.mxu0 0.0
  %2904 = vmatpush.msra.mxu0 0.0
  %2905 = vmatpush.msra.mxu0 0.0
  %2906 = vmatpush.msra.mxu0 0.0
  %2907 = vmatpush.msra.mxu0 0.0
  %2908 = vmatpush.msra.mxu0 0.0
  %v2909 = vand.u32 %v2817, 4294901760
  %v2910 = vsub.f32 %v2817, %v2909
  %2911 = vmatpush.msra.mxu0 %v2910
  %v2912 = vand.u32 %v2816, 4294901760
  %v2913 = vsub.f32 %v2816, %v2912
  %2914 = vmatpush.msra.mxu0 %v2913
  %v2915 = vand.u32 %v2815, 4294901760
  %v2916 = vsub.f32 %v2815, %v2915
  %2917 = vmatpush.msra.mxu0 %v2916
  %v2918 = vand.u32 %v2814, 4294901760
  %v2919 = vsub.f32 %v2814, %v2918
  %2920 = vmatpush.msra.mxu0 %v2919
  %v2921 = vand.u32 %v2825, 4294901760
  %v2922 = vsub.f32 %v2825, %v2921
  %2923 = vmatmul.f32.gmra.mxu0 %v2922
  %v2924 = vpop.f32.mrf.mxu0
  %v2925 = vadd.f32 %v2895, %v2924
  %2926 = vdwg.mxu0
  %2927 = vmatpush.msra.mxu0 0.0
  %2928 = vmatpush.msra.mxu0 0.0
  %2929 = vmatpush.msra.mxu0 0.0
  %2930 = vmatpush.msra.mxu0 0.0
  %2931 = vmatpush.msra.mxu0 0.0
  %2932 = vmatpush.msra.mxu0 0.0
  %2933 = vmatpush.msra.mxu0 0.0
  %2934 = vmatpush.msra.mxu0 0.0
  %2935 = vmatpush.msra.mxu0 0.0
  %2936 = vmatpush.msra.mxu0 0.0
  %2937 = vmatpush.msra.mxu0 0.0
  %2938 = vmatpush.msra.mxu0 0.0
  %v2939 = vand.u32 %v2817, 4294901760
  %2940 = vmatpush.msra.mxu0 %v2939
  %v2941 = vand.u32 %v2816, 4294901760
  %2942 = vmatpush.msra.mxu0 %v2941
  %v2943 = vand.u32 %v2815, 4294901760
  %2944 = vmatpush.msra.mxu0 %v2943
  %v2945 = vand.u32 %v2814, 4294901760
  %2946 = vmatpush.msra.mxu0 %v2945
  %v2947 = vand.u32 %v2825, 4294901760
  %v2948 = vsub.f32 %v2825, %v2947
  %v2949 = vand.u32 %v2948, 4294901760
  %2950 = vmatmul.f32.gmra.mxu0 %v2949
  %v2951 = vpop.f32.mrf.mxu0
  %v2952 = vadd.f32 %v2925, %v2951
  %2953 = vdwg.mxu0
  %2954 = vmatpush.msra.mxu0 0.0
  %2955 = vmatpush.msra.mxu0 0.0
  %2956 = vmatpush.msra.mxu0 0.0
  %2957 = vmatpush.msra.mxu0 0.0
  %2958 = vmatpush.msra.mxu0 0.0
  %2959 = vmatpush.msra.mxu0 0.0
  %2960 = vmatpush.msra.mxu0 0.0
  %2961 = vmatpush.msra.mxu0 0.0
  %2962 = vmatpush.msra.mxu0 0.0
  %2963 = vmatpush.msra.mxu0 0.0
  %2964 = vmatpush.msra.mxu0 0.0
  %2965 = vmatpush.msra.mxu0 0.0
  %v2966 = vand.u32 %v2817, 4294901760
  %v2967 = vsub.f32 %v2817, %v2966
  %v2968 = vand.u32 %v2967, 4294901760
  %2969 = vmatpush.msra.mxu0 %v2968
  %v2970 = vand.u32 %v2816, 4294901760
  %v2971 = vsub.f32 %v2816, %v2970
  %v2972 = vand.u32 %v2971, 4294901760
  %2973 = vmatpush.msra.mxu0 %v2972
  %v2974 = vand.u32 %v2815, 4294901760
  %v2975 = vsub.f32 %v2815, %v2974
  %v2976 = vand.u32 %v2975, 4294901760
  %2977 = vmatpush.msra.mxu0 %v2976
  %v2978 = vand.u32 %v2814, 4294901760
  %v2979 = vsub.f32 %v2814, %v2978
  %v2980 = vand.u32 %v2979, 4294901760
  %2981 = vmatpush.msra.mxu0 %v2980
  %v2982 = vand.u32 %v2825, 4294901760
  %2983 = vmatmul.f32.gmra.mxu0 %v2982
  %v2984 = vpop.f32.mrf.mxu0
  %v2985 = vadd.f32 %v2952, %v2984
  %2986 = vdwg.mxu0
  %2987 = vmatpush.msra.mxu0 0.0
  %2988 = vmatpush.msra.mxu0 0.0
  %2989 = vmatpush.msra.mxu0 0.0
  %2990 = vmatpush.msra.mxu0 0.0
  %2991 = vmatpush.msra.mxu0 0.0
  %2992 = vmatpush.msra.mxu0 0.0
  %2993 = vmatpush.msra.mxu0 0.0
  %2994 = vmatpush.msra.mxu0 0.0
  %2995 = vmatpush.msra.mxu0 0.0
  %2996 = vmatpush.msra.mxu0 0.0
  %2997 = vmatpush.msra.mxu0 0.0
  %2998 = vmatpush.msra.mxu0 0.0
  %v2999 = vand.u32 %v2817, 4294901760
  %3000 = vmatpush.msra.mxu0 %v2999
  %v3001 = vand.u32 %v2816, 4294901760
  %3002 = vmatpush.msra.mxu0 %v3001
  %v3003 = vand.u32 %v2815, 4294901760
  %3004 = vmatpush.msra.mxu0 %v3003
  %v3005 = vand.u32 %v2814, 4294901760
  %3006 = vmatpush.msra.mxu0 %v3005
  %v3007 = vand.u32 %v2825, 4294901760
  %3008 = vmatmul.f32.gmra.mxu0 %v3007
  %v3009 = vpop.f32.mrf.mxu0
  %v3010 = vadd.f32 %v2985, %v3009
  %3011 = vdwg.mxu0
  %v3012 = vsel %vm1527, %v3010, -inf
  %3013 = vmax.xlane.f32.xlu0 %v3012
  %v3014 = vpop.xlane.xlu0 %3013
  %v3015 = vsub.f32 %v3010, %v3014
  %v3016 = vmul.f32 %v3015, 1.442695
  %v3017 = vpow.pop %v3016
  %v3018 = vsel %vm1527, %v3017, 0.0
  %3019 = vadd.xlane.f32.xlu0 %v3018
  %v3020 = vpop.xlane.xlu0 %3019
  %v3021 = vlog2.pop %v3020
  %v3022 = vmul.f32 %v3021, 0.6931472
  %v3023 = vadd.f32 %v3014, %v3022
  %v3024 = vsub.f32 %v3010, %v3023
  %s3025 = scalar_lea.vmem %s13, 2
  %3026 = vst [vmem:[%s3025] sm:$0x3] %v3024
  %v3027 = vsel %vm1527, %v3024, -inf
  %3028 = vmax.xlane.f32.xlu0 %v3027
  %v3029 = vpop.xlane.xlu0 %3028
  %vm3030 = vcmp.ge.f32.partialorder %v3024, %v3029
  %v3031 = vsel %vm3030, %v45, 128
  %v3032 = vsel %vm1527, %v3031, 2147483647
  %v3033 = vand.u32 %v3032, 65535
  %v3034 = vshra.s32 %v3032, 16
  %v3035 = vcvt.s32.f32 %v3033
  %v3036 = vcvt.s32.f32 %v3034
  %3037 = vmin.xlane.f32.xlu0 %v3036
  %v3038 = vpop.xlane.xlu0 %3037
  %vm3039 = vcmp.eq.f32.partialorder %v3036, %v3038
  %v3040 = vsel %vm3039, %v3035, inf
  %3041 = vmin.xlane.f32.xlu0 %v3040
  %v3042 = vpop.xlane.xlu0 %3041
  %v3043 = vcvt.f32.s32 %v3042
  %v3044 = vcvt.f32.s32 %v3038
  %v3045 = vshll.u32 %v3044, 16
  %v3046 = vadd.s32 %v3045, %v3043
  %vm3047 = vcmp.eq.s32.totalorder %v45, %v3046
  %v3048 = vsel %vm3047, 1, 0
  %v3049 = vcvt.s32.f32 %v3048
  %v3050 = vld [vmem:[%s3] sm:$0xff]
  %v3051 = vld [vmem:[%s3 + $0x8] sm:$0xff]
  %v3052 = vld [vmem:[%s3 + $0x10] sm:$0xff]
  %v3053 = vld [vmem:[%s3 + $0x18] sm:$0xff]
  %v3054 = vld [vmem:[%s3 + $0x20] sm:$0xff]
  %v3055 = vld [vmem:[%s3 + $0x28] sm:$0xff]
  %v3056 = vld [vmem:[%s3 + $0x30] sm:$0xff]
  %v3057 = vld [vmem:[%s3 + $0x38] sm:$0xff]
  %v3058 = vld [vmem:[%s3 + $0x40] sm:$0xff]
  %v3059 = vld [vmem:[%s3 + $0x48] sm:$0xff]
  %v3060 = vld [vmem:[%s3 + $0x50] sm:$0xff]
  %v3061 = vld [vmem:[%s3 + $0x58] sm:$0xff]
  %v3062 = vld [vmem:[%s3 + $0x60] sm:$0xff]
  %v3063 = vld [vmem:[%s3 + $0x68] sm:$0xff]
  %v3064 = vld [vmem:[%s3 + $0x70] sm:$0xff]
  %v3065 = vld [vmem:[%s3 + $0x78] sm:$0xff]
  %v3066 = vand.u32 %v3065, 4294901760
  %3067 = vmatpush.msra.mxu0 %v3066
  %v3068 = vand.u32 %v3064, 4294901760
  %3069 = vmatpush.msra.mxu0 %v3068
  %v3070 = vand.u32 %v3063, 4294901760
  %3071 = vmatpush.msra.mxu0 %v3070
  %v3072 = vand.u32 %v3062, 4294901760
  %3073 = vmatpush.msra.mxu0 %v3072
  %v3074 = vand.u32 %v3061, 4294901760
  %3075 = vmatpush.msra.mxu0 %v3074
  %v3076 = vand.u32 %v3060, 4294901760
  %3077 = vmatpush.msra.mxu0 %v3076
  %v3078 = vand.u32 %v3059, 4294901760
  %3079 = vmatpush.msra.mxu0 %v3078
  %v3080 = vand.u32 %v3058, 4294901760
  %3081 = vmatpush.msra.mxu0 %v3080
  %v3082 = vand.u32 %v3057, 4294901760
  %3083 = vmatpush.msra.mxu0 %v3082
  %v3084 = vand.u32 %v3056, 4294901760
  %3085 = vmatpush.msra.mxu0 %v3084
  %v3086 = vand.u32 %v3055, 4294901760
  %3087 = vmatpush.msra.mxu0 %v3086
  %v3088 = vand.u32 %v3054, 4294901760
  %3089 = vmatpush.msra.mxu0 %v3088
  %v3090 = vand.u32 %v3053, 4294901760
  %3091 = vmatpush.msra.mxu0 %v3090
  %v3092 = vand.u32 %v3052, 4294901760
  %3093 = vmatpush.msra.mxu0 %v3092
  %v3094 = vand.u32 %v3051, 4294901760
  %3095 = vmatpush.msra.mxu0 %v3094
  %v3096 = vand.u32 %v3050, 4294901760
  %3097 = vmatpush.msra.mxu0 %v3096
  %v3098 = vand.u32 %v3049, 4294901760
  %v3099 = vsub.f32 %v3049, %v3098
  %v3100 = vand.u32 %v3099, 4294901760
  %v3101 = vsub.f32 %v3099, %v3100
  %v3102 = vand.u32 %v3101, 4294901760
  %3103 = vmatmul.f32.gmra.mxu0 %v3102
  %v3104 = vpop.f32.mrf.mxu0
  %v3105 = vadd.f32 0.0, %v3104
  %3106 = vdwg.mxu0
  %v3107 = vand.u32 %v3065, 4294901760
  %v3108 = vsub.f32 %v3065, %v3107
  %v3109 = vand.u32 %v3108, 4294901760
  %v3110 = vsub.f32 %v3108, %v3109
  %v3111 = vand.u32 %v3110, 4294901760
  %3112 = vmatpush.msra.mxu0 %v3111
  %v3113 = vand.u32 %v3064, 4294901760
  %v3114 = vsub.f32 %v3064, %v3113
  %v3115 = vand.u32 %v3114, 4294901760
  %v3116 = vsub.f32 %v3114, %v3115
  %v3117 = vand.u32 %v3116, 4294901760
  %3118 = vmatpush.msra.mxu0 %v3117
  %v3119 = vand.u32 %v3063, 4294901760
  %v3120 = vsub.f32 %v3063, %v3119
  %v3121 = vand.u32 %v3120, 4294901760
  %v3122 = vsub.f32 %v3120, %v3121
  %v3123 = vand.u32 %v3122, 4294901760
  %3124 = vmatpush.msra.mxu0 %v3123
  %v3125 = vand.u32 %v3062, 4294901760
  %v3126 = vsub.f32 %v3062, %v3125
  %v3127 = vand.u32 %v3126, 4294901760
  %v3128 = vsub.f32 %v3126, %v3127
  %v3129 = vand.u32 %v3128, 4294901760
  %3130 = vmatpush.msra.mxu0 %v3129
  %v3131 = vand.u32 %v3061, 4294901760
  %v3132 = vsub.f32 %v3061, %v3131
  %v3133 = vand.u32 %v3132, 4294901760
  %v3134 = vsub.f32 %v3132, %v3133
  %v3135 = vand.u32 %v3134, 4294901760
  %3136 = vmatpush.msra.mxu0 %v3135
  %v3137 = vand.u32 %v3060, 4294901760
  %v3138 = vsub.f32 %v3060, %v3137
  %v3139 = vand.u32 %v3138, 4294901760
  %v3140 = vsub.f32 %v3138, %v3139
  %v3141 = vand.u32 %v3140, 4294901760
  %3142 = vmatpush.msra.mxu0 %v3141
  %v3143 = vand.u32 %v3059, 4294901760
  %v3144 = vsub.f32 %v3059, %v3143
  %v3145 = vand.u32 %v3144, 4294901760
  %v3146 = vsub.f32 %v3144, %v3145
  %v3147 = vand.u32 %v3146, 4294901760
  %3148 = vmatpush.msra.mxu0 %v3147
  %v3149 = vand.u32 %v3058, 4294901760
  %v3150 = vsub.f32 %v3058, %v3149
  %v3151 = vand.u32 %v3150, 4294901760
  %v3152 = vsub.f32 %v3150, %v3151
  %v3153 = vand.u32 %v3152, 4294901760
  %3154 = vmatpush.msra.mxu0 %v3153
  %v3155 = vand.u32 %v3057, 4294901760
  %v3156 = vsub.f32 %v3057, %v3155
  %v3157 = vand.u32 %v3156, 4294901760
  %v3158 = vsub.f32 %v3156, %v3157
  %v3159 = vand.u32 %v3158, 4294901760
  %3160 = vmatpush.msra.mxu0 %v3159
  %v3161 = vand.u32 %v3056, 4294901760
  %v3162 = vsub.f32 %v3056, %v3161
  %v3163 = vand.u32 %v3162, 4294901760
  %v3164 = vsub.f32 %v3162, %v3163
  %v3165 = vand.u32 %v3164, 4294901760
  %3166 = vmatpush.msra.mxu0 %v3165
  %v3167 = vand.u32 %v3055, 4294901760
  %v3168 = vsub.f32 %v3055, %v3167
  %v3169 = vand.u32 %v3168, 4294901760
  %v3170 = vsub.f32 %v3168, %v3169
  %v3171 = vand.u32 %v3170, 4294901760
  %3172 = vmatpush.msra.mxu0 %v3171
  %v3173 = vand.u32 %v3054, 4294901760
  %v3174 = vsub.f32 %v3054, %v3173
  %v3175 = vand.u32 %v3174, 4294901760
  %v3176 = vsub.f32 %v3174, %v3175
  %v3177 = vand.u32 %v3176, 4294901760
  %3178 = vmatpush.msra.mxu0 %v3177
  %v3179 = vand.u32 %v3053, 4294901760
  %v3180 = vsub.f32 %v3053, %v3179
  %v3181 = vand.u32 %v3180, 4294901760
  %v3182 = vsub.f32 %v3180, %v3181
  %v3183 = vand.u32 %v3182, 4294901760
  %3184 = vmatpush.msra.mxu0 %v3183
  %v3185 = vand.u32 %v3052, 4294901760
  %v3186 = vsub.f32 %v3052, %v3185
  %v3187 = vand.u32 %v3186, 4294901760
  %v3188 = vsub.f32 %v3186, %v3187
  %v3189 = vand.u32 %v3188, 4294901760
  %3190 = vmatpush.msra.mxu0 %v3189
  %v3191 = vand.u32 %v3051, 4294901760
  %v3192 = vsub.f32 %v3051, %v3191
  %v3193 = vand.u32 %v3192, 4294901760
  %v3194 = vsub.f32 %v3192, %v3193
  %v3195 = vand.u32 %v3194, 4294901760
  %3196 = vmatpush.msra.mxu0 %v3195
  %v3197 = vand.u32 %v3050, 4294901760
  %v3198 = vsub.f32 %v3050, %v3197
  %v3199 = vand.u32 %v3198, 4294901760
  %v3200 = vsub.f32 %v3198, %v3199
  %v3201 = vand.u32 %v3200, 4294901760
  %3202 = vmatpush.msra.mxu0 %v3201
  %v3203 = vand.u32 %v3049, 4294901760
  %3204 = vmatmul.f32.gmra.mxu0 %v3203
  %v3205 = vpop.f32.mrf.mxu0
  %v3206 = vadd.f32 %v3105, %v3205
  %3207 = vdwg.mxu0
  %v3208 = vand.u32 %v3065, 4294901760
  %v3209 = vsub.f32 %v3065, %v3208
  %3210 = vmatpush.msra.mxu0 %v3209
  %v3211 = vand.u32 %v3064, 4294901760
  %v3212 = vsub.f32 %v3064, %v3211
  %3213 = vmatpush.msra.mxu0 %v3212
  %v3214 = vand.u32 %v3063, 4294901760
  %v3215 = vsub.f32 %v3063, %v3214
  %3216 = vmatpush.msra.mxu0 %v3215
  %v3217 = vand.u32 %v3062, 4294901760
  %v3218 = vsub.f32 %v3062, %v3217
  %3219 = vmatpush.msra.mxu0 %v3218
  %v3220 = vand.u32 %v3061, 4294901760
  %v3221 = vsub.f32 %v3061, %v3220
  %3222 = vmatpush.msra.mxu0 %v3221
  %v3223 = vand.u32 %v3060, 4294901760
  %v3224 = vsub.f32 %v3060, %v3223
  %3225 = vmatpush.msra.mxu0 %v3224
  %v3226 = vand.u32 %v3059, 4294901760
  %v3227 = vsub.f32 %v3059, %v3226
  %3228 = vmatpush.msra.mxu0 %v3227
  %v3229 = vand.u32 %v3058, 4294901760
  %v3230 = vsub.f32 %v3058, %v3229
  %3231 = vmatpush.msra.mxu0 %v3230
  %v3232 = vand.u32 %v3057, 4294901760
  %v3233 = vsub.f32 %v3057, %v3232
  %3234 = vmatpush.msra.mxu0 %v3233
  %v3235 = vand.u32 %v3056, 4294901760
  %v3236 = vsub.f32 %v3056, %v3235
  %3237 = vmatpush.msra.mxu0 %v3236
  %v3238 = vand.u32 %v3055, 4294901760
  %v3239 = vsub.f32 %v3055, %v3238
  %3240 = vmatpush.msra.mxu0 %v3239
  %v3241 = vand.u32 %v3054, 4294901760
  %v3242 = vsub.f32 %v3054, %v3241
  %3243 = vmatpush.msra.mxu0 %v3242
  %v3244 = vand.u32 %v3053, 4294901760
  %v3245 = vsub.f32 %v3053, %v3244
  %3246 = vmatpush.msra.mxu0 %v3245
  %v3247 = vand.u32 %v3052, 4294901760
  %v3248 = vsub.f32 %v3052, %v3247
  %3249 = vmatpush.msra.mxu0 %v3248
  %v3250 = vand.u32 %v3051, 4294901760
  %v3251 = vsub.f32 %v3051, %v3250
  %3252 = vmatpush.msra.mxu0 %v3251
  %v3253 = vand.u32 %v3050, 4294901760
  %v3254 = vsub.f32 %v3050, %v3253
  %3255 = vmatpush.msra.mxu0 %v3254
  %v3256 = vand.u32 %v3049, 4294901760
  %v3257 = vsub.f32 %v3049, %v3256
  %3258 = vmatmul.f32.gmra.mxu0 %v3257
  %v3259 = vpop.f32.mrf.mxu0
  %v3260 = vadd.f32 %v3206, %v3259
  %3261 = vdwg.mxu0
  %v3262 = vand.u32 %v3065, 4294901760
  %3263 = vmatpush.msra.mxu0 %v3262
  %v3264 = vand.u32 %v3064, 4294901760
  %3265 = vmatpush.msra.mxu0 %v3264
  %v3266 = vand.u32 %v3063, 4294901760
  %3267 = vmatpush.msra.mxu0 %v3266
  %v3268 = vand.u32 %v3062, 4294901760
  %3269 = vmatpush.msra.mxu0 %v3268
  %v3270 = vand.u32 %v3061, 4294901760
  %3271 = vmatpush.msra.mxu0 %v3270
  %v3272 = vand.u32 %v3060, 4294901760
  %3273 = vmatpush.msra.mxu0 %v3272
  %v3274 = vand.u32 %v3059, 4294901760
  %3275 = vmatpush.msra.mxu0 %v3274
  %v3276 = vand.u32 %v3058, 4294901760
  %3277 = vmatpush.msra.mxu0 %v3276
  %v3278 = vand.u32 %v3057, 4294901760
  %3279 = vmatpush.msra.mxu0 %v3278
  %v3280 = vand.u32 %v3056, 4294901760
  %3281 = vmatpush.msra.mxu0 %v3280
  %v3282 = vand.u32 %v3055, 4294901760
  %3283 = vmatpush.msra.mxu0 %v3282
  %v3284 = vand.u32 %v3054, 4294901760
  %3285 = vmatpush.msra.mxu0 %v3284
  %v3286 = vand.u32 %v3053, 4294901760
  %3287 = vmatpush.msra.mxu0 %v3286
  %v3288 = vand.u32 %v3052, 4294901760
  %3289 = vmatpush.msra.mxu0 %v3288
  %v3290 = vand.u32 %v3051, 4294901760
  %3291 = vmatpush.msra.mxu0 %v3290
  %v3292 = vand.u32 %v3050, 4294901760
  %3293 = vmatpush.msra.mxu0 %v3292
  %v3294 = vand.u32 %v3049, 4294901760
  %v3295 = vsub.f32 %v3049, %v3294
  %v3296 = vand.u32 %v3295, 4294901760
  %3297 = vmatmul.f32.gmra.mxu0 %v3296
  %v3298 = vpop.f32.mrf.mxu0
  %v3299 = vadd.f32 %v3260, %v3298
  %3300 = vdwg.mxu0
  %v3301 = vand.u32 %v3065, 4294901760
  %v3302 = vsub.f32 %v3065, %v3301
  %v3303 = vand.u32 %v3302, 4294901760
  %3304 = vmatpush.msra.mxu0 %v3303
  %v3305 = vand.u32 %v3064, 4294901760
  %v3306 = vsub.f32 %v3064, %v3305
  %v3307 = vand.u32 %v3306, 4294901760
  %3308 = vmatpush.msra.mxu0 %v3307
  %v3309 = vand.u32 %v3063, 4294901760
  %v3310 = vsub.f32 %v3063, %v3309
  %v3311 = vand.u32 %v3310, 4294901760
  %3312 = vmatpush.msra.mxu0 %v3311
  %v3313 = vand.u32 %v3062, 4294901760
  %v3314 = vsub.f32 %v3062, %v3313
  %v3315 = vand.u32 %v3314, 4294901760
  %3316 = vmatpush.msra.mxu0 %v3315
  %v3317 = vand.u32 %v3061, 4294901760
  %v3318 = vsub.f32 %v3061, %v3317
  %v3319 = vand.u32 %v3318, 4294901760
  %3320 = vmatpush.msra.mxu0 %v3319
  %v3321 = vand.u32 %v3060, 4294901760
  %v3322 = vsub.f32 %v3060, %v3321
  %v3323 = vand.u32 %v3322, 4294901760
  %3324 = vmatpush.msra.mxu0 %v3323
  %v3325 = vand.u32 %v3059, 4294901760
  %v3326 = vsub.f32 %v3059, %v3325
  %v3327 = vand.u32 %v3326, 4294901760
  %3328 = vmatpush.msra.mxu0 %v3327
  %v3329 = vand.u32 %v3058, 4294901760
  %v3330 = vsub.f32 %v3058, %v3329
  %v3331 = vand.u32 %v3330, 4294901760
  %3332 = vmatpush.msra.mxu0 %v3331
  %v3333 = vand.u32 %v3057, 4294901760
  %v3334 = vsub.f32 %v3057, %v3333
  %v3335 = vand.u32 %v3334, 4294901760
  %3336 = vmatpush.msra.mxu0 %v3335
  %v3337 = vand.u32 %v3056, 4294901760
  %v3338 = vsub.f32 %v3056, %v3337
  %v3339 = vand.u32 %v3338, 4294901760
  %3340 = vmatpush.msra.mxu0 %v3339
  %v3341 = vand.u32 %v3055, 4294901760
  %v3342 = vsub.f32 %v3055, %v3341
  %v3343 = vand.u32 %v3342, 4294901760
  %3344 = vmatpush.msra.mxu0 %v3343
  %v3345 = vand.u32 %v3054, 4294901760
  %v3346 = vsub.f32 %v3054, %v3345
  %v3347 = vand.u32 %v3346, 4294901760
  %3348 = vmatpush.msra.mxu0 %v3347
  %v3349 = vand.u32 %v3053, 4294901760
  %v3350 = vsub.f32 %v3053, %v3349
  %v3351 = vand.u32 %v3350, 4294901760
  %3352 = vmatpush.msra.mxu0 %v3351
  %v3353 = vand.u32 %v3052, 4294901760
  %v3354 = vsub.f32 %v3052, %v3353
  %v3355 = vand.u32 %v3354, 4294901760
  %3356 = vmatpush.msra.mxu0 %v3355
  %v3357 = vand.u32 %v3051, 4294901760
  %v3358 = vsub.f32 %v3051, %v3357
  %v3359 = vand.u32 %v3358, 4294901760
  %3360 = vmatpush.msra.mxu0 %v3359
  %v3361 = vand.u32 %v3050, 4294901760
  %v3362 = vsub.f32 %v3050, %v3361
  %v3363 = vand.u32 %v3362, 4294901760
  %3364 = vmatpush.msra.mxu0 %v3363
  %v3365 = vand.u32 %v3049, 4294901760
  %3366 = vmatmul.f32.gmra.mxu0 %v3365
  %v3367 = vpop.f32.mrf.mxu0
  %v3368 = vadd.f32 %v3299, %v3367
  %3369 = vdwg.mxu0
  %v3370 = vand.u32 %v3065, 4294901760
  %3371 = vmatpush.msra.mxu0 %v3370
  %v3372 = vand.u32 %v3064, 4294901760
  %3373 = vmatpush.msra.mxu0 %v3372
  %v3374 = vand.u32 %v3063, 4294901760
  %3375 = vmatpush.msra.mxu0 %v3374
  %v3376 = vand.u32 %v3062, 4294901760
  %3377 = vmatpush.msra.mxu0 %v3376
  %v3378 = vand.u32 %v3061, 4294901760
  %3379 = vmatpush.msra.mxu0 %v3378
  %v3380 = vand.u32 %v3060, 4294901760
  %3381 = vmatpush.msra.mxu0 %v3380
  %v3382 = vand.u32 %v3059, 4294901760
  %3383 = vmatpush.msra.mxu0 %v3382
  %v3384 = vand.u32 %v3058, 4294901760
  %3385 = vmatpush.msra.mxu0 %v3384
  %v3386 = vand.u32 %v3057, 4294901760
  %3387 = vmatpush.msra.mxu0 %v3386
  %v3388 = vand.u32 %v3056, 4294901760
  %3389 = vmatpush.msra.mxu0 %v3388
  %v3390 = vand.u32 %v3055, 4294901760
  %3391 = vmatpush.msra.mxu0 %v3390
  %v3392 = vand.u32 %v3054, 4294901760
  %3393 = vmatpush.msra.mxu0 %v3392
  %v3394 = vand.u32 %v3053, 4294901760
  %3395 = vmatpush.msra.mxu0 %v3394
  %v3396 = vand.u32 %v3052, 4294901760
  %3397 = vmatpush.msra.mxu0 %v3396
  %v3398 = vand.u32 %v3051, 4294901760
  %3399 = vmatpush.msra.mxu0 %v3398
  %v3400 = vand.u32 %v3050, 4294901760
  %3401 = vmatpush.msra.mxu0 %v3400
  %v3402 = vand.u32 %v3049, 4294901760
  %3403 = vmatmul.f32.gmra.mxu0 %v3402
  %v3404 = vpop.f32.mrf.mxu0
  %v3405 = vadd.f32 %v3368, %v3404
  %3406 = vdwg.mxu0
  %v3407 = vld [vmem:[%s4] sm:$0xff]
  %v3408 = vld [vmem:[%s4 + $0x8] sm:$0xff]
  %v3409 = vld [vmem:[%s4 + $0x10] sm:$0xff]
  %v3410 = vld [vmem:[%s4 + $0x18] sm:$0xff]
  %3411 = vmatpush.msra.mxu0 0.0
  %3412 = vmatpush.msra.mxu0 0.0
  %3413 = vmatpush.msra.mxu0 0.0
  %3414 = vmatpush.msra.mxu0 0.0
  %3415 = vmatpush.msra.mxu0 0.0
  %3416 = vmatpush.msra.mxu0 0.0
  %3417 = vmatpush.msra.mxu0 0.0
  %3418 = vmatpush.msra.mxu0 0.0
  %3419 = vmatpush.msra.mxu0 0.0
  %3420 = vmatpush.msra.mxu0 0.0
  %3421 = vmatpush.msra.mxu0 0.0
  %3422 = vmatpush.msra.mxu0 0.0
  %v3423 = vand.u32 %v3410, 4294901760
  %3424 = vmatpush.msra.mxu0 %v3423
  %v3425 = vand.u32 %v3409, 4294901760
  %3426 = vmatpush.msra.mxu0 %v3425
  %v3427 = vand.u32 %v3408, 4294901760
  %3428 = vmatpush.msra.mxu0 %v3427
  %v3429 = vand.u32 %v3407, 4294901760
  %3430 = vmatpush.msra.mxu0 %v3429
  %v3431 = vand.u32 %v2825, 4294901760
  %v3432 = vsub.f32 %v2825, %v3431
  %v3433 = vand.u32 %v3432, 4294901760
  %v3434 = vsub.f32 %v3432, %v3433
  %v3435 = vand.u32 %v3434, 4294901760
  %3436 = vmatmul.f32.gmra.mxu0 %v3435
  %v3437 = vpop.f32.mrf.mxu0
  %v3438 = vadd.f32 0.0, %v3437
  %3439 = vdwg.mxu0
  %3440 = vmatpush.msra.mxu0 0.0
  %3441 = vmatpush.msra.mxu0 0.0
  %3442 = vmatpush.msra.mxu0 0.0
  %3443 = vmatpush.msra.mxu0 0.0
  %3444 = vmatpush.msra.mxu0 0.0
  %3445 = vmatpush.msra.mxu0 0.0
  %3446 = vmatpush.msra.mxu0 0.0
  %3447 = vmatpush.msra.mxu0 0.0
  %3448 = vmatpush.msra.mxu0 0.0
  %3449 = vmatpush.msra.mxu0 0.0
  %3450 = vmatpush.msra.mxu0 0.0
  %3451 = vmatpush.msra.mxu0 0.0
  %v3452 = vand.u32 %v3410, 4294901760
  %v3453 = vsub.f32 %v3410, %v3452
  %v3454 = vand.u32 %v3453, 4294901760
  %v3455 = vsub.f32 %v3453, %v3454
  %v3456 = vand.u32 %v3455, 4294901760
  %3457 = vmatpush.msra.mxu0 %v3456
  %v3458 = vand.u32 %v3409, 4294901760
  %v3459 = vsub.f32 %v3409, %v3458
  %v3460 = vand.u32 %v3459, 4294901760
  %v3461 = vsub.f32 %v3459, %v3460
  %v3462 = vand.u32 %v3461, 4294901760
  %3463 = vmatpush.msra.mxu0 %v3462
  %v3464 = vand.u32 %v3408, 4294901760
  %v3465 = vsub.f32 %v3408, %v3464
  %v3466 = vand.u32 %v3465, 4294901760
  %v3467 = vsub.f32 %v3465, %v3466
  %v3468 = vand.u32 %v3467, 4294901760
  %3469 = vmatpush.msra.mxu0 %v3468
  %v3470 = vand.u32 %v3407, 4294901760
  %v3471 = vsub.f32 %v3407, %v3470
  %v3472 = vand.u32 %v3471, 4294901760
  %v3473 = vsub.f32 %v3471, %v3472
  %v3474 = vand.u32 %v3473, 4294901760
  %3475 = vmatpush.msra.mxu0 %v3474
  %v3476 = vand.u32 %v2825, 4294901760
  %3477 = vmatmul.f32.gmra.mxu0 %v3476
  %v3478 = vpop.f32.mrf.mxu0
  %v3479 = vadd.f32 %v3438, %v3478
  %3480 = vdwg.mxu0
  %3481 = vmatpush.msra.mxu0 0.0
  %3482 = vmatpush.msra.mxu0 0.0
  %3483 = vmatpush.msra.mxu0 0.0
  %3484 = vmatpush.msra.mxu0 0.0
  %3485 = vmatpush.msra.mxu0 0.0
  %3486 = vmatpush.msra.mxu0 0.0
  %3487 = vmatpush.msra.mxu0 0.0
  %3488 = vmatpush.msra.mxu0 0.0
  %3489 = vmatpush.msra.mxu0 0.0
  %3490 = vmatpush.msra.mxu0 0.0
  %3491 = vmatpush.msra.mxu0 0.0
  %3492 = vmatpush.msra.mxu0 0.0
  %v3493 = vand.u32 %v3410, 4294901760
  %v3494 = vsub.f32 %v3410, %v3493
  %3495 = vmatpush.msra.mxu0 %v3494
  %v3496 = vand.u32 %v3409, 4294901760
  %v3497 = vsub.f32 %v3409, %v3496
  %3498 = vmatpush.msra.mxu0 %v3497
  %v3499 = vand.u32 %v3408, 4294901760
  %v3500 = vsub.f32 %v3408, %v3499
  %3501 = vmatpush.msra.mxu0 %v3500
  %v3502 = vand.u32 %v3407, 4294901760
  %v3503 = vsub.f32 %v3407, %v3502
  %3504 = vmatpush.msra.mxu0 %v3503
  %v3505 = vand.u32 %v2825, 4294901760
  %v3506 = vsub.f32 %v2825, %v3505
  %3507 = vmatmul.f32.gmra.mxu0 %v3506
  %v3508 = vpop.f32.mrf.mxu0
  %v3509 = vadd.f32 %v3479, %v3508
  %3510 = vdwg.mxu0
  %3511 = vmatpush.msra.mxu0 0.0
  %3512 = vmatpush.msra.mxu0 0.0
  %3513 = vmatpush.msra.mxu0 0.0
  %3514 = vmatpush.msra.mxu0 0.0
  %3515 = vmatpush.msra.mxu0 0.0
  %3516 = vmatpush.msra.mxu0 0.0
  %3517 = vmatpush.msra.mxu0 0.0
  %3518 = vmatpush.msra.mxu0 0.0
  %3519 = vmatpush.msra.mxu0 0.0
  %3520 = vmatpush.msra.mxu0 0.0
  %3521 = vmatpush.msra.mxu0 0.0
  %3522 = vmatpush.msra.mxu0 0.0
  %v3523 = vand.u32 %v3410, 4294901760
  %3524 = vmatpush.msra.mxu0 %v3523
  %v3525 = vand.u32 %v3409, 4294901760
  %3526 = vmatpush.msra.mxu0 %v3525
  %v3527 = vand.u32 %v3408, 4294901760
  %3528 = vmatpush.msra.mxu0 %v3527
  %v3529 = vand.u32 %v3407, 4294901760
  %3530 = vmatpush.msra.mxu0 %v3529
  %v3531 = vand.u32 %v2825, 4294901760
  %v3532 = vsub.f32 %v2825, %v3531
  %v3533 = vand.u32 %v3532, 4294901760
  %3534 = vmatmul.f32.gmra.mxu0 %v3533
  %v3535 = vpop.f32.mrf.mxu0
  %v3536 = vadd.f32 %v3509, %v3535
  %3537 = vdwg.mxu0
  %3538 = vmatpush.msra.mxu0 0.0
  %3539 = vmatpush.msra.mxu0 0.0
  %3540 = vmatpush.msra.mxu0 0.0
  %3541 = vmatpush.msra.mxu0 0.0
  %3542 = vmatpush.msra.mxu0 0.0
  %3543 = vmatpush.msra.mxu0 0.0
  %3544 = vmatpush.msra.mxu0 0.0
  %3545 = vmatpush.msra.mxu0 0.0
  %3546 = vmatpush.msra.mxu0 0.0
  %3547 = vmatpush.msra.mxu0 0.0
  %3548 = vmatpush.msra.mxu0 0.0
  %3549 = vmatpush.msra.mxu0 0.0
  %v3550 = vand.u32 %v3410, 4294901760
  %v3551 = vsub.f32 %v3410, %v3550
  %v3552 = vand.u32 %v3551, 4294901760
  %3553 = vmatpush.msra.mxu0 %v3552
  %v3554 = vand.u32 %v3409, 4294901760
  %v3555 = vsub.f32 %v3409, %v3554
  %v3556 = vand.u32 %v3555, 4294901760
  %3557 = vmatpush.msra.mxu0 %v3556
  %v3558 = vand.u32 %v3408, 4294901760
  %v3559 = vsub.f32 %v3408, %v3558
  %v3560 = vand.u32 %v3559, 4294901760
  %3561 = vmatpush.msra.mxu0 %v3560
  %v3562 = vand.u32 %v3407, 4294901760
  %v3563 = vsub.f32 %v3407, %v3562
  %v3564 = vand.u32 %v3563, 4294901760
  %3565 = vmatpush.msra.mxu0 %v3564
  %v3566 = vand.u32 %v2825, 4294901760
  %3567 = vmatmul.f32.gmra.mxu0 %v3566
  %v3568 = vpop.f32.mrf.mxu0
  %v3569 = vadd.f32 %v3536, %v3568
  %3570 = vdwg.mxu0
  %3571 = vmatpush.msra.mxu0 0.0
  %3572 = vmatpush.msra.mxu0 0.0
  %3573 = vmatpush.msra.mxu0 0.0
  %3574 = vmatpush.msra.mxu0 0.0
  %3575 = vmatpush.msra.mxu0 0.0
  %3576 = vmatpush.msra.mxu0 0.0
  %3577 = vmatpush.msra.mxu0 0.0
  %3578 = vmatpush.msra.mxu0 0.0
  %3579 = vmatpush.msra.mxu0 0.0
  %3580 = vmatpush.msra.mxu0 0.0
  %3581 = vmatpush.msra.mxu0 0.0
  %3582 = vmatpush.msra.mxu0 0.0
  %v3583 = vand.u32 %v3410, 4294901760
  %3584 = vmatpush.msra.mxu0 %v3583
  %v3585 = vand.u32 %v3409, 4294901760
  %3586 = vmatpush.msra.mxu0 %v3585
  %v3587 = vand.u32 %v3408, 4294901760
  %3588 = vmatpush.msra.mxu0 %v3587
  %v3589 = vand.u32 %v3407, 4294901760
  %3590 = vmatpush.msra.mxu0 %v3589
  %v3591 = vand.u32 %v2825, 4294901760
  %3592 = vmatmul.f32.gmra.mxu0 %v3591
  %v3593 = vpop.f32.mrf.mxu0
  %v3594 = vadd.f32 %v3569, %v3593
  %3595 = vdwg.mxu0
  %v3596 = vld [vmem:[%s0] sm:$0xff]
  %v3597 = vld [vmem:[%s0 + $0x8] sm:$0xff]
  %v3599 = vrot.slane %v3594, 1
  %v3600 = vperm.slane %v3594, 0
  %v3601 = vperm.slane %v3599, 0
  %v3604 = vadd.f32 %v3596, %v3600
  %v3605 = vadd.f32 %v3597, %v3601
  %v3606 = vtanh.pop %v3604
  %v3607 = vtanh.pop %v3605
  %v3608 = vld [vmem:[%s5] sm:$0x1]
  %v3610 = vperm.slane %v3608, 0
  %v3612 = vmul.f32 %v3606, %v3610
  %v3613 = vmul.f32 %v3607, %v3610
  %v3614 = vsel %vm431, %v3612, 0.0
  %3615 = vadd.xlane.f32.xlu0 %v3614
  %v3616 = vpop.xlane.xlu0 %3615
  %v3617 = vsel %vm431, %v3613, 0.0
  %3618 = vadd.xlane.f32.xlu0 %v3617
  %v3619 = vpop.xlane.xlu0 %3618
  %v3622 = vperm.slane %v3616, %v45
  %v3623 = vperm.slane %v3619, %v45
  %v3624 = vsel %vm648, %v3623, %v3622
  %v3626 = vsel %vm651, %v3624, -inf
  %3627 = vmax.xlane.f32.xlu0 %v3626
  %v3628 = vpop.xlane.xlu0 %3627
  %v3630 = vperm.slane %v3628, 0
  %v3631 = vperm.slane %v3628, 1
  %v3634 = vsub.f32 %v3616, %v3630
  %v3635 = vsub.f32 %v3619, %v3631
  %v3636 = vmul.f32 %v3634, 1.442695
  %v3637 = vpow.pop %v3636
  %v3638 = vmul.f32 %v3635, 1.442695
  %v3639 = vpow.pop %v3638
  %3642 = vset.pattern.permute.xlu0 0
  %3643 = vperm.xlu0 %3642, %v3637
  %v3644 = vpop.permute.xlu0 %3643
  %3645 = vset.pattern.permute.xlu0 0
  %3646 = vperm.xlu0 %3645, %v3639
  %v3647 = vpop.permute.xlu0 %3646
  %v3648 = vperm.slane %v3644, %v45
  %v3649 = vperm.slane %v3647, %v45
  %v3650 = vsel %vm648, %v3649, %v3648
  %v3652 = vsel %vm651, %v3650, 0.0
  %3653 = vadd.xlane.f32.xlu0 %v3652
  %v3654 = vpop.xlane.xlu0 %3653
  %v3655 = vrcp.pop %v3654
  %v3656 = vmul.f32 %v3654, %v3655
  %v3657 = vsub.f32 1.0, %v3656
  %v3658 = vmul.f32 %v3655, %v3657
  %v3659 = vadd.f32 %v3655, %v3658
  %vm3660 = vweird.f32 %v3654
  %vm3661 = vweird.f32 %v3655
  %vm3662 = vmor %vm3660, %vm3661
  %v3663 = vsel %vm3662, %v3655, %v3659
  %v3664 = vand.u32 2147483647, %v3654
  %vm3665 = vcmp.eq.f32.partialorder %v3664, 8.507059e+37
  %v3666 = vand.u32 %v3654, 2147483648
  %v3667 = vor.u32 1.1754944e-38, %v3666
  %v3668 = vsel %vm3665, %v3667, %v3663
  %v3670 = vperm.slane %v3668, 0
  %v3671 = vperm.slane %v3668, 1
  %v3674 = vmul.f32 %v3637, %v3670
  %v3675 = vmul.f32 %v3639, %v3671
  %v3676 = vld [vmem:[%s1] sm:$0xff]
  %v3677 = vld [vmem:[%s1 + $0x8] sm:$0xff]
  %3679 = vset.pattern.permute.xlu0 0
  %3680 = vperm.xlu0 %3679, %v3674
  %v3681 = vpop.permute.xlu0 %3680
  %3684 = vset.pattern.permute.xlu0 0
  %3685 = vperm.xlu0 %3684, %v3675
  %v3686 = vpop.permute.xlu0 %3685
  %v3688 = vmul.f32 %v3681, %v3676
  %v3689 = vmul.f32 %v3686, %v3677
  %v3690 = vsel %vm431, %v3688, 0.0
  %v3691 = vrot.slane %v3690, 4
  %v3692 = vadd.f32 %v3690, %v3691
  %v3693 = vrot.slane %v3692, 2
  %v3694 = vadd.f32 %v3692, %v3693
  %v3695 = vrot.slane %v3694, 1
  %v3696 = vadd.f32 %v3694, %v3695
  %v3697 = vsel %vm431, %v3689, 0.0
  %v3698 = vrot.slane %v3697, 4
  %v3699 = vadd.f32 %v3697, %v3698
  %v3700 = vrot.slane %v3699, 2
  %v3701 = vadd.f32 %v3699, %v3700
  %v3702 = vrot.slane %v3701, 1
  %v3703 = vadd.f32 %v3701, %v3702
  %v3704 = vld [vmem:[%s6] sm:$0xff]
  %v3705 = vld [vmem:[%s6 + $0x8] sm:$0xff]
  %v3706 = vld [vmem:[%s7] sm:$0xff]
  %v3707 = vld [vmem:[%s7 + $0x8] sm:$0xff]
  %v3708 = vld [vmem:[%s7 + $0x10] sm:$0xff]
  %v3709 = vld [vmem:[%s7 + $0x18] sm:$0xff]
  %v3712 = vsel %vm648, %v3703, %v3696
  %v3713 = vsel %vm431, %v3712, 0
  %3715 = vmatpush.msra.mxu0 0.0
  %3716 = vmatpush.msra.mxu0 0.0
  %3717 = vmatpush.msra.mxu0 0.0
  %3718 = vmatpush.msra.mxu0 0.0
  %3719 = vmatpush.msra.mxu0 0.0
  %3720 = vmatpush.msra.mxu0 0.0
  %3721 = vmatpush.msra.mxu0 0.0
  %3722 = vmatpush.msra.mxu0 0.0
  %3723 = vmatpush.msra.mxu0 0.0
  %3724 = vmatpush.msra.mxu0 0.0
  %3725 = vmatpush.msra.mxu0 0.0
  %3726 = vmatpush.msra.mxu0 0.0
  %v3727 = vand.u32 %v3709, 4294901760
  %3728 = vmatpush.msra.mxu0 %v3727
  %v3729 = vand.u32 %v3708, 4294901760
  %3730 = vmatpush.msra.mxu0 %v3729
  %v3731 = vand.u32 %v3707, 4294901760
  %3732 = vmatpush.msra.mxu0 %v3731
  %v3733 = vand.u32 %v3706, 4294901760
  %3734 = vmatpush.msra.mxu0 %v3733
  %v3735 = vand.u32 %v3713, 4294901760
  %v3736 = vsub.f32 %v3713, %v3735
  %v3737 = vand.u32 %v3736, 4294901760
  %v3738 = vsub.f32 %v3736, %v3737
  %v3739 = vand.u32 %v3738, 4294901760
  %3740 = vmatmul.f32.gmra.mxu0 %v3739
  %v3741 = vpop.f32.mrf.mxu0
  %v3742 = vadd.f32 0.0, %v3741
  %3743 = vdwg.mxu0
  %3744 = vmatpush.msra.mxu0 0.0
  %3745 = vmatpush.msra.mxu0 0.0
  %3746 = vmatpush.msra.mxu0 0.0
  %3747 = vmatpush.msra.mxu0 0.0
  %3748 = vmatpush.msra.mxu0 0.0
  %3749 = vmatpush.msra.mxu0 0.0
  %3750 = vmatpush.msra.mxu0 0.0
  %3751 = vmatpush.msra.mxu0 0.0
  %3752 = vmatpush.msra.mxu0 0.0
  %3753 = vmatpush.msra.mxu0 0.0
  %3754 = vmatpush.msra.mxu0 0.0
  %3755 = vmatpush.msra.mxu0 0.0
  %v3756 = vand.u32 %v3709, 4294901760
  %v3757 = vsub.f32 %v3709, %v3756
  %v3758 = vand.u32 %v3757, 4294901760
  %v3759 = vsub.f32 %v3757, %v3758
  %v3760 = vand.u32 %v3759, 4294901760
  %3761 = vmatpush.msra.mxu0 %v3760
  %v3762 = vand.u32 %v3708, 4294901760
  %v3763 = vsub.f32 %v3708, %v3762
  %v3764 = vand.u32 %v3763, 4294901760
  %v3765 = vsub.f32 %v3763, %v3764
  %v3766 = vand.u32 %v3765, 4294901760
  %3767 = vmatpush.msra.mxu0 %v3766
  %v3768 = vand.u32 %v3707, 4294901760
  %v3769 = vsub.f32 %v3707, %v3768
  %v3770 = vand.u32 %v3769, 4294901760
  %v3771 = vsub.f32 %v3769, %v3770
  %v3772 = vand.u32 %v3771, 4294901760
  %3773 = vmatpush.msra.mxu0 %v3772
  %v3774 = vand.u32 %v3706, 4294901760
  %v3775 = vsub.f32 %v3706, %v3774
  %v3776 = vand.u32 %v3775, 4294901760
  %v3777 = vsub.f32 %v3775, %v3776
  %v3778 = vand.u32 %v3777, 4294901760
  %3779 = vmatpush.msra.mxu0 %v3778
  %v3780 = vand.u32 %v3713, 4294901760
  %3781 = vmatmul.f32.gmra.mxu0 %v3780
  %v3782 = vpop.f32.mrf.mxu0
  %v3783 = vadd.f32 %v3742, %v3782
  %3784 = vdwg.mxu0
  %3785 = vmatpush.msra.mxu0 0.0
  %3786 = vmatpush.msra.mxu0 0.0
  %3787 = vmatpush.msra.mxu0 0.0
  %3788 = vmatpush.msra.mxu0 0.0
  %3789 = vmatpush.msra.mxu0 0.0
  %3790 = vmatpush.msra.mxu0 0.0
  %3791 = vmatpush.msra.mxu0 0.0
  %3792 = vmatpush.msra.mxu0 0.0
  %3793 = vmatpush.msra.mxu0 0.0
  %3794 = vmatpush.msra.mxu0 0.0
  %3795 = vmatpush.msra.mxu0 0.0
  %3796 = vmatpush.msra.mxu0 0.0
  %v3797 = vand.u32 %v3709, 4294901760
  %v3798 = vsub.f32 %v3709, %v3797
  %3799 = vmatpush.msra.mxu0 %v3798
  %v3800 = vand.u32 %v3708, 4294901760
  %v3801 = vsub.f32 %v3708, %v3800
  %3802 = vmatpush.msra.mxu0 %v3801
  %v3803 = vand.u32 %v3707, 4294901760
  %v3804 = vsub.f32 %v3707, %v3803
  %3805 = vmatpush.msra.mxu0 %v3804
  %v3806 = vand.u32 %v3706, 4294901760
  %v3807 = vsub.f32 %v3706, %v3806
  %3808 = vmatpush.msra.mxu0 %v3807
  %v3809 = vand.u32 %v3713, 4294901760
  %v3810 = vsub.f32 %v3713, %v3809
  %3811 = vmatmul.f32.gmra.mxu0 %v3810
  %v3812 = vpop.f32.mrf.mxu0
  %v3813 = vadd.f32 %v3783, %v3812
  %3814 = vdwg.mxu0
  %3815 = vmatpush.msra.mxu0 0.0
  %3816 = vmatpush.msra.mxu0 0.0
  %3817 = vmatpush.msra.mxu0 0.0
  %3818 = vmatpush.msra.mxu0 0.0
  %3819 = vmatpush.msra.mxu0 0.0
  %3820 = vmatpush.msra.mxu0 0.0
  %3821 = vmatpush.msra.mxu0 0.0
  %3822 = vmatpush.msra.mxu0 0.0
  %3823 = vmatpush.msra.mxu0 0.0
  %3824 = vmatpush.msra.mxu0 0.0
  %3825 = vmatpush.msra.mxu0 0.0
  %3826 = vmatpush.msra.mxu0 0.0
  %v3827 = vand.u32 %v3709, 4294901760
  %3828 = vmatpush.msra.mxu0 %v3827
  %v3829 = vand.u32 %v3708, 4294901760
  %3830 = vmatpush.msra.mxu0 %v3829
  %v3831 = vand.u32 %v3707, 4294901760
  %3832 = vmatpush.msra.mxu0 %v3831
  %v3833 = vand.u32 %v3706, 4294901760
  %3834 = vmatpush.msra.mxu0 %v3833
  %v3835 = vand.u32 %v3713, 4294901760
  %v3836 = vsub.f32 %v3713, %v3835
  %v3837 = vand.u32 %v3836, 4294901760
  %3838 = vmatmul.f32.gmra.mxu0 %v3837
  %v3839 = vpop.f32.mrf.mxu0
  %v3840 = vadd.f32 %v3813, %v3839
  %3841 = vdwg.mxu0
  %3842 = vmatpush.msra.mxu0 0.0
  %3843 = vmatpush.msra.mxu0 0.0
  %3844 = vmatpush.msra.mxu0 0.0
  %3845 = vmatpush.msra.mxu0 0.0
  %3846 = vmatpush.msra.mxu0 0.0
  %3847 = vmatpush.msra.mxu0 0.0
  %3848 = vmatpush.msra.mxu0 0.0
  %3849 = vmatpush.msra.mxu0 0.0
  %3850 = vmatpush.msra.mxu0 0.0
  %3851 = vmatpush.msra.mxu0 0.0
  %3852 = vmatpush.msra.mxu0 0.0
  %3853 = vmatpush.msra.mxu0 0.0
  %v3854 = vand.u32 %v3709, 4294901760
  %v3855 = vsub.f32 %v3709, %v3854
  %v3856 = vand.u32 %v3855, 4294901760
  %3857 = vmatpush.msra.mxu0 %v3856
  %v3858 = vand.u32 %v3708, 4294901760
  %v3859 = vsub.f32 %v3708, %v3858
  %v3860 = vand.u32 %v3859, 4294901760
  %3861 = vmatpush.msra.mxu0 %v3860
  %v3862 = vand.u32 %v3707, 4294901760
  %v3863 = vsub.f32 %v3707, %v3862
  %v3864 = vand.u32 %v3863, 4294901760
  %3865 = vmatpush.msra.mxu0 %v3864
  %v3866 = vand.u32 %v3706, 4294901760
  %v3867 = vsub.f32 %v3706, %v3866
  %v3868 = vand.u32 %v3867, 4294901760
  %3869 = vmatpush.msra.mxu0 %v3868
  %v3870 = vand.u32 %v3713, 4294901760
  %3871 = vmatmul.f32.gmra.mxu0 %v3870
  %v3872 = vpop.f32.mrf.mxu0
  %v3873 = vadd.f32 %v3840, %v3872
  %3874 = vdwg.mxu0
  %3875 = vmatpush.msra.mxu0 0.0
  %3876 = vmatpush.msra.mxu0 0.0
  %3877 = vmatpush.msra.mxu0 0.0
  %3878 = vmatpush.msra.mxu0 0.0
  %3879 = vmatpush.msra.mxu0 0.0
  %3880 = vmatpush.msra.mxu0 0.0
  %3881 = vmatpush.msra.mxu0 0.0
  %3882 = vmatpush.msra.mxu0 0.0
  %3883 = vmatpush.msra.mxu0 0.0
  %3884 = vmatpush.msra.mxu0 0.0
  %3885 = vmatpush.msra.mxu0 0.0
  %3886 = vmatpush.msra.mxu0 0.0
  %v3887 = vand.u32 %v3709, 4294901760
  %3888 = vmatpush.msra.mxu0 %v3887
  %v3889 = vand.u32 %v3708, 4294901760
  %3890 = vmatpush.msra.mxu0 %v3889
  %v3891 = vand.u32 %v3707, 4294901760
  %3892 = vmatpush.msra.mxu0 %v3891
  %v3893 = vand.u32 %v3706, 4294901760
  %3894 = vmatpush.msra.mxu0 %v3893
  %v3895 = vand.u32 %v3713, 4294901760
  %3896 = vmatmul.f32.gmra.mxu0 %v3895
  %v3897 = vpop.f32.mrf.mxu0
  %v3898 = vadd.f32 %v3873, %v3897
  %3899 = vdwg.mxu0
  %v3901 = vsel %vm926, %v3405, 0
  %3903 = vmatpush.msra.mxu0 0.0
  %3904 = vmatpush.msra.mxu0 0.0
  %3905 = vmatpush.msra.mxu0 0.0
  %3906 = vmatpush.msra.mxu0 0.0
  %3907 = vmatpush.msra.mxu0 0.0
  %3908 = vmatpush.msra.mxu0 0.0
  %3909 = vmatpush.msra.mxu0 0.0
  %3910 = vmatpush.msra.mxu0 0.0
  %3911 = vmatpush.msra.mxu0 0.0
  %3912 = vmatpush.msra.mxu0 0.0
  %3913 = vmatpush.msra.mxu0 0.0
  %3914 = vmatpush.msra.mxu0 0.0
  %3915 = vmatpush.msra.mxu0 0.0
  %3916 = vmatpush.msra.mxu0 0.0
  %v3917 = vand.u32 %v3705, 4294901760
  %3918 = vmatpush.msra.mxu0 %v3917
  %v3919 = vand.u32 %v3704, 4294901760
  %3920 = vmatpush.msra.mxu0 %v3919
  %v3921 = vand.u32 %v3901, 4294901760
  %v3922 = vsub.f32 %v3901, %v3921
  %v3923 = vand.u32 %v3922, 4294901760
  %v3924 = vsub.f32 %v3922, %v3923
  %v3925 = vand.u32 %v3924, 4294901760
  %3926 = vmatmul.f32.gmra.mxu0 %v3925
  %v3927 = vpop.f32.mrf.mxu0
  %v3928 = vadd.f32 %v3898, %v3927
  %3929 = vdwg.mxu0
  %3930 = vmatpush.msra.mxu0 0.0
  %3931 = vmatpush.msra.mxu0 0.0
  %3932 = vmatpush.msra.mxu0 0.0
  %3933 = vmatpush.msra.mxu0 0.0
  %3934 = vmatpush.msra.mxu0 0.0
  %3935 = vmatpush.msra.mxu0 0.0
  %3936 = vmatpush.msra.mxu0 0.0
  %3937 = vmatpush.msra.mxu0 0.0
  %3938 = vmatpush.msra.mxu0 0.0
  %3939 = vmatpush.msra.mxu0 0.0
  %3940 = vmatpush.msra.mxu0 0.0
  %3941 = vmatpush.msra.mxu0 0.0
  %3942 = vmatpush.msra.mxu0 0.0
  %3943 = vmatpush.msra.mxu0 0.0
  %v3944 = vand.u32 %v3705, 4294901760
  %v3945 = vsub.f32 %v3705, %v3944
  %v3946 = vand.u32 %v3945, 4294901760
  %v3947 = vsub.f32 %v3945, %v3946
  %v3948 = vand.u32 %v3947, 4294901760
  %3949 = vmatpush.msra.mxu0 %v3948
  %v3950 = vand.u32 %v3704, 4294901760
  %v3951 = vsub.f32 %v3704, %v3950
  %v3952 = vand.u32 %v3951, 4294901760
  %v3953 = vsub.f32 %v3951, %v3952
  %v3954 = vand.u32 %v3953, 4294901760
  %3955 = vmatpush.msra.mxu0 %v3954
  %v3956 = vand.u32 %v3901, 4294901760
  %3957 = vmatmul.f32.gmra.mxu0 %v3956
  %v3958 = vpop.f32.mrf.mxu0
  %v3959 = vadd.f32 %v3928, %v3958
  %3960 = vdwg.mxu0
  %3961 = vmatpush.msra.mxu0 0.0
  %3962 = vmatpush.msra.mxu0 0.0
  %3963 = vmatpush.msra.mxu0 0.0
  %3964 = vmatpush.msra.mxu0 0.0
  %3965 = vmatpush.msra.mxu0 0.0
  %3966 = vmatpush.msra.mxu0 0.0
  %3967 = vmatpush.msra.mxu0 0.0
  %3968 = vmatpush.msra.mxu0 0.0
  %3969 = vmatpush.msra.mxu0 0.0
  %3970 = vmatpush.msra.mxu0 0.0
  %3971 = vmatpush.msra.mxu0 0.0
  %3972 = vmatpush.msra.mxu0 0.0
  %3973 = vmatpush.msra.mxu0 0.0
  %3974 = vmatpush.msra.mxu0 0.0
  %v3975 = vand.u32 %v3705, 4294901760
  %v3976 = vsub.f32 %v3705, %v3975
  %3977 = vmatpush.msra.mxu0 %v3976
  %v3978 = vand.u32 %v3704, 4294901760
  %v3979 = vsub.f32 %v3704, %v3978
  %3980 = vmatpush.msra.mxu0 %v3979
  %v3981 = vand.u32 %v3901, 4294901760
  %v3982 = vsub.f32 %v3901, %v3981
  %3983 = vmatmul.f32.gmra.mxu0 %v3982
  %v3984 = vpop.f32.mrf.mxu0
  %v3985 = vadd.f32 %v3959, %v3984
  %3986 = vdwg.mxu0
  %3987 = vmatpush.msra.mxu0 0.0
  %3988 = vmatpush.msra.mxu0 0.0
  %3989 = vmatpush.msra.mxu0 0.0
  %3990 = vmatpush.msra.mxu0 0.0
  %3991 = vmatpush.msra.mxu0 0.0
  %3992 = vmatpush.msra.mxu0 0.0
  %3993 = vmatpush.msra.mxu0 0.0
  %3994 = vmatpush.msra.mxu0 0.0
  %3995 = vmatpush.msra.mxu0 0.0
  %3996 = vmatpush.msra.mxu0 0.0
  %3997 = vmatpush.msra.mxu0 0.0
  %3998 = vmatpush.msra.mxu0 0.0
  %3999 = vmatpush.msra.mxu0 0.0
  %4000 = vmatpush.msra.mxu0 0.0
  %v4001 = vand.u32 %v3705, 4294901760
  %4002 = vmatpush.msra.mxu0 %v4001
  %v4003 = vand.u32 %v3704, 4294901760
  %4004 = vmatpush.msra.mxu0 %v4003
  %v4005 = vand.u32 %v3901, 4294901760
  %v4006 = vsub.f32 %v3901, %v4005
  %v4007 = vand.u32 %v4006, 4294901760
  %4008 = vmatmul.f32.gmra.mxu0 %v4007
  %v4009 = vpop.f32.mrf.mxu0
  %v4010 = vadd.f32 %v3985, %v4009
  %4011 = vdwg.mxu0
  %4012 = vmatpush.msra.mxu0 0.0
  %4013 = vmatpush.msra.mxu0 0.0
  %4014 = vmatpush.msra.mxu0 0.0
  %4015 = vmatpush.msra.mxu0 0.0
  %4016 = vmatpush.msra.mxu0 0.0
  %4017 = vmatpush.msra.mxu0 0.0
  %4018 = vmatpush.msra.mxu0 0.0
  %4019 = vmatpush.msra.mxu0 0.0
  %4020 = vmatpush.msra.mxu0 0.0
  %4021 = vmatpush.msra.mxu0 0.0
  %4022 = vmatpush.msra.mxu0 0.0
  %4023 = vmatpush.msra.mxu0 0.0
  %4024 = vmatpush.msra.mxu0 0.0
  %4025 = vmatpush.msra.mxu0 0.0
  %v4026 = vand.u32 %v3705, 4294901760
  %v4027 = vsub.f32 %v3705, %v4026
  %v4028 = vand.u32 %v4027, 4294901760
  %4029 = vmatpush.msra.mxu0 %v4028
  %v4030 = vand.u32 %v3704, 4294901760
  %v4031 = vsub.f32 %v3704, %v4030
  %v4032 = vand.u32 %v4031, 4294901760
  %4033 = vmatpush.msra.mxu0 %v4032
  %v4034 = vand.u32 %v3901, 4294901760
  %4035 = vmatmul.f32.gmra.mxu0 %v4034
  %v4036 = vpop.f32.mrf.mxu0
  %v4037 = vadd.f32 %v4010, %v4036
  %4038 = vdwg.mxu0
  %4039 = vmatpush.msra.mxu0 0.0
  %4040 = vmatpush.msra.mxu0 0.0
  %4041 = vmatpush.msra.mxu0 0.0
  %4042 = vmatpush.msra.mxu0 0.0
  %4043 = vmatpush.msra.mxu0 0.0
  %4044 = vmatpush.msra.mxu0 0.0
  %4045 = vmatpush.msra.mxu0 0.0
  %4046 = vmatpush.msra.mxu0 0.0
  %4047 = vmatpush.msra.mxu0 0.0
  %4048 = vmatpush.msra.mxu0 0.0
  %4049 = vmatpush.msra.mxu0 0.0
  %4050 = vmatpush.msra.mxu0 0.0
  %4051 = vmatpush.msra.mxu0 0.0
  %4052 = vmatpush.msra.mxu0 0.0
  %v4053 = vand.u32 %v3705, 4294901760
  %4054 = vmatpush.msra.mxu0 %v4053
  %v4055 = vand.u32 %v3704, 4294901760
  %4056 = vmatpush.msra.mxu0 %v4055
  %v4057 = vand.u32 %v3901, 4294901760
  %4058 = vmatmul.f32.gmra.mxu0 %v4057
  %v4059 = vpop.f32.mrf.mxu0
  %v4060 = vadd.f32 %v4037, %v4059
  %4061 = vdwg.mxu0
  %v4062 = vld [vmem:[%s9] sm:$0x1]
  %v4064 = vperm.slane %v4062, 0
  %v4066 = vadd.f32 %v4060, %v4064
  %v4067 = vld [vmem:[%s8] sm:$0xff]
  %v4068 = vld [vmem:[%s8 + $0x8] sm:$0xff]
  %v4069 = vld [vmem:[%s8 + $0x10] sm:$0xff]
  %v4070 = vld [vmem:[%s8 + $0x18] sm:$0xff]
  %v4071 = vld [vmem:[%s10] sm:$0x1]
  %v4073 = vperm.slane %v4071, 0
  %4075 = vmatpush.msra.mxu0 0.0
  %4076 = vmatpush.msra.mxu0 0.0
  %4077 = vmatpush.msra.mxu0 0.0
  %4078 = vmatpush.msra.mxu0 0.0
  %4079 = vmatpush.msra.mxu0 0.0
  %4080 = vmatpush.msra.mxu0 0.0
  %4081 = vmatpush.msra.mxu0 0.0
  %4082 = vmatpush.msra.mxu0 0.0
  %4083 = vmatpush.msra.mxu0 0.0
  %4084 = vmatpush.msra.mxu0 0.0
  %4085 = vmatpush.msra.mxu0 0.0
  %4086 = vmatpush.msra.mxu0 0.0
  %v4087 = vand.u32 %v4070, 4294901760
  %4088 = vmatpush.msra.mxu0 %v4087
  %v4089 = vand.u32 %v4069, 4294901760
  %4090 = vmatpush.msra.mxu0 %v4089
  %v4091 = vand.u32 %v4068, 4294901760
  %4092 = vmatpush.msra.mxu0 %v4091
  %v4093 = vand.u32 %v4067, 4294901760
  %4094 = vmatpush.msra.mxu0 %v4093
  %v4095 = vand.u32 %v2825, 4294901760
  %v4096 = vsub.f32 %v2825, %v4095
  %v4097 = vand.u32 %v4096, 4294901760
  %v4098 = vsub.f32 %v4096, %v4097
  %v4099 = vand.u32 %v4098, 4294901760
  %4100 = vmatmul.f32.gmra.mxu0 %v4099
  %v4101 = vpop.f32.mrf.mxu0
  %v4102 = vadd.f32 %v4073, %v4101
  %4103 = vdwg.mxu0
  %4104 = vmatpush.msra.mxu0 0.0
  %4105 = vmatpush.msra.mxu0 0.0
  %4106 = vmatpush.msra.mxu0 0.0
  %4107 = vmatpush.msra.mxu0 0.0
  %4108 = vmatpush.msra.mxu0 0.0
  %4109 = vmatpush.msra.mxu0 0.0
  %4110 = vmatpush.msra.mxu0 0.0
  %4111 = vmatpush.msra.mxu0 0.0
  %4112 = vmatpush.msra.mxu0 0.0
  %4113 = vmatpush.msra.mxu0 0.0
  %4114 = vmatpush.msra.mxu0 0.0
  %4115 = vmatpush.msra.mxu0 0.0
  %v4116 = vand.u32 %v4070, 4294901760
  %v4117 = vsub.f32 %v4070, %v4116
  %v4118 = vand.u32 %v4117, 4294901760
  %v4119 = vsub.f32 %v4117, %v4118
  %v4120 = vand.u32 %v4119, 4294901760
  %4121 = vmatpush.msra.mxu0 %v4120
  %v4122 = vand.u32 %v4069, 4294901760
  %v4123 = vsub.f32 %v4069, %v4122
  %v4124 = vand.u32 %v4123, 4294901760
  %v4125 = vsub.f32 %v4123, %v4124
  %v4126 = vand.u32 %v4125, 4294901760
  %4127 = vmatpush.msra.mxu0 %v4126
  %v4128 = vand.u32 %v4068, 4294901760
  %v4129 = vsub.f32 %v4068, %v4128
  %v4130 = vand.u32 %v4129, 4294901760
  %v4131 = vsub.f32 %v4129, %v4130
  %v4132 = vand.u32 %v4131, 4294901760
  %4133 = vmatpush.msra.mxu0 %v4132
  %v4134 = vand.u32 %v4067, 4294901760
  %v4135 = vsub.f32 %v4067, %v4134
  %v4136 = vand.u32 %v4135, 4294901760
  %v4137 = vsub.f32 %v4135, %v4136
  %v4138 = vand.u32 %v4137, 4294901760
  %4139 = vmatpush.msra.mxu0 %v4138
  %v4140 = vand.u32 %v2825, 4294901760
  %4141 = vmatmul.f32.gmra.mxu0 %v4140
  %v4142 = vpop.f32.mrf.mxu0
  %v4143 = vadd.f32 %v4102, %v4142
  %4144 = vdwg.mxu0
  %4145 = vmatpush.msra.mxu0 0.0
  %4146 = vmatpush.msra.mxu0 0.0
  %4147 = vmatpush.msra.mxu0 0.0
  %4148 = vmatpush.msra.mxu0 0.0
  %4149 = vmatpush.msra.mxu0 0.0
  %4150 = vmatpush.msra.mxu0 0.0
  %4151 = vmatpush.msra.mxu0 0.0
  %4152 = vmatpush.msra.mxu0 0.0
  %4153 = vmatpush.msra.mxu0 0.0
  %4154 = vmatpush.msra.mxu0 0.0
  %4155 = vmatpush.msra.mxu0 0.0
  %4156 = vmatpush.msra.mxu0 0.0
  %v4157 = vand.u32 %v4070, 4294901760
  %v4158 = vsub.f32 %v4070, %v4157
  %4159 = vmatpush.msra.mxu0 %v4158
  %v4160 = vand.u32 %v4069, 4294901760
  %v4161 = vsub.f32 %v4069, %v4160
  %4162 = vmatpush.msra.mxu0 %v4161
  %v4163 = vand.u32 %v4068, 4294901760
  %v4164 = vsub.f32 %v4068, %v4163
  %4165 = vmatpush.msra.mxu0 %v4164
  %v4166 = vand.u32 %v4067, 4294901760
  %v4167 = vsub.f32 %v4067, %v4166
  %4168 = vmatpush.msra.mxu0 %v4167
  %v4169 = vand.u32 %v2825, 4294901760
  %v4170 = vsub.f32 %v2825, %v4169
  %4171 = vmatmul.f32.gmra.mxu0 %v4170
  %v4172 = vpop.f32.mrf.mxu0
  %v4173 = vadd.f32 %v4143, %v4172
  %4174 = vdwg.mxu0
  %4175 = vmatpush.msra.mxu0 0.0
  %4176 = vmatpush.msra.mxu0 0.0
  %4177 = vmatpush.msra.mxu0 0.0
  %4178 = vmatpush.msra.mxu0 0.0
  %4179 = vmatpush.msra.mxu0 0.0
  %4180 = vmatpush.msra.mxu0 0.0
  %4181 = vmatpush.msra.mxu0 0.0
  %4182 = vmatpush.msra.mxu0 0.0
  %4183 = vmatpush.msra.mxu0 0.0
  %4184 = vmatpush.msra.mxu0 0.0
  %4185 = vmatpush.msra.mxu0 0.0
  %4186 = vmatpush.msra.mxu0 0.0
  %v4187 = vand.u32 %v4070, 4294901760
  %4188 = vmatpush.msra.mxu0 %v4187
  %v4189 = vand.u32 %v4069, 4294901760
  %4190 = vmatpush.msra.mxu0 %v4189
  %v4191 = vand.u32 %v4068, 4294901760
  %4192 = vmatpush.msra.mxu0 %v4191
  %v4193 = vand.u32 %v4067, 4294901760
  %4194 = vmatpush.msra.mxu0 %v4193
  %v4195 = vand.u32 %v2825, 4294901760
  %v4196 = vsub.f32 %v2825, %v4195
  %v4197 = vand.u32 %v4196, 4294901760
  %4198 = vmatmul.f32.gmra.mxu0 %v4197
  %v4199 = vpop.f32.mrf.mxu0
  %v4200 = vadd.f32 %v4173, %v4199
  %4201 = vdwg.mxu0
  %4202 = vmatpush.msra.mxu0 0.0
  %4203 = vmatpush.msra.mxu0 0.0
  %4204 = vmatpush.msra.mxu0 0.0
  %4205 = vmatpush.msra.mxu0 0.0
  %4206 = vmatpush.msra.mxu0 0.0
  %4207 = vmatpush.msra.mxu0 0.0
  %4208 = vmatpush.msra.mxu0 0.0
  %4209 = vmatpush.msra.mxu0 0.0
  %4210 = vmatpush.msra.mxu0 0.0
  %4211 = vmatpush.msra.mxu0 0.0
  %4212 = vmatpush.msra.mxu0 0.0
  %4213 = vmatpush.msra.mxu0 0.0
  %v4214 = vand.u32 %v4070, 4294901760
  %v4215 = vsub.f32 %v4070, %v4214
  %v4216 = vand.u32 %v4215, 4294901760
  %4217 = vmatpush.msra.mxu0 %v4216
  %v4218 = vand.u32 %v4069, 4294901760
  %v4219 = vsub.f32 %v4069, %v4218
  %v4220 = vand.u32 %v4219, 4294901760
  %4221 = vmatpush.msra.mxu0 %v4220
  %v4222 = vand.u32 %v4068, 4294901760
  %v4223 = vsub.f32 %v4068, %v4222
  %v4224 = vand.u32 %v4223, 4294901760
  %4225 = vmatpush.msra.mxu0 %v4224
  %v4226 = vand.u32 %v4067, 4294901760
  %v4227 = vsub.f32 %v4067, %v4226
  %v4228 = vand.u32 %v4227, 4294901760
  %4229 = vmatpush.msra.mxu0 %v4228
  %v4230 = vand.u32 %v2825, 4294901760
  %4231 = vmatmul.f32.gmra.mxu0 %v4230
  %v4232 = vpop.f32.mrf.mxu0
  %v4233 = vadd.f32 %v4200, %v4232
  %4234 = vdwg.mxu0
  %4235 = vmatpush.msra.mxu0 0.0
  %4236 = vmatpush.msra.mxu0 0.0
  %4237 = vmatpush.msra.mxu0 0.0
  %4238 = vmatpush.msra.mxu0 0.0
  %4239 = vmatpush.msra.mxu0 0.0
  %4240 = vmatpush.msra.mxu0 0.0
  %4241 = vmatpush.msra.mxu0 0.0
  %4242 = vmatpush.msra.mxu0 0.0
  %4243 = vmatpush.msra.mxu0 0.0
  %4244 = vmatpush.msra.mxu0 0.0
  %4245 = vmatpush.msra.mxu0 0.0
  %4246 = vmatpush.msra.mxu0 0.0
  %v4247 = vand.u32 %v4070, 4294901760
  %4248 = vmatpush.msra.mxu0 %v4247
  %v4249 = vand.u32 %v4069, 4294901760
  %4250 = vmatpush.msra.mxu0 %v4249
  %v4251 = vand.u32 %v4068, 4294901760
  %4252 = vmatpush.msra.mxu0 %v4251
  %v4253 = vand.u32 %v4067, 4294901760
  %4254 = vmatpush.msra.mxu0 %v4253
  %v4255 = vand.u32 %v2825, 4294901760
  %4256 = vmatmul.f32.gmra.mxu0 %v4255
  %v4257 = vpop.f32.mrf.mxu0
  %v4258 = vadd.f32 %v4233, %v4257
  %4259 = vdwg.mxu0
  %v4260 = vadd.f32 %v4066, %v4258
  %v4261 = vxor.u32 %v4260, 2147483648
  %v4262 = vmul.f32 %v4261, 1.442695
  %v4263 = vpow.pop %v4262
  %v4264 = vadd.f32 %v4263, 1.0
  %v4265 = vrcp.pop %v4264
  %v4266 = vmul.f32 %v4264, %v4265
  %v4267 = vsub.f32 1.0, %v4266
  %v4268 = vmul.f32 %v4265, %v4267
  %v4269 = vadd.f32 %v4265, %v4268
  %vm4270 = vweird.f32 %v4264
  %vm4271 = vweird.f32 %v4265
  %vm4272 = vmor %vm4270, %vm4271
  %v4273 = vsel %vm4272, %v4265, %v4269
  %v4274 = vand.u32 2147483647, %v4264
  %vm4275 = vcmp.eq.f32.partialorder %v4274, 8.507059e+37
  %v4276 = vand.u32 %v4264, 2147483648
  %v4277 = vor.u32 1.1754944e-38, %v4276
  %v4278 = vsel %vm4275, %v4277, %v4273
  %v4279 = vmul.f32 1.0, %v4278
  %4281 = vrot.lane.b32.xlu0 %v4258, 64
  %v4282 = vpop.permute.xlu0 %4281
  %v4284 = vmul.f32 %v4279, %v4282
  %4286 = vrot.lane.b32.xlu0 %v4284, 64
  %v4287 = vpop.permute.xlu0 %4286
  %v4289 = vadd.f32 %v4066, %v4287
  %v4290 = vtanh.pop %v4289
  %v4291 = vsub.f32 1.0, %v4279
  %4293 = vrot.lane.b32.xlu0 %v4290, 96
  %v4294 = vpop.permute.xlu0 %4293
  %v4296 = vmul.f32 %v4291, %v4294
  %v4297 = vmul.f32 %v4279, %v2813
  %v4298 = vadd.f32 %v4296, %v4297
  %v4299 = vld [vmem:[%s11] sm:$0xff]
  %v4300 = vld [vmem:[%s11 + $0x8] sm:$0xff]
  %v4301 = vld [vmem:[%s11 + $0x10] sm:$0xff]
  %v4302 = vld [vmem:[%s11 + $0x18] sm:$0xff]
  %v4303 = vld [vmem:[%s12] sm:$0x1]
  %v4305 = vperm.slane %v4303, 0
  %4308 = vrot.lane.b32.xlu0 %v4298, 96
  %v4309 = vpop.permute.xlu0 %4308
  %v4310 = vsel %vm431, %v4309, 0
  %4312 = vmatpush.msra.mxu0 0.0
  %4313 = vmatpush.msra.mxu0 0.0
  %4314 = vmatpush.msra.mxu0 0.0
  %4315 = vmatpush.msra.mxu0 0.0
  %4316 = vmatpush.msra.mxu0 0.0
  %4317 = vmatpush.msra.mxu0 0.0
  %4318 = vmatpush.msra.mxu0 0.0
  %4319 = vmatpush.msra.mxu0 0.0
  %4320 = vmatpush.msra.mxu0 0.0
  %4321 = vmatpush.msra.mxu0 0.0
  %4322 = vmatpush.msra.mxu0 0.0
  %4323 = vmatpush.msra.mxu0 0.0
  %v4324 = vand.u32 %v4302, 4294901760
  %4325 = vmatpush.msra.mxu0 %v4324
  %v4326 = vand.u32 %v4301, 4294901760
  %4327 = vmatpush.msra.mxu0 %v4326
  %v4328 = vand.u32 %v4300, 4294901760
  %4329 = vmatpush.msra.mxu0 %v4328
  %v4330 = vand.u32 %v4299, 4294901760
  %4331 = vmatpush.msra.mxu0 %v4330
  %v4332 = vand.u32 %v4310, 4294901760
  %v4333 = vsub.f32 %v4310, %v4332
  %v4334 = vand.u32 %v4333, 4294901760
  %v4335 = vsub.f32 %v4333, %v4334
  %v4336 = vand.u32 %v4335, 4294901760
  %4337 = vmatmul.f32.gmra.mxu0 %v4336
  %v4338 = vpop.f32.mrf.mxu0
  %v4339 = vadd.f32 %v4305, %v4338
  %4340 = vdwg.mxu0
  %4341 = vmatpush.msra.mxu0 0.0
  %4342 = vmatpush.msra.mxu0 0.0
  %4343 = vmatpush.msra.mxu0 0.0
  %4344 = vmatpush.msra.mxu0 0.0
  %4345 = vmatpush.msra.mxu0 0.0
  %4346 = vmatpush.msra.mxu0 0.0
  %4347 = vmatpush.msra.mxu0 0.0
  %4348 = vmatpush.msra.mxu0 0.0
  %4349 = vmatpush.msra.mxu0 0.0
  %4350 = vmatpush.msra.mxu0 0.0
  %4351 = vmatpush.msra.mxu0 0.0
  %4352 = vmatpush.msra.mxu0 0.0
  %v4353 = vand.u32 %v4302, 4294901760
  %v4354 = vsub.f32 %v4302, %v4353
  %v4355 = vand.u32 %v4354, 4294901760
  %v4356 = vsub.f32 %v4354, %v4355
  %v4357 = vand.u32 %v4356, 4294901760
  %4358 = vmatpush.msra.mxu0 %v4357
  %v4359 = vand.u32 %v4301, 4294901760
  %v4360 = vsub.f32 %v4301, %v4359
  %v4361 = vand.u32 %v4360, 4294901760
  %v4362 = vsub.f32 %v4360, %v4361
  %v4363 = vand.u32 %v4362, 4294901760
  %4364 = vmatpush.msra.mxu0 %v4363
  %v4365 = vand.u32 %v4300, 4294901760
  %v4366 = vsub.f32 %v4300, %v4365
  %v4367 = vand.u32 %v4366, 4294901760
  %v4368 = vsub.f32 %v4366, %v4367
  %v4369 = vand.u32 %v4368, 4294901760
  %4370 = vmatpush.msra.mxu0 %v4369
  %v4371 = vand.u32 %v4299, 4294901760
  %v4372 = vsub.f32 %v4299, %v4371
  %v4373 = vand.u32 %v4372, 4294901760
  %v4374 = vsub.f32 %v4372, %v4373
  %v4375 = vand.u32 %v4374, 4294901760
  %4376 = vmatpush.msra.mxu0 %v4375
  %v4377 = vand.u32 %v4310, 4294901760
  %4378 = vmatmul.f32.gmra.mxu0 %v4377
  %v4379 = vpop.f32.mrf.mxu0
  %v4380 = vadd.f32 %v4339, %v4379
  %4381 = vdwg.mxu0
  %4382 = vmatpush.msra.mxu0 0.0
  %4383 = vmatpush.msra.mxu0 0.0
  %4384 = vmatpush.msra.mxu0 0.0
  %4385 = vmatpush.msra.mxu0 0.0
  %4386 = vmatpush.msra.mxu0 0.0
  %4387 = vmatpush.msra.mxu0 0.0
  %4388 = vmatpush.msra.mxu0 0.0
  %4389 = vmatpush.msra.mxu0 0.0
  %4390 = vmatpush.msra.mxu0 0.0
  %4391 = vmatpush.msra.mxu0 0.0
  %4392 = vmatpush.msra.mxu0 0.0
  %4393 = vmatpush.msra.mxu0 0.0
  %v4394 = vand.u32 %v4302, 4294901760
  %v4395 = vsub.f32 %v4302, %v4394
  %4396 = vmatpush.msra.mxu0 %v4395
  %v4397 = vand.u32 %v4301, 4294901760
  %v4398 = vsub.f32 %v4301, %v4397
  %4399 = vmatpush.msra.mxu0 %v4398
  %v4400 = vand.u32 %v4300, 4294901760
  %v4401 = vsub.f32 %v4300, %v4400
  %4402 = vmatpush.msra.mxu0 %v4401
  %v4403 = vand.u32 %v4299, 4294901760
  %v4404 = vsub.f32 %v4299, %v4403
  %4405 = vmatpush.msra.mxu0 %v4404
  %v4406 = vand.u32 %v4310, 4294901760
  %v4407 = vsub.f32 %v4310, %v4406
  %4408 = vmatmul.f32.gmra.mxu0 %v4407
  %v4409 = vpop.f32.mrf.mxu0
  %v4410 = vadd.f32 %v4380, %v4409
  %4411 = vdwg.mxu0
  %4412 = vmatpush.msra.mxu0 0.0
  %4413 = vmatpush.msra.mxu0 0.0
  %4414 = vmatpush.msra.mxu0 0.0
  %4415 = vmatpush.msra.mxu0 0.0
  %4416 = vmatpush.msra.mxu0 0.0
  %4417 = vmatpush.msra.mxu0 0.0
  %4418 = vmatpush.msra.mxu0 0.0
  %4419 = vmatpush.msra.mxu0 0.0
  %4420 = vmatpush.msra.mxu0 0.0
  %4421 = vmatpush.msra.mxu0 0.0
  %4422 = vmatpush.msra.mxu0 0.0
  %4423 = vmatpush.msra.mxu0 0.0
  %v4424 = vand.u32 %v4302, 4294901760
  %4425 = vmatpush.msra.mxu0 %v4424
  %v4426 = vand.u32 %v4301, 4294901760
  %4427 = vmatpush.msra.mxu0 %v4426
  %v4428 = vand.u32 %v4300, 4294901760
  %4429 = vmatpush.msra.mxu0 %v4428
  %v4430 = vand.u32 %v4299, 4294901760
  %4431 = vmatpush.msra.mxu0 %v4430
  %v4432 = vand.u32 %v4310, 4294901760
  %v4433 = vsub.f32 %v4310, %v4432
  %v4434 = vand.u32 %v4433, 4294901760
  %4435 = vmatmul.f32.gmra.mxu0 %v4434
  %v4436 = vpop.f32.mrf.mxu0
  %v4437 = vadd.f32 %v4410, %v4436
  %4438 = vdwg.mxu0
  %4439 = vmatpush.msra.mxu0 0.0
  %4440 = vmatpush.msra.mxu0 0.0
  %4441 = vmatpush.msra.mxu0 0.0
  %4442 = vmatpush.msra.mxu0 0.0
  %4443 = vmatpush.msra.mxu0 0.0
  %4444 = vmatpush.msra.mxu0 0.0
  %4445 = vmatpush.msra.mxu0 0.0
  %4446 = vmatpush.msra.mxu0 0.0
  %4447 = vmatpush.msra.mxu0 0.0
  %4448 = vmatpush.msra.mxu0 0.0
  %4449 = vmatpush.msra.mxu0 0.0
  %4450 = vmatpush.msra.mxu0 0.0
  %v4451 = vand.u32 %v4302, 4294901760
  %v4452 = vsub.f32 %v4302, %v4451
  %v4453 = vand.u32 %v4452, 4294901760
  %4454 = vmatpush.msra.mxu0 %v4453
  %v4455 = vand.u32 %v4301, 4294901760
  %v4456 = vsub.f32 %v4301, %v4455
  %v4457 = vand.u32 %v4456, 4294901760
  %4458 = vmatpush.msra.mxu0 %v4457
  %v4459 = vand.u32 %v4300, 4294901760
  %v4460 = vsub.f32 %v4300, %v4459
  %v4461 = vand.u32 %v4460, 4294901760
  %4462 = vmatpush.msra.mxu0 %v4461
  %v4463 = vand.u32 %v4299, 4294901760
  %v4464 = vsub.f32 %v4299, %v4463
  %v4465 = vand.u32 %v4464, 4294901760
  %4466 = vmatpush.msra.mxu0 %v4465
  %v4467 = vand.u32 %v4310, 4294901760
  %4468 = vmatmul.f32.gmra.mxu0 %v4467
  %v4469 = vpop.f32.mrf.mxu0
  %v4470 = vadd.f32 %v4437, %v4469
  %4471 = vdwg.mxu0
  %4472 = vmatpush.msra.mxu0 0.0
  %4473 = vmatpush.msra.mxu0 0.0
  %4474 = vmatpush.msra.mxu0 0.0
  %4475 = vmatpush.msra.mxu0 0.0
  %4476 = vmatpush.msra.mxu0 0.0
  %4477 = vmatpush.msra.mxu0 0.0
  %4478 = vmatpush.msra.mxu0 0.0
  %4479 = vmatpush.msra.mxu0 0.0
  %4480 = vmatpush.msra.mxu0 0.0
  %4481 = vmatpush.msra.mxu0 0.0
  %4482 = vmatpush.msra.mxu0 0.0
  %4483 = vmatpush.msra.mxu0 0.0
  %v4484 = vand.u32 %v4302, 4294901760
  %4485 = vmatpush.msra.mxu0 %v4484
  %v4486 = vand.u32 %v4301, 4294901760
  %4487 = vmatpush.msra.mxu0 %v4486
  %v4488 = vand.u32 %v4300, 4294901760
  %4489 = vmatpush.msra.mxu0 %v4488
  %v4490 = vand.u32 %v4299, 4294901760
  %4491 = vmatpush.msra.mxu0 %v4490
  %v4492 = vand.u32 %v4310, 4294901760
  %4493 = vmatmul.f32.gmra.mxu0 %v4492
  %v4494 = vpop.f32.mrf.mxu0
  %v4495 = vadd.f32 %v4470, %v4494
  %4496 = vdwg.mxu0
  %v4497 = vsel %vm1527, %v4495, -inf
  %4498 = vmax.xlane.f32.xlu0 %v4497
  %v4499 = vpop.xlane.xlu0 %4498
  %v4500 = vsub.f32 %v4495, %v4499
  %v4501 = vmul.f32 %v4500, 1.442695
  %v4502 = vpow.pop %v4501
  %v4503 = vsel %vm1527, %v4502, 0.0
  %4504 = vadd.xlane.f32.xlu0 %v4503
  %v4505 = vpop.xlane.xlu0 %4504
  %v4506 = vlog2.pop %v4505
  %v4507 = vmul.f32 %v4506, 0.6931472
  %v4508 = vadd.f32 %v4499, %v4507
  %v4509 = vsub.f32 %v4495, %v4508
  %s4510 = scalar_lea.vmem %s13, 4
  %4511 = vst [vmem:[%s4510] sm:$0x3] %v4509
  %v4512 = vsel %vm1527, %v4509, -inf
  %4513 = vmax.xlane.f32.xlu0 %v4512
  %v4514 = vpop.xlane.xlu0 %4513
  %vm4515 = vcmp.ge.f32.partialorder %v4509, %v4514
  %v4516 = vsel %vm4515, %v45, 128
  %v4517 = vsel %vm1527, %v4516, 2147483647
  %v4518 = vand.u32 %v4517, 65535
  %v4519 = vshra.s32 %v4517, 16
  %v4520 = vcvt.s32.f32 %v4518
  %v4521 = vcvt.s32.f32 %v4519
  %4522 = vmin.xlane.f32.xlu0 %v4521
  %v4523 = vpop.xlane.xlu0 %4522
  %vm4524 = vcmp.eq.f32.partialorder %v4521, %v4523
  %v4525 = vsel %vm4524, %v4520, inf
  %4526 = vmin.xlane.f32.xlu0 %v4525
  %v4527 = vpop.xlane.xlu0 %4526
  %v4528 = vcvt.f32.s32 %v4527
  %v4529 = vcvt.f32.s32 %v4523
  %v4530 = vshll.u32 %v4529, 16
  %v4531 = vadd.s32 %v4530, %v4528
  %vm4532 = vcmp.eq.s32.totalorder %v45, %v4531
  %v4533 = vsel %vm4532, 1, 0
  %v4534 = vcvt.s32.f32 %v4533
  %v4535 = vld [vmem:[%s3] sm:$0xff]
  %v4536 = vld [vmem:[%s3 + $0x8] sm:$0xff]
  %v4537 = vld [vmem:[%s3 + $0x10] sm:$0xff]
  %v4538 = vld [vmem:[%s3 + $0x18] sm:$0xff]
  %v4539 = vld [vmem:[%s3 + $0x20] sm:$0xff]
  %v4540 = vld [vmem:[%s3 + $0x28] sm:$0xff]
  %v4541 = vld [vmem:[%s3 + $0x30] sm:$0xff]
  %v4542 = vld [vmem:[%s3 + $0x38] sm:$0xff]
  %v4543 = vld [vmem:[%s3 + $0x40] sm:$0xff]
  %v4544 = vld [vmem:[%s3 + $0x48] sm:$0xff]
  %v4545 = vld [vmem:[%s3 + $0x50] sm:$0xff]
  %v4546 = vld [vmem:[%s3 + $0x58] sm:$0xff]
  %v4547 = vld [vmem:[%s3 + $0x60] sm:$0xff]
  %v4548 = vld [vmem:[%s3 + $0x68] sm:$0xff]
  %v4549 = vld [vmem:[%s3 + $0x70] sm:$0xff]
  %v4550 = vld [vmem:[%s3 + $0x78] sm:$0xff]
  %v4551 = vand.u32 %v4550, 4294901760
  %4552 = vmatpush.msra.mxu0 %v4551
  %v4553 = vand.u32 %v4549, 4294901760
  %4554 = vmatpush.msra.mxu0 %v4553
  %v4555 = vand.u32 %v4548, 4294901760
  %4556 = vmatpush.msra.mxu0 %v4555
  %v4557 = vand.u32 %v4547, 4294901760
  %4558 = vmatpush.msra.mxu0 %v4557
  %v4559 = vand.u32 %v4546, 4294901760
  %4560 = vmatpush.msra.mxu0 %v4559
  %v4561 = vand.u32 %v4545, 4294901760
  %4562 = vmatpush.msra.mxu0 %v4561
  %v4563 = vand.u32 %v4544, 4294901760
  %4564 = vmatpush.msra.mxu0 %v4563
  %v4565 = vand.u32 %v4543, 4294901760
  %4566 = vmatpush.msra.mxu0 %v4565
  %v4567 = vand.u32 %v4542, 4294901760
  %4568 = vmatpush.msra.mxu0 %v4567
  %v4569 = vand.u32 %v4541, 4294901760
  %4570 = vmatpush.msra.mxu0 %v4569
  %v4571 = vand.u32 %v4540, 4294901760
  %4572 = vmatpush.msra.mxu0 %v4571
  %v4573 = vand.u32 %v4539, 4294901760
  %4574 = vmatpush.msra.mxu0 %v4573
  %v4575 = vand.u32 %v4538, 4294901760
  %4576 = vmatpush.msra.mxu0 %v4575
  %v4577 = vand.u32 %v4537, 4294901760
  %4578 = vmatpush.msra.mxu0 %v4577
  %v4579 = vand.u32 %v4536, 4294901760
  %4580 = vmatpush.msra.mxu0 %v4579
  %v4581 = vand.u32 %v4535, 4294901760
  %4582 = vmatpush.msra.mxu0 %v4581
  %v4583 = vand.u32 %v4534, 4294901760
  %v4584 = vsub.f32 %v4534, %v4583
  %v4585 = vand.u32 %v4584, 4294901760
  %v4586 = vsub.f32 %v4584, %v4585
  %v4587 = vand.u32 %v4586, 4294901760
  %4588 = vmatmul.f32.gmra.mxu0 %v4587
  %v4589 = vpop.f32.mrf.mxu0
  %v4590 = vadd.f32 0.0, %v4589
  %4591 = vdwg.mxu0
  %v4592 = vand.u32 %v4550, 4294901760
  %v4593 = vsub.f32 %v4550, %v4592
  %v4594 = vand.u32 %v4593, 4294901760
  %v4595 = vsub.f32 %v4593, %v4594
  %v4596 = vand.u32 %v4595, 4294901760
  %4597 = vmatpush.msra.mxu0 %v4596
  %v4598 = vand.u32 %v4549, 4294901760
  %v4599 = vsub.f32 %v4549, %v4598
  %v4600 = vand.u32 %v4599, 4294901760
  %v4601 = vsub.f32 %v4599, %v4600
  %v4602 = vand.u32 %v4601, 4294901760
  %4603 = vmatpush.msra.mxu0 %v4602
  %v4604 = vand.u32 %v4548, 4294901760
  %v4605 = vsub.f32 %v4548, %v4604
  %v4606 = vand.u32 %v4605, 4294901760
  %v4607 = vsub.f32 %v4605, %v4606
  %v4608 = vand.u32 %v4607, 4294901760
  %4609 = vmatpush.msra.mxu0 %v4608
  %v4610 = vand.u32 %v4547, 4294901760
  %v4611 = vsub.f32 %v4547, %v4610
  %v4612 = vand.u32 %v4611, 4294901760
  %v4613 = vsub.f32 %v4611, %v4612
  %v4614 = vand.u32 %v4613, 4294901760
  %4615 = vmatpush.msra.mxu0 %v4614
  %v4616 = vand.u32 %v4546, 4294901760
  %v4617 = vsub.f32 %v4546, %v4616
  %v4618 = vand.u32 %v4617, 4294901760
  %v4619 = vsub.f32 %v4617, %v4618
  %v4620 = vand.u32 %v4619, 4294901760
  %4621 = vmatpush.msra.mxu0 %v4620
  %v4622 = vand.u32 %v4545, 4294901760
  %v4623 = vsub.f32 %v4545, %v4622
  %v4624 = vand.u32 %v4623, 4294901760
  %v4625 = vsub.f32 %v4623, %v4624
  %v4626 = vand.u32 %v4625, 4294901760
  %4627 = vmatpush.msra.mxu0 %v4626
  %v4628 = vand.u32 %v4544, 4294901760
  %v4629 = vsub.f32 %v4544, %v4628
  %v4630 = vand.u32 %v4629, 4294901760
  %v4631 = vsub.f32 %v4629, %v4630
  %v4632 = vand.u32 %v4631, 4294901760
  %4633 = vmatpush.msra.mxu0 %v4632
  %v4634 = vand.u32 %v4543, 4294901760
  %v4635 = vsub.f32 %v4543, %v4634
  %v4636 = vand.u32 %v4635, 4294901760
  %v4637 = vsub.f32 %v4635, %v4636
  %v4638 = vand.u32 %v4637, 4294901760
  %4639 = vmatpush.msra.mxu0 %v4638
  %v4640 = vand.u32 %v4542, 4294901760
  %v4641 = vsub.f32 %v4542, %v4640
  %v4642 = vand.u32 %v4641, 4294901760
  %v4643 = vsub.f32 %v4641, %v4642
  %v4644 = vand.u32 %v4643, 4294901760
  %4645 = vmatpush.msra.mxu0 %v4644
  %v4646 = vand.u32 %v4541, 4294901760
  %v4647 = vsub.f32 %v4541, %v4646
  %v4648 = vand.u32 %v4647, 4294901760
  %v4649 = vsub.f32 %v4647, %v4648
  %v4650 = vand.u32 %v4649, 4294901760
  %4651 = vmatpush.msra.mxu0 %v4650
  %v4652 = vand.u32 %v4540, 4294901760
  %v4653 = vsub.f32 %v4540, %v4652
  %v4654 = vand.u32 %v4653, 4294901760
  %v4655 = vsub.f32 %v4653, %v4654
  %v4656 = vand.u32 %v4655, 4294901760
  %4657 = vmatpush.msra.mxu0 %v4656
  %v4658 = vand.u32 %v4539, 4294901760
  %v4659 = vsub.f32 %v4539, %v4658
  %v4660 = vand.u32 %v4659, 4294901760
  %v4661 = vsub.f32 %v4659, %v4660
  %v4662 = vand.u32 %v4661, 4294901760
  %4663 = vmatpush.msra.mxu0 %v4662
  %v4664 = vand.u32 %v4538, 4294901760
  %v4665 = vsub.f32 %v4538, %v4664
  %v4666 = vand.u32 %v4665, 4294901760
  %v4667 = vsub.f32 %v4665, %v4666
  %v4668 = vand.u32 %v4667, 4294901760
  %4669 = vmatpush.msra.mxu0 %v4668
  %v4670 = vand.u32 %v4537, 4294901760
  %v4671 = vsub.f32 %v4537, %v4670
  %v4672 = vand.u32 %v4671, 4294901760
  %v4673 = vsub.f32 %v4671, %v4672
  %v4674 = vand.u32 %v4673, 4294901760
  %4675 = vmatpush.msra.mxu0 %v4674
  %v4676 = vand.u32 %v4536, 4294901760
  %v4677 = vsub.f32 %v4536, %v4676
  %v4678 = vand.u32 %v4677, 4294901760
  %v4679 = vsub.f32 %v4677, %v4678
  %v4680 = vand.u32 %v4679, 4294901760
  %4681 = vmatpush.msra.mxu0 %v4680
  %v4682 = vand.u32 %v4535, 4294901760
  %v4683 = vsub.f32 %v4535, %v4682
  %v4684 = vand.u32 %v4683, 4294901760
  %v4685 = vsub.f32 %v4683, %v4684
  %v4686 = vand.u32 %v4685, 4294901760
  %4687 = vmatpush.msra.mxu0 %v4686
  %v4688 = vand.u32 %v4534, 4294901760
  %4689 = vmatmul.f32.gmra.mxu0 %v4688
  %v4690 = vpop.f32.mrf.mxu0
  %v4691 = vadd.f32 %v4590, %v4690
  %4692 = vdwg.mxu0
  %v4693 = vand.u32 %v4550, 4294901760
  %v4694 = vsub.f32 %v4550, %v4693
  %4695 = vmatpush.msra.mxu0 %v4694
  %v4696 = vand.u32 %v4549, 4294901760
  %v4697 = vsub.f32 %v4549, %v4696
  %4698 = vmatpush.msra.mxu0 %v4697
  %v4699 = vand.u32 %v4548, 4294901760
  %v4700 = vsub.f32 %v4548, %v4699
  %4701 = vmatpush.msra.mxu0 %v4700
  %v4702 = vand.u32 %v4547, 4294901760
  %v4703 = vsub.f32 %v4547, %v4702
  %4704 = vmatpush.msra.mxu0 %v4703
  %v4705 = vand.u32 %v4546, 4294901760
  %v4706 = vsub.f32 %v4546, %v4705
  %4707 = vmatpush.msra.mxu0 %v4706
  %v4708 = vand.u32 %v4545, 4294901760
  %v4709 = vsub.f32 %v4545, %v4708
  %4710 = vmatpush.msra.mxu0 %v4709
  %v4711 = vand.u32 %v4544, 4294901760
  %v4712 = vsub.f32 %v4544, %v4711
  %4713 = vmatpush.msra.mxu0 %v4712
  %v4714 = vand.u32 %v4543, 4294901760
  %v4715 = vsub.f32 %v4543, %v4714
  %4716 = vmatpush.msra.mxu0 %v4715
  %v4717 = vand.u32 %v4542, 4294901760
  %v4718 = vsub.f32 %v4542, %v4717
  %4719 = vmatpush.msra.mxu0 %v4718
  %v4720 = vand.u32 %v4541, 4294901760
  %v4721 = vsub.f32 %v4541, %v4720
  %4722 = vmatpush.msra.mxu0 %v4721
  %v4723 = vand.u32 %v4540, 4294901760
  %v4724 = vsub.f32 %v4540, %v4723
  %4725 = vmatpush.msra.mxu0 %v4724
  %v4726 = vand.u32 %v4539, 4294901760
  %v4727 = vsub.f32 %v4539, %v4726
  %4728 = vmatpush.msra.mxu0 %v4727
  %v4729 = vand.u32 %v4538, 4294901760
  %v4730 = vsub.f32 %v4538, %v4729
  %4731 = vmatpush.msra.mxu0 %v4730
  %v4732 = vand.u32 %v4537, 4294901760
  %v4733 = vsub.f32 %v4537, %v4732
  %4734 = vmatpush.msra.mxu0 %v4733
  %v4735 = vand.u32 %v4536, 4294901760
  %v4736 = vsub.f32 %v4536, %v4735
  %4737 = vmatpush.msra.mxu0 %v4736
  %v4738 = vand.u32 %v4535, 4294901760
  %v4739 = vsub.f32 %v4535, %v4738
  %4740 = vmatpush.msra.mxu0 %v4739
  %v4741 = vand.u32 %v4534, 4294901760
  %v4742 = vsub.f32 %v4534, %v4741
  %4743 = vmatmul.f32.gmra.mxu0 %v4742
  %v4744 = vpop.f32.mrf.mxu0
  %v4745 = vadd.f32 %v4691, %v4744
  %4746 = vdwg.mxu0
  %v4747 = vand.u32 %v4550, 4294901760
  %4748 = vmatpush.msra.mxu0 %v4747
  %v4749 = vand.u32 %v4549, 4294901760
  %4750 = vmatpush.msra.mxu0 %v4749
  %v4751 = vand.u32 %v4548, 4294901760
  %4752 = vmatpush.msra.mxu0 %v4751
  %v4753 = vand.u32 %v4547, 4294901760
  %4754 = vmatpush.msra.mxu0 %v4753
  %v4755 = vand.u32 %v4546, 4294901760
  %4756 = vmatpush.msra.mxu0 %v4755
  %v4757 = vand.u32 %v4545, 4294901760
  %4758 = vmatpush.msra.mxu0 %v4757
  %v4759 = vand.u32 %v4544, 4294901760
  %4760 = vmatpush.msra.mxu0 %v4759
  %v4761 = vand.u32 %v4543, 4294901760
  %4762 = vmatpush.msra.mxu0 %v4761
  %v4763 = vand.u32 %v4542, 4294901760
  %4764 = vmatpush.msra.mxu0 %v4763
  %v4765 = vand.u32 %v4541, 4294901760
  %4766 = vmatpush.msra.mxu0 %v4765
  %v4767 = vand.u32 %v4540, 4294901760
  %4768 = vmatpush.msra.mxu0 %v4767
  %v4769 = vand.u32 %v4539, 4294901760
  %4770 = vmatpush.msra.mxu0 %v4769
  %v4771 = vand.u32 %v4538, 4294901760
  %4772 = vmatpush.msra.mxu0 %v4771
  %v4773 = vand.u32 %v4537, 4294901760
  %4774 = vmatpush.msra.mxu0 %v4773
  %v4775 = vand.u32 %v4536, 4294901760
  %4776 = vmatpush.msra.mxu0 %v4775
  %v4777 = vand.u32 %v4535, 4294901760
  %4778 = vmatpush.msra.mxu0 %v4777
  %v4779 = vand.u32 %v4534, 4294901760
  %v4780 = vsub.f32 %v4534, %v4779
  %v4781 = vand.u32 %v4780, 4294901760
  %4782 = vmatmul.f32.gmra.mxu0 %v4781
  %v4783 = vpop.f32.mrf.mxu0
  %v4784 = vadd.f32 %v4745, %v4783
  %4785 = vdwg.mxu0
  %v4786 = vand.u32 %v4550, 4294901760
  %v4787 = vsub.f32 %v4550, %v4786
  %v4788 = vand.u32 %v4787, 4294901760
  %4789 = vmatpush.msra.mxu0 %v4788
  %v4790 = vand.u32 %v4549, 4294901760
  %v4791 = vsub.f32 %v4549, %v4790
  %v4792 = vand.u32 %v4791, 4294901760
  %4793 = vmatpush.msra.mxu0 %v4792
  %v4794 = vand.u32 %v4548, 4294901760
  %v4795 = vsub.f32 %v4548, %v4794
  %v4796 = vand.u32 %v4795, 4294901760
  %4797 = vmatpush.msra.mxu0 %v4796
  %v4798 = vand.u32 %v4547, 4294901760
  %v4799 = vsub.f32 %v4547, %v4798
  %v4800 = vand.u32 %v4799, 4294901760
  %4801 = vmatpush.msra.mxu0 %v4800
  %v4802 = vand.u32 %v4546, 4294901760
  %v4803 = vsub.f32 %v4546, %v4802
  %v4804 = vand.u32 %v4803, 4294901760
  %4805 = vmatpush.msra.mxu0 %v4804
  %v4806 = vand.u32 %v4545, 4294901760
  %v4807 = vsub.f32 %v4545, %v4806
  %v4808 = vand.u32 %v4807, 4294901760
  %4809 = vmatpush.msra.mxu0 %v4808
  %v4810 = vand.u32 %v4544, 4294901760
  %v4811 = vsub.f32 %v4544, %v4810
  %v4812 = vand.u32 %v4811, 4294901760
  %4813 = vmatpush.msra.mxu0 %v4812
  %v4814 = vand.u32 %v4543, 4294901760
  %v4815 = vsub.f32 %v4543, %v4814
  %v4816 = vand.u32 %v4815, 4294901760
  %4817 = vmatpush.msra.mxu0 %v4816
  %v4818 = vand.u32 %v4542, 4294901760
  %v4819 = vsub.f32 %v4542, %v4818
  %v4820 = vand.u32 %v4819, 4294901760
  %4821 = vmatpush.msra.mxu0 %v4820
  %v4822 = vand.u32 %v4541, 4294901760
  %v4823 = vsub.f32 %v4541, %v4822
  %v4824 = vand.u32 %v4823, 4294901760
  %4825 = vmatpush.msra.mxu0 %v4824
  %v4826 = vand.u32 %v4540, 4294901760
  %v4827 = vsub.f32 %v4540, %v4826
  %v4828 = vand.u32 %v4827, 4294901760
  %4829 = vmatpush.msra.mxu0 %v4828
  %v4830 = vand.u32 %v4539, 4294901760
  %v4831 = vsub.f32 %v4539, %v4830
  %v4832 = vand.u32 %v4831, 4294901760
  %4833 = vmatpush.msra.mxu0 %v4832
  %v4834 = vand.u32 %v4538, 4294901760
  %v4835 = vsub.f32 %v4538, %v4834
  %v4836 = vand.u32 %v4835, 4294901760
  %4837 = vmatpush.msra.mxu0 %v4836
  %v4838 = vand.u32 %v4537, 4294901760
  %v4839 = vsub.f32 %v4537, %v4838
  %v4840 = vand.u32 %v4839, 4294901760
  %4841 = vmatpush.msra.mxu0 %v4840
  %v4842 = vand.u32 %v4536, 4294901760
  %v4843 = vsub.f32 %v4536, %v4842
  %v4844 = vand.u32 %v4843, 4294901760
  %4845 = vmatpush.msra.mxu0 %v4844
  %v4846 = vand.u32 %v4535, 4294901760
  %v4847 = vsub.f32 %v4535, %v4846
  %v4848 = vand.u32 %v4847, 4294901760
  %4849 = vmatpush.msra.mxu0 %v4848
  %v4850 = vand.u32 %v4534, 4294901760
  %4851 = vmatmul.f32.gmra.mxu0 %v4850
  %v4852 = vpop.f32.mrf.mxu0
  %v4853 = vadd.f32 %v4784, %v4852
  %4854 = vdwg.mxu0
  %v4855 = vand.u32 %v4550, 4294901760
  %4856 = vmatpush.msra.mxu0 %v4855
  %v4857 = vand.u32 %v4549, 4294901760
  %4858 = vmatpush.msra.mxu0 %v4857
  %v4859 = vand.u32 %v4548, 4294901760
  %4860 = vmatpush.msra.mxu0 %v4859
  %v4861 = vand.u32 %v4547, 4294901760
  %4862 = vmatpush.msra.mxu0 %v4861
  %v4863 = vand.u32 %v4546, 4294901760
  %4864 = vmatpush.msra.mxu0 %v4863
  %v4865 = vand.u32 %v4545, 4294901760
  %4866 = vmatpush.msra.mxu0 %v4865
  %v4867 = vand.u32 %v4544, 4294901760
  %4868 = vmatpush.msra.mxu0 %v4867
  %v4869 = vand.u32 %v4543, 4294901760
  %4870 = vmatpush.msra.mxu0 %v4869
  %v4871 = vand.u32 %v4542, 4294901760
  %4872 = vmatpush.msra.mxu0 %v4871
  %v4873 = vand.u32 %v4541, 4294901760
  %4874 = vmatpush.msra.mxu0 %v4873
  %v4875 = vand.u32 %v4540, 4294901760
  %4876 = vmatpush.msra.mxu0 %v4875
  %v4877 = vand.u32 %v4539, 4294901760
  %4878 = vmatpush.msra.mxu0 %v4877
  %v4879 = vand.u32 %v4538, 4294901760
  %4880 = vmatpush.msra.mxu0 %v4879
  %v4881 = vand.u32 %v4537, 4294901760
  %4882 = vmatpush.msra.mxu0 %v4881
  %v4883 = vand.u32 %v4536, 4294901760
  %4884 = vmatpush.msra.mxu0 %v4883
  %v4885 = vand.u32 %v4535, 4294901760
  %4886 = vmatpush.msra.mxu0 %v4885
  %v4887 = vand.u32 %v4534, 4294901760
  %4888 = vmatmul.f32.gmra.mxu0 %v4887
  %v4889 = vpop.f32.mrf.mxu0
  %v4890 = vadd.f32 %v4853, %v4889
  %4891 = vdwg.mxu0
  %v4892 = vld [vmem:[%s4] sm:$0xff]
  %v4893 = vld [vmem:[%s4 + $0x8] sm:$0xff]
  %v4894 = vld [vmem:[%s4 + $0x10] sm:$0xff]
  %v4895 = vld [vmem:[%s4 + $0x18] sm:$0xff]
  %4896 = vmatpush.msra.mxu0 0.0
  %4897 = vmatpush.msra.mxu0 0.0
  %4898 = vmatpush.msra.mxu0 0.0
  %4899 = vmatpush.msra.mxu0 0.0
  %4900 = vmatpush.msra.mxu0 0.0
  %4901 = vmatpush.msra.mxu0 0.0
  %4902 = vmatpush.msra.mxu0 0.0
  %4903 = vmatpush.msra.mxu0 0.0
  %4904 = vmatpush.msra.mxu0 0.0
  %4905 = vmatpush.msra.mxu0 0.0
  %4906 = vmatpush.msra.mxu0 0.0
  %4907 = vmatpush.msra.mxu0 0.0
  %v4908 = vand.u32 %v4895, 4294901760
  %4909 = vmatpush.msra.mxu0 %v4908
  %v4910 = vand.u32 %v4894, 4294901760
  %4911 = vmatpush.msra.mxu0 %v4910
  %v4912 = vand.u32 %v4893, 4294901760
  %4913 = vmatpush.msra.mxu0 %v4912
  %v4914 = vand.u32 %v4892, 4294901760
  %4915 = vmatpush.msra.mxu0 %v4914
  %v4916 = vand.u32 %v4310, 4294901760
  %v4917 = vsub.f32 %v4310, %v4916
  %v4918 = vand.u32 %v4917, 4294901760
  %v4919 = vsub.f32 %v4917, %v4918
  %v4920 = vand.u32 %v4919, 4294901760
  %4921 = vmatmul.f32.gmra.mxu0 %v4920
  %v4922 = vpop.f32.mrf.mxu0
  %v4923 = vadd.f32 0.0, %v4922
  %4924 = vdwg.mxu0
  %4925 = vmatpush.msra.mxu0 0.0
  %4926 = vmatpush.msra.mxu0 0.0
  %4927 = vmatpush.msra.mxu0 0.0
  %4928 = vmatpush.msra.mxu0 0.0
  %4929 = vmatpush.msra.mxu0 0.0
  %4930 = vmatpush.msra.mxu0 0.0
  %4931 = vmatpush.msra.mxu0 0.0
  %4932 = vmatpush.msra.mxu0 0.0
  %4933 = vmatpush.msra.mxu0 0.0
  %4934 = vmatpush.msra.mxu0 0.0
  %4935 = vmatpush.msra.mxu0 0.0
  %4936 = vmatpush.msra.mxu0 0.0
  %v4937 = vand.u32 %v4895, 4294901760
  %v4938 = vsub.f32 %v4895, %v4937
  %v4939 = vand.u32 %v4938, 4294901760
  %v4940 = vsub.f32 %v4938, %v4939
  %v4941 = vand.u32 %v4940, 4294901760
  %4942 = vmatpush.msra.mxu0 %v4941
  %v4943 = vand.u32 %v4894, 4294901760
  %v4944 = vsub.f32 %v4894, %v4943
  %v4945 = vand.u32 %v4944, 4294901760
  %v4946 = vsub.f32 %v4944, %v4945
  %v4947 = vand.u32 %v4946, 4294901760
  %4948 = vmatpush.msra.mxu0 %v4947
  %v4949 = vand.u32 %v4893, 4294901760
  %v4950 = vsub.f32 %v4893, %v4949
  %v4951 = vand.u32 %v4950, 4294901760
  %v4952 = vsub.f32 %v4950, %v4951
  %v4953 = vand.u32 %v4952, 4294901760
  %4954 = vmatpush.msra.mxu0 %v4953
  %v4955 = vand.u32 %v4892, 4294901760
  %v4956 = vsub.f32 %v4892, %v4955
  %v4957 = vand.u32 %v4956, 4294901760
  %v4958 = vsub.f32 %v4956, %v4957
  %v4959 = vand.u32 %v4958, 4294901760
  %4960 = vmatpush.msra.mxu0 %v4959
  %v4961 = vand.u32 %v4310, 4294901760
  %4962 = vmatmul.f32.gmra.mxu0 %v4961
  %v4963 = vpop.f32.mrf.mxu0
  %v4964 = vadd.f32 %v4923, %v4963
  %4965 = vdwg.mxu0
  %4966 = vmatpush.msra.mxu0 0.0
  %4967 = vmatpush.msra.mxu0 0.0
  %4968 = vmatpush.msra.mxu0 0.0
  %4969 = vmatpush.msra.mxu0 0.0
  %4970 = vmatpush.msra.mxu0 0.0
  %4971 = vmatpush.msra.mxu0 0.0
  %4972 = vmatpush.msra.mxu0 0.0
  %4973 = vmatpush.msra.mxu0 0.0
  %4974 = vmatpush.msra.mxu0 0.0
  %4975 = vmatpush.msra.mxu0 0.0
  %4976 = vmatpush.msra.mxu0 0.0
  %4977 = vmatpush.msra.mxu0 0.0
  %v4978 = vand.u32 %v4895, 4294901760
  %v4979 = vsub.f32 %v4895, %v4978
  %4980 = vmatpush.msra.mxu0 %v4979
  %v4981 = vand.u32 %v4894, 4294901760
  %v4982 = vsub.f32 %v4894, %v4981
  %4983 = vmatpush.msra.mxu0 %v4982
  %v4984 = vand.u32 %v4893, 4294901760
  %v4985 = vsub.f32 %v4893, %v4984
  %4986 = vmatpush.msra.mxu0 %v4985
  %v4987 = vand.u32 %v4892, 4294901760
  %v4988 = vsub.f32 %v4892, %v4987
  %4989 = vmatpush.msra.mxu0 %v4988
  %v4990 = vand.u32 %v4310, 4294901760
  %v4991 = vsub.f32 %v4310, %v4990
  %4992 = vmatmul.f32.gmra.mxu0 %v4991
  %v4993 = vpop.f32.mrf.mxu0
  %v4994 = vadd.f32 %v4964, %v4993
  %4995 = vdwg.mxu0
  %4996 = vmatpush.msra.mxu0 0.0
  %4997 = vmatpush.msra.mxu0 0.0
  %4998 = vmatpush.msra.mxu0 0.0
  %4999 = vmatpush.msra.mxu0 0.0
  %5000 = vmatpush.msra.mxu0 0.0
  %5001 = vmatpush.msra.mxu0 0.0
  %5002 = vmatpush.msra.mxu0 0.0
  %5003 = vmatpush.msra.mxu0 0.0
  %5004 = vmatpush.msra.mxu0 0.0
  %5005 = vmatpush.msra.mxu0 0.0
  %5006 = vmatpush.msra.mxu0 0.0
  %5007 = vmatpush.msra.mxu0 0.0
  %v5008 = vand.u32 %v4895, 4294901760
  %5009 = vmatpush.msra.mxu0 %v5008
  %v5010 = vand.u32 %v4894, 4294901760
  %5011 = vmatpush.msra.mxu0 %v5010
  %v5012 = vand.u32 %v4893, 4294901760
  %5013 = vmatpush.msra.mxu0 %v5012
  %v5014 = vand.u32 %v4892, 4294901760
  %5015 = vmatpush.msra.mxu0 %v5014
  %v5016 = vand.u32 %v4310, 4294901760
  %v5017 = vsub.f32 %v4310, %v5016
  %v5018 = vand.u32 %v5017, 4294901760
  %5019 = vmatmul.f32.gmra.mxu0 %v5018
  %v5020 = vpop.f32.mrf.mxu0
  %v5021 = vadd.f32 %v4994, %v5020
  %5022 = vdwg.mxu0
  %5023 = vmatpush.msra.mxu0 0.0
  %5024 = vmatpush.msra.mxu0 0.0
  %5025 = vmatpush.msra.mxu0 0.0
  %5026 = vmatpush.msra.mxu0 0.0
  %5027 = vmatpush.msra.mxu0 0.0
  %5028 = vmatpush.msra.mxu0 0.0
  %5029 = vmatpush.msra.mxu0 0.0
  %5030 = vmatpush.msra.mxu0 0.0
  %5031 = vmatpush.msra.mxu0 0.0
  %5032 = vmatpush.msra.mxu0 0.0
  %5033 = vmatpush.msra.mxu0 0.0
  %5034 = vmatpush.msra.mxu0 0.0
  %v5035 = vand.u32 %v4895, 4294901760
  %v5036 = vsub.f32 %v4895, %v5035
  %v5037 = vand.u32 %v5036, 4294901760
  %5038 = vmatpush.msra.mxu0 %v5037
  %v5039 = vand.u32 %v4894, 4294901760
  %v5040 = vsub.f32 %v4894, %v5039
  %v5041 = vand.u32 %v5040, 4294901760
  %5042 = vmatpush.msra.mxu0 %v5041
  %v5043 = vand.u32 %v4893, 4294901760
  %v5044 = vsub.f32 %v4893, %v5043
  %v5045 = vand.u32 %v5044, 4294901760
  %5046 = vmatpush.msra.mxu0 %v5045
  %v5047 = vand.u32 %v4892, 4294901760
  %v5048 = vsub.f32 %v4892, %v5047
  %v5049 = vand.u32 %v5048, 4294901760
  %5050 = vmatpush.msra.mxu0 %v5049
  %v5051 = vand.u32 %v4310, 4294901760
  %5052 = vmatmul.f32.gmra.mxu0 %v5051
  %v5053 = vpop.f32.mrf.mxu0
  %v5054 = vadd.f32 %v5021, %v5053
  %5055 = vdwg.mxu0
  %5056 = vmatpush.msra.mxu0 0.0
  %5057 = vmatpush.msra.mxu0 0.0
  %5058 = vmatpush.msra.mxu0 0.0
  %5059 = vmatpush.msra.mxu0 0.0
  %5060 = vmatpush.msra.mxu0 0.0
  %5061 = vmatpush.msra.mxu0 0.0
  %5062 = vmatpush.msra.mxu0 0.0
  %5063 = vmatpush.msra.mxu0 0.0
  %5064 = vmatpush.msra.mxu0 0.0
  %5065 = vmatpush.msra.mxu0 0.0
  %5066 = vmatpush.msra.mxu0 0.0
  %5067 = vmatpush.msra.mxu0 0.0
  %v5068 = vand.u32 %v4895, 4294901760
  %5069 = vmatpush.msra.mxu0 %v5068
  %v5070 = vand.u32 %v4894, 4294901760
  %5071 = vmatpush.msra.mxu0 %v5070
  %v5072 = vand.u32 %v4893, 4294901760
  %5073 = vmatpush.msra.mxu0 %v5072
  %v5074 = vand.u32 %v4892, 4294901760
  %5075 = vmatpush.msra.mxu0 %v5074
  %v5076 = vand.u32 %v4310, 4294901760
  %5077 = vmatmul.f32.gmra.mxu0 %v5076
  %v5078 = vpop.f32.mrf.mxu0
  %v5079 = vadd.f32 %v5054, %v5078
  %5080 = vdwg.mxu0
  %v5081 = vld [vmem:[%s0] sm:$0xff]
  %v5082 = vld [vmem:[%s0 + $0x8] sm:$0xff]
  %v5084 = vrot.slane %v5079, 1
  %v5085 = vperm.slane %v5079, 0
  %v5086 = vperm.slane %v5084, 0
  %v5089 = vadd.f32 %v5081, %v5085
  %v5090 = vadd.f32 %v5082, %v5086
  %v5091 = vtanh.pop %v5089
  %v5092 = vtanh.pop %v5090
  %v5093 = vld [vmem:[%s5] sm:$0x1]
  %v5095 = vperm.slane %v5093, 0
  %v5097 = vmul.f32 %v5091, %v5095
  %v5098 = vmul.f32 %v5092, %v5095
  %v5099 = vsel %vm431, %v5097, 0.0
  %5100 = vadd.xlane.f32.xlu0 %v5099
  %v5101 = vpop.xlane.xlu0 %5100
  %v5102 = vsel %vm431, %v5098, 0.0
  %5103 = vadd.xlane.f32.xlu0 %v5102
  %v5104 = vpop.xlane.xlu0 %5103
  %v5107 = vperm.slane %v5101, %v45
  %v5108 = vperm.slane %v5104, %v45
  %v5109 = vsel %vm648, %v5108, %v5107
  %v5111 = vsel %vm651, %v5109, -inf
  %5112 = vmax.xlane.f32.xlu0 %v5111
  %v5113 = vpop.xlane.xlu0 %5112
  %v5115 = vperm.slane %v5113, 0
  %v5116 = vperm.slane %v5113, 1
  %v5119 = vsub.f32 %v5101, %v5115
  %v5120 = vsub.f32 %v5104, %v5116
  %v5121 = vmul.f32 %v5119, 1.442695
  %v5122 = vpow.pop %v5121
  %v5123 = vmul.f32 %v5120, 1.442695
  %v5124 = vpow.pop %v5123
  %5127 = vset.pattern.permute.xlu0 0
  %5128 = vperm.xlu0 %5127, %v5122
  %v5129 = vpop.permute.xlu0 %5128
  %5130 = vset.pattern.permute.xlu0 0
  %5131 = vperm.xlu0 %5130, %v5124
  %v5132 = vpop.permute.xlu0 %5131
  %v5133 = vperm.slane %v5129, %v45
  %v5134 = vperm.slane %v5132, %v45
  %v5135 = vsel %vm648, %v5134, %v5133
  %v5137 = vsel %vm651, %v5135, 0.0
  %5138 = vadd.xlane.f32.xlu0 %v5137
  %v5139 = vpop.xlane.xlu0 %5138
  %v5140 = vrcp.pop %v5139
  %v5141 = vmul.f32 %v5139, %v5140
  %v5142 = vsub.f32 1.0, %v5141
  %v5143 = vmul.f32 %v5140, %v5142
  %v5144 = vadd.f32 %v5140, %v5143
  %vm5145 = vweird.f32 %v5139
  %vm5146 = vweird.f32 %v5140
  %vm5147 = vmor %vm5145, %vm5146
  %v5148 = vsel %vm5147, %v5140, %v5144
  %v5149 = vand.u32 2147483647, %v5139
  %vm5150 = vcmp.eq.f32.partialorder %v5149, 8.507059e+37
  %v5151 = vand.u32 %v5139, 2147483648
  %v5152 = vor.u32 1.1754944e-38, %v5151
  %v5153 = vsel %vm5150, %v5152, %v5148
  %v5155 = vperm.slane %v5153, 0
  %v5156 = vperm.slane %v5153, 1
  %v5159 = vmul.f32 %v5122, %v5155
  %v5160 = vmul.f32 %v5124, %v5156
  %v5161 = vld [vmem:[%s1] sm:$0xff]
  %v5162 = vld [vmem:[%s1 + $0x8] sm:$0xff]
  %5164 = vset.pattern.permute.xlu0 0
  %5165 = vperm.xlu0 %5164, %v5159
  %v5166 = vpop.permute.xlu0 %5165
  %5169 = vset.pattern.permute.xlu0 0
  %5170 = vperm.xlu0 %5169, %v5160
  %v5171 = vpop.permute.xlu0 %5170
  %v5173 = vmul.f32 %v5166, %v5161
  %v5174 = vmul.f32 %v5171, %v5162
  %v5175 = vsel %vm431, %v5173, 0.0
  %v5176 = vrot.slane %v5175, 4
  %v5177 = vadd.f32 %v5175, %v5176
  %v5178 = vrot.slane %v5177, 2
  %v5179 = vadd.f32 %v5177, %v5178
  %v5180 = vrot.slane %v5179, 1
  %v5181 = vadd.f32 %v5179, %v5180
  %v5182 = vsel %vm431, %v5174, 0.0
  %v5183 = vrot.slane %v5182, 4
  %v5184 = vadd.f32 %v5182, %v5183
  %v5185 = vrot.slane %v5184, 2
  %v5186 = vadd.f32 %v5184, %v5185
  %v5187 = vrot.slane %v5186, 1
  %v5188 = vadd.f32 %v5186, %v5187
  %v5189 = vld [vmem:[%s6] sm:$0xff]
  %v5190 = vld [vmem:[%s6 + $0x8] sm:$0xff]
  %v5191 = vld [vmem:[%s7] sm:$0xff]
  %v5192 = vld [vmem:[%s7 + $0x8] sm:$0xff]
  %v5193 = vld [vmem:[%s7 + $0x10] sm:$0xff]
  %v5194 = vld [vmem:[%s7 + $0x18] sm:$0xff]
  %v5197 = vsel %vm648, %v5188, %v5181
  %v5198 = vsel %vm431, %v5197, 0
  %5200 = vmatpush.msra.mxu0 0.0
  %5201 = vmatpush.msra.mxu0 0.0
  %5202 = vmatpush.msra.mxu0 0.0
  %5203 = vmatpush.msra.mxu0 0.0
  %5204 = vmatpush.msra.mxu0 0.0
  %5205 = vmatpush.msra.mxu0 0.0
  %5206 = vmatpush.msra.mxu0 0.0
  %5207 = vmatpush.msra.mxu0 0.0
  %5208 = vmatpush.msra.mxu0 0.0
  %5209 = vmatpush.msra.mxu0 0.0
  %5210 = vmatpush.msra.mxu0 0.0
  %5211 = vmatpush.msra.mxu0 0.0
  %v5212 = vand.u32 %v5194, 4294901760
  %5213 = vmatpush.msra.mxu0 %v5212
  %v5214 = vand.u32 %v5193, 4294901760
  %5215 = vmatpush.msra.mxu0 %v5214
  %v5216 = vand.u32 %v5192, 4294901760
  %5217 = vmatpush.msra.mxu0 %v5216
  %v5218 = vand.u32 %v5191, 4294901760
  %5219 = vmatpush.msra.mxu0 %v5218
  %v5220 = vand.u32 %v5198, 4294901760
  %v5221 = vsub.f32 %v5198, %v5220
  %v5222 = vand.u32 %v5221, 4294901760
  %v5223 = vsub.f32 %v5221, %v5222
  %v5224 = vand.u32 %v5223, 4294901760
  %5225 = vmatmul.f32.gmra.mxu0 %v5224
  %v5226 = vpop.f32.mrf.mxu0
  %v5227 = vadd.f32 0.0, %v5226
  %5228 = vdwg.mxu0
  %5229 = vmatpush.msra.mxu0 0.0
  %5230 = vmatpush.msra.mxu0 0.0
  %5231 = vmatpush.msra.mxu0 0.0
  %5232 = vmatpush.msra.mxu0 0.0
  %5233 = vmatpush.msra.mxu0 0.0
  %5234 = vmatpush.msra.mxu0 0.0
  %5235 = vmatpush.msra.mxu0 0.0
  %5236 = vmatpush.msra.mxu0 0.0
  %5237 = vmatpush.msra.mxu0 0.0
  %5238 = vmatpush.msra.mxu0 0.0
  %5239 = vmatpush.msra.mxu0 0.0
  %5240 = vmatpush.msra.mxu0 0.0
  %v5241 = vand.u32 %v5194, 4294901760
  %v5242 = vsub.f32 %v5194, %v5241
  %v5243 = vand.u32 %v5242, 4294901760
  %v5244 = vsub.f32 %v5242, %v5243
  %v5245 = vand.u32 %v5244, 4294901760
  %5246 = vmatpush.msra.mxu0 %v5245
  %v5247 = vand.u32 %v5193, 4294901760
  %v5248 = vsub.f32 %v5193, %v5247
  %v5249 = vand.u32 %v5248, 4294901760
  %v5250 = vsub.f32 %v5248, %v5249
  %v5251 = vand.u32 %v5250, 4294901760
  %5252 = vmatpush.msra.mxu0 %v5251
  %v5253 = vand.u32 %v5192, 4294901760
  %v5254 = vsub.f32 %v5192, %v5253
  %v5255 = vand.u32 %v5254, 4294901760
  %v5256 = vsub.f32 %v5254, %v5255
  %v5257 = vand.u32 %v5256, 4294901760
  %5258 = vmatpush.msra.mxu0 %v5257
  %v5259 = vand.u32 %v5191, 4294901760
  %v5260 = vsub.f32 %v5191, %v5259
  %v5261 = vand.u32 %v5260, 4294901760
  %v5262 = vsub.f32 %v5260, %v5261
  %v5263 = vand.u32 %v5262, 4294901760
  %5264 = vmatpush.msra.mxu0 %v5263
  %v5265 = vand.u32 %v5198, 4294901760
  %5266 = vmatmul.f32.gmra.mxu0 %v5265
  %v5267 = vpop.f32.mrf.mxu0
  %v5268 = vadd.f32 %v5227, %v5267
  %5269 = vdwg.mxu0
  %5270 = vmatpush.msra.mxu0 0.0
  %5271 = vmatpush.msra.mxu0 0.0
  %5272 = vmatpush.msra.mxu0 0.0
  %5273 = vmatpush.msra.mxu0 0.0
  %5274 = vmatpush.msra.mxu0 0.0
  %5275 = vmatpush.msra.mxu0 0.0
  %5276 = vmatpush.msra.mxu0 0.0
  %5277 = vmatpush.msra.mxu0 0.0
  %5278 = vmatpush.msra.mxu0 0.0
  %5279 = vmatpush.msra.mxu0 0.0
  %5280 = vmatpush.msra.mxu0 0.0
  %5281 = vmatpush.msra.mxu0 0.0
  %v5282 = vand.u32 %v5194, 4294901760
  %v5283 = vsub.f32 %v5194, %v5282
  %5284 = vmatpush.msra.mxu0 %v5283
  %v5285 = vand.u32 %v5193, 4294901760
  %v5286 = vsub.f32 %v5193, %v5285
  %5287 = vmatpush.msra.mxu0 %v5286
  %v5288 = vand.u32 %v5192, 4294901760
  %v5289 = vsub.f32 %v5192, %v5288
  %5290 = vmatpush.msra.mxu0 %v5289
  %v5291 = vand.u32 %v5191, 4294901760
  %v5292 = vsub.f32 %v5191, %v5291
  %5293 = vmatpush.msra.mxu0 %v5292
  %v5294 = vand.u32 %v5198, 4294901760
  %v5295 = vsub.f32 %v5198, %v5294
  %5296 = vmatmul.f32.gmra.mxu0 %v5295
  %v5297 = vpop.f32.mrf.mxu0
  %v5298 = vadd.f32 %v5268, %v5297
  %5299 = vdwg.mxu0
  %5300 = vmatpush.msra.mxu0 0.0
  %5301 = vmatpush.msra.mxu0 0.0
  %5302 = vmatpush.msra.mxu0 0.0
  %5303 = vmatpush.msra.mxu0 0.0
  %5304 = vmatpush.msra.mxu0 0.0
  %5305 = vmatpush.msra.mxu0 0.0
  %5306 = vmatpush.msra.mxu0 0.0
  %5307 = vmatpush.msra.mxu0 0.0
  %5308 = vmatpush.msra.mxu0 0.0
  %5309 = vmatpush.msra.mxu0 0.0
  %5310 = vmatpush.msra.mxu0 0.0
  %5311 = vmatpush.msra.mxu0 0.0
  %v5312 = vand.u32 %v5194, 4294901760
  %5313 = vmatpush.msra.mxu0 %v5312
  %v5314 = vand.u32 %v5193, 4294901760
  %5315 = vmatpush.msra.mxu0 %v5314
  %v5316 = vand.u32 %v5192, 4294901760
  %5317 = vmatpush.msra.mxu0 %v5316
  %v5318 = vand.u32 %v5191, 4294901760
  %5319 = vmatpush.msra.mxu0 %v5318
  %v5320 = vand.u32 %v5198, 4294901760
  %v5321 = vsub.f32 %v5198, %v5320
  %v5322 = vand.u32 %v5321, 4294901760
  %5323 = vmatmul.f32.gmra.mxu0 %v5322
  %v5324 = vpop.f32.mrf.mxu0
  %v5325 = vadd.f32 %v5298, %v5324
  %5326 = vdwg.mxu0
  %5327 = vmatpush.msra.mxu0 0.0
  %5328 = vmatpush.msra.mxu0 0.0
  %5329 = vmatpush.msra.mxu0 0.0
  %5330 = vmatpush.msra.mxu0 0.0
  %5331 = vmatpush.msra.mxu0 0.0
  %5332 = vmatpush.msra.mxu0 0.0
  %5333 = vmatpush.msra.mxu0 0.0
  %5334 = vmatpush.msra.mxu0 0.0
  %5335 = vmatpush.msra.mxu0 0.0
  %5336 = vmatpush.msra.mxu0 0.0
  %5337 = vmatpush.msra.mxu0 0.0
  %5338 = vmatpush.msra.mxu0 0.0
  %v5339 = vand.u32 %v5194, 4294901760
  %v5340 = vsub.f32 %v5194, %v5339
  %v5341 = vand.u32 %v5340, 4294901760
  %5342 = vmatpush.msra.mxu0 %v5341
  %v5343 = vand.u32 %v5193, 4294901760
  %v5344 = vsub.f32 %v5193, %v5343
  %v5345 = vand.u32 %v5344, 4294901760
  %5346 = vmatpush.msra.mxu0 %v5345
  %v5347 = vand.u32 %v5192, 4294901760
  %v5348 = vsub.f32 %v5192, %v5347
  %v5349 = vand.u32 %v5348, 4294901760
  %5350 = vmatpush.msra.mxu0 %v5349
  %v5351 = vand.u32 %v5191, 4294901760
  %v5352 = vsub.f32 %v5191, %v5351
  %v5353 = vand.u32 %v5352, 4294901760
  %5354 = vmatpush.msra.mxu0 %v5353
  %v5355 = vand.u32 %v5198, 4294901760
  %5356 = vmatmul.f32.gmra.mxu0 %v5355
  %v5357 = vpop.f32.mrf.mxu0
  %v5358 = vadd.f32 %v5325, %v5357
  %5359 = vdwg.mxu0
  %5360 = vmatpush.msra.mxu0 0.0
  %5361 = vmatpush.msra.mxu0 0.0
  %5362 = vmatpush.msra.mxu0 0.0
  %5363 = vmatpush.msra.mxu0 0.0
  %5364 = vmatpush.msra.mxu0 0.0
  %5365 = vmatpush.msra.mxu0 0.0
  %5366 = vmatpush.msra.mxu0 0.0
  %5367 = vmatpush.msra.mxu0 0.0
  %5368 = vmatpush.msra.mxu0 0.0
  %5369 = vmatpush.msra.mxu0 0.0
  %5370 = vmatpush.msra.mxu0 0.0
  %5371 = vmatpush.msra.mxu0 0.0
  %v5372 = vand.u32 %v5194, 4294901760
  %5373 = vmatpush.msra.mxu0 %v5372
  %v5374 = vand.u32 %v5193, 4294901760
  %5375 = vmatpush.msra.mxu0 %v5374
  %v5376 = vand.u32 %v5192, 4294901760
  %5377 = vmatpush.msra.mxu0 %v5376
  %v5378 = vand.u32 %v5191, 4294901760
  %5379 = vmatpush.msra.mxu0 %v5378
  %v5380 = vand.u32 %v5198, 4294901760
  %5381 = vmatmul.f32.gmra.mxu0 %v5380
  %v5382 = vpop.f32.mrf.mxu0
  %v5383 = vadd.f32 %v5358, %v5382
  %5384 = vdwg.mxu0
  %v5386 = vsel %vm926, %v4890, 0
  %5388 = vmatpush.msra.mxu0 0.0
  %5389 = vmatpush.msra.mxu0 0.0
  %5390 = vmatpush.msra.mxu0 0.0
  %5391 = vmatpush.msra.mxu0 0.0
  %5392 = vmatpush.msra.mxu0 0.0
  %5393 = vmatpush.msra.mxu0 0.0
  %5394 = vmatpush.msra.mxu0 0.0
  %5395 = vmatpush.msra.mxu0 0.0
  %5396 = vmatpush.msra.mxu0 0.0
  %5397 = vmatpush.msra.mxu0 0.0
  %5398 = vmatpush.msra.mxu0 0.0
  %5399 = vmatpush.msra.mxu0 0.0
  %5400 = vmatpush.msra.mxu0 0.0
  %5401 = vmatpush.msra.mxu0 0.0
  %v5402 = vand.u32 %v5190, 4294901760
  %5403 = vmatpush.msra.mxu0 %v5402
  %v5404 = vand.u32 %v5189, 4294901760
  %5405 = vmatpush.msra.mxu0 %v5404
  %v5406 = vand.u32 %v5386, 4294901760
  %v5407 = vsub.f32 %v5386, %v5406
  %v5408 = vand.u32 %v5407, 4294901760
  %v5409 = vsub.f32 %v5407, %v5408
  %v5410 = vand.u32 %v5409, 4294901760
  %5411 = vmatmul.f32.gmra.mxu0 %v5410
  %v5412 = vpop.f32.mrf.mxu0
  %v5413 = vadd.f32 %v5383, %v5412
  %5414 = vdwg.mxu0
  %5415 = vmatpush.msra.mxu0 0.0
  %5416 = vmatpush.msra.mxu0 0.0
  %5417 = vmatpush.msra.mxu0 0.0
  %5418 = vmatpush.msra.mxu0 0.0
  %5419 = vmatpush.msra.mxu0 0.0
  %5420 = vmatpush.msra.mxu0 0.0
  %5421 = vmatpush.msra.mxu0 0.0
  %5422 = vmatpush.msra.mxu0 0.0
  %5423 = vmatpush.msra.mxu0 0.0
  %5424 = vmatpush.msra.mxu0 0.0
  %5425 = vmatpush.msra.mxu0 0.0
  %5426 = vmatpush.msra.mxu0 0.0
  %5427 = vmatpush.msra.mxu0 0.0
  %5428 = vmatpush.msra.mxu0 0.0
  %v5429 = vand.u32 %v5190, 4294901760
  %v5430 = vsub.f32 %v5190, %v5429
  %v5431 = vand.u32 %v5430, 4294901760
  %v5432 = vsub.f32 %v5430, %v5431
  %v5433 = vand.u32 %v5432, 4294901760
  %5434 = vmatpush.msra.mxu0 %v5433
  %v5435 = vand.u32 %v5189, 4294901760
  %v5436 = vsub.f32 %v5189, %v5435
  %v5437 = vand.u32 %v5436, 4294901760
  %v5438 = vsub.f32 %v5436, %v5437
  %v5439 = vand.u32 %v5438, 4294901760
  %5440 = vmatpush.msra.mxu0 %v5439
  %v5441 = vand.u32 %v5386, 4294901760
  %5442 = vmatmul.f32.gmra.mxu0 %v5441
  %v5443 = vpop.f32.mrf.mxu0
  %v5444 = vadd.f32 %v5413, %v5443
  %5445 = vdwg.mxu0
  %5446 = vmatpush.msra.mxu0 0.0
  %5447 = vmatpush.msra.mxu0 0.0
  %5448 = vmatpush.msra.mxu0 0.0
  %5449 = vmatpush.msra.mxu0 0.0
  %5450 = vmatpush.msra.mxu0 0.0
  %5451 = vmatpush.msra.mxu0 0.0
  %5452 = vmatpush.msra.mxu0 0.0
  %5453 = vmatpush.msra.mxu0 0.0
  %5454 = vmatpush.msra.mxu0 0.0
  %5455 = vmatpush.msra.mxu0 0.0
  %5456 = vmatpush.msra.mxu0 0.0
  %5457 = vmatpush.msra.mxu0 0.0
  %5458 = vmatpush.msra.mxu0 0.0
  %5459 = vmatpush.msra.mxu0 0.0
  %v5460 = vand.u32 %v5190, 4294901760
  %v5461 = vsub.f32 %v5190, %v5460
  %5462 = vmatpush.msra.mxu0 %v5461
  %v5463 = vand.u32 %v5189, 4294901760
  %v5464 = vsub.f32 %v5189, %v5463
  %5465 = vmatpush.msra.mxu0 %v5464
  %v5466 = vand.u32 %v5386, 4294901760
  %v5467 = vsub.f32 %v5386, %v5466
  %5468 = vmatmul.f32.gmra.mxu0 %v5467
  %v5469 = vpop.f32.mrf.mxu0
  %v5470 = vadd.f32 %v5444, %v5469
  %5471 = vdwg.mxu0
  %5472 = vmatpush.msra.mxu0 0.0
  %5473 = vmatpush.msra.mxu0 0.0
  %5474 = vmatpush.msra.mxu0 0.0
  %5475 = vmatpush.msra.mxu0 0.0
  %5476 = vmatpush.msra.mxu0 0.0
  %5477 = vmatpush.msra.mxu0 0.0
  %5478 = vmatpush.msra.mxu0 0.0
  %5479 = vmatpush.msra.mxu0 0.0
  %5480 = vmatpush.msra.mxu0 0.0
  %5481 = vmatpush.msra.mxu0 0.0
  %5482 = vmatpush.msra.mxu0 0.0
  %5483 = vmatpush.msra.mxu0 0.0
  %5484 = vmatpush.msra.mxu0 0.0
  %5485 = vmatpush.msra.mxu0 0.0
  %v5486 = vand.u32 %v5190, 4294901760
  %5487 = vmatpush.msra.mxu0 %v5486
  %v5488 = vand.u32 %v5189, 4294901760
  %5489 = vmatpush.msra.mxu0 %v5488
  %v5490 = vand.u32 %v5386, 4294901760
  %v5491 = vsub.f32 %v5386, %v5490
  %v5492 = vand.u32 %v5491, 4294901760
  %5493 = vmatmul.f32.gmra.mxu0 %v5492
  %v5494 = vpop.f32.mrf.mxu0
  %v5495 = vadd.f32 %v5470, %v5494
  %5496 = vdwg.mxu0
  %5497 = vmatpush.msra.mxu0 0.0
  %5498 = vmatpush.msra.mxu0 0.0
  %5499 = vmatpush.msra.mxu0 0.0
  %5500 = vmatpush.msra.mxu0 0.0
  %5501 = vmatpush.msra.mxu0 0.0
  %5502 = vmatpush.msra.mxu0 0.0
  %5503 = vmatpush.msra.mxu0 0.0
  %5504 = vmatpush.msra.mxu0 0.0
  %5505 = vmatpush.msra.mxu0 0.0
  %5506 = vmatpush.msra.mxu0 0.0
  %5507 = vmatpush.msra.mxu0 0.0
  %5508 = vmatpush.msra.mxu0 0.0
  %5509 = vmatpush.msra.mxu0 0.0
  %5510 = vmatpush.msra.mxu0 0.0
  %v5511 = vand.u32 %v5190, 4294901760
  %v5512 = vsub.f32 %v5190, %v5511
  %v5513 = vand.u32 %v5512, 4294901760
  %5514 = vmatpush.msra.mxu0 %v5513
  %v5515 = vand.u32 %v5189, 4294901760
  %v5516 = vsub.f32 %v5189, %v5515
  %v5517 = vand.u32 %v5516, 4294901760
  %5518 = vmatpush.msra.mxu0 %v5517
  %v5519 = vand.u32 %v5386, 4294901760
  %5520 = vmatmul.f32.gmra.mxu0 %v5519
  %v5521 = vpop.f32.mrf.mxu0
  %v5522 = vadd.f32 %v5495, %v5521
  %5523 = vdwg.mxu0
  %5524 = vmatpush.msra.mxu0 0.0
  %5525 = vmatpush.msra.mxu0 0.0
  %5526 = vmatpush.msra.mxu0 0.0
  %5527 = vmatpush.msra.mxu0 0.0
  %5528 = vmatpush.msra.mxu0 0.0
  %5529 = vmatpush.msra.mxu0 0.0
  %5530 = vmatpush.msra.mxu0 0.0
  %5531 = vmatpush.msra.mxu0 0.0
  %5532 = vmatpush.msra.mxu0 0.0
  %5533 = vmatpush.msra.mxu0 0.0
  %5534 = vmatpush.msra.mxu0 0.0
  %5535 = vmatpush.msra.mxu0 0.0
  %5536 = vmatpush.msra.mxu0 0.0
  %5537 = vmatpush.msra.mxu0 0.0
  %v5538 = vand.u32 %v5190, 4294901760
  %5539 = vmatpush.msra.mxu0 %v5538
  %v5540 = vand.u32 %v5189, 4294901760
  %5541 = vmatpush.msra.mxu0 %v5540
  %v5542 = vand.u32 %v5386, 4294901760
  %5543 = vmatmul.f32.gmra.mxu0 %v5542
  %v5544 = vpop.f32.mrf.mxu0
  %v5545 = vadd.f32 %v5522, %v5544
  %5546 = vdwg.mxu0
  %v5547 = vld [vmem:[%s9] sm:$0x1]
  %v5549 = vperm.slane %v5547, 0
  %v5551 = vadd.f32 %v5545, %v5549
  %v5552 = vld [vmem:[%s8] sm:$0xff]
  %v5553 = vld [vmem:[%s8 + $0x8] sm:$0xff]
  %v5554 = vld [vmem:[%s8 + $0x10] sm:$0xff]
  %v5555 = vld [vmem:[%s8 + $0x18] sm:$0xff]
  %v5556 = vld [vmem:[%s10] sm:$0x1]
  %v5558 = vperm.slane %v5556, 0
  %5560 = vmatpush.msra.mxu0 0.0
  %5561 = vmatpush.msra.mxu0 0.0
  %5562 = vmatpush.msra.mxu0 0.0
  %5563 = vmatpush.msra.mxu0 0.0
  %5564 = vmatpush.msra.mxu0 0.0
  %5565 = vmatpush.msra.mxu0 0.0
  %5566 = vmatpush.msra.mxu0 0.0
  %5567 = vmatpush.msra.mxu0 0.0
  %5568 = vmatpush.msra.mxu0 0.0
  %5569 = vmatpush.msra.mxu0 0.0
  %5570 = vmatpush.msra.mxu0 0.0
  %5571 = vmatpush.msra.mxu0 0.0
  %v5572 = vand.u32 %v5555, 4294901760
  %5573 = vmatpush.msra.mxu0 %v5572
  %v5574 = vand.u32 %v5554, 4294901760
  %5575 = vmatpush.msra.mxu0 %v5574
  %v5576 = vand.u32 %v5553, 4294901760
  %5577 = vmatpush.msra.mxu0 %v5576
  %v5578 = vand.u32 %v5552, 4294901760
  %5579 = vmatpush.msra.mxu0 %v5578
  %v5580 = vand.u32 %v4310, 4294901760
  %v5581 = vsub.f32 %v4310, %v5580
  %v5582 = vand.u32 %v5581, 4294901760
  %v5583 = vsub.f32 %v5581, %v5582
  %v5584 = vand.u32 %v5583, 4294901760
  %5585 = vmatmul.f32.gmra.mxu0 %v5584
  %v5586 = vpop.f32.mrf.mxu0
  %v5587 = vadd.f32 %v5558, %v5586
  %5588 = vdwg.mxu0
  %5589 = vmatpush.msra.mxu0 0.0
  %5590 = vmatpush.msra.mxu0 0.0
  %5591 = vmatpush.msra.mxu0 0.0
  %5592 = vmatpush.msra.mxu0 0.0
  %5593 = vmatpush.msra.mxu0 0.0
  %5594 = vmatpush.msra.mxu0 0.0
  %5595 = vmatpush.msra.mxu0 0.0
  %5596 = vmatpush.msra.mxu0 0.0
  %5597 = vmatpush.msra.mxu0 0.0
  %5598 = vmatpush.msra.mxu0 0.0
  %5599 = vmatpush.msra.mxu0 0.0
  %5600 = vmatpush.msra.mxu0 0.0
  %v5601 = vand.u32 %v5555, 4294901760
  %v5602 = vsub.f32 %v5555, %v5601
  %v5603 = vand.u32 %v5602, 4294901760
  %v5604 = vsub.f32 %v5602, %v5603
  %v5605 = vand.u32 %v5604, 4294901760
  %5606 = vmatpush.msra.mxu0 %v5605
  %v5607 = vand.u32 %v5554, 4294901760
  %v5608 = vsub.f32 %v5554, %v5607
  %v5609 = vand.u32 %v5608, 4294901760
  %v5610 = vsub.f32 %v5608, %v5609
  %v5611 = vand.u32 %v5610, 4294901760
  %5612 = vmatpush.msra.mxu0 %v5611
  %v5613 = vand.u32 %v5553, 4294901760
  %v5614 = vsub.f32 %v5553, %v5613
  %v5615 = vand.u32 %v5614, 4294901760
  %v5616 = vsub.f32 %v5614, %v5615
  %v5617 = vand.u32 %v5616, 4294901760
  %5618 = vmatpush.msra.mxu0 %v5617
  %v5619 = vand.u32 %v5552, 4294901760
  %v5620 = vsub.f32 %v5552, %v5619
  %v5621 = vand.u32 %v5620, 4294901760
  %v5622 = vsub.f32 %v5620, %v5621
  %v5623 = vand.u32 %v5622, 4294901760
  %5624 = vmatpush.msra.mxu0 %v5623
  %v5625 = vand.u32 %v4310, 4294901760
  %5626 = vmatmul.f32.gmra.mxu0 %v5625
  %v5627 = vpop.f32.mrf.mxu0
  %v5628 = vadd.f32 %v5587, %v5627
  %5629 = vdwg.mxu0
  %5630 = vmatpush.msra.mxu0 0.0
  %5631 = vmatpush.msra.mxu0 0.0
  %5632 = vmatpush.msra.mxu0 0.0
  %5633 = vmatpush.msra.mxu0 0.0
  %5634 = vmatpush.msra.mxu0 0.0
  %5635 = vmatpush.msra.mxu0 0.0
  %5636 = vmatpush.msra.mxu0 0.0
  %5637 = vmatpush.msra.mxu0 0.0
  %5638 = vmatpush.msra.mxu0 0.0
  %5639 = vmatpush.msra.mxu0 0.0
  %5640 = vmatpush.msra.mxu0 0.0
  %5641 = vmatpush.msra.mxu0 0.0
  %v5642 = vand.u32 %v5555, 4294901760
  %v5643 = vsub.f32 %v5555, %v5642
  %5644 = vmatpush.msra.mxu0 %v5643
  %v5645 = vand.u32 %v5554, 4294901760
  %v5646 = vsub.f32 %v5554, %v5645
  %5647 = vmatpush.msra.mxu0 %v5646
  %v5648 = vand.u32 %v5553, 4294901760
  %v5649 = vsub.f32 %v5553, %v5648
  %5650 = vmatpush.msra.mxu0 %v5649
  %v5651 = vand.u32 %v5552, 4294901760
  %v5652 = vsub.f32 %v5552, %v5651
  %5653 = vmatpush.msra.mxu0 %v5652
  %v5654 = vand.u32 %v4310, 4294901760
  %v5655 = vsub.f32 %v4310, %v5654
  %5656 = vmatmul.f32.gmra.mxu0 %v5655
  %v5657 = vpop.f32.mrf.mxu0
  %v5658 = vadd.f32 %v5628, %v5657
  %5659 = vdwg.mxu0
  %5660 = vmatpush.msra.mxu0 0.0
  %5661 = vmatpush.msra.mxu0 0.0
  %5662 = vmatpush.msra.mxu0 0.0
  %5663 = vmatpush.msra.mxu0 0.0
  %5664 = vmatpush.msra.mxu0 0.0
  %5665 = vmatpush.msra.mxu0 0.0
  %5666 = vmatpush.msra.mxu0 0.0
  %5667 = vmatpush.msra.mxu0 0.0
  %5668 = vmatpush.msra.mxu0 0.0
  %5669 = vmatpush.msra.mxu0 0.0
  %5670 = vmatpush.msra.mxu0 0.0
  %5671 = vmatpush.msra.mxu0 0.0
  %v5672 = vand.u32 %v5555, 4294901760
  %5673 = vmatpush.msra.mxu0 %v5672
  %v5674 = vand.u32 %v5554, 4294901760
  %5675 = vmatpush.msra.mxu0 %v5674
  %v5676 = vand.u32 %v5553, 4294901760
  %5677 = vmatpush.msra.mxu0 %v5676
  %v5678 = vand.u32 %v5552, 4294901760
  %5679 = vmatpush.msra.mxu0 %v5678
  %v5680 = vand.u32 %v4310, 4294901760
  %v5681 = vsub.f32 %v4310, %v5680
  %v5682 = vand.u32 %v5681, 4294901760
  %5683 = vmatmul.f32.gmra.mxu0 %v5682
  %v5684 = vpop.f32.mrf.mxu0
  %v5685 = vadd.f32 %v5658, %v5684
  %5686 = vdwg.mxu0
  %5687 = vmatpush.msra.mxu0 0.0
  %5688 = vmatpush.msra.mxu0 0.0
  %5689 = vmatpush.msra.mxu0 0.0
  %5690 = vmatpush.msra.mxu0 0.0
  %5691 = vmatpush.msra.mxu0 0.0
  %5692 = vmatpush.msra.mxu0 0.0
  %5693 = vmatpush.msra.mxu0 0.0
  %5694 = vmatpush.msra.mxu0 0.0
  %5695 = vmatpush.msra.mxu0 0.0
  %5696 = vmatpush.msra.mxu0 0.0
  %5697 = vmatpush.msra.mxu0 0.0
  %5698 = vmatpush.msra.mxu0 0.0
  %v5699 = vand.u32 %v5555, 4294901760
  %v5700 = vsub.f32 %v5555, %v5699
  %v5701 = vand.u32 %v5700, 4294901760
  %5702 = vmatpush.msra.mxu0 %v5701
  %v5703 = vand.u32 %v5554, 4294901760
  %v5704 = vsub.f32 %v5554, %v5703
  %v5705 = vand.u32 %v5704, 4294901760
  %5706 = vmatpush.msra.mxu0 %v5705
  %v5707 = vand.u32 %v5553, 4294901760
  %v5708 = vsub.f32 %v5553, %v5707
  %v5709 = vand.u32 %v5708, 4294901760
  %5710 = vmatpush.msra.mxu0 %v5709
  %v5711 = vand.u32 %v5552, 4294901760
  %v5712 = vsub.f32 %v5552, %v5711
  %v5713 = vand.u32 %v5712, 4294901760
  %5714 = vmatpush.msra.mxu0 %v5713
  %v5715 = vand.u32 %v4310, 4294901760
  %5716 = vmatmul.f32.gmra.mxu0 %v5715
  %v5717 = vpop.f32.mrf.mxu0
  %v5718 = vadd.f32 %v5685, %v5717
  %5719 = vdwg.mxu0
  %5720 = vmatpush.msra.mxu0 0.0
  %5721 = vmatpush.msra.mxu0 0.0
  %5722 = vmatpush.msra.mxu0 0.0
  %5723 = vmatpush.msra.mxu0 0.0
  %5724 = vmatpush.msra.mxu0 0.0
  %5725 = vmatpush.msra.mxu0 0.0
  %5726 = vmatpush.msra.mxu0 0.0
  %5727 = vmatpush.msra.mxu0 0.0
  %5728 = vmatpush.msra.mxu0 0.0
  %5729 = vmatpush.msra.mxu0 0.0
  %5730 = vmatpush.msra.mxu0 0.0
  %5731 = vmatpush.msra.mxu0 0.0
  %v5732 = vand.u32 %v5555, 4294901760
  %5733 = vmatpush.msra.mxu0 %v5732
  %v5734 = vand.u32 %v5554, 4294901760
  %5735 = vmatpush.msra.mxu0 %v5734
  %v5736 = vand.u32 %v5553, 4294901760
  %5737 = vmatpush.msra.mxu0 %v5736
  %v5738 = vand.u32 %v5552, 4294901760
  %5739 = vmatpush.msra.mxu0 %v5738
  %v5740 = vand.u32 %v4310, 4294901760
  %5741 = vmatmul.f32.gmra.mxu0 %v5740
  %v5742 = vpop.f32.mrf.mxu0
  %v5743 = vadd.f32 %v5718, %v5742
  %5744 = vdwg.mxu0
  %v5745 = vadd.f32 %v5551, %v5743
  %v5746 = vxor.u32 %v5745, 2147483648
  %v5747 = vmul.f32 %v5746, 1.442695
  %v5748 = vpow.pop %v5747
  %v5749 = vadd.f32 %v5748, 1.0
  %v5750 = vrcp.pop %v5749
  %v5751 = vmul.f32 %v5749, %v5750
  %v5752 = vsub.f32 1.0, %v5751
  %v5753 = vmul.f32 %v5750, %v5752
  %v5754 = vadd.f32 %v5750, %v5753
  %vm5755 = vweird.f32 %v5749
  %vm5756 = vweird.f32 %v5750
  %vm5757 = vmor %vm5755, %vm5756
  %v5758 = vsel %vm5757, %v5750, %v5754
  %v5759 = vand.u32 2147483647, %v5749
  %vm5760 = vcmp.eq.f32.partialorder %v5759, 8.507059e+37
  %v5761 = vand.u32 %v5749, 2147483648
  %v5762 = vor.u32 1.1754944e-38, %v5761
  %v5763 = vsel %vm5760, %v5762, %v5758
  %v5764 = vmul.f32 1.0, %v5763
  %5766 = vrot.lane.b32.xlu0 %v5743, 64
  %v5767 = vpop.permute.xlu0 %5766
  %v5769 = vmul.f32 %v5764, %v5767
  %5771 = vrot.lane.b32.xlu0 %v5769, 64
  %v5772 = vpop.permute.xlu0 %5771
  %v5774 = vadd.f32 %v5551, %v5772
  %v5775 = vtanh.pop %v5774
  %v5776 = vsub.f32 1.0, %v5764
  %5778 = vrot.lane.b32.xlu0 %v5775, 96
  %v5779 = vpop.permute.xlu0 %5778
  %v5781 = vmul.f32 %v5776, %v5779
  %v5782 = vmul.f32 %v5764, %v4298
  %v5783 = vadd.f32 %v5781, %v5782
  %v5784 = vld [vmem:[%s11] sm:$0xff]
  %v5785 = vld [vmem:[%s11 + $0x8] sm:$0xff]
  %v5786 = vld [vmem:[%s11 + $0x10] sm:$0xff]
  %v5787 = vld [vmem:[%s11 + $0x18] sm:$0xff]
  %v5788 = vld [vmem:[%s12] sm:$0x1]
  %v5790 = vperm.slane %v5788, 0
  %5793 = vrot.lane.b32.xlu0 %v5783, 96
  %v5794 = vpop.permute.xlu0 %5793
  %v5795 = vsel %vm431, %v5794, 0
  %5797 = vmatpush.msra.mxu0 0.0
  %5798 = vmatpush.msra.mxu0 0.0
  %5799 = vmatpush.msra.mxu0 0.0
  %5800 = vmatpush.msra.mxu0 0.0
  %5801 = vmatpush.msra.mxu0 0.0
  %5802 = vmatpush.msra.mxu0 0.0
  %5803 = vmatpush.msra.mxu0 0.0
  %5804 = vmatpush.msra.mxu0 0.0
  %5805 = vmatpush.msra.mxu0 0.0
  %5806 = vmatpush.msra.mxu0 0.0
  %5807 = vmatpush.msra.mxu0 0.0
  %5808 = vmatpush.msra.mxu0 0.0
  %v5809 = vand.u32 %v5787, 4294901760
  %5810 = vmatpush.msra.mxu0 %v5809
  %v5811 = vand.u32 %v5786, 4294901760
  %5812 = vmatpush.msra.mxu0 %v5811
  %v5813 = vand.u32 %v5785, 4294901760
  %5814 = vmatpush.msra.mxu0 %v5813
  %v5815 = vand.u32 %v5784, 4294901760
  %5816 = vmatpush.msra.mxu0 %v5815
  %v5817 = vand.u32 %v5795, 4294901760
  %v5818 = vsub.f32 %v5795, %v5817
  %v5819 = vand.u32 %v5818, 4294901760
  %v5820 = vsub.f32 %v5818, %v5819
  %v5821 = vand.u32 %v5820, 4294901760
  %5822 = vmatmul.f32.gmra.mxu0 %v5821
  %v5823 = vpop.f32.mrf.mxu0
  %v5824 = vadd.f32 %v5790, %v5823
  %5825 = vdwg.mxu0
  %5826 = vmatpush.msra.mxu0 0.0
  %5827 = vmatpush.msra.mxu0 0.0
  %5828 = vmatpush.msra.mxu0 0.0
  %5829 = vmatpush.msra.mxu0 0.0
  %5830 = vmatpush.msra.mxu0 0.0
  %5831 = vmatpush.msra.mxu0 0.0
  %5832 = vmatpush.msra.mxu0 0.0
  %5833 = vmatpush.msra.mxu0 0.0
  %5834 = vmatpush.msra.mxu0 0.0
  %5835 = vmatpush.msra.mxu0 0.0
  %5836 = vmatpush.msra.mxu0 0.0
  %5837 = vmatpush.msra.mxu0 0.0
  %v5838 = vand.u32 %v5787, 4294901760
  %v5839 = vsub.f32 %v5787, %v5838
  %v5840 = vand.u32 %v5839, 4294901760
  %v5841 = vsub.f32 %v5839, %v5840
  %v5842 = vand.u32 %v5841, 4294901760
  %5843 = vmatpush.msra.mxu0 %v5842
  %v5844 = vand.u32 %v5786, 4294901760
  %v5845 = vsub.f32 %v5786, %v5844
  %v5846 = vand.u32 %v5845, 4294901760
  %v5847 = vsub.f32 %v5845, %v5846
  %v5848 = vand.u32 %v5847, 4294901760
  %5849 = vmatpush.msra.mxu0 %v5848
  %v5850 = vand.u32 %v5785, 4294901760
  %v5851 = vsub.f32 %v5785, %v5850
  %v5852 = vand.u32 %v5851, 4294901760
  %v5853 = vsub.f32 %v5851, %v5852
  %v5854 = vand.u32 %v5853, 4294901760
  %5855 = vmatpush.msra.mxu0 %v5854
  %v5856 = vand.u32 %v5784, 4294901760
  %v5857 = vsub.f32 %v5784, %v5856
  %v5858 = vand.u32 %v5857, 4294901760
  %v5859 = vsub.f32 %v5857, %v5858
  %v5860 = vand.u32 %v5859, 4294901760
  %5861 = vmatpush.msra.mxu0 %v5860
  %v5862 = vand.u32 %v5795, 4294901760
  %5863 = vmatmul.f32.gmra.mxu0 %v5862
  %v5864 = vpop.f32.mrf.mxu0
  %v5865 = vadd.f32 %v5824, %v5864
  %5866 = vdwg.mxu0
  %5867 = vmatpush.msra.mxu0 0.0
  %5868 = vmatpush.msra.mxu0 0.0
  %5869 = vmatpush.msra.mxu0 0.0
  %5870 = vmatpush.msra.mxu0 0.0
  %5871 = vmatpush.msra.mxu0 0.0
  %5872 = vmatpush.msra.mxu0 0.0
  %5873 = vmatpush.msra.mxu0 0.0
  %5874 = vmatpush.msra.mxu0 0.0
  %5875 = vmatpush.msra.mxu0 0.0
  %5876 = vmatpush.msra.mxu0 0.0
  %5877 = vmatpush.msra.mxu0 0.0
  %5878 = vmatpush.msra.mxu0 0.0
  %v5879 = vand.u32 %v5787, 4294901760
  %v5880 = vsub.f32 %v5787, %v5879
  %5881 = vmatpush.msra.mxu0 %v5880
  %v5882 = vand.u32 %v5786, 4294901760
  %v5883 = vsub.f32 %v5786, %v5882
  %5884 = vmatpush.msra.mxu0 %v5883
  %v5885 = vand.u32 %v5785, 4294901760
  %v5886 = vsub.f32 %v5785, %v5885
  %5887 = vmatpush.msra.mxu0 %v5886
  %v5888 = vand.u32 %v5784, 4294901760
  %v5889 = vsub.f32 %v5784, %v5888
  %5890 = vmatpush.msra.mxu0 %v5889
  %v5891 = vand.u32 %v5795, 4294901760
  %v5892 = vsub.f32 %v5795, %v5891
  %5893 = vmatmul.f32.gmra.mxu0 %v5892
  %v5894 = vpop.f32.mrf.mxu0
  %v5895 = vadd.f32 %v5865, %v5894
  %5896 = vdwg.mxu0
  %5897 = vmatpush.msra.mxu0 0.0
  %5898 = vmatpush.msra.mxu0 0.0
  %5899 = vmatpush.msra.mxu0 0.0
  %5900 = vmatpush.msra.mxu0 0.0
  %5901 = vmatpush.msra.mxu0 0.0
  %5902 = vmatpush.msra.mxu0 0.0
  %5903 = vmatpush.msra.mxu0 0.0
  %5904 = vmatpush.msra.mxu0 0.0
  %5905 = vmatpush.msra.mxu0 0.0
  %5906 = vmatpush.msra.mxu0 0.0
  %5907 = vmatpush.msra.mxu0 0.0
  %5908 = vmatpush.msra.mxu0 0.0
  %v5909 = vand.u32 %v5787, 4294901760
  %5910 = vmatpush.msra.mxu0 %v5909
  %v5911 = vand.u32 %v5786, 4294901760
  %5912 = vmatpush.msra.mxu0 %v5911
  %v5913 = vand.u32 %v5785, 4294901760
  %5914 = vmatpush.msra.mxu0 %v5913
  %v5915 = vand.u32 %v5784, 4294901760
  %5916 = vmatpush.msra.mxu0 %v5915
  %v5917 = vand.u32 %v5795, 4294901760
  %v5918 = vsub.f32 %v5795, %v5917
  %v5919 = vand.u32 %v5918, 4294901760
  %5920 = vmatmul.f32.gmra.mxu0 %v5919
  %v5921 = vpop.f32.mrf.mxu0
  %v5922 = vadd.f32 %v5895, %v5921
  %5923 = vdwg.mxu0
  %5924 = vmatpush.msra.mxu0 0.0
  %5925 = vmatpush.msra.mxu0 0.0
  %5926 = vmatpush.msra.mxu0 0.0
  %5927 = vmatpush.msra.mxu0 0.0
  %5928 = vmatpush.msra.mxu0 0.0
  %5929 = vmatpush.msra.mxu0 0.0
  %5930 = vmatpush.msra.mxu0 0.0
  %5931 = vmatpush.msra.mxu0 0.0
  %5932 = vmatpush.msra.mxu0 0.0
  %5933 = vmatpush.msra.mxu0 0.0
  %5934 = vmatpush.msra.mxu0 0.0
  %5935 = vmatpush.msra.mxu0 0.0
  %v5936 = vand.u32 %v5787, 4294901760
  %v5937 = vsub.f32 %v5787, %v5936
  %v5938 = vand.u32 %v5937, 4294901760
  %5939 = vmatpush.msra.mxu0 %v5938
  %v5940 = vand.u32 %v5786, 4294901760
  %v5941 = vsub.f32 %v5786, %v5940
  %v5942 = vand.u32 %v5941, 4294901760
  %5943 = vmatpush.msra.mxu0 %v5942
  %v5944 = vand.u32 %v5785, 4294901760
  %v5945 = vsub.f32 %v5785, %v5944
  %v5946 = vand.u32 %v5945, 4294901760
  %5947 = vmatpush.msra.mxu0 %v5946
  %v5948 = vand.u32 %v5784, 4294901760
  %v5949 = vsub.f32 %v5784, %v5948
  %v5950 = vand.u32 %v5949, 4294901760
  %5951 = vmatpush.msra.mxu0 %v5950
  %v5952 = vand.u32 %v5795, 4294901760
  %5953 = vmatmul.f32.gmra.mxu0 %v5952
  %v5954 = vpop.f32.mrf.mxu0
  %v5955 = vadd.f32 %v5922, %v5954
  %5956 = vdwg.mxu0
  %5957 = vmatpush.msra.mxu0 0.0
  %5958 = vmatpush.msra.mxu0 0.0
  %5959 = vmatpush.msra.mxu0 0.0
  %5960 = vmatpush.msra.mxu0 0.0
  %5961 = vmatpush.msra.mxu0 0.0
  %5962 = vmatpush.msra.mxu0 0.0
  %5963 = vmatpush.msra.mxu0 0.0
  %5964 = vmatpush.msra.mxu0 0.0
  %5965 = vmatpush.msra.mxu0 0.0
  %5966 = vmatpush.msra.mxu0 0.0
  %5967 = vmatpush.msra.mxu0 0.0
  %5968 = vmatpush.msra.mxu0 0.0
  %v5969 = vand.u32 %v5787, 4294901760
  %5970 = vmatpush.msra.mxu0 %v5969
  %v5971 = vand.u32 %v5786, 4294901760
  %5972 = vmatpush.msra.mxu0 %v5971
  %v5973 = vand.u32 %v5785, 4294901760
  %5974 = vmatpush.msra.mxu0 %v5973
  %v5975 = vand.u32 %v5784, 4294901760
  %5976 = vmatpush.msra.mxu0 %v5975
  %v5977 = vand.u32 %v5795, 4294901760
  %5978 = vmatmul.f32.gmra.mxu0 %v5977
  %v5979 = vpop.f32.mrf.mxu0
  %v5980 = vadd.f32 %v5955, %v5979
  %5981 = vdwg.mxu0
  %v5982 = vsel %vm1527, %v5980, -inf
  %5983 = vmax.xlane.f32.xlu0 %v5982
  %v5984 = vpop.xlane.xlu0 %5983
  %v5985 = vsub.f32 %v5980, %v5984
  %v5986 = vmul.f32 %v5985, 1.442695
  %v5987 = vpow.pop %v5986
  %v5988 = vsel %vm1527, %v5987, 0.0
  %5989 = vadd.xlane.f32.xlu0 %v5988
  %v5990 = vpop.xlane.xlu0 %5989
  %v5991 = vlog2.pop %v5990
  %v5992 = vmul.f32 %v5991, 0.6931472
  %v5993 = vadd.f32 %v5984, %v5992
  %v5994 = vsub.f32 %v5980, %v5993
  %s5995 = scalar_lea.vmem %s13, 6
  %5996 = vst [vmem:[%s5995] sm:$0x3] %v5994
  // Predicated region
  $region54: #{run.1} parent=0 // pred_check
    _
  $region55: #{run.1} parent=0 // pred_check_branch
    %5998 = sbr.rel (0) target = $region57
  $region56: #{run.1} parent=0 // pred_region
    _
  $region57: #{run.1} parent=0 // pred_fallthru
    _
  // Predicated region
  $region58: #{run.1} parent=0 // pred_check
    _
  $region59: #{run.1} parent=0 // pred_check_branch
    %6000 = sbr.rel (0) target = $region61
  $region60: #{run.1} parent=0 // pred_region
    _
  $region61: #{run.1} parent=0 // pred_fallthru
    _

</llo_original>
